<compile_context>
chip_gen: v7x
topology: tpu7x:2x2x1
jax: 0.10.0
libtpu: 0.0.40
codegen_flags: <defaults>
</compile_context>

<pallas_src>
import jax
import jax.numpy as jnp
from jax.experimental import pallas as pl
from jax.experimental.pallas import tpu as pltpu

C_IN, C_MID1, C_MID2, SPATIAL = 512, 256, 128, 49
TILE_N = 8  # samples per grid step; x tile = 8*512*49*4B ~= 0.8 MiB per buffer


def inout_decoder_kernel(x_ref, w1_ref, s1_ref, b1_ref,
                         w2_ref, s2_ref, b2_ref,
                         w3s3_ref, fcw_ref, scal_ref, out_ref):
    # Parameters (VMEM-resident across grid steps; constant index maps).
    w1 = w1_ref[...]                       # (256, 512) bf16   (Cout, Cin)
    w2 = w2_ref[...]                       # (128, 256) bf16
    s1, b1 = s1_ref[...], b1_ref[...]      # (256, 1) f32 folded BN1 scale/shift
    s2, b2 = s2_ref[...], b2_ref[...]      # (128, 1) f32 folded BN2 scale/shift
    w3s3 = w3s3_ref[...]                   # (128, 1) f32 conv3 weight * BN3 scale
    fcw = fcw_ref[...]                     # (1, 49)  f32 fc_inout weight
    bias3 = scal_ref[0]                    # BN3 folded shift (scalar, SMEM)
    fc_b = scal_ref[1]                     # fc_inout bias    (scalar, SMEM)

    tile_n = out_ref.shape[0]
    for n in range(tile_n):                # static unroll over samples in tile
        # Sample n stays in (channels, positions) layout -> plain 2D matmuls.
        x_n = x_ref[n].astype(jnp.bfloat16)                        # (512, 49)

        # conv1 (1x1, 512->256) + BN1 + ReLU
        h = jnp.dot(w1, x_n, preferred_element_type=jnp.float32)   # (256, 49)
        h = jnp.maximum(h * s1 + b1, 0.0)

        # conv2 (1x1, 256->128) + BN2 + ReLU
        h = jnp.dot(w2, h.astype(jnp.bfloat16),
                    preferred_element_type=jnp.float32)            # (128, 49)
        h = jnp.maximum(h * s2 + b2, 0.0)

        # conv3 (1x1, 128->1) + BN3 + ReLU as VPU multiply + sublane reduce
        # (avoids a lane-width-1 MXU pass and a (P, 1) intermediate).
        y = jnp.maximum(jnp.sum(h * w3s3, axis=0, keepdims=True) + bias3,
                        0.0)                                       # (1, 49)

        # fc_inout: out[n] = sum_p y[p] * fc_w[p] + fc_b (in-tile 49-reduction)
        out_ref[pl.ds(n, 1), :] = (
            jnp.sum(y * fcw, axis=1, keepdims=True) + fc_b)        # (1, 1)


def inout_decoder(x_nchw, params, *, tile_n=TILE_N):
    N, C, H, W = x_nchw.shape
    assert (C, H, W) == (C_IN, 7, 7), "InoutDecoder requires (N, 512, 7, 7)"

    eps = 1e-5

    def fold_bn(g, b, m, v):
        scale = g / jnp.sqrt(v + eps)
        return scale, b - m * scale

    s1, t1 = fold_bn(params["bn1_g"], params["bn1_b"], params["bn1_m"], params["bn1_v"])
    s2, t2 = fold_bn(params["bn2_g"], params["bn2_b"], params["bn2_m"], params["bn2_v"])
    s3, t3 = fold_bn(params["bn3_g"], params["bn3_b"], params["bn3_m"], params["bn3_v"])

    # 1x1 conv weights already live in PyTorch's (Cout, Cin) layout -> bf16 MXU.
    w1 = params["w1"].astype(jnp.bfloat16)                          # (256, 512)
    w2 = params["w2"].astype(jnp.bfloat16)                          # (128, 256)
    # conv3 weight folded with BN3 scale (used on the VPU in f32).
    w3s3 = (params["w3"][0] * s3[0]).reshape(C_MID2, 1).astype(jnp.float32)
    fcw = params["fc_w"].reshape(1, SPATIAL).astype(jnp.float32)
    scalars = jnp.stack([t3[0], params["fc_b"][0]]).astype(jnp.float32)  # SMEM

    s1c = s1.reshape(C_MID1, 1).astype(jnp.float32)
    t1c = t1.reshape(C_MID1, 1).astype(jnp.float32)
    s2c = s2.reshape(C_MID2, 1).astype(jnp.float32)
    t2c = t2.reshape(C_MID2, 1).astype(jnp.float32)

    # NCHW -> (N, 512, 49): pure metadata reshape, no HBM transpose round-trip.
    # The kernel casts each tile to bf16 in VMEM, so HBM sees the f32 input once.
    x3 = x_nchw.reshape(N, C_IN, SPATIAL).astype(jnp.float32)
    n_pad = ((N + tile_n - 1) // tile_n) * tile_n
    if n_pad != N:
        # Pad the batch so the (tile_n, 1) output block satisfies the sublane
        # rule; padded samples are computed and sliced off below.
        x3 = jnp.pad(x3, ((0, n_pad - N), (0, 0), (0, 0)))

    grid = (n_pad // tile_n,)

    flops = (2 * n_pad * SPATIAL * (C_IN * C_MID1 + C_MID1 * C_MID2 + C_MID2)
             + 2 * n_pad * SPATIAL)
    bytes_accessed = (x3.size * 4 + w1.size * 2 + w2.size * 2
                      + (s1c.size + t1c.size + s2c.size + t2c.size
                         + w3s3.size + fcw.size + scalars.size) * 4
                      + n_pad * 4)

    const2 = lambda i: (0, 0)
    out = pl.pallas_call(
        inout_decoder_kernel,
        out_shape=jax.ShapeDtypeStruct((n_pad, 1), jnp.float32),
        grid=grid,
        in_specs=[
            pl.BlockSpec((tile_n, C_IN, SPATIAL), lambda i: (i, 0, 0)),  # x tile
            pl.BlockSpec((C_MID1, C_IN), const2),                        # w1
            pl.BlockSpec((C_MID1, 1), const2),                           # s1
            pl.BlockSpec((C_MID1, 1), const2),                           # b1
            pl.BlockSpec((C_MID2, C_MID1), const2),                      # w2
            pl.BlockSpec((C_MID2, 1), const2),                           # s2
            pl.BlockSpec((C_MID2, 1), const2),                           # b2
            pl.BlockSpec((C_MID2, 1), const2),                           # w3*s3
            pl.BlockSpec((1, SPATIAL), const2),                          # fc_w
            pl.BlockSpec(memory_space=pltpu.MemorySpace.SMEM),           # scalars
        ],
        out_specs=pl.BlockSpec((tile_n, 1), lambda i: (i, 0)),
        compiler_params=pltpu.CompilerParams(
            dimension_semantics=("parallel",),
            vmem_limit_bytes=32 * 1024 * 1024),
        cost_estimate=pl.CostEstimate(
            flops=flops, transcendentals=0, bytes_accessed=bytes_accessed),
    )(x3, w1, s1c, t1c, w2, s2c, t2c, w3s3, fcw, scalars)

    return out[:N]


def make_params(key):
    ks = jax.random.split(key, 16)
    p = {}
    # Conv2d weights in PyTorch (Cout, Cin) layout (kernel_size=1 squeezed).
    p["w1"] = 0.05 * jax.random.normal(ks[0], (C_MID1, C_IN), jnp.float32)
    p["w2"] = 0.05 * jax.random.normal(ks[1], (C_MID2, C_MID1), jnp.float32)
    p["w3"] = 0.05 * jax.random.normal(ks[2], (1, C_MID2), jnp.float32)
    for idx, (i, c) in enumerate(zip((1, 2, 3), (C_MID1, C_MID2, 1))):
        p[f"bn{i}_g"] = 1.0 + 0.1 * jax.random.normal(ks[3 + idx], (c,), jnp.float32)
        p[f"bn{i}_b"] = 0.1 * jax.random.normal(ks[6 + idx], (c,), jnp.float32)
        p[f"bn{i}_m"] = 0.05 * jax.random.normal(ks[9 + idx], (c,), jnp.float32)
        p[f"bn{i}_v"] = jnp.abs(0.5 + 0.1 * jax.random.normal(ks[12 + idx], (c,), jnp.float32))
    bound = 1.0 / jnp.sqrt(float(SPATIAL))
    p["fc_w"] = jax.random.uniform(ks[15], (1, SPATIAL), jnp.float32, -bound, bound)
    p["fc_b"] = jax.random.uniform(ks[15], (1,), jnp.float32, -bound, bound)
    return p


def reference(x_nchw, params, *, mxu_bf16=True, eps=1e-5):
    # Pure-JAX mirror of the PyTorch forward (eval-mode BN). With mxu_bf16=True
    # the conv1/conv2 operands are cast to bf16 with f32 accumulation, matching
    # the kernel's MXU numerics; with False everything runs in full f32.
    def bn(h, g, b, m, v):
        s = g / jnp.sqrt(v + eps)
        return h * s[:, None] + (b - m * s)[:, None]

    if mxu_bf16:
        cast, prec = (lambda a: a.astype(jnp.bfloat16)), None
    else:
        cast, prec = (lambda a: a), "highest"

    N = x_nchw.shape[0]
    x = x_nchw.reshape(N, C_IN, SPATIAL)
    h = jnp.einsum("dc,ncp->ndp", cast(params["w1"]), cast(x),
                   preferred_element_type=jnp.float32, precision=prec)
    h = jnp.maximum(bn(h, params["bn1_g"], params["bn1_b"],
                       params["bn1_m"], params["bn1_v"]), 0.0)
    h = jnp.einsum("dc,ncp->ndp", cast(params["w2"]), cast(h),
                   preferred_element_type=jnp.float32, precision=prec)
    h = jnp.maximum(bn(h, params["bn2_g"], params["bn2_b"],
                       params["bn2_m"], params["bn2_v"]), 0.0)
    # conv3 + BN3 + ReLU (f32, matching the kernel's VPU path)
    h = jnp.einsum("dc,ncp->ndp", params["w3"], h,
                   preferred_element_type=jnp.float32, precision="highest")
    h = jnp.maximum(bn(h, params["bn3_g"], params["bn3_b"],
                       params["bn3_m"], params["bn3_v"]), 0.0)
    h = h.reshape(N, SPATIAL)
    return jnp.sum(h * params["fc_w"], axis=1, keepdims=True) + params["fc_b"]


if __name__ == "__main__":
    key = jax.random.PRNGKey(0)
    kx, kp = jax.random.split(key)
    # Shapes fixed by the module: 512 in-channels, 7x7 spatial (view(-1, 49)).
    N = 2
    x = jax.random.normal(kx, (N, C_IN, 7, 7), jnp.float32)
    params = make_params(kp)

    out = jax.block_until_ready(inout_decoder(x, params))
    assert out.shape == (N, 1)

    ref_mirror = reference(x, params, mxu_bf16=True)   # same MXU numerics
    ref_f32 = reference(x, params, mxu_bf16=False)     # full-f32 semantics
    assert jnp.allclose(out, ref_mirror, atol=1e-3, rtol=1e-3), (out, ref_mirror)
    assert jnp.allclose(out, ref_f32, atol=5e-2, rtol=5e-2), (out, ref_f32)
    print("KERNEL_OK")
</pallas_src>

<mosaic_0001>
module attributes {stable_mosaic.version = 11 : i64} {
  func.func @inout_decoder_kernel(%arg0: i32, %arg1: memref<8x512x49xf32, #tpu.memory_space<vmem>>, %arg2: memref<256x512xbf16, #tpu.memory_space<vmem>>, %arg3: memref<256x1xf32, #tpu.memory_space<vmem>>, %arg4: memref<256x1xf32, #tpu.memory_space<vmem>>, %arg5: memref<128x256xbf16, #tpu.memory_space<vmem>>, %arg6: memref<128x1xf32, #tpu.memory_space<vmem>>, %arg7: memref<128x1xf32, #tpu.memory_space<vmem>>, %arg8: memref<128x1xf32, #tpu.memory_space<vmem>>, %arg9: memref<1x49xf32, #tpu.memory_space<vmem>>, %arg10: memref<2xf32, #tpu.memory_space<smem>>, %arg11: memref<8x1xf32, #tpu.memory_space<vmem>>) attributes {dimension_semantics = [#tpu.dimension_semantics<parallel>], iteration_bounds = array<i64: 1>, scalar_prefetch = 0 : i64, scratch_operands = 0 : i64, tpu.core_type = #tpu.core_type<tc>, window_params = [{transform_indices = @transform_0, window_bounds = array<i64: 8, 512, 49>}, {pipeline_mode = #tpu.pipeline_mode<synchronous>, transform_indices = @transform_1, window_bounds = array<i64: 256, 512>}, {pipeline_mode = #tpu.pipeline_mode<synchronous>, transform_indices = @transform_2, window_bounds = array<i64: 256, 1>}, {pipeline_mode = #tpu.pipeline_mode<synchronous>, transform_indices = @transform_3, window_bounds = array<i64: 256, 1>}, {pipeline_mode = #tpu.pipeline_mode<synchronous>, transform_indices = @transform_4, window_bounds = array<i64: 128, 256>}, {pipeline_mode = #tpu.pipeline_mode<synchronous>, transform_indices = @transform_5, window_bounds = array<i64: 128, 1>}, {pipeline_mode = #tpu.pipeline_mode<synchronous>, transform_indices = @transform_6, window_bounds = array<i64: 128, 1>}, {pipeline_mode = #tpu.pipeline_mode<synchronous>, transform_indices = @transform_7, window_bounds = array<i64: 128, 1>}, {pipeline_mode = #tpu.pipeline_mode<synchronous>, transform_indices = @transform_8, window_bounds = array<i64: 1, 49>}, {transform_indices = @transform_9, window_bounds = array<i64: 2>}, {transform_indices = @transform_10, window_bounds = array<i64: 8, 1>}]} {
    %c0 = arith.constant 0 : index
    %c0_0 = arith.constant 0 : index
    %0 = vector.load %arg2[%c0, %c0_0] : memref<256x512xbf16, #tpu.memory_space<vmem>>, vector<256x512xbf16>
    %c0_1 = arith.constant 0 : index
    %c0_2 = arith.constant 0 : index
    %1 = vector.load %arg5[%c0_1, %c0_2] : memref<128x256xbf16, #tpu.memory_space<vmem>>, vector<128x256xbf16>
    %c0_3 = arith.constant 0 : index
    %c0_4 = arith.constant 0 : index
    %2 = vector.load %arg3[%c0_3, %c0_4] : memref<256x1xf32, #tpu.memory_space<vmem>>, vector<256x1xf32>
    %c0_5 = arith.constant 0 : index
    %c0_6 = arith.constant 0 : index
    %3 = vector.load %arg4[%c0_5, %c0_6] : memref<256x1xf32, #tpu.memory_space<vmem>>, vector<256x1xf32>
    %c0_7 = arith.constant 0 : index
    %c0_8 = arith.constant 0 : index
    %4 = vector.load %arg6[%c0_7, %c0_8] : memref<128x1xf32, #tpu.memory_space<vmem>>, vector<128x1xf32>
    %c0_9 = arith.constant 0 : index
    %c0_10 = arith.constant 0 : index
    %5 = vector.load %arg7[%c0_9, %c0_10] : memref<128x1xf32, #tpu.memory_space<vmem>>, vector<128x1xf32>
    %c0_11 = arith.constant 0 : index
    %c0_12 = arith.constant 0 : index
    %6 = vector.load %arg8[%c0_11, %c0_12] : memref<128x1xf32, #tpu.memory_space<vmem>>, vector<128x1xf32>
    %c0_13 = arith.constant 0 : index
    %c0_14 = arith.constant 0 : index
    %7 = vector.load %arg9[%c0_13, %c0_14] : memref<1x49xf32, #tpu.memory_space<vmem>>, vector<1x49xf32>
    %c0_15 = arith.constant 0 : index
    %8 = memref.load %arg10[%c0_15] : memref<2xf32, #tpu.memory_space<smem>>
    %c1 = arith.constant 1 : index
    %9 = memref.load %arg10[%c1] : memref<2xf32, #tpu.memory_space<smem>>
    %c0_16 = arith.constant 0 : index
    %c0_17 = arith.constant 0 : index
    %c0_18 = arith.constant 0 : index
    %10 = vector.load %arg1[%c0_16, %c0_17, %c0_18] : memref<8x512x49xf32, #tpu.memory_space<vmem>>, vector<1x512x49xf32>
    %11 = vector.shape_cast %10 : vector<1x512x49xf32> to vector<512x49xf32>
    %12 = arith.truncf %11 : vector<512x49xf32> to vector<512x49xbf16>
    %cst = arith.constant dense<0.000000e+00> : vector<256x49xf32>
    %13 = tpu.matmul %0, %12, %cst {dimension_numbers = #tpu.dot_dimension_numbers<[1], [0], [0], [1], [0, 0, 1, 1], [], []>} : vector<256x512xbf16>, vector<512x49xbf16>, vector<256x49xf32> -> vector<256x49xf32>
    %14 = vector.broadcast %2 : vector<256x1xf32> to vector<256x49xf32>
    %15 = arith.mulf %13, %14 : vector<256x49xf32>
    %16 = vector.broadcast %3 : vector<256x1xf32> to vector<256x49xf32>
    %17 = arith.addf %15, %16 : vector<256x49xf32>
    %cst_19 = arith.constant 0.000000e+00 : f32
    %18 = vector.broadcast %cst_19 : f32 to vector<256x49xf32>
    %19 = arith.maximumf %17, %18 : vector<256x49xf32>
    %20 = arith.truncf %19 : vector<256x49xf32> to vector<256x49xbf16>
    %cst_20 = arith.constant dense<0.000000e+00> : vector<128x49xf32>
    %21 = tpu.matmul %1, %20, %cst_20 {dimension_numbers = #tpu.dot_dimension_numbers<[1], [0], [0], [1], [0, 0, 1, 1], [], []>} : vector<128x256xbf16>, vector<256x49xbf16>, vector<128x49xf32> -> vector<128x49xf32>
    %22 = vector.broadcast %4 : vector<128x1xf32> to vector<128x49xf32>
    %23 = arith.mulf %21, %22 : vector<128x49xf32>
    %24 = vector.broadcast %5 : vector<128x1xf32> to vector<128x49xf32>
    %25 = arith.addf %23, %24 : vector<128x49xf32>
    %cst_21 = arith.constant 0.000000e+00 : f32
    %26 = vector.broadcast %cst_21 : f32 to vector<128x49xf32>
    %27 = arith.maximumf %25, %26 : vector<128x49xf32>
    %28 = vector.broadcast %6 : vector<128x1xf32> to vector<128x49xf32>
    %29 = arith.mulf %27, %28 : vector<128x49xf32>
    %cst_22 = arith.constant dense<0.000000e+00> : vector<49xf32>
    %30 = vector.multi_reduction <add>, %29, %cst_22 [0] : vector<128x49xf32> to vector<49xf32>
    %31 = vector.shape_cast %30 : vector<49xf32> to vector<1x49xf32>
    %32 = vector.broadcast %8 : f32 to vector<1x49xf32>
    %33 = arith.addf %31, %32 : vector<1x49xf32>
    %cst_23 = arith.constant 0.000000e+00 : f32
    %34 = vector.broadcast %cst_23 : f32 to vector<1x49xf32>
    %35 = arith.maximumf %33, %34 : vector<1x49xf32>
    %36 = arith.mulf %35, %7 : vector<1x49xf32>
    %cst_24 = arith.constant dense<0.000000e+00> : vector<1xf32>
    %37 = vector.multi_reduction <add>, %36, %cst_24 [1] : vector<1x49xf32> to vector<1xf32>
    %38 = vector.shape_cast %37 : vector<1xf32> to vector<1x1xf32>
    %39 = vector.broadcast %9 : f32 to vector<1x1xf32>
    %40 = arith.addf %38, %39 : vector<1x1xf32>
    %c0_25 = arith.constant 0 : index
    %c0_26 = arith.constant 0 : index
    %41 = vector.load %arg11[%c0_25, %c0_26] : memref<8x1xf32, #tpu.memory_space<vmem>>, vector<1x1xf32>
    tpu.vector_store %arg11[%c0_25, %c0_26], %40 {strides = array<i32>} : memref<8x1xf32, #tpu.memory_space<vmem>>, vector<1x1xf32>,
    %c1_27 = arith.constant 1 : index
    %c0_28 = arith.constant 0 : index
    %c0_29 = arith.constant 0 : index
    %42 = vector.load %arg1[%c1_27, %c0_28, %c0_29] : memref<8x512x49xf32, #tpu.memory_space<vmem>>, vector<1x512x49xf32>
    %43 = vector.shape_cast %42 : vector<1x512x49xf32> to vector<512x49xf32>
    %44 = arith.truncf %43 : vector<512x49xf32> to vector<512x49xbf16>
    %cst_30 = arith.constant dense<0.000000e+00> : vector<256x49xf32>
    %45 = tpu.matmul %0, %44, %cst_30 {dimension_numbers = #tpu.dot_dimension_numbers<[1], [0], [0], [1], [0, 0, 1, 1], [], []>} : vector<256x512xbf16>, vector<512x49xbf16>, vector<256x49xf32> -> vector<256x49xf32>
    %46 = vector.broadcast %2 : vector<256x1xf32> to vector<256x49xf32>
    %47 = arith.mulf %45, %46 : vector<256x49xf32>
    %48 = vector.broadcast %3 : vector<256x1xf32> to vector<256x49xf32>
    %49 = arith.addf %47, %48 : vector<256x49xf32>
    %cst_31 = arith.constant 0.000000e+00 : f32
    %50 = vector.broadcast %cst_31 : f32 to vector<256x49xf32>
    %51 = arith.maximumf %49, %50 : vector<256x49xf32>
    %52 = arith.truncf %51 : vector<256x49xf32> to vector<256x49xbf16>
    %cst_32 = arith.constant dense<0.000000e+00> : vector<128x49xf32>
    %53 = tpu.matmul %1, %52, %cst_32 {dimension_numbers = #tpu.dot_dimension_numbers<[1], [0], [0], [1], [0, 0, 1, 1], [], []>} : vector<128x256xbf16>, vector<256x49xbf16>, vector<128x49xf32> -> vector<128x49xf32>
    %54 = vector.broadcast %4 : vector<128x1xf32> to vector<128x49xf32>
    %55 = arith.mulf %53, %54 : vector<128x49xf32>
    %56 = vector.broadcast %5 : vector<128x1xf32> to vector<128x49xf32>
    %57 = arith.addf %55, %56 : vector<128x49xf32>
    %cst_33 = arith.constant 0.000000e+00 : f32
    %58 = vector.broadcast %cst_33 : f32 to vector<128x49xf32>
    %59 = arith.maximumf %57, %58 : vector<128x49xf32>
    %60 = vector.broadcast %6 : vector<128x1xf32> to vector<128x49xf32>
    %61 = arith.mulf %59, %60 : vector<128x49xf32>
    %cst_34 = arith.constant dense<0.000000e+00> : vector<49xf32>
    %62 = vector.multi_reduction <add>, %61, %cst_34 [0] : vector<128x49xf32> to vector<49xf32>
    %63 = vector.shape_cast %62 : vector<49xf32> to vector<1x49xf32>
    %64 = vector.broadcast %8 : f32 to vector<1x49xf32>
    %65 = arith.addf %63, %64 : vector<1x49xf32>
    %cst_35 = arith.constant 0.000000e+00 : f32
    %66 = vector.broadcast %cst_35 : f32 to vector<1x49xf32>
    %67 = arith.maximumf %65, %66 : vector<1x49xf32>
    %68 = arith.mulf %67, %7 : vector<1x49xf32>
    %cst_36 = arith.constant dense<0.000000e+00> : vector<1xf32>
    %69 = vector.multi_reduction <add>, %68, %cst_36 [1] : vector<1x49xf32> to vector<1xf32>
    %70 = vector.shape_cast %69 : vector<1xf32> to vector<1x1xf32>
    %71 = vector.broadcast %9 : f32 to vector<1x1xf32>
    %72 = arith.addf %70, %71 : vector<1x1xf32>
    %c1_37 = arith.constant 1 : index
    %c0_38 = arith.constant 0 : index
    %73 = vector.load %arg11[%c1_37, %c0_38] : memref<8x1xf32, #tpu.memory_space<vmem>>, vector<1x1xf32>
    tpu.vector_store %arg11[%c1_37, %c0_38], %72 {strides = array<i32>} : memref<8x1xf32, #tpu.memory_space<vmem>>, vector<1x1xf32>,
    %c2 = arith.constant 2 : index
    %c0_39 = arith.constant 0 : index
    %c0_40 = arith.constant 0 : index
    %74 = vector.load %arg1[%c2, %c0_39, %c0_40] : memref<8x512x49xf32, #tpu.memory_space<vmem>>, vector<1x512x49xf32>
    %75 = vector.shape_cast %74 : vector<1x512x49xf32> to vector<512x49xf32>
    %76 = arith.truncf %75 : vector<512x49xf32> to vector<512x49xbf16>
    %cst_41 = arith.constant dense<0.000000e+00> : vector<256x49xf32>
    %77 = tpu.matmul %0, %76, %cst_41 {dimension_numbers = #tpu.dot_dimension_numbers<[1], [0], [0], [1], [0, 0, 1, 1], [], []>} : vector<256x512xbf16>, vector<512x49xbf16>, vector<256x49xf32> -> vector<256x49xf32>
    %78 = vector.broadcast %2 : vector<256x1xf32> to vector<256x49xf32>
    %79 = arith.mulf %77, %78 : vector<256x49xf32>
    %80 = vector.broadcast %3 : vector<256x1xf32> to vector<256x49xf32>
    %81 = arith.addf %79, %80 : vector<256x49xf32>
    %cst_42 = arith.constant 0.000000e+00 : f32
    %82 = vector.broadcast %cst_42 : f32 to vector<256x49xf32>
    %83 = arith.maximumf %81, %82 : vector<256x49xf32>
    %84 = arith.truncf %83 : vector<256x49xf32> to vector<256x49xbf16>
    %cst_43 = arith.constant dense<0.000000e+00> : vector<128x49xf32>
    %85 = tpu.matmul %1, %84, %cst_43 {dimension_numbers = #tpu.dot_dimension_numbers<[1], [0], [0], [1], [0, 0, 1, 1], [], []>} : vector<128x256xbf16>, vector<256x49xbf16>, vector<128x49xf32> -> vector<128x49xf32>
    %86 = vector.broadcast %4 : vector<128x1xf32> to vector<128x49xf32>
    %87 = arith.mulf %85, %86 : vector<128x49xf32>
    %88 = vector.broadcast %5 : vector<128x1xf32> to vector<128x49xf32>
    %89 = arith.addf %87, %88 : vector<128x49xf32>
    %cst_44 = arith.constant 0.000000e+00 : f32
    %90 = vector.broadcast %cst_44 : f32 to vector<128x49xf32>
    %91 = arith.maximumf %89, %90 : vector<128x49xf32>
    %92 = vector.broadcast %6 : vector<128x1xf32> to vector<128x49xf32>
    %93 = arith.mulf %91, %92 : vector<128x49xf32>
    %cst_45 = arith.constant dense<0.000000e+00> : vector<49xf32>
    %94 = vector.multi_reduction <add>, %93, %cst_45 [0] : vector<128x49xf32> to vector<49xf32>
    %95 = vector.shape_cast %94 : vector<49xf32> to vector<1x49xf32>
    %96 = vector.broadcast %8 : f32 to vector<1x49xf32>
    %97 = arith.addf %95, %96 : vector<1x49xf32>
    %cst_46 = arith.constant 0.000000e+00 : f32
    %98 = vector.broadcast %cst_46 : f32 to vector<1x49xf32>
    %99 = arith.maximumf %97, %98 : vector<1x49xf32>
    %100 = arith.mulf %99, %7 : vector<1x49xf32>
    %cst_47 = arith.constant dense<0.000000e+00> : vector<1xf32>
    %101 = vector.multi_reduction <add>, %100, %cst_47 [1] : vector<1x49xf32> to vector<1xf32>
    %102 = vector.shape_cast %101 : vector<1xf32> to vector<1x1xf32>
    %103 = vector.broadcast %9 : f32 to vector<1x1xf32>
    %104 = arith.addf %102, %103 : vector<1x1xf32>
    %c2_48 = arith.constant 2 : index
    %c0_49 = arith.constant 0 : index
    %105 = vector.load %arg11[%c2_48, %c0_49] : memref<8x1xf32, #tpu.memory_space<vmem>>, vector<1x1xf32>
    tpu.vector_store %arg11[%c2_48, %c0_49], %104 {strides = array<i32>} : memref<8x1xf32, #tpu.memory_space<vmem>>, vector<1x1xf32>,
    %c3 = arith.constant 3 : index
    %c0_50 = arith.constant 0 : index
    %c0_51 = arith.constant 0 : index
    %106 = vector.load %arg1[%c3, %c0_50, %c0_51] : memref<8x512x49xf32, #tpu.memory_space<vmem>>, vector<1x512x49xf32>
    %107 = vector.shape_cast %106 : vector<1x512x49xf32> to vector<512x49xf32>
    %108 = arith.truncf %107 : vector<512x49xf32> to vector<512x49xbf16>
    %cst_52 = arith.constant dense<0.000000e+00> : vector<256x49xf32>
    %109 = tpu.matmul %0, %108, %cst_52 {dimension_numbers = #tpu.dot_dimension_numbers<[1], [0], [0], [1], [0, 0, 1, 1], [], []>} : vector<256x512xbf16>, vector<512x49xbf16>, vector<256x49xf32> -> vector<256x49xf32>
    %110 = vector.broadcast %2 : vector<256x1xf32> to vector<256x49xf32>
    %111 = arith.mulf %109, %110 : vector<256x49xf32>
    %112 = vector.broadcast %3 : vector<256x1xf32> to vector<256x49xf32>
    %113 = arith.addf %111, %112 : vector<256x49xf32>
    %cst_53 = arith.constant 0.000000e+00 : f32
    %114 = vector.broadcast %cst_53 : f32 to vector<256x49xf32>
    %115 = arith.maximumf %113, %114 : vector<256x49xf32>
    %116 = arith.truncf %115 : vector<256x49xf32> to vector<256x49xbf16>
    %cst_54 = arith.constant dense<0.000000e+00> : vector<128x49xf32>
    %117 = tpu.matmul %1, %116, %cst_54 {dimension_numbers = #tpu.dot_dimension_numbers<[1], [0], [0], [1], [0, 0, 1, 1], [], []>} : vector<128x256xbf16>, vector<256x49xbf16>, vector<128x49xf32> -> vector<128x49xf32>
    %118 = vector.broadcast %4 : vector<128x1xf32> to vector<128x49xf32>
    %119 = arith.mulf %117, %118 : vector<128x49xf32>
    %120 = vector.broadcast %5 : vector<128x1xf32> to vector<128x49xf32>
    %121 = arith.addf %119, %120 : vector<128x49xf32>
    %cst_55 = arith.constant 0.000000e+00 : f32
    %122 = vector.broadcast %cst_55 : f32 to vector<128x49xf32>
    %123 = arith.maximumf %121, %122 : vector<128x49xf32>
    %124 = vector.broadcast %6 : vector<128x1xf32> to vector<128x49xf32>
    %125 = arith.mulf %123, %124 : vector<128x49xf32>
    %cst_56 = arith.constant dense<0.000000e+00> : vector<49xf32>
    %126 = vector.multi_reduction <add>, %125, %cst_56 [0] : vector<128x49xf32> to vector<49xf32>
    %127 = vector.shape_cast %126 : vector<49xf32> to vector<1x49xf32>
    %128 = vector.broadcast %8 : f32 to vector<1x49xf32>
    %129 = arith.addf %127, %128 : vector<1x49xf32>
    %cst_57 = arith.constant 0.000000e+00 : f32
    %130 = vector.broadcast %cst_57 : f32 to vector<1x49xf32>
    %131 = arith.maximumf %129, %130 : vector<1x49xf32>
    %132 = arith.mulf %131, %7 : vector<1x49xf32>
    %cst_58 = arith.constant dense<0.000000e+00> : vector<1xf32>
    %133 = vector.multi_reduction <add>, %132, %cst_58 [1] : vector<1x49xf32> to vector<1xf32>
    %134 = vector.shape_cast %133 : vector<1xf32> to vector<1x1xf32>
    %135 = vector.broadcast %9 : f32 to vector<1x1xf32>
    %136 = arith.addf %134, %135 : vector<1x1xf32>
    %c3_59 = arith.constant 3 : index
    %c0_60 = arith.constant 0 : index
    %137 = vector.load %arg11[%c3_59, %c0_60] : memref<8x1xf32, #tpu.memory_space<vmem>>, vector<1x1xf32>
    tpu.vector_store %arg11[%c3_59, %c0_60], %136 {strides = array<i32>} : memref<8x1xf32, #tpu.memory_space<vmem>>, vector<1x1xf32>,
    %c4 = arith.constant 4 : index
    %c0_61 = arith.constant 0 : index
    %c0_62 = arith.constant 0 : index
    %138 = vector.load %arg1[%c4, %c0_61, %c0_62] : memref<8x512x49xf32, #tpu.memory_space<vmem>>, vector<1x512x49xf32>
    %139 = vector.shape_cast %138 : vector<1x512x49xf32> to vector<512x49xf32>
    %140 = arith.truncf %139 : vector<512x49xf32> to vector<512x49xbf16>
    %cst_63 = arith.constant dense<0.000000e+00> : vector<256x49xf32>
    %141 = tpu.matmul %0, %140, %cst_63 {dimension_numbers = #tpu.dot_dimension_numbers<[1], [0], [0], [1], [0, 0, 1, 1], [], []>} : vector<256x512xbf16>, vector<512x49xbf16>, vector<256x49xf32> -> vector<256x49xf32>
    %142 = vector.broadcast %2 : vector<256x1xf32> to vector<256x49xf32>
    %143 = arith.mulf %141, %142 : vector<256x49xf32>
    %144 = vector.broadcast %3 : vector<256x1xf32> to vector<256x49xf32>
    %145 = arith.addf %143, %144 : vector<256x49xf32>
    %cst_64 = arith.constant 0.000000e+00 : f32
    %146 = vector.broadcast %cst_64 : f32 to vector<256x49xf32>
    %147 = arith.maximumf %145, %146 : vector<256x49xf32>
    %148 = arith.truncf %147 : vector<256x49xf32> to vector<256x49xbf16>
    %cst_65 = arith.constant dense<0.000000e+00> : vector<128x49xf32>
    %149 = tpu.matmul %1, %148, %cst_65 {dimension_numbers = #tpu.dot_dimension_numbers<[1], [0], [0], [1], [0, 0, 1, 1], [], []>} : vector<128x256xbf16>, vector<256x49xbf16>, vector<128x49xf32> -> vector<128x49xf32>
    %150 = vector.broadcast %4 : vector<128x1xf32> to vector<128x49xf32>
    %151 = arith.mulf %149, %150 : vector<128x49xf32>
    %152 = vector.broadcast %5 : vector<128x1xf32> to vector<128x49xf32>
    %153 = arith.addf %151, %152 : vector<128x49xf32>
    %cst_66 = arith.constant 0.000000e+00 : f32
    %154 = vector.broadcast %cst_66 : f32 to vector<128x49xf32>
    %155 = arith.maximumf %153, %154 : vector<128x49xf32>
    %156 = vector.broadcast %6 : vector<128x1xf32> to vector<128x49xf32>
    %157 = arith.mulf %155, %156 : vector<128x49xf32>
    %cst_67 = arith.constant dense<0.000000e+00> : vector<49xf32>
    %158 = vector.multi_reduction <add>, %157, %cst_67 [0] : vector<128x49xf32> to vector<49xf32>
    %159 = vector.shape_cast %158 : vector<49xf32> to vector<1x49xf32>
    %160 = vector.broadcast %8 : f32 to vector<1x49xf32>
    %161 = arith.addf %159, %160 : vector<1x49xf32>
    %cst_68 = arith.constant 0.000000e+00 : f32
    %162 = vector.broadcast %cst_68 : f32 to vector<1x49xf32>
    %163 = arith.maximumf %161, %162 : vector<1x49xf32>
    %164 = arith.mulf %163, %7 : vector<1x49xf32>
    %cst_69 = arith.constant dense<0.000000e+00> : vector<1xf32>
    %165 = vector.multi_reduction <add>, %164, %cst_69 [1] : vector<1x49xf32> to vector<1xf32>
    %166 = vector.shape_cast %165 : vector<1xf32> to vector<1x1xf32>
    %167 = vector.broadcast %9 : f32 to vector<1x1xf32>
    %168 = arith.addf %166, %167 : vector<1x1xf32>
    %c4_70 = arith.constant 4 : index
    %c0_71 = arith.constant 0 : index
    %169 = vector.load %arg11[%c4_70, %c0_71] : memref<8x1xf32, #tpu.memory_space<vmem>>, vector<1x1xf32>
    tpu.vector_store %arg11[%c4_70, %c0_71], %168 {strides = array<i32>} : memref<8x1xf32, #tpu.memory_space<vmem>>, vector<1x1xf32>,
    %c5 = arith.constant 5 : index
    %c0_72 = arith.constant 0 : index
    %c0_73 = arith.constant 0 : index
    %170 = vector.load %arg1[%c5, %c0_72, %c0_73] : memref<8x512x49xf32, #tpu.memory_space<vmem>>, vector<1x512x49xf32>
    %171 = vector.shape_cast %170 : vector<1x512x49xf32> to vector<512x49xf32>
    %172 = arith.truncf %171 : vector<512x49xf32> to vector<512x49xbf16>
    %cst_74 = arith.constant dense<0.000000e+00> : vector<256x49xf32>
    %173 = tpu.matmul %0, %172, %cst_74 {dimension_numbers = #tpu.dot_dimension_numbers<[1], [0], [0], [1], [0, 0, 1, 1], [], []>} : vector<256x512xbf16>, vector<512x49xbf16>, vector<256x49xf32> -> vector<256x49xf32>
    %174 = vector.broadcast %2 : vector<256x1xf32> to vector<256x49xf32>
    %175 = arith.mulf %173, %174 : vector<256x49xf32>
    %176 = vector.broadcast %3 : vector<256x1xf32> to vector<256x49xf32>
    %177 = arith.addf %175, %176 : vector<256x49xf32>
    %cst_75 = arith.constant 0.000000e+00 : f32
    %178 = vector.broadcast %cst_75 : f32 to vector<256x49xf32>
    %179 = arith.maximumf %177, %178 : vector<256x49xf32>
    %180 = arith.truncf %179 : vector<256x49xf32> to vector<256x49xbf16>
    %cst_76 = arith.constant dense<0.000000e+00> : vector<128x49xf32>
    %181 = tpu.matmul %1, %180, %cst_76 {dimension_numbers = #tpu.dot_dimension_numbers<[1], [0], [0], [1], [0, 0, 1, 1], [], []>} : vector<128x256xbf16>, vector<256x49xbf16>, vector<128x49xf32> -> vector<128x49xf32>
    %182 = vector.broadcast %4 : vector<128x1xf32> to vector<128x49xf32>
    %183 = arith.mulf %181, %182 : vector<128x49xf32>
    %184 = vector.broadcast %5 : vector<128x1xf32> to vector<128x49xf32>
    %185 = arith.addf %183, %184 : vector<128x49xf32>
    %cst_77 = arith.constant 0.000000e+00 : f32
    %186 = vector.broadcast %cst_77 : f32 to vector<128x49xf32>
    %187 = arith.maximumf %185, %186 : vector<128x49xf32>
    %188 = vector.broadcast %6 : vector<128x1xf32> to vector<128x49xf32>
    %189 = arith.mulf %187, %188 : vector<128x49xf32>
    %cst_78 = arith.constant dense<0.000000e+00> : vector<49xf32>
    %190 = vector.multi_reduction <add>, %189, %cst_78 [0] : vector<128x49xf32> to vector<49xf32>
    %191 = vector.shape_cast %190 : vector<49xf32> to vector<1x49xf32>
    %192 = vector.broadcast %8 : f32 to vector<1x49xf32>
    %193 = arith.addf %191, %192 : vector<1x49xf32>
    %cst_79 = arith.constant 0.000000e+00 : f32
    %194 = vector.broadcast %cst_79 : f32 to vector<1x49xf32>
    %195 = arith.maximumf %193, %194 : vector<1x49xf32>
    %196 = arith.mulf %195, %7 : vector<1x49xf32>
    %cst_80 = arith.constant dense<0.000000e+00> : vector<1xf32>
    %197 = vector.multi_reduction <add>, %196, %cst_80 [1] : vector<1x49xf32> to vector<1xf32>
    %198 = vector.shape_cast %197 : vector<1xf32> to vector<1x1xf32>
    %199 = vector.broadcast %9 : f32 to vector<1x1xf32>
    %200 = arith.addf %198, %199 : vector<1x1xf32>
    %c5_81 = arith.constant 5 : index
    %c0_82 = arith.constant 0 : index
    %201 = vector.load %arg11[%c5_81, %c0_82] : memref<8x1xf32, #tpu.memory_space<vmem>>, vector<1x1xf32>
    tpu.vector_store %arg11[%c5_81, %c0_82], %200 {strides = array<i32>} : memref<8x1xf32, #tpu.memory_space<vmem>>, vector<1x1xf32>,
    %c6 = arith.constant 6 : index
    %c0_83 = arith.constant 0 : index
    %c0_84 = arith.constant 0 : index
    %202 = vector.load %arg1[%c6, %c0_83, %c0_84] : memref<8x512x49xf32, #tpu.memory_space<vmem>>, vector<1x512x49xf32>
    %203 = vector.shape_cast %202 : vector<1x512x49xf32> to vector<512x49xf32>
    %204 = arith.truncf %203 : vector<512x49xf32> to vector<512x49xbf16>
    %cst_85 = arith.constant dense<0.000000e+00> : vector<256x49xf32>
    %205 = tpu.matmul %0, %204, %cst_85 {dimension_numbers = #tpu.dot_dimension_numbers<[1], [0], [0], [1], [0, 0, 1, 1], [], []>} : vector<256x512xbf16>, vector<512x49xbf16>, vector<256x49xf32> -> vector<256x49xf32>
    %206 = vector.broadcast %2 : vector<256x1xf32> to vector<256x49xf32>
    %207 = arith.mulf %205, %206 : vector<256x49xf32>
    %208 = vector.broadcast %3 : vector<256x1xf32> to vector<256x49xf32>
    %209 = arith.addf %207, %208 : vector<256x49xf32>
    %cst_86 = arith.constant 0.000000e+00 : f32
    %210 = vector.broadcast %cst_86 : f32 to vector<256x49xf32>
    %211 = arith.maximumf %209, %210 : vector<256x49xf32>
    %212 = arith.truncf %211 : vector<256x49xf32> to vector<256x49xbf16>
    %cst_87 = arith.constant dense<0.000000e+00> : vector<128x49xf32>
    %213 = tpu.matmul %1, %212, %cst_87 {dimension_numbers = #tpu.dot_dimension_numbers<[1], [0], [0], [1], [0, 0, 1, 1], [], []>} : vector<128x256xbf16>, vector<256x49xbf16>, vector<128x49xf32> -> vector<128x49xf32>
    %214 = vector.broadcast %4 : vector<128x1xf32> to vector<128x49xf32>
    %215 = arith.mulf %213, %214 : vector<128x49xf32>
    %216 = vector.broadcast %5 : vector<128x1xf32> to vector<128x49xf32>
    %217 = arith.addf %215, %216 : vector<128x49xf32>
    %cst_88 = arith.constant 0.000000e+00 : f32
    %218 = vector.broadcast %cst_88 : f32 to vector<128x49xf32>
    %219 = arith.maximumf %217, %218 : vector<128x49xf32>
    %220 = vector.broadcast %6 : vector<128x1xf32> to vector<128x49xf32>
    %221 = arith.mulf %219, %220 : vector<128x49xf32>
    %cst_89 = arith.constant dense<0.000000e+00> : vector<49xf32>
    %222 = vector.multi_reduction <add>, %221, %cst_89 [0] : vector<128x49xf32> to vector<49xf32>
    %223 = vector.shape_cast %222 : vector<49xf32> to vector<1x49xf32>
    %224 = vector.broadcast %8 : f32 to vector<1x49xf32>
    %225 = arith.addf %223, %224 : vector<1x49xf32>
    %cst_90 = arith.constant 0.000000e+00 : f32
    %226 = vector.broadcast %cst_90 : f32 to vector<1x49xf32>
    %227 = arith.maximumf %225, %226 : vector<1x49xf32>
    %228 = arith.mulf %227, %7 : vector<1x49xf32>
    %cst_91 = arith.constant dense<0.000000e+00> : vector<1xf32>
    %229 = vector.multi_reduction <add>, %228, %cst_91 [1] : vector<1x49xf32> to vector<1xf32>
    %230 = vector.shape_cast %229 : vector<1xf32> to vector<1x1xf32>
    %231 = vector.broadcast %9 : f32 to vector<1x1xf32>
    %232 = arith.addf %230, %231 : vector<1x1xf32>
    %c6_92 = arith.constant 6 : index
    %c0_93 = arith.constant 0 : index
    %233 = vector.load %arg11[%c6_92, %c0_93] : memref<8x1xf32, #tpu.memory_space<vmem>>, vector<1x1xf32>
    tpu.vector_store %arg11[%c6_92, %c0_93], %232 {strides = array<i32>} : memref<8x1xf32, #tpu.memory_space<vmem>>, vector<1x1xf32>,
    %c7 = arith.constant 7 : index
    %c0_94 = arith.constant 0 : index
    %c0_95 = arith.constant 0 : index
    %234 = vector.load %arg1[%c7, %c0_94, %c0_95] : memref<8x512x49xf32, #tpu.memory_space<vmem>>, vector<1x512x49xf32>
    %235 = vector.shape_cast %234 : vector<1x512x49xf32> to vector<512x49xf32>
    %236 = arith.truncf %235 : vector<512x49xf32> to vector<512x49xbf16>
    %cst_96 = arith.constant dense<0.000000e+00> : vector<256x49xf32>
    %237 = tpu.matmul %0, %236, %cst_96 {dimension_numbers = #tpu.dot_dimension_numbers<[1], [0], [0], [1], [0, 0, 1, 1], [], []>} : vector<256x512xbf16>, vector<512x49xbf16>, vector<256x49xf32> -> vector<256x49xf32>
    %238 = vector.broadcast %2 : vector<256x1xf32> to vector<256x49xf32>
    %239 = arith.mulf %237, %238 : vector<256x49xf32>
    %240 = vector.broadcast %3 : vector<256x1xf32> to vector<256x49xf32>
    %241 = arith.addf %239, %240 : vector<256x49xf32>
    %cst_97 = arith.constant 0.000000e+00 : f32
    %242 = vector.broadcast %cst_97 : f32 to vector<256x49xf32>
    %243 = arith.maximumf %241, %242 : vector<256x49xf32>
    %244 = arith.truncf %243 : vector<256x49xf32> to vector<256x49xbf16>
    %cst_98 = arith.constant dense<0.000000e+00> : vector<128x49xf32>
    %245 = tpu.matmul %1, %244, %cst_98 {dimension_numbers = #tpu.dot_dimension_numbers<[1], [0], [0], [1], [0, 0, 1, 1], [], []>} : vector<128x256xbf16>, vector<256x49xbf16>, vector<128x49xf32> -> vector<128x49xf32>
    %246 = vector.broadcast %4 : vector<128x1xf32> to vector<128x49xf32>
    %247 = arith.mulf %245, %246 : vector<128x49xf32>
    %248 = vector.broadcast %5 : vector<128x1xf32> to vector<128x49xf32>
    %249 = arith.addf %247, %248 : vector<128x49xf32>
    %cst_99 = arith.constant 0.000000e+00 : f32
    %250 = vector.broadcast %cst_99 : f32 to vector<128x49xf32>
    %251 = arith.maximumf %249, %250 : vector<128x49xf32>
    %252 = vector.broadcast %6 : vector<128x1xf32> to vector<128x49xf32>
    %253 = arith.mulf %251, %252 : vector<128x49xf32>
    %cst_100 = arith.constant dense<0.000000e+00> : vector<49xf32>
    %254 = vector.multi_reduction <add>, %253, %cst_100 [0] : vector<128x49xf32> to vector<49xf32>
    %255 = vector.shape_cast %254 : vector<49xf32> to vector<1x49xf32>
    %256 = vector.broadcast %8 : f32 to vector<1x49xf32>
    %257 = arith.addf %255, %256 : vector<1x49xf32>
    %cst_101 = arith.constant 0.000000e+00 : f32
    %258 = vector.broadcast %cst_101 : f32 to vector<1x49xf32>
    %259 = arith.maximumf %257, %258 : vector<1x49xf32>
    %260 = arith.mulf %259, %7 : vector<1x49xf32>
    %cst_102 = arith.constant dense<0.000000e+00> : vector<1xf32>
    %261 = vector.multi_reduction <add>, %260, %cst_102 [1] : vector<1x49xf32> to vector<1xf32>
    %262 = vector.shape_cast %261 : vector<1xf32> to vector<1x1xf32>
    %263 = vector.broadcast %9 : f32 to vector<1x1xf32>
    %264 = arith.addf %262, %263 : vector<1x1xf32>
    %c7_103 = arith.constant 7 : index
    %c0_104 = arith.constant 0 : index
    %265 = vector.load %arg11[%c7_103, %c0_104] : memref<8x1xf32, #tpu.memory_space<vmem>>, vector<1x1xf32>
    tpu.vector_store %arg11[%c7_103, %c0_104], %264 {strides = array<i32>} : memref<8x1xf32, #tpu.memory_space<vmem>>, vector<1x1xf32>,
    return
  }
  func.func @transform_0(%arg0: i32) -> (i32, i32, i32) {
    %c0_i32 = arith.constant 0 : i32
    %c0_i32_0 = arith.constant 0 : i32
    %c0_i32_1 = arith.constant 0 : i32
    return %arg0, %c0_i32, %c0_i32_0 : i32, i32, i32
  }
  func.func @transform_1(%arg0: i32) -> (i32, i32) {
    %c0_i32 = arith.constant 0 : i32
    %c0_i32_0 = arith.constant 0 : i32
    %c0_i32_1 = arith.constant 0 : i32
    return %c0_i32, %c0_i32_0 : i32, i32
  }
  func.func @transform_2(%arg0: i32) -> (i32, i32) {
    %c0_i32 = arith.constant 0 : i32
    %c0_i32_0 = arith.constant 0 : i32
    %c0_i32_1 = arith.constant 0 : i32
    return %c0_i32, %c0_i32_0 : i32, i32
  }
  func.func @transform_3(%arg0: i32) -> (i32, i32) {
    %c0_i32 = arith.constant 0 : i32
    %c0_i32_0 = arith.constant 0 : i32
    %c0_i32_1 = arith.constant 0 : i32
    return %c0_i32, %c0_i32_0 : i32, i32
  }
  func.func @transform_4(%arg0: i32) -> (i32, i32) {
    %c0_i32 = arith.constant 0 : i32
    %c0_i32_0 = arith.constant 0 : i32
    %c0_i32_1 = arith.constant 0 : i32
    return %c0_i32, %c0_i32_0 : i32, i32
  }
  func.func @transform_5(%arg0: i32) -> (i32, i32) {
    %c0_i32 = arith.constant 0 : i32
    %c0_i32_0 = arith.constant 0 : i32
    %c0_i32_1 = arith.constant 0 : i32
    return %c0_i32, %c0_i32_0 : i32, i32
  }
  func.func @transform_6(%arg0: i32) -> (i32, i32) {
    %c0_i32 = arith.constant 0 : i32
    %c0_i32_0 = arith.constant 0 : i32
    %c0_i32_1 = arith.constant 0 : i32
    return %c0_i32, %c0_i32_0 : i32, i32
  }
  func.func @transform_7(%arg0: i32) -> (i32, i32) {
    %c0_i32 = arith.constant 0 : i32
    %c0_i32_0 = arith.constant 0 : i32
    %c0_i32_1 = arith.constant 0 : i32
    return %c0_i32, %c0_i32_0 : i32, i32
  }
  func.func @transform_8(%arg0: i32) -> (i32, i32) {
    %c0_i32 = arith.constant 0 : i32
    %c0_i32_0 = arith.constant 0 : i32
    %c0_i32_1 = arith.constant 0 : i32
    return %c0_i32, %c0_i32_0 : i32, i32
  }
  func.func @transform_9(%arg0: i32) -> i32 {
    %c0_i32 = arith.constant 0 : i32
    %c0_i32_0 = arith.constant 0 : i32
    return %c0_i32 : i32
  }
  func.func @transform_10(%arg0: i32) -> (i32, i32) {
    %c0_i32 = arith.constant 0 : i32
    %c0_i32_0 = arith.constant 0 : i32
    return %arg0, %c0_i32 : i32, i32
  }
}

</mosaic_0001>

<llo_original>
// kernel: tpu_custom_call.1
$region0: #{tpu_custom_call.1}
  #allocation0 [shape = 'u32[]', space=smem, size = 0x4, offset = 0x4, fixed_abs, tag = 'smem constant byte address 0x4 - core index']
  #allocation1 [shape = 'u32[144,128]{1,0:T(1,128)}', space=vmem, size = 0x12000, scoped, tag = 'internal scratch']
  %s0 = inlined_call_operand.vmem [shape: f32[8,512,49], index: 0, kind: input, shape index: {}]
  %s1 = inlined_call_operand.vmem [shape: bf16[256,512], index: 1, kind: input, shape index: {}]
  %s2 = inlined_call_operand.vmem [shape: f32[256,1], index: 2, kind: input, shape index: {}]
  %s3 = inlined_call_operand.vmem [shape: f32[256,1], index: 3, kind: input, shape index: {}]
  %s4 = inlined_call_operand.vmem [shape: bf16[128,256], index: 4, kind: input, shape index: {}]
  %s5 = inlined_call_operand.vmem [shape: f32[128,1], index: 5, kind: input, shape index: {}]
  %s6 = inlined_call_operand.vmem [shape: f32[128,1], index: 6, kind: input, shape index: {}]
  %s7 = inlined_call_operand.vmem [shape: f32[128,1], index: 7, kind: input, shape index: {}]
  %s8 = inlined_call_operand.vmem [shape: f32[1,49], index: 8, kind: input, shape index: {}]
  %s9 = inlined_call_operand.vmem [shape: f32[2], index: 9, kind: input, shape index: {}]
  %s10 = inlined_call_operand.vmem [shape: f32[8,1], index: 10, kind: output, shape index: {}]
  %s11 = sld [smem:[#allocation0]]
  $region54: #{tpu_custom_call.1} parent=0
    _
  %s13 = ssub.s32 1, %s11
  %s14 = scalar_select 0, %s13, %s11
  $region1: #{tpu_custom_call.1} parent=0
    #allocation2 [shape = 'u8[512]{0}', space=smem, size = 0x200, scoped, tag = 'input window, operand 9, single buffered']
    #allocation3 [shape = 's32[1]{0}', space=sflag, size = 0x4, scoped, tag = 'scoped memory for tpu_custom_call.1']
    %15 = vsyncpa [#allocation3], 0
    // Predicated region
    $region2: #{tpu_custom_call.1} parent=1 // pred_check
      _
    $region3: #{tpu_custom_call.1} parent=1 // pred_check_branch
      %17 = sbr.rel (0) target = $region5
    $region4: #{tpu_custom_call.1} parent=1 // pred_region
      _
    $region5: #{tpu_custom_call.1} parent=1 // pred_fallthru
      _
    // Predicated region
    $region6: #{tpu_custom_call.1} parent=1 // pred_check
      _
    $region7: #{tpu_custom_call.1} parent=1 // pred_check_branch
      %19 = sbr.rel (0) target = $region9
    $region8: #{tpu_custom_call.1} parent=1 // pred_region
      _
    $region9: #{tpu_custom_call.1} parent=1 // pred_fallthru
      _
    // Predicated region
    $region10: #{tpu_custom_call.1} parent=1 // pred_check
      _
    $region11: #{tpu_custom_call.1} parent=1 // pred_check_branch
      %21 = sbr.rel (0) target = $region13
    $region12: #{tpu_custom_call.1} parent=1 // pred_region
      _
    $region13: #{tpu_custom_call.1} parent=1 // pred_fallthru
      _
    // Predicated region
    $region14: #{tpu_custom_call.1} parent=1 // pred_check
      _
    $region15: #{tpu_custom_call.1} parent=1 // pred_check_branch
      %23 = sbr.rel (0) target = $region17
    $region16: #{tpu_custom_call.1} parent=1 // pred_region
      _
    $region17: #{tpu_custom_call.1} parent=1 // pred_fallthru
      _
    // Predicated region
    $region18: #{tpu_custom_call.1} parent=1 // pred_check
      _
    $region19: #{tpu_custom_call.1} parent=1 // pred_check_branch
      %25 = sbr.rel (0) target = $region21
    $region20: #{tpu_custom_call.1} parent=1 // pred_region
      _
    $region21: #{tpu_custom_call.1} parent=1 // pred_fallthru
      _
    // Predicated region
    $region22: #{tpu_custom_call.1} parent=1 // pred_check
      _
    $region23: #{tpu_custom_call.1} parent=1 // pred_check_branch
      %27 = sbr.rel (0) target = $region25
    $region24: #{tpu_custom_call.1} parent=1 // pred_region
      _
    $region25: #{tpu_custom_call.1} parent=1 // pred_fallthru
      _
    // Predicated region
    $region26: #{tpu_custom_call.1} parent=1 // pred_check
      _
    $region27: #{tpu_custom_call.1} parent=1 // pred_check_branch
      %29 = sbr.rel (0) target = $region29
    $region28: #{tpu_custom_call.1} parent=1 // pred_region
      _
    $region29: #{tpu_custom_call.1} parent=1 // pred_fallthru
      _
    // Predicated region
    $region30: #{tpu_custom_call.1} parent=1 // pred_check
      _
    $region31: #{tpu_custom_call.1} parent=1 // pred_check_branch
      %31 = sbr.rel (0) target = $region33
    $region32: #{tpu_custom_call.1} parent=1 // pred_region
      _
    $region33: #{tpu_custom_call.1} parent=1 // pred_fallthru
      _
    // Predicated region
    $region34: #{tpu_custom_call.1} parent=1 // pred_check
      _
    $region35: #{tpu_custom_call.1} parent=1 // pred_check_branch
      %33 = sbr.rel (0) target = $region37
    $region36: #{tpu_custom_call.1} parent=1 // pred_region
      _
    $region37: #{tpu_custom_call.1} parent=1 // pred_fallthru
      _
    // Predicated region
    $region38: #{tpu_custom_call.1} parent=1 // pred_check
      _
    $region39: #{tpu_custom_call.1} parent=1 // pred_check_branch
      %35 = sbr.rel (0) target = $region41
    $region40: #{tpu_custom_call.1} parent=1 // pred_region
      %s37 = ssub.s32 16, 16
      %38 = vsyncadd [#allocation3], %s37
      %s40 = sshll.u32 %s9, 4
      %s41 = int_to_ptr.vmem [resolvable:$true] %s40
      %43 = dma.vmem_to_smem %s41, 16, [#allocation2], [#allocation3]
    $region41: #{tpu_custom_call.1} parent=1 // pred_fallthru
      _
    // Predicated region
    $region42: #{tpu_custom_call.1} parent=1 // pred_check
      _
    $region43: #{tpu_custom_call.1} parent=1 // pred_check_branch
      %45 = sbr.rel (0) target = $region45
    $region44: #{tpu_custom_call.1} parent=1 // pred_region
      %46 = dma.done [#allocation3], 16
    $region45: #{tpu_custom_call.1} parent=1 // pred_fallthru
      _
    %47 = sfence
    %v49 = vld [vmem:[%s1] sm:$0xff]
    %v50 = vld [vmem:[%s1 + $0x8] sm:$0xff]
    %v51 = vld [vmem:[%s1 + $0x10] sm:$0xff]
    %v52 = vld [vmem:[%s1 + $0x18] sm:$0xff]
    %v53 = vld [vmem:[%s1 + $0x20] sm:$0xff]
    %v54 = vld [vmem:[%s1 + $0x28] sm:$0xff]
    %v55 = vld [vmem:[%s1 + $0x30] sm:$0xff]
    %v56 = vld [vmem:[%s1 + $0x38] sm:$0xff]
    %v57 = vld [vmem:[%s1 + $0x40] sm:$0xff]
    %v58 = vld [vmem:[%s1 + $0x48] sm:$0xff]
    %v59 = vld [vmem:[%s1 + $0x50] sm:$0xff]
    %v60 = vld [vmem:[%s1 + $0x58] sm:$0xff]
    %v61 = vld [vmem:[%s1 + $0x60] sm:$0xff]
    %v62 = vld [vmem:[%s1 + $0x68] sm:$0xff]
    %v63 = vld [vmem:[%s1 + $0x70] sm:$0xff]
    %v64 = vld [vmem:[%s1 + $0x78] sm:$0xff]
    %v65 = vld [vmem:[%s1 + $0x80] sm:$0xff]
    %v66 = vld [vmem:[%s1 + $0x88] sm:$0xff]
    %v67 = vld [vmem:[%s1 + $0x90] sm:$0xff]
    %v68 = vld [vmem:[%s1 + $0x98] sm:$0xff]
    %v69 = vld [vmem:[%s1 + $0xa0] sm:$0xff]
    %v70 = vld [vmem:[%s1 + $0xa8] sm:$0xff]
    %v71 = vld [vmem:[%s1 + $0xb0] sm:$0xff]
    %v72 = vld [vmem:[%s1 + $0xb8] sm:$0xff]
    %v73 = vld [vmem:[%s1 + $0xc0] sm:$0xff]
    %v74 = vld [vmem:[%s1 + $0xc8] sm:$0xff]
    %v75 = vld [vmem:[%s1 + $0xd0] sm:$0xff]
    %v76 = vld [vmem:[%s1 + $0xd8] sm:$0xff]
    %v77 = vld [vmem:[%s1 + $0xe0] sm:$0xff]
    %v78 = vld [vmem:[%s1 + $0xe8] sm:$0xff]
    %v79 = vld [vmem:[%s1 + $0xf0] sm:$0xff]
    %v80 = vld [vmem:[%s1 + $0xf8] sm:$0xff]
    %v81 = vld [vmem:[%s1 + $0x100] sm:$0xff]
    %v82 = vld [vmem:[%s1 + $0x108] sm:$0xff]
    %v83 = vld [vmem:[%s1 + $0x110] sm:$0xff]
    %v84 = vld [vmem:[%s1 + $0x118] sm:$0xff]
    %v85 = vld [vmem:[%s1 + $0x120] sm:$0xff]
    %v86 = vld [vmem:[%s1 + $0x128] sm:$0xff]
    %v87 = vld [vmem:[%s1 + $0x130] sm:$0xff]
    %v88 = vld [vmem:[%s1 + $0x138] sm:$0xff]
    %v89 = vld [vmem:[%s1 + $0x140] sm:$0xff]
    %v90 = vld [vmem:[%s1 + $0x148] sm:$0xff]
    %v91 = vld [vmem:[%s1 + $0x150] sm:$0xff]
    %v92 = vld [vmem:[%s1 + $0x158] sm:$0xff]
    %v93 = vld [vmem:[%s1 + $0x160] sm:$0xff]
    %v94 = vld [vmem:[%s1 + $0x168] sm:$0xff]
    %v95 = vld [vmem:[%s1 + $0x170] sm:$0xff]
    %v96 = vld [vmem:[%s1 + $0x178] sm:$0xff]
    %v97 = vld [vmem:[%s1 + $0x180] sm:$0xff]
    %v98 = vld [vmem:[%s1 + $0x188] sm:$0xff]
    %v99 = vld [vmem:[%s1 + $0x190] sm:$0xff]
    %v100 = vld [vmem:[%s1 + $0x198] sm:$0xff]
    %v101 = vld [vmem:[%s1 + $0x1a0] sm:$0xff]
    %v102 = vld [vmem:[%s1 + $0x1a8] sm:$0xff]
    %v103 = vld [vmem:[%s1 + $0x1b0] sm:$0xff]
    %v104 = vld [vmem:[%s1 + $0x1b8] sm:$0xff]
    %v105 = vld [vmem:[%s1 + $0x1c0] sm:$0xff]
    %v106 = vld [vmem:[%s1 + $0x1c8] sm:$0xff]
    %v107 = vld [vmem:[%s1 + $0x1d0] sm:$0xff]
    %v108 = vld [vmem:[%s1 + $0x1d8] sm:$0xff]
    %v109 = vld [vmem:[%s1 + $0x1e0] sm:$0xff]
    %v110 = vld [vmem:[%s1 + $0x1e8] sm:$0xff]
    %v111 = vld [vmem:[%s1 + $0x1f0] sm:$0xff]
    %v112 = vld [vmem:[%s1 + $0x1f8] sm:$0xff]
    %v113 = vld [vmem:[%s4] sm:$0xff]
    %v114 = vld [vmem:[%s4 + $0x8] sm:$0xff]
    %v115 = vld [vmem:[%s4 + $0x10] sm:$0xff]
    %v116 = vld [vmem:[%s4 + $0x18] sm:$0xff]
    %v117 = vld [vmem:[%s4 + $0x20] sm:$0xff]
    %v118 = vld [vmem:[%s4 + $0x28] sm:$0xff]
    %v119 = vld [vmem:[%s4 + $0x30] sm:$0xff]
    %v120 = vld [vmem:[%s4 + $0x38] sm:$0xff]
    %v121 = vld [vmem:[%s4 + $0x40] sm:$0xff]
    %v122 = vld [vmem:[%s4 + $0x48] sm:$0xff]
    %v123 = vld [vmem:[%s4 + $0x50] sm:$0xff]
    %v124 = vld [vmem:[%s4 + $0x58] sm:$0xff]
    %v125 = vld [vmem:[%s4 + $0x60] sm:$0xff]
    %v126 = vld [vmem:[%s4 + $0x68] sm:$0xff]
    %v127 = vld [vmem:[%s4 + $0x70] sm:$0xff]
    %v128 = vld [vmem:[%s4 + $0x78] sm:$0xff]
    %v129 = vld [vmem:[%s2] sm:$0xff]
    %v130 = vld [vmem:[%s2 + $0x8] sm:$0xff]
    %v131 = vld [vmem:[%s2 + $0x10] sm:$0xff]
    %v132 = vld [vmem:[%s2 + $0x18] sm:$0xff]
    %v133 = vld [vmem:[%s2 + $0x20] sm:$0xff]
    %v134 = vld [vmem:[%s2 + $0x28] sm:$0xff]
    %v135 = vld [vmem:[%s2 + $0x30] sm:$0xff]
    %v136 = vld [vmem:[%s2 + $0x38] sm:$0xff]
    %v137 = vld [vmem:[%s2 + $0x40] sm:$0xff]
    %v138 = vld [vmem:[%s2 + $0x48] sm:$0xff]
    %v139 = vld [vmem:[%s2 + $0x50] sm:$0xff]
    %v140 = vld [vmem:[%s2 + $0x58] sm:$0xff]
    %v141 = vld [vmem:[%s2 + $0x60] sm:$0xff]
    %v142 = vld [vmem:[%s2 + $0x68] sm:$0xff]
    %v143 = vld [vmem:[%s2 + $0x70] sm:$0xff]
    %v144 = vld [vmem:[%s2 + $0x78] sm:$0xff]
    %v145 = vld [vmem:[%s2 + $0x80] sm:$0xff]
    %v146 = vld [vmem:[%s2 + $0x88] sm:$0xff]
    %v147 = vld [vmem:[%s2 + $0x90] sm:$0xff]
    %v148 = vld [vmem:[%s2 + $0x98] sm:$0xff]
    %v149 = vld [vmem:[%s2 + $0xa0] sm:$0xff]
    %v150 = vld [vmem:[%s2 + $0xa8] sm:$0xff]
    %v151 = vld [vmem:[%s2 + $0xb0] sm:$0xff]
    %v152 = vld [vmem:[%s2 + $0xb8] sm:$0xff]
    %v153 = vld [vmem:[%s2 + $0xc0] sm:$0xff]
    %v154 = vld [vmem:[%s2 + $0xc8] sm:$0xff]
    %v155 = vld [vmem:[%s2 + $0xd0] sm:$0xff]
    %v156 = vld [vmem:[%s2 + $0xd8] sm:$0xff]
    %v157 = vld [vmem:[%s2 + $0xe0] sm:$0xff]
    %v158 = vld [vmem:[%s2 + $0xe8] sm:$0xff]
    %v159 = vld [vmem:[%s2 + $0xf0] sm:$0xff]
    %v160 = vld [vmem:[%s2 + $0xf8] sm:$0xff]
    %v161 = vld [vmem:[%s3] sm:$0xff]
    %v162 = vld [vmem:[%s3 + $0x8] sm:$0xff]
    %v163 = vld [vmem:[%s3 + $0x10] sm:$0xff]
    %v164 = vld [vmem:[%s3 + $0x18] sm:$0xff]
    %v165 = vld [vmem:[%s3 + $0x20] sm:$0xff]
    %v166 = vld [vmem:[%s3 + $0x28] sm:$0xff]
    %v167 = vld [vmem:[%s3 + $0x30] sm:$0xff]
    %v168 = vld [vmem:[%s3 + $0x38] sm:$0xff]
    %v169 = vld [vmem:[%s3 + $0x40] sm:$0xff]
    %v170 = vld [vmem:[%s3 + $0x48] sm:$0xff]
    %v171 = vld [vmem:[%s3 + $0x50] sm:$0xff]
    %v172 = vld [vmem:[%s3 + $0x58] sm:$0xff]
    %v173 = vld [vmem:[%s3 + $0x60] sm:$0xff]
    %v174 = vld [vmem:[%s3 + $0x68] sm:$0xff]
    %v175 = vld [vmem:[%s3 + $0x70] sm:$0xff]
    %v176 = vld [vmem:[%s3 + $0x78] sm:$0xff]
    %v177 = vld [vmem:[%s3 + $0x80] sm:$0xff]
    %v178 = vld [vmem:[%s3 + $0x88] sm:$0xff]
    %v179 = vld [vmem:[%s3 + $0x90] sm:$0xff]
    %v180 = vld [vmem:[%s3 + $0x98] sm:$0xff]
    %v181 = vld [vmem:[%s3 + $0xa0] sm:$0xff]
    %v182 = vld [vmem:[%s3 + $0xa8] sm:$0xff]
    %v183 = vld [vmem:[%s3 + $0xb0] sm:$0xff]
    %v184 = vld [vmem:[%s3 + $0xb8] sm:$0xff]
    %v185 = vld [vmem:[%s3 + $0xc0] sm:$0xff]
    %v186 = vld [vmem:[%s3 + $0xc8] sm:$0xff]
    %v187 = vld [vmem:[%s3 + $0xd0] sm:$0xff]
    %v188 = vld [vmem:[%s3 + $0xd8] sm:$0xff]
    %v189 = vld [vmem:[%s3 + $0xe0] sm:$0xff]
    %v190 = vld [vmem:[%s3 + $0xe8] sm:$0xff]
    %v191 = vld [vmem:[%s3 + $0xf0] sm:$0xff]
    %v192 = vld [vmem:[%s3 + $0xf8] sm:$0xff]
    %v193 = vld [vmem:[%s5] sm:$0xff]
    %v194 = vld [vmem:[%s5 + $0x8] sm:$0xff]
    %v195 = vld [vmem:[%s5 + $0x10] sm:$0xff]
    %v196 = vld [vmem:[%s5 + $0x18] sm:$0xff]
    %v197 = vld [vmem:[%s5 + $0x20] sm:$0xff]
    %v198 = vld [vmem:[%s5 + $0x28] sm:$0xff]
    %v199 = vld [vmem:[%s5 + $0x30] sm:$0xff]
    %v200 = vld [vmem:[%s5 + $0x38] sm:$0xff]
    %v201 = vld [vmem:[%s5 + $0x40] sm:$0xff]
    %v202 = vld [vmem:[%s5 + $0x48] sm:$0xff]
    %v203 = vld [vmem:[%s5 + $0x50] sm:$0xff]
    %v204 = vld [vmem:[%s5 + $0x58] sm:$0xff]
    %v205 = vld [vmem:[%s5 + $0x60] sm:$0xff]
    %v206 = vld [vmem:[%s5 + $0x68] sm:$0xff]
    %v207 = vld [vmem:[%s5 + $0x70] sm:$0xff]
    %v208 = vld [vmem:[%s5 + $0x78] sm:$0xff]
    %v209 = vld [vmem:[%s6] sm:$0xff]
    %v210 = vld [vmem:[%s6 + $0x8] sm:$0xff]
    %v211 = vld [vmem:[%s6 + $0x10] sm:$0xff]
    %v212 = vld [vmem:[%s6 + $0x18] sm:$0xff]
    %v213 = vld [vmem:[%s6 + $0x20] sm:$0xff]
    %v214 = vld [vmem:[%s6 + $0x28] sm:$0xff]
    %v215 = vld [vmem:[%s6 + $0x30] sm:$0xff]
    %v216 = vld [vmem:[%s6 + $0x38] sm:$0xff]
    %v217 = vld [vmem:[%s6 + $0x40] sm:$0xff]
    %v218 = vld [vmem:[%s6 + $0x48] sm:$0xff]
    %v219 = vld [vmem:[%s6 + $0x50] sm:$0xff]
    %v220 = vld [vmem:[%s6 + $0x58] sm:$0xff]
    %v221 = vld [vmem:[%s6 + $0x60] sm:$0xff]
    %v222 = vld [vmem:[%s6 + $0x68] sm:$0xff]
    %v223 = vld [vmem:[%s6 + $0x70] sm:$0xff]
    %v224 = vld [vmem:[%s6 + $0x78] sm:$0xff]
    %v225 = vld [vmem:[%s7] sm:$0xff]
    %v226 = vld [vmem:[%s7 + $0x8] sm:$0xff]
    %v227 = vld [vmem:[%s7 + $0x10] sm:$0xff]
    %v228 = vld [vmem:[%s7 + $0x18] sm:$0xff]
    %v229 = vld [vmem:[%s7 + $0x20] sm:$0xff]
    %v230 = vld [vmem:[%s7 + $0x28] sm:$0xff]
    %v231 = vld [vmem:[%s7 + $0x30] sm:$0xff]
    %v232 = vld [vmem:[%s7 + $0x38] sm:$0xff]
    %v233 = vld [vmem:[%s7 + $0x40] sm:$0xff]
    %v234 = vld [vmem:[%s7 + $0x48] sm:$0xff]
    %v235 = vld [vmem:[%s7 + $0x50] sm:$0xff]
    %v236 = vld [vmem:[%s7 + $0x58] sm:$0xff]
    %v237 = vld [vmem:[%s7 + $0x60] sm:$0xff]
    %v238 = vld [vmem:[%s7 + $0x68] sm:$0xff]
    %v239 = vld [vmem:[%s7 + $0x70] sm:$0xff]
    %v240 = vld [vmem:[%s7 + $0x78] sm:$0xff]
    %v241 = vld [vmem:[%s8] sm:$0x1]
    %s242 = sld [smem:[#allocation2]]
    %s243 = sld [smem:[#allocation2 + $0x1]]
    %v244 = vld [vmem:[%s0] sm:$0xff]
    %v245 = vld [vmem:[%s0 + $0x8] sm:$0xff]
    %v246 = vld [vmem:[%s0 + $0x10] sm:$0xff]
    %v247 = vld [vmem:[%s0 + $0x18] sm:$0xff]
    %v248 = vld [vmem:[%s0 + $0x20] sm:$0xff]
    %v249 = vld [vmem:[%s0 + $0x28] sm:$0xff]
    %v250 = vld [vmem:[%s0 + $0x30] sm:$0xff]
    %v251 = vld [vmem:[%s0 + $0x38] sm:$0xff]
    %v252 = vld [vmem:[%s0 + $0x40] sm:$0xff]
    %v253 = vld [vmem:[%s0 + $0x48] sm:$0xff]
    %v254 = vld [vmem:[%s0 + $0x50] sm:$0xff]
    %v255 = vld [vmem:[%s0 + $0x58] sm:$0xff]
    %v256 = vld [vmem:[%s0 + $0x60] sm:$0xff]
    %v257 = vld [vmem:[%s0 + $0x68] sm:$0xff]
    %v258 = vld [vmem:[%s0 + $0x70] sm:$0xff]
    %v259 = vld [vmem:[%s0 + $0x78] sm:$0xff]
    %v260 = vld [vmem:[%s0 + $0x80] sm:$0xff]
    %v261 = vld [vmem:[%s0 + $0x88] sm:$0xff]
    %v262 = vld [vmem:[%s0 + $0x90] sm:$0xff]
    %v263 = vld [vmem:[%s0 + $0x98] sm:$0xff]
    %v264 = vld [vmem:[%s0 + $0xa0] sm:$0xff]
    %v265 = vld [vmem:[%s0 + $0xa8] sm:$0xff]
    %v266 = vld [vmem:[%s0 + $0xb0] sm:$0xff]
    %v267 = vld [vmem:[%s0 + $0xb8] sm:$0xff]
    %v268 = vld [vmem:[%s0 + $0xc0] sm:$0xff]
    %v269 = vld [vmem:[%s0 + $0xc8] sm:$0xff]
    %v270 = vld [vmem:[%s0 + $0xd0] sm:$0xff]
    %v271 = vld [vmem:[%s0 + $0xd8] sm:$0xff]
    %v272 = vld [vmem:[%s0 + $0xe0] sm:$0xff]
    %v273 = vld [vmem:[%s0 + $0xe8] sm:$0xff]
    %v274 = vld [vmem:[%s0 + $0xf0] sm:$0xff]
    %v275 = vld [vmem:[%s0 + $0xf8] sm:$0xff]
    %v276 = vld [vmem:[%s0 + $0x100] sm:$0xff]
    %v277 = vld [vmem:[%s0 + $0x108] sm:$0xff]
    %v278 = vld [vmem:[%s0 + $0x110] sm:$0xff]
    %v279 = vld [vmem:[%s0 + $0x118] sm:$0xff]
    %v280 = vld [vmem:[%s0 + $0x120] sm:$0xff]
    %v281 = vld [vmem:[%s0 + $0x128] sm:$0xff]
    %v282 = vld [vmem:[%s0 + $0x130] sm:$0xff]
    %v283 = vld [vmem:[%s0 + $0x138] sm:$0xff]
    %v284 = vld [vmem:[%s0 + $0x140] sm:$0xff]
    %v285 = vld [vmem:[%s0 + $0x148] sm:$0xff]
    %v286 = vld [vmem:[%s0 + $0x150] sm:$0xff]
    %v287 = vld [vmem:[%s0 + $0x158] sm:$0xff]
    %v288 = vld [vmem:[%s0 + $0x160] sm:$0xff]
    %v289 = vld [vmem:[%s0 + $0x168] sm:$0xff]
    %v290 = vld [vmem:[%s0 + $0x170] sm:$0xff]
    %v291 = vld [vmem:[%s0 + $0x178] sm:$0xff]
    %v292 = vld [vmem:[%s0 + $0x180] sm:$0xff]
    %v293 = vld [vmem:[%s0 + $0x188] sm:$0xff]
    %v294 = vld [vmem:[%s0 + $0x190] sm:$0xff]
    %v295 = vld [vmem:[%s0 + $0x198] sm:$0xff]
    %v296 = vld [vmem:[%s0 + $0x1a0] sm:$0xff]
    %v297 = vld [vmem:[%s0 + $0x1a8] sm:$0xff]
    %v298 = vld [vmem:[%s0 + $0x1b0] sm:$0xff]
    %v299 = vld [vmem:[%s0 + $0x1b8] sm:$0xff]
    %v300 = vld [vmem:[%s0 + $0x1c0] sm:$0xff]
    %v301 = vld [vmem:[%s0 + $0x1c8] sm:$0xff]
    %v302 = vld [vmem:[%s0 + $0x1d0] sm:$0xff]
    %v303 = vld [vmem:[%s0 + $0x1d8] sm:$0xff]
    %v304 = vld [vmem:[%s0 + $0x1e0] sm:$0xff]
    %v305 = vld [vmem:[%s0 + $0x1e8] sm:$0xff]
    %v306 = vld [vmem:[%s0 + $0x1f0] sm:$0xff]
    %v307 = vld [vmem:[%s0 + $0x1f8] sm:$0xff]
    %v308 = vpack.c.bf16 %v245, %v244
    %v309 = vpack.c.bf16 %v247, %v246
    %v310 = vpack.c.bf16 %v249, %v248
    %v311 = vpack.c.bf16 %v251, %v250
    %v312 = vpack.c.bf16 %v253, %v252
    %v313 = vpack.c.bf16 %v255, %v254
    %v314 = vpack.c.bf16 %v257, %v256
    %v315 = vpack.c.bf16 %v259, %v258
    %v316 = vpack.c.bf16 %v261, %v260
    %v317 = vpack.c.bf16 %v263, %v262
    %v318 = vpack.c.bf16 %v265, %v264
    %v319 = vpack.c.bf16 %v267, %v266
    %v320 = vpack.c.bf16 %v269, %v268
    %v321 = vpack.c.bf16 %v271, %v270
    %v322 = vpack.c.bf16 %v273, %v272
    %v323 = vpack.c.bf16 %v275, %v274
    %v324 = vpack.c.bf16 %v277, %v276
    %v325 = vpack.c.bf16 %v279, %v278
    %v326 = vpack.c.bf16 %v281, %v280
    %v327 = vpack.c.bf16 %v283, %v282
    %v328 = vpack.c.bf16 %v285, %v284
    %v329 = vpack.c.bf16 %v287, %v286
    %v330 = vpack.c.bf16 %v289, %v288
    %v331 = vpack.c.bf16 %v291, %v290
    %v332 = vpack.c.bf16 %v293, %v292
    %v333 = vpack.c.bf16 %v295, %v294
    %v334 = vpack.c.bf16 %v297, %v296
    %v335 = vpack.c.bf16 %v299, %v298
    %v336 = vpack.c.bf16 %v301, %v300
    %v337 = vpack.c.bf16 %v303, %v302
    %v338 = vpack.c.bf16 %v305, %v304
    %v339 = vpack.c.bf16 %v307, %v306
    %v404 = vunpack.c.l.b16 %v49
    %v405 = vunpack.c.h.b16 %v49
    %v406 = vunpack.c.l.b16 %v50
    %v407 = vunpack.c.h.b16 %v50
    %v408 = vunpack.c.l.b16 %v51
    %v409 = vunpack.c.h.b16 %v51
    %v410 = vunpack.c.l.b16 %v52
    %v411 = vunpack.c.h.b16 %v52
    %v412 = vunpack.c.l.b16 %v53
    %v413 = vunpack.c.h.b16 %v53
    %v414 = vunpack.c.l.b16 %v54
    %v415 = vunpack.c.h.b16 %v54
    %v416 = vunpack.c.l.b16 %v55
    %v417 = vunpack.c.h.b16 %v55
    %v418 = vunpack.c.l.b16 %v56
    %v419 = vunpack.c.h.b16 %v56
    %v420 = vunpack.c.l.b16 %v57
    %v421 = vunpack.c.h.b16 %v57
    %v422 = vunpack.c.l.b16 %v58
    %v423 = vunpack.c.h.b16 %v58
    %v424 = vunpack.c.l.b16 %v59
    %v425 = vunpack.c.h.b16 %v59
    %v426 = vunpack.c.l.b16 %v60
    %v427 = vunpack.c.h.b16 %v60
    %v428 = vunpack.c.l.b16 %v61
    %v429 = vunpack.c.h.b16 %v61
    %v430 = vunpack.c.l.b16 %v62
    %v431 = vunpack.c.h.b16 %v62
    %v432 = vunpack.c.l.b16 %v63
    %v433 = vunpack.c.h.b16 %v63
    %v434 = vunpack.c.l.b16 %v64
    %v435 = vunpack.c.h.b16 %v64
    %v436 = vunpack.c.l.b16 %v65
    %v437 = vunpack.c.h.b16 %v65
    %v438 = vunpack.c.l.b16 %v66
    %v439 = vunpack.c.h.b16 %v66
    %v440 = vunpack.c.l.b16 %v67
    %v441 = vunpack.c.h.b16 %v67
    %v442 = vunpack.c.l.b16 %v68
    %v443 = vunpack.c.h.b16 %v68
    %v444 = vunpack.c.l.b16 %v69
    %v445 = vunpack.c.h.b16 %v69
    %v446 = vunpack.c.l.b16 %v70
    %v447 = vunpack.c.h.b16 %v70
    %v448 = vunpack.c.l.b16 %v71
    %v449 = vunpack.c.h.b16 %v71
    %v450 = vunpack.c.l.b16 %v72
    %v451 = vunpack.c.h.b16 %v72
    %v452 = vunpack.c.l.b16 %v73
    %v453 = vunpack.c.h.b16 %v73
    %v454 = vunpack.c.l.b16 %v74
    %v455 = vunpack.c.h.b16 %v74
    %v456 = vunpack.c.l.b16 %v75
    %v457 = vunpack.c.h.b16 %v75
    %v458 = vunpack.c.l.b16 %v76
    %v459 = vunpack.c.h.b16 %v76
    %v460 = vunpack.c.l.b16 %v77
    %v461 = vunpack.c.h.b16 %v77
    %v462 = vunpack.c.l.b16 %v78
    %v463 = vunpack.c.h.b16 %v78
    %v464 = vunpack.c.l.b16 %v79
    %v465 = vunpack.c.h.b16 %v79
    %v466 = vunpack.c.l.b16 %v80
    %v467 = vunpack.c.h.b16 %v80
    %v468 = vunpack.c.l.b16 %v81
    %v469 = vunpack.c.h.b16 %v81
    %v470 = vunpack.c.l.b16 %v82
    %v471 = vunpack.c.h.b16 %v82
    %v472 = vunpack.c.l.b16 %v83
    %v473 = vunpack.c.h.b16 %v83
    %v474 = vunpack.c.l.b16 %v84
    %v475 = vunpack.c.h.b16 %v84
    %v476 = vunpack.c.l.b16 %v85
    %v477 = vunpack.c.h.b16 %v85
    %v478 = vunpack.c.l.b16 %v86
    %v479 = vunpack.c.h.b16 %v86
    %v480 = vunpack.c.l.b16 %v87
    %v481 = vunpack.c.h.b16 %v87
    %v482 = vunpack.c.l.b16 %v88
    %v483 = vunpack.c.h.b16 %v88
    %v484 = vunpack.c.l.b16 %v89
    %v485 = vunpack.c.h.b16 %v89
    %v486 = vunpack.c.l.b16 %v90
    %v487 = vunpack.c.h.b16 %v90
    %v488 = vunpack.c.l.b16 %v91
    %v489 = vunpack.c.h.b16 %v91
    %v490 = vunpack.c.l.b16 %v92
    %v491 = vunpack.c.h.b16 %v92
    %v492 = vunpack.c.l.b16 %v93
    %v493 = vunpack.c.h.b16 %v93
    %v494 = vunpack.c.l.b16 %v94
    %v495 = vunpack.c.h.b16 %v94
    %v496 = vunpack.c.l.b16 %v95
    %v497 = vunpack.c.h.b16 %v95
    %v498 = vunpack.c.l.b16 %v96
    %v499 = vunpack.c.h.b16 %v96
    %v500 = vunpack.c.l.b16 %v97
    %v501 = vunpack.c.h.b16 %v97
    %v502 = vunpack.c.l.b16 %v98
    %v503 = vunpack.c.h.b16 %v98
    %v504 = vunpack.c.l.b16 %v99
    %v505 = vunpack.c.h.b16 %v99
    %v506 = vunpack.c.l.b16 %v100
    %v507 = vunpack.c.h.b16 %v100
    %v508 = vunpack.c.l.b16 %v101
    %v509 = vunpack.c.h.b16 %v101
    %v510 = vunpack.c.l.b16 %v102
    %v511 = vunpack.c.h.b16 %v102
    %v512 = vunpack.c.l.b16 %v103
    %v513 = vunpack.c.h.b16 %v103
    %v514 = vunpack.c.l.b16 %v104
    %v515 = vunpack.c.h.b16 %v104
    %v516 = vunpack.c.l.b16 %v105
    %v517 = vunpack.c.h.b16 %v105
    %v518 = vunpack.c.l.b16 %v106
    %v519 = vunpack.c.h.b16 %v106
    %v520 = vunpack.c.l.b16 %v107
    %v521 = vunpack.c.h.b16 %v107
    %v522 = vunpack.c.l.b16 %v108
    %v523 = vunpack.c.h.b16 %v108
    %v524 = vunpack.c.l.b16 %v109
    %v525 = vunpack.c.h.b16 %v109
    %v526 = vunpack.c.l.b16 %v110
    %v527 = vunpack.c.h.b16 %v110
    %v528 = vunpack.c.l.b16 %v111
    %v529 = vunpack.c.h.b16 %v111
    %v530 = vunpack.c.l.b16 %v112
    %v531 = vunpack.c.h.b16 %v112
    %v532 = vpack.c.b16 %v408, %v404
    %v533 = vpack.c.b16 %v409, %v405
    %v534 = vpack.c.b16 %v410, %v406
    %v535 = vpack.c.b16 %v411, %v407
    %v536 = vpack.c.b16 %v416, %v412
    %v537 = vpack.c.b16 %v417, %v413
    %v538 = vpack.c.b16 %v418, %v414
    %v539 = vpack.c.b16 %v419, %v415
    %v540 = vpack.c.b16 %v424, %v420
    %v541 = vpack.c.b16 %v425, %v421
    %v542 = vpack.c.b16 %v426, %v422
    %v543 = vpack.c.b16 %v427, %v423
    %v544 = vpack.c.b16 %v432, %v428
    %v545 = vpack.c.b16 %v433, %v429
    %v546 = vpack.c.b16 %v434, %v430
    %v547 = vpack.c.b16 %v435, %v431
    %v548 = vpack.c.b16 %v440, %v436
    %v549 = vpack.c.b16 %v441, %v437
    %v550 = vpack.c.b16 %v442, %v438
    %v551 = vpack.c.b16 %v443, %v439
    %v552 = vpack.c.b16 %v448, %v444
    %v553 = vpack.c.b16 %v449, %v445
    %v554 = vpack.c.b16 %v450, %v446
    %v555 = vpack.c.b16 %v451, %v447
    %v556 = vpack.c.b16 %v456, %v452
    %v557 = vpack.c.b16 %v457, %v453
    %v558 = vpack.c.b16 %v458, %v454
    %v559 = vpack.c.b16 %v459, %v455
    %v560 = vpack.c.b16 %v464, %v460
    %v561 = vpack.c.b16 %v465, %v461
    %v562 = vpack.c.b16 %v466, %v462
    %v563 = vpack.c.b16 %v467, %v463
    %v564 = vpack.c.b16 %v472, %v468
    %v565 = vpack.c.b16 %v473, %v469
    %v566 = vpack.c.b16 %v474, %v470
    %v567 = vpack.c.b16 %v475, %v471
    %v568 = vpack.c.b16 %v480, %v476
    %v569 = vpack.c.b16 %v481, %v477
    %v570 = vpack.c.b16 %v482, %v478
    %v571 = vpack.c.b16 %v483, %v479
    %v572 = vpack.c.b16 %v488, %v484
    %v573 = vpack.c.b16 %v489, %v485
    %v574 = vpack.c.b16 %v490, %v486
    %v575 = vpack.c.b16 %v491, %v487
    %v576 = vpack.c.b16 %v496, %v492
    %v577 = vpack.c.b16 %v497, %v493
    %v578 = vpack.c.b16 %v498, %v494
    %v579 = vpack.c.b16 %v499, %v495
    %v580 = vpack.c.b16 %v504, %v500
    %v581 = vpack.c.b16 %v505, %v501
    %v582 = vpack.c.b16 %v506, %v502
    %v583 = vpack.c.b16 %v507, %v503
    %v584 = vpack.c.b16 %v512, %v508
    %v585 = vpack.c.b16 %v513, %v509
    %v586 = vpack.c.b16 %v514, %v510
    %v587 = vpack.c.b16 %v515, %v511
    %v588 = vpack.c.b16 %v520, %v516
    %v589 = vpack.c.b16 %v521, %v517
    %v590 = vpack.c.b16 %v522, %v518
    %v591 = vpack.c.b16 %v523, %v519
    %v592 = vpack.c.b16 %v528, %v524
    %v593 = vpack.c.b16 %v529, %v525
    %v594 = vpack.c.b16 %v530, %v526
    %v595 = vpack.c.b16 %v531, %v527
    %660 = vmatprep.subr.bf16.mxu0 0
    %661 = vmatpush1.bf16.msra.mxu0 %v308
    %662 = vmatprep.subr.bf16.mxu0 0
    %663 = vmatpush1.bf16.msra.mxu0 %v309
    %664 = vmatprep.subr.bf16.mxu0 0
    %665 = vmatpush1.bf16.msra.mxu0 %v310
    %666 = vmatprep.subr.bf16.mxu0 0
    %667 = vmatpush1.bf16.msra.mxu0 %v311
    %668 = vmatprep.subr.bf16.mxu0 0
    %669 = vmatpush1.bf16.msra.mxu0 %v312
    %670 = vmatprep.subr.bf16.mxu0 0
    %671 = vmatpush1.bf16.msra.mxu0 %v313
    %672 = vmatprep.subr.bf16.mxu0 0
    %673 = vmatpush1.bf16.msra.mxu0 %v314
    %674 = vmatprep.subr.bf16.mxu0 0
    %675 = vmatpush1.bf16.msra.mxu0 %v315
    %676 = vmatprep.subr.bf16.mxu0 0
    %677 = vmatpush1.bf16.msra.mxu0 %v316
    %678 = vmatprep.subr.bf16.mxu0 0
    %679 = vmatpush1.bf16.msra.mxu0 %v317
    %680 = vmatprep.subr.bf16.mxu0 0
    %681 = vmatpush1.bf16.msra.mxu0 %v318
    %682 = vmatprep.subr.bf16.mxu0 0
    %683 = vmatpush1.bf16.msra.mxu0 %v319
    %684 = vmatprep.subr.bf16.mxu0 0
    %685 = vmatpush1.bf16.msra.mxu0 %v320
    %686 = vmatprep.subr.bf16.mxu0 0
    %687 = vmatpush1.bf16.msra.mxu0 %v321
    %688 = vmatprep.subr.bf16.mxu0 0
    %689 = vmatpush1.bf16.msra.mxu0 %v322
    %690 = vmatprep.subr.bf16.mxu0 0
    %691 = vmatpush1.bf16.msra.mxu0 %v323
    %692 = vmatprep.mubr.bf16.mxu0 %v533
    %693 = vmatmul.mubr.bf16.gmra.mrb[0].mxu0 %v532
    %v694 = vpop.f32.mrb[0].mxu0
    %v695 = vadd.f32 0.0, %v694
    %v696 = vpop.f32.mrb[0].mxu0
    %v697 = vpop.f32.mrb[0].mxu0
    %v698 = vadd.f32 0.0, %v697
    %v699 = vpop.f32.mrb[0].mxu0
    %700 = vmatprep.mubr.bf16.mxu0 %v537
    %701 = vmatmul.mubr.bf16.gmra.mrb[0].mxu0 %v536
    %v702 = vpop.f32.mrb[0].mxu0
    %v703 = vadd.f32 0.0, %v702
    %v704 = vpop.f32.mrb[0].mxu0
    %v705 = vpop.f32.mrb[0].mxu0
    %v706 = vadd.f32 0.0, %v705
    %v707 = vpop.f32.mrb[0].mxu0
    %708 = vmatprep.mubr.bf16.mxu0 %v541
    %709 = vmatmul.mubr.bf16.gmra.mrb[0].mxu0 %v540
    %v710 = vpop.f32.mrb[0].mxu0
    %v711 = vadd.f32 0.0, %v710
    %v712 = vpop.f32.mrb[0].mxu0
    %v713 = vpop.f32.mrb[0].mxu0
    %v714 = vadd.f32 0.0, %v713
    %v715 = vpop.f32.mrb[0].mxu0
    %716 = vmatprep.mubr.bf16.mxu0 %v545
    %717 = vmatmul.mubr.bf16.gmra.mrb[0].mxu0 %v544
    %v718 = vpop.f32.mrb[0].mxu0
    %v719 = vadd.f32 0.0, %v718
    %v720 = vpop.f32.mrb[0].mxu0
    %v721 = vpop.f32.mrb[0].mxu0
    %v722 = vadd.f32 0.0, %v721
    %v723 = vpop.f32.mrb[0].mxu0
    %724 = vmatprep.mubr.bf16.mxu0 %v549
    %725 = vmatmul.mubr.bf16.gmra.mrb[0].mxu0 %v548
    %v726 = vpop.f32.mrb[0].mxu0
    %v727 = vadd.f32 0.0, %v726
    %v728 = vpop.f32.mrb[0].mxu0
    %v729 = vpop.f32.mrb[0].mxu0
    %v730 = vadd.f32 0.0, %v729
    %v731 = vpop.f32.mrb[0].mxu0
    %732 = vmatprep.mubr.bf16.mxu0 %v553
    %733 = vmatmul.mubr.bf16.gmra.mrb[0].mxu0 %v552
    %v734 = vpop.f32.mrb[0].mxu0
    %v735 = vadd.f32 0.0, %v734
    %v736 = vpop.f32.mrb[0].mxu0
    %v737 = vpop.f32.mrb[0].mxu0
    %v738 = vadd.f32 0.0, %v737
    %v739 = vpop.f32.mrb[0].mxu0
    %740 = vmatprep.mubr.bf16.mxu0 %v557
    %741 = vmatmul.mubr.bf16.gmra.mrb[0].mxu0 %v556
    %v742 = vpop.f32.mrb[0].mxu0
    %v743 = vadd.f32 0.0, %v742
    %v744 = vpop.f32.mrb[0].mxu0
    %v745 = vpop.f32.mrb[0].mxu0
    %v746 = vadd.f32 0.0, %v745
    %v747 = vpop.f32.mrb[0].mxu0
    %748 = vmatprep.mubr.bf16.mxu0 %v561
    %749 = vmatmul.mubr.bf16.gmra.mrb[0].mxu0 %v560
    %v750 = vpop.f32.mrb[0].mxu0
    %v751 = vadd.f32 0.0, %v750
    %v752 = vpop.f32.mrb[0].mxu0
    %v753 = vpop.f32.mrb[0].mxu0
    %v754 = vadd.f32 0.0, %v753
    %v755 = vpop.f32.mrb[0].mxu0
    %756 = vmatprep.mubr.bf16.mxu0 %v565
    %757 = vmatmul.mubr.bf16.gmra.mrb[0].mxu0 %v564
    %v758 = vpop.f32.mrb[0].mxu0
    %v759 = vadd.f32 0.0, %v758
    %v760 = vpop.f32.mrb[0].mxu0
    %v761 = vpop.f32.mrb[0].mxu0
    %v762 = vadd.f32 0.0, %v761
    %v763 = vpop.f32.mrb[0].mxu0
    %764 = vmatprep.mubr.bf16.mxu0 %v569
    %765 = vmatmul.mubr.bf16.gmra.mrb[0].mxu0 %v568
    %v766 = vpop.f32.mrb[0].mxu0
    %v767 = vadd.f32 0.0, %v766
    %v768 = vpop.f32.mrb[0].mxu0
    %v769 = vpop.f32.mrb[0].mxu0
    %v770 = vadd.f32 0.0, %v769
    %v771 = vpop.f32.mrb[0].mxu0
    %772 = vmatprep.mubr.bf16.mxu0 %v573
    %773 = vmatmul.mubr.bf16.gmra.mrb[0].mxu0 %v572
    %v774 = vpop.f32.mrb[0].mxu0
    %v775 = vadd.f32 0.0, %v774
    %v776 = vpop.f32.mrb[0].mxu0
    %v777 = vpop.f32.mrb[0].mxu0
    %v778 = vadd.f32 0.0, %v777
    %v779 = vpop.f32.mrb[0].mxu0
    %780 = vmatprep.mubr.bf16.mxu0 %v577
    %781 = vmatmul.mubr.bf16.gmra.mrb[0].mxu0 %v576
    %v782 = vpop.f32.mrb[0].mxu0
    %v783 = vadd.f32 0.0, %v782
    %v784 = vpop.f32.mrb[0].mxu0
    %v785 = vpop.f32.mrb[0].mxu0
    %v786 = vadd.f32 0.0, %v785
    %v787 = vpop.f32.mrb[0].mxu0
    %788 = vmatprep.mubr.bf16.mxu0 %v581
    %789 = vmatmul.mubr.bf16.gmra.mrb[0].mxu0 %v580
    %v790 = vpop.f32.mrb[0].mxu0
    %v791 = vadd.f32 0.0, %v790
    %v792 = vpop.f32.mrb[0].mxu0
    %v793 = vpop.f32.mrb[0].mxu0
    %v794 = vadd.f32 0.0, %v793
    %v795 = vpop.f32.mrb[0].mxu0
    %796 = vmatprep.mubr.bf16.mxu0 %v585
    %797 = vmatmul.mubr.bf16.gmra.mrb[0].mxu0 %v584
    %v798 = vpop.f32.mrb[0].mxu0
    %v799 = vadd.f32 0.0, %v798
    %v800 = vpop.f32.mrb[0].mxu0
    %v801 = vpop.f32.mrb[0].mxu0
    %v802 = vadd.f32 0.0, %v801
    %v803 = vpop.f32.mrb[0].mxu0
    %804 = vmatprep.mubr.bf16.mxu0 %v589
    %805 = vmatmul.mubr.bf16.gmra.mrb[0].mxu0 %v588
    %v806 = vpop.f32.mrb[0].mxu0
    %v807 = vadd.f32 0.0, %v806
    %v808 = vpop.f32.mrb[0].mxu0
    %v809 = vpop.f32.mrb[0].mxu0
    %v810 = vadd.f32 0.0, %v809
    %v811 = vpop.f32.mrb[0].mxu0
    %812 = vmatprep.mubr.bf16.mxu0 %v593
    %813 = vmatmul.mubr.bf16.gmra.mrb[0].mxu0 %v592
    %v814 = vpop.f32.mrb[0].mxu0
    %v815 = vadd.f32 0.0, %v814
    %v816 = vpop.f32.mrb[0].mxu0
    %v817 = vpop.f32.mrb[0].mxu0
    %v818 = vadd.f32 0.0, %v817
    %v819 = vpop.f32.mrb[0].mxu0
    %820 = vdwg.mxu0
    %821 = vmatprep.subr.bf16.mxu0 0
    %822 = vmatpush1.bf16.msra.mxu0 %v324
    %823 = vmatprep.subr.bf16.mxu0 0
    %824 = vmatpush1.bf16.msra.mxu0 %v325
    %825 = vmatprep.subr.bf16.mxu0 0
    %826 = vmatpush1.bf16.msra.mxu0 %v326
    %827 = vmatprep.subr.bf16.mxu0 0
    %828 = vmatpush1.bf16.msra.mxu0 %v327
    %829 = vmatprep.subr.bf16.mxu0 0
    %830 = vmatpush1.bf16.msra.mxu0 %v328
    %831 = vmatprep.subr.bf16.mxu0 0
    %832 = vmatpush1.bf16.msra.mxu0 %v329
    %833 = vmatprep.subr.bf16.mxu0 0
    %834 = vmatpush1.bf16.msra.mxu0 %v330
    %835 = vmatprep.subr.bf16.mxu0 0
    %836 = vmatpush1.bf16.msra.mxu0 %v331
    %837 = vmatprep.subr.bf16.mxu0 0
    %838 = vmatpush1.bf16.msra.mxu0 %v332
    %839 = vmatprep.subr.bf16.mxu0 0
    %840 = vmatpush1.bf16.msra.mxu0 %v333
    %841 = vmatprep.subr.bf16.mxu0 0
    %842 = vmatpush1.bf16.msra.mxu0 %v334
    %843 = vmatprep.subr.bf16.mxu0 0
    %844 = vmatpush1.bf16.msra.mxu0 %v335
    %845 = vmatprep.subr.bf16.mxu0 0
    %846 = vmatpush1.bf16.msra.mxu0 %v336
    %847 = vmatprep.subr.bf16.mxu0 0
    %848 = vmatpush1.bf16.msra.mxu0 %v337
    %849 = vmatprep.subr.bf16.mxu0 0
    %850 = vmatpush1.bf16.msra.mxu0 %v338
    %851 = vmatprep.subr.bf16.mxu0 0
    %852 = vmatpush1.bf16.msra.mxu0 %v339
    %853 = vmatprep.mubr.bf16.mxu0 %v535
    %854 = vmatmul.mubr.bf16.gmra.mrb[0].mxu0 %v534
    %v855 = vpop.f32.mrb[0].mxu0
    %v856 = vadd.f32 %v695, %v855
    %v857 = vpop.f32.mrb[0].mxu0
    %v858 = vpop.f32.mrb[0].mxu0
    %v859 = vadd.f32 %v698, %v858
    %v860 = vpop.f32.mrb[0].mxu0
    %861 = vmatprep.mubr.bf16.mxu0 %v539
    %862 = vmatmul.mubr.bf16.gmra.mrb[0].mxu0 %v538
    %v863 = vpop.f32.mrb[0].mxu0
    %v864 = vadd.f32 %v703, %v863
    %v865 = vpop.f32.mrb[0].mxu0
    %v866 = vpop.f32.mrb[0].mxu0
    %v867 = vadd.f32 %v706, %v866
    %v868 = vpop.f32.mrb[0].mxu0
    %869 = vmatprep.mubr.bf16.mxu0 %v543
    %870 = vmatmul.mubr.bf16.gmra.mrb[0].mxu0 %v542
    %v871 = vpop.f32.mrb[0].mxu0
    %v872 = vadd.f32 %v711, %v871
    %v873 = vpop.f32.mrb[0].mxu0
    %v874 = vpop.f32.mrb[0].mxu0
    %v875 = vadd.f32 %v714, %v874
    %v876 = vpop.f32.mrb[0].mxu0
    %877 = vmatprep.mubr.bf16.mxu0 %v547
    %878 = vmatmul.mubr.bf16.gmra.mrb[0].mxu0 %v546
    %v879 = vpop.f32.mrb[0].mxu0
    %v880 = vadd.f32 %v719, %v879
    %v881 = vpop.f32.mrb[0].mxu0
    %v882 = vpop.f32.mrb[0].mxu0
    %v883 = vadd.f32 %v722, %v882
    %v884 = vpop.f32.mrb[0].mxu0
    %885 = vmatprep.mubr.bf16.mxu0 %v551
    %886 = vmatmul.mubr.bf16.gmra.mrb[0].mxu0 %v550
    %v887 = vpop.f32.mrb[0].mxu0
    %v888 = vadd.f32 %v727, %v887
    %v889 = vpop.f32.mrb[0].mxu0
    %v890 = vpop.f32.mrb[0].mxu0
    %v891 = vadd.f32 %v730, %v890
    %v892 = vpop.f32.mrb[0].mxu0
    %893 = vmatprep.mubr.bf16.mxu0 %v555
    %894 = vmatmul.mubr.bf16.gmra.mrb[0].mxu0 %v554
    %v895 = vpop.f32.mrb[0].mxu0
    %v896 = vadd.f32 %v735, %v895
    %v897 = vpop.f32.mrb[0].mxu0
    %v898 = vpop.f32.mrb[0].mxu0
    %v899 = vadd.f32 %v738, %v898
    %v900 = vpop.f32.mrb[0].mxu0
    %901 = vmatprep.mubr.bf16.mxu0 %v559
    %902 = vmatmul.mubr.bf16.gmra.mrb[0].mxu0 %v558
    %v903 = vpop.f32.mrb[0].mxu0
    %v904 = vadd.f32 %v743, %v903
    %v905 = vpop.f32.mrb[0].mxu0
    %v906 = vpop.f32.mrb[0].mxu0
    %v907 = vadd.f32 %v746, %v906
    %v908 = vpop.f32.mrb[0].mxu0
    %909 = vmatprep.mubr.bf16.mxu0 %v563
    %910 = vmatmul.mubr.bf16.gmra.mrb[0].mxu0 %v562
    %v911 = vpop.f32.mrb[0].mxu0
    %v912 = vadd.f32 %v751, %v911
    %v913 = vpop.f32.mrb[0].mxu0
    %v914 = vpop.f32.mrb[0].mxu0
    %v915 = vadd.f32 %v754, %v914
    %v916 = vpop.f32.mrb[0].mxu0
    %917 = vmatprep.mubr.bf16.mxu0 %v567
    %918 = vmatmul.mubr.bf16.gmra.mrb[0].mxu0 %v566
    %v919 = vpop.f32.mrb[0].mxu0
    %v920 = vadd.f32 %v759, %v919
    %v921 = vpop.f32.mrb[0].mxu0
    %v922 = vpop.f32.mrb[0].mxu0
    %v923 = vadd.f32 %v762, %v922
    %v924 = vpop.f32.mrb[0].mxu0
    %925 = vmatprep.mubr.bf16.mxu0 %v571
    %926 = vmatmul.mubr.bf16.gmra.mrb[0].mxu0 %v570
    %v927 = vpop.f32.mrb[0].mxu0
    %v928 = vadd.f32 %v767, %v927
    %v929 = vpop.f32.mrb[0].mxu0
    %v930 = vpop.f32.mrb[0].mxu0
    %v931 = vadd.f32 %v770, %v930
    %v932 = vpop.f32.mrb[0].mxu0
    %933 = vmatprep.mubr.bf16.mxu0 %v575
    %934 = vmatmul.mubr.bf16.gmra.mrb[0].mxu0 %v574
    %v935 = vpop.f32.mrb[0].mxu0
    %v936 = vadd.f32 %v775, %v935
    %v937 = vpop.f32.mrb[0].mxu0
    %v938 = vpop.f32.mrb[0].mxu0
    %v939 = vadd.f32 %v778, %v938
    %v940 = vpop.f32.mrb[0].mxu0
    %941 = vmatprep.mubr.bf16.mxu0 %v579
    %942 = vmatmul.mubr.bf16.gmra.mrb[0].mxu0 %v578
    %v943 = vpop.f32.mrb[0].mxu0
    %v944 = vadd.f32 %v783, %v943
    %v945 = vpop.f32.mrb[0].mxu0
    %v946 = vpop.f32.mrb[0].mxu0
    %v947 = vadd.f32 %v786, %v946
    %v948 = vpop.f32.mrb[0].mxu0
    %949 = vmatprep.mubr.bf16.mxu0 %v583
    %950 = vmatmul.mubr.bf16.gmra.mrb[0].mxu0 %v582
    %v951 = vpop.f32.mrb[0].mxu0
    %v952 = vadd.f32 %v791, %v951
    %v953 = vpop.f32.mrb[0].mxu0
    %v954 = vpop.f32.mrb[0].mxu0
    %v955 = vadd.f32 %v794, %v954
    %v956 = vpop.f32.mrb[0].mxu0
    %957 = vmatprep.mubr.bf16.mxu0 %v587
    %958 = vmatmul.mubr.bf16.gmra.mrb[0].mxu0 %v586
    %v959 = vpop.f32.mrb[0].mxu0
    %v960 = vadd.f32 %v799, %v959
    %v961 = vpop.f32.mrb[0].mxu0
    %v962 = vpop.f32.mrb[0].mxu0
    %v963 = vadd.f32 %v802, %v962
    %v964 = vpop.f32.mrb[0].mxu0
    %965 = vmatprep.mubr.bf16.mxu0 %v591
    %966 = vmatmul.mubr.bf16.gmra.mrb[0].mxu0 %v590
    %v967 = vpop.f32.mrb[0].mxu0
    %v968 = vadd.f32 %v807, %v967
    %v969 = vpop.f32.mrb[0].mxu0
    %v970 = vpop.f32.mrb[0].mxu0
    %v971 = vadd.f32 %v810, %v970
    %v972 = vpop.f32.mrb[0].mxu0
    %973 = vmatprep.mubr.bf16.mxu0 %v595
    %974 = vmatmul.mubr.bf16.gmra.mrb[0].mxu0 %v594
    %v975 = vpop.f32.mrb[0].mxu0
    %v976 = vadd.f32 %v815, %v975
    %v977 = vpop.f32.mrb[0].mxu0
    %v978 = vpop.f32.mrb[0].mxu0
    %v979 = vadd.f32 %v818, %v978
    %v980 = vpop.f32.mrb[0].mxu0
    %981 = vdwg.mxu0
    %983 = vset.pattern.permute.xlu0 0
    %984 = vperm.xlu0 %983, %v129
    %v985 = vpop.permute.xlu0 %984
    %988 = vset.pattern.permute.xlu0 0
    %989 = vperm.xlu0 %988, %v130
    %v990 = vpop.permute.xlu0 %989
    %993 = vset.pattern.permute.xlu0 0
    %994 = vperm.xlu0 %993, %v131
    %v995 = vpop.permute.xlu0 %994
    %998 = vset.pattern.permute.xlu0 0
    %999 = vperm.xlu0 %998, %v132
    %v1000 = vpop.permute.xlu0 %999
    %1003 = vset.pattern.permute.xlu0 0
    %1004 = vperm.xlu0 %1003, %v133
    %v1005 = vpop.permute.xlu0 %1004
    %1008 = vset.pattern.permute.xlu0 0
    %1009 = vperm.xlu0 %1008, %v134
    %v1010 = vpop.permute.xlu0 %1009
    %1013 = vset.pattern.permute.xlu0 0
    %1014 = vperm.xlu0 %1013, %v135
    %v1015 = vpop.permute.xlu0 %1014
    %1018 = vset.pattern.permute.xlu0 0
    %1019 = vperm.xlu0 %1018, %v136
    %v1020 = vpop.permute.xlu0 %1019
    %1023 = vset.pattern.permute.xlu0 0
    %1024 = vperm.xlu0 %1023, %v137
    %v1025 = vpop.permute.xlu0 %1024
    %1028 = vset.pattern.permute.xlu0 0
    %1029 = vperm.xlu0 %1028, %v138
    %v1030 = vpop.permute.xlu0 %1029
    %1033 = vset.pattern.permute.xlu0 0
    %1034 = vperm.xlu0 %1033, %v139
    %v1035 = vpop.permute.xlu0 %1034
    %1038 = vset.pattern.permute.xlu0 0
    %1039 = vperm.xlu0 %1038, %v140
    %v1040 = vpop.permute.xlu0 %1039
    %1043 = vset.pattern.permute.xlu0 0
    %1044 = vperm.xlu0 %1043, %v141
    %v1045 = vpop.permute.xlu0 %1044
    %1048 = vset.pattern.permute.xlu0 0
    %1049 = vperm.xlu0 %1048, %v142
    %v1050 = vpop.permute.xlu0 %1049
    %1053 = vset.pattern.permute.xlu0 0
    %1054 = vperm.xlu0 %1053, %v143
    %v1055 = vpop.permute.xlu0 %1054
    %1058 = vset.pattern.permute.xlu0 0
    %1059 = vperm.xlu0 %1058, %v144
    %v1060 = vpop.permute.xlu0 %1059
    %1063 = vset.pattern.permute.xlu0 0
    %1064 = vperm.xlu0 %1063, %v145
    %v1065 = vpop.permute.xlu0 %1064
    %1068 = vset.pattern.permute.xlu0 0
    %1069 = vperm.xlu0 %1068, %v146
    %v1070 = vpop.permute.xlu0 %1069
    %1073 = vset.pattern.permute.xlu0 0
    %1074 = vperm.xlu0 %1073, %v147
    %v1075 = vpop.permute.xlu0 %1074
    %1078 = vset.pattern.permute.xlu0 0
    %1079 = vperm.xlu0 %1078, %v148
    %v1080 = vpop.permute.xlu0 %1079
    %1083 = vset.pattern.permute.xlu0 0
    %1084 = vperm.xlu0 %1083, %v149
    %v1085 = vpop.permute.xlu0 %1084
    %1088 = vset.pattern.permute.xlu0 0
    %1089 = vperm.xlu0 %1088, %v150
    %v1090 = vpop.permute.xlu0 %1089
    %1093 = vset.pattern.permute.xlu0 0
    %1094 = vperm.xlu0 %1093, %v151
    %v1095 = vpop.permute.xlu0 %1094
    %1098 = vset.pattern.permute.xlu0 0
    %1099 = vperm.xlu0 %1098, %v152
    %v1100 = vpop.permute.xlu0 %1099
    %1103 = vset.pattern.permute.xlu0 0
    %1104 = vperm.xlu0 %1103, %v153
    %v1105 = vpop.permute.xlu0 %1104
    %1108 = vset.pattern.permute.xlu0 0
    %1109 = vperm.xlu0 %1108, %v154
    %v1110 = vpop.permute.xlu0 %1109
    %1113 = vset.pattern.permute.xlu0 0
    %1114 = vperm.xlu0 %1113, %v155
    %v1115 = vpop.permute.xlu0 %1114
    %1118 = vset.pattern.permute.xlu0 0
    %1119 = vperm.xlu0 %1118, %v156
    %v1120 = vpop.permute.xlu0 %1119
    %1123 = vset.pattern.permute.xlu0 0
    %1124 = vperm.xlu0 %1123, %v157
    %v1125 = vpop.permute.xlu0 %1124
    %1128 = vset.pattern.permute.xlu0 0
    %1129 = vperm.xlu0 %1128, %v158
    %v1130 = vpop.permute.xlu0 %1129
    %1133 = vset.pattern.permute.xlu0 0
    %1134 = vperm.xlu0 %1133, %v159
    %v1135 = vpop.permute.xlu0 %1134
    %1138 = vset.pattern.permute.xlu0 0
    %1139 = vperm.xlu0 %1138, %v160
    %v1140 = vpop.permute.xlu0 %1139
    %v1142 = vmul.f32 %v856, %v985
    %v1143 = vmul.f32 %v859, %v990
    %v1144 = vmul.f32 %v864, %v995
    %v1145 = vmul.f32 %v867, %v1000
    %v1146 = vmul.f32 %v872, %v1005
    %v1147 = vmul.f32 %v875, %v1010
    %v1148 = vmul.f32 %v880, %v1015
    %v1149 = vmul.f32 %v883, %v1020
    %v1150 = vmul.f32 %v888, %v1025
    %v1151 = vmul.f32 %v891, %v1030
    %v1152 = vmul.f32 %v896, %v1035
    %v1153 = vmul.f32 %v899, %v1040
    %v1154 = vmul.f32 %v904, %v1045
    %v1155 = vmul.f32 %v907, %v1050
    %v1156 = vmul.f32 %v912, %v1055
    %v1157 = vmul.f32 %v915, %v1060
    %v1158 = vmul.f32 %v920, %v1065
    %v1159 = vmul.f32 %v923, %v1070
    %v1160 = vmul.f32 %v928, %v1075
    %v1161 = vmul.f32 %v931, %v1080
    %v1162 = vmul.f32 %v936, %v1085
    %v1163 = vmul.f32 %v939, %v1090
    %v1164 = vmul.f32 %v944, %v1095
    %v1165 = vmul.f32 %v947, %v1100
    %v1166 = vmul.f32 %v952, %v1105
    %v1167 = vmul.f32 %v955, %v1110
    %v1168 = vmul.f32 %v960, %v1115
    %v1169 = vmul.f32 %v963, %v1120
    %v1170 = vmul.f32 %v968, %v1125
    %v1171 = vmul.f32 %v971, %v1130
    %v1172 = vmul.f32 %v976, %v1135
    %v1173 = vmul.f32 %v979, %v1140
    %1175 = vset.pattern.permute.xlu0 0
    %1176 = vperm.xlu0 %1175, %v161
    %v1177 = vpop.permute.xlu0 %1176
    %1180 = vset.pattern.permute.xlu0 0
    %1181 = vperm.xlu0 %1180, %v162
    %v1182 = vpop.permute.xlu0 %1181
    %1185 = vset.pattern.permute.xlu0 0
    %1186 = vperm.xlu0 %1185, %v163
    %v1187 = vpop.permute.xlu0 %1186
    %1190 = vset.pattern.permute.xlu0 0
    %1191 = vperm.xlu0 %1190, %v164
    %v1192 = vpop.permute.xlu0 %1191
    %1195 = vset.pattern.permute.xlu0 0
    %1196 = vperm.xlu0 %1195, %v165
    %v1197 = vpop.permute.xlu0 %1196
    %1200 = vset.pattern.permute.xlu0 0
    %1201 = vperm.xlu0 %1200, %v166
    %v1202 = vpop.permute.xlu0 %1201
    %1205 = vset.pattern.permute.xlu0 0
    %1206 = vperm.xlu0 %1205, %v167
    %v1207 = vpop.permute.xlu0 %1206
    %1210 = vset.pattern.permute.xlu0 0
    %1211 = vperm.xlu0 %1210, %v168
    %v1212 = vpop.permute.xlu0 %1211
    %1215 = vset.pattern.permute.xlu0 0
    %1216 = vperm.xlu0 %1215, %v169
    %v1217 = vpop.permute.xlu0 %1216
    %1220 = vset.pattern.permute.xlu0 0
    %1221 = vperm.xlu0 %1220, %v170
    %v1222 = vpop.permute.xlu0 %1221
    %1225 = vset.pattern.permute.xlu0 0
    %1226 = vperm.xlu0 %1225, %v171
    %v1227 = vpop.permute.xlu0 %1226
    %1230 = vset.pattern.permute.xlu0 0
    %1231 = vperm.xlu0 %1230, %v172
    %v1232 = vpop.permute.xlu0 %1231
    %1235 = vset.pattern.permute.xlu0 0
    %1236 = vperm.xlu0 %1235, %v173
    %v1237 = vpop.permute.xlu0 %1236
    %1240 = vset.pattern.permute.xlu0 0
    %1241 = vperm.xlu0 %1240, %v174
    %v1242 = vpop.permute.xlu0 %1241
    %1245 = vset.pattern.permute.xlu0 0
    %1246 = vperm.xlu0 %1245, %v175
    %v1247 = vpop.permute.xlu0 %1246
    %1250 = vset.pattern.permute.xlu0 0
    %1251 = vperm.xlu0 %1250, %v176
    %v1252 = vpop.permute.xlu0 %1251
    %1255 = vset.pattern.permute.xlu0 0
    %1256 = vperm.xlu0 %1255, %v177
    %v1257 = vpop.permute.xlu0 %1256
    %1260 = vset.pattern.permute.xlu0 0
    %1261 = vperm.xlu0 %1260, %v178
    %v1262 = vpop.permute.xlu0 %1261
    %1265 = vset.pattern.permute.xlu0 0
    %1266 = vperm.xlu0 %1265, %v179
    %v1267 = vpop.permute.xlu0 %1266
    %1270 = vset.pattern.permute.xlu0 0
    %1271 = vperm.xlu0 %1270, %v180
    %v1272 = vpop.permute.xlu0 %1271
    %1275 = vset.pattern.permute.xlu0 0
    %1276 = vperm.xlu0 %1275, %v181
    %v1277 = vpop.permute.xlu0 %1276
    %1280 = vset.pattern.permute.xlu0 0
    %1281 = vperm.xlu0 %1280, %v182
    %v1282 = vpop.permute.xlu0 %1281
    %1285 = vset.pattern.permute.xlu0 0
    %1286 = vperm.xlu0 %1285, %v183
    %v1287 = vpop.permute.xlu0 %1286
    %1290 = vset.pattern.permute.xlu0 0
    %1291 = vperm.xlu0 %1290, %v184
    %v1292 = vpop.permute.xlu0 %1291
    %1295 = vset.pattern.permute.xlu0 0
    %1296 = vperm.xlu0 %1295, %v185
    %v1297 = vpop.permute.xlu0 %1296
    %1300 = vset.pattern.permute.xlu0 0
    %1301 = vperm.xlu0 %1300, %v186
    %v1302 = vpop.permute.xlu0 %1301
    %1305 = vset.pattern.permute.xlu0 0
    %1306 = vperm.xlu0 %1305, %v187
    %v1307 = vpop.permute.xlu0 %1306
    %1310 = vset.pattern.permute.xlu0 0
    %1311 = vperm.xlu0 %1310, %v188
    %v1312 = vpop.permute.xlu0 %1311
    %1315 = vset.pattern.permute.xlu0 0
    %1316 = vperm.xlu0 %1315, %v189
    %v1317 = vpop.permute.xlu0 %1316
    %1320 = vset.pattern.permute.xlu0 0
    %1321 = vperm.xlu0 %1320, %v190
    %v1322 = vpop.permute.xlu0 %1321
    %1325 = vset.pattern.permute.xlu0 0
    %1326 = vperm.xlu0 %1325, %v191
    %v1327 = vpop.permute.xlu0 %1326
    %1330 = vset.pattern.permute.xlu0 0
    %1331 = vperm.xlu0 %1330, %v192
    %v1332 = vpop.permute.xlu0 %1331
    %v1334 = vadd.f32 %v1142, %v1177
    %v1335 = vadd.f32 %v1143, %v1182
    %v1336 = vadd.f32 %v1144, %v1187
    %v1337 = vadd.f32 %v1145, %v1192
    %v1338 = vadd.f32 %v1146, %v1197
    %v1339 = vadd.f32 %v1147, %v1202
    %v1340 = vadd.f32 %v1148, %v1207
    %v1341 = vadd.f32 %v1149, %v1212
    %v1342 = vadd.f32 %v1150, %v1217
    %v1343 = vadd.f32 %v1151, %v1222
    %v1344 = vadd.f32 %v1152, %v1227
    %v1345 = vadd.f32 %v1153, %v1232
    %v1346 = vadd.f32 %v1154, %v1237
    %v1347 = vadd.f32 %v1155, %v1242
    %v1348 = vadd.f32 %v1156, %v1247
    %v1349 = vadd.f32 %v1157, %v1252
    %v1350 = vadd.f32 %v1158, %v1257
    %v1351 = vadd.f32 %v1159, %v1262
    %v1352 = vadd.f32 %v1160, %v1267
    %v1353 = vadd.f32 %v1161, %v1272
    %v1354 = vadd.f32 %v1162, %v1277
    %v1355 = vadd.f32 %v1163, %v1282
    %v1356 = vadd.f32 %v1164, %v1287
    %v1357 = vadd.f32 %v1165, %v1292
    %v1358 = vadd.f32 %v1166, %v1297
    %v1359 = vadd.f32 %v1167, %v1302
    %v1360 = vadd.f32 %v1168, %v1307
    %v1361 = vadd.f32 %v1169, %v1312
    %v1362 = vadd.f32 %v1170, %v1317
    %v1363 = vadd.f32 %v1171, %v1322
    %v1364 = vadd.f32 %v1172, %v1327
    %v1365 = vadd.f32 %v1173, %v1332
    %v1366 = vmax.f32 %v1334, 0.0
    %v1367 = vmax.f32 %v1335, 0.0
    %v1368 = vmax.f32 %v1336, 0.0
    %v1369 = vmax.f32 %v1337, 0.0
    %v1370 = vmax.f32 %v1338, 0.0
    %v1371 = vmax.f32 %v1339, 0.0
    %v1372 = vmax.f32 %v1340, 0.0
    %v1373 = vmax.f32 %v1341, 0.0
    %v1374 = vmax.f32 %v1342, 0.0
    %v1375 = vmax.f32 %v1343, 0.0
    %v1376 = vmax.f32 %v1344, 0.0
    %v1377 = vmax.f32 %v1345, 0.0
    %v1378 = vmax.f32 %v1346, 0.0
    %v1379 = vmax.f32 %v1347, 0.0
    %v1380 = vmax.f32 %v1348, 0.0
    %v1381 = vmax.f32 %v1349, 0.0
    %v1382 = vmax.f32 %v1350, 0.0
    %v1383 = vmax.f32 %v1351, 0.0
    %v1384 = vmax.f32 %v1352, 0.0
    %v1385 = vmax.f32 %v1353, 0.0
    %v1386 = vmax.f32 %v1354, 0.0
    %v1387 = vmax.f32 %v1355, 0.0
    %v1388 = vmax.f32 %v1356, 0.0
    %v1389 = vmax.f32 %v1357, 0.0
    %v1390 = vmax.f32 %v1358, 0.0
    %v1391 = vmax.f32 %v1359, 0.0
    %v1392 = vmax.f32 %v1360, 0.0
    %v1393 = vmax.f32 %v1361, 0.0
    %v1394 = vmax.f32 %v1362, 0.0
    %v1395 = vmax.f32 %v1363, 0.0
    %v1396 = vmax.f32 %v1364, 0.0
    %v1397 = vmax.f32 %v1365, 0.0
    %v1398 = vpack.c.bf16 %v1367, %v1366
    %v1399 = vpack.c.bf16 %v1369, %v1368
    %v1400 = vpack.c.bf16 %v1371, %v1370
    %v1401 = vpack.c.bf16 %v1373, %v1372
    %v1402 = vpack.c.bf16 %v1375, %v1374
    %v1403 = vpack.c.bf16 %v1377, %v1376
    %v1404 = vpack.c.bf16 %v1379, %v1378
    %v1405 = vpack.c.bf16 %v1381, %v1380
    %v1406 = vpack.c.bf16 %v1383, %v1382
    %v1407 = vpack.c.bf16 %v1385, %v1384
    %v1408 = vpack.c.bf16 %v1387, %v1386
    %v1409 = vpack.c.bf16 %v1389, %v1388
    %v1410 = vpack.c.bf16 %v1391, %v1390
    %v1411 = vpack.c.bf16 %v1393, %v1392
    %v1412 = vpack.c.bf16 %v1395, %v1394
    %v1413 = vpack.c.bf16 %v1397, %v1396
    %v1430 = vunpack.c.l.b16 %v113
    %v1431 = vunpack.c.h.b16 %v113
    %v1432 = vunpack.c.l.b16 %v114
    %v1433 = vunpack.c.h.b16 %v114
    %v1434 = vunpack.c.l.b16 %v115
    %v1435 = vunpack.c.h.b16 %v115
    %v1436 = vunpack.c.l.b16 %v116
    %v1437 = vunpack.c.h.b16 %v116
    %v1438 = vunpack.c.l.b16 %v117
    %v1439 = vunpack.c.h.b16 %v117
    %v1440 = vunpack.c.l.b16 %v118
    %v1441 = vunpack.c.h.b16 %v118
    %v1442 = vunpack.c.l.b16 %v119
    %v1443 = vunpack.c.h.b16 %v119
    %v1444 = vunpack.c.l.b16 %v120
    %v1445 = vunpack.c.h.b16 %v120
    %v1446 = vunpack.c.l.b16 %v121
    %v1447 = vunpack.c.h.b16 %v121
    %v1448 = vunpack.c.l.b16 %v122
    %v1449 = vunpack.c.h.b16 %v122
    %v1450 = vunpack.c.l.b16 %v123
    %v1451 = vunpack.c.h.b16 %v123
    %v1452 = vunpack.c.l.b16 %v124
    %v1453 = vunpack.c.h.b16 %v124
    %v1454 = vunpack.c.l.b16 %v125
    %v1455 = vunpack.c.h.b16 %v125
    %v1456 = vunpack.c.l.b16 %v126
    %v1457 = vunpack.c.h.b16 %v126
    %v1458 = vunpack.c.l.b16 %v127
    %v1459 = vunpack.c.h.b16 %v127
    %v1460 = vunpack.c.l.b16 %v128
    %v1461 = vunpack.c.h.b16 %v128
    %v1462 = vpack.c.b16 %v1432, %v1430
    %v1463 = vpack.c.b16 %v1433, %v1431
    %v1464 = vpack.c.b16 %v1436, %v1434
    %v1465 = vpack.c.b16 %v1437, %v1435
    %v1466 = vpack.c.b16 %v1440, %v1438
    %v1467 = vpack.c.b16 %v1441, %v1439
    %v1468 = vpack.c.b16 %v1444, %v1442
    %v1469 = vpack.c.b16 %v1445, %v1443
    %v1470 = vpack.c.b16 %v1448, %v1446
    %v1471 = vpack.c.b16 %v1449, %v1447
    %v1472 = vpack.c.b16 %v1452, %v1450
    %v1473 = vpack.c.b16 %v1453, %v1451
    %v1474 = vpack.c.b16 %v1456, %v1454
    %v1475 = vpack.c.b16 %v1457, %v1455
    %v1476 = vpack.c.b16 %v1460, %v1458
    %v1477 = vpack.c.b16 %v1461, %v1459
    %1494 = vmatprep.subr.bf16.mxu0 0
    %1495 = vmatpush1.bf16.msra.mxu0 %v1398
    %1496 = vmatprep.subr.bf16.mxu0 0
    %1497 = vmatpush1.bf16.msra.mxu0 %v1399
    %1498 = vmatprep.subr.bf16.mxu0 0
    %1499 = vmatpush1.bf16.msra.mxu0 %v1400
    %1500 = vmatprep.subr.bf16.mxu0 0
    %1501 = vmatpush1.bf16.msra.mxu0 %v1401
    %1502 = vmatprep.subr.bf16.mxu0 0
    %1503 = vmatpush1.bf16.msra.mxu0 %v1402
    %1504 = vmatprep.subr.bf16.mxu0 0
    %1505 = vmatpush1.bf16.msra.mxu0 %v1403
    %1506 = vmatprep.subr.bf16.mxu0 0
    %1507 = vmatpush1.bf16.msra.mxu0 %v1404
    %1508 = vmatprep.subr.bf16.mxu0 0
    %1509 = vmatpush1.bf16.msra.mxu0 %v1405
    %1510 = vmatprep.subr.bf16.mxu0 0
    %1511 = vmatpush1.bf16.msra.mxu0 %v1406
    %1512 = vmatprep.subr.bf16.mxu0 0
    %1513 = vmatpush1.bf16.msra.mxu0 %v1407
    %1514 = vmatprep.subr.bf16.mxu0 0
    %1515 = vmatpush1.bf16.msra.mxu0 %v1408
    %1516 = vmatprep.subr.bf16.mxu0 0
    %1517 = vmatpush1.bf16.msra.mxu0 %v1409
    %1518 = vmatprep.subr.bf16.mxu0 0
    %1519 = vmatpush1.bf16.msra.mxu0 %v1410
    %1520 = vmatprep.subr.bf16.mxu0 0
    %1521 = vmatpush1.bf16.msra.mxu0 %v1411
    %1522 = vmatprep.subr.bf16.mxu0 0
    %1523 = vmatpush1.bf16.msra.mxu0 %v1412
    %1524 = vmatprep.subr.bf16.mxu0 0
    %1525 = vmatpush1.bf16.msra.mxu0 %v1413
    %1526 = vmatprep.mubr.bf16.mxu0 %v1463
    %1527 = vmatmul.mubr.bf16.gmra.mrb[0].mxu0 %v1462
    %v1528 = vpop.f32.mrb[0].mxu0
    %v1529 = vadd.f32 0.0, %v1528
    %v1530 = vpop.f32.mrb[0].mxu0
    %v1531 = vpop.f32.mrb[0].mxu0
    %v1532 = vadd.f32 0.0, %v1531
    %v1533 = vpop.f32.mrb[0].mxu0
    %1534 = vmatprep.mubr.bf16.mxu0 %v1465
    %1535 = vmatmul.mubr.bf16.gmra.mrb[0].mxu0 %v1464
    %v1536 = vpop.f32.mrb[0].mxu0
    %v1537 = vadd.f32 0.0, %v1536
    %v1538 = vpop.f32.mrb[0].mxu0
    %v1539 = vpop.f32.mrb[0].mxu0
    %v1540 = vadd.f32 0.0, %v1539
    %v1541 = vpop.f32.mrb[0].mxu0
    %1542 = vmatprep.mubr.bf16.mxu0 %v1467
    %1543 = vmatmul.mubr.bf16.gmra.mrb[0].mxu0 %v1466
    %v1544 = vpop.f32.mrb[0].mxu0
    %v1545 = vadd.f32 0.0, %v1544
    %v1546 = vpop.f32.mrb[0].mxu0
    %v1547 = vpop.f32.mrb[0].mxu0
    %v1548 = vadd.f32 0.0, %v1547
    %v1549 = vpop.f32.mrb[0].mxu0
    %1550 = vmatprep.mubr.bf16.mxu0 %v1469
    %1551 = vmatmul.mubr.bf16.gmra.mrb[0].mxu0 %v1468
    %v1552 = vpop.f32.mrb[0].mxu0
    %v1553 = vadd.f32 0.0, %v1552
    %v1554 = vpop.f32.mrb[0].mxu0
    %v1555 = vpop.f32.mrb[0].mxu0
    %v1556 = vadd.f32 0.0, %v1555
    %v1557 = vpop.f32.mrb[0].mxu0
    %1558 = vmatprep.mubr.bf16.mxu0 %v1471
    %1559 = vmatmul.mubr.bf16.gmra.mrb[0].mxu0 %v1470
    %v1560 = vpop.f32.mrb[0].mxu0
    %v1561 = vadd.f32 0.0, %v1560
    %v1562 = vpop.f32.mrb[0].mxu0
    %v1563 = vpop.f32.mrb[0].mxu0
    %v1564 = vadd.f32 0.0, %v1563
    %v1565 = vpop.f32.mrb[0].mxu0
    %1566 = vmatprep.mubr.bf16.mxu0 %v1473
    %1567 = vmatmul.mubr.bf16.gmra.mrb[0].mxu0 %v1472
    %v1568 = vpop.f32.mrb[0].mxu0
    %v1569 = vadd.f32 0.0, %v1568
    %v1570 = vpop.f32.mrb[0].mxu0
    %v1571 = vpop.f32.mrb[0].mxu0
    %v1572 = vadd.f32 0.0, %v1571
    %v1573 = vpop.f32.mrb[0].mxu0
    %1574 = vmatprep.mubr.bf16.mxu0 %v1475
    %1575 = vmatmul.mubr.bf16.gmra.mrb[0].mxu0 %v1474
    %v1576 = vpop.f32.mrb[0].mxu0
    %v1577 = vadd.f32 0.0, %v1576
    %v1578 = vpop.f32.mrb[0].mxu0
    %v1579 = vpop.f32.mrb[0].mxu0
    %v1580 = vadd.f32 0.0, %v1579
    %v1581 = vpop.f32.mrb[0].mxu0
    %1582 = vmatprep.mubr.bf16.mxu0 %v1477
    %1583 = vmatmul.mubr.bf16.gmra.mrb[0].mxu0 %v1476
    %v1584 = vpop.f32.mrb[0].mxu0
    %v1585 = vadd.f32 0.0, %v1584
    %v1586 = vpop.f32.mrb[0].mxu0
    %v1587 = vpop.f32.mrb[0].mxu0
    %v1588 = vadd.f32 0.0, %v1587
    %v1589 = vpop.f32.mrb[0].mxu0
    %1590 = vdwg.mxu0
    %1592 = vset.pattern.permute.xlu0 0
    %1593 = vperm.xlu0 %1592, %v193
    %v1594 = vpop.permute.xlu0 %1593
    %1597 = vset.pattern.permute.xlu0 0
    %1598 = vperm.xlu0 %1597, %v194
    %v1599 = vpop.permute.xlu0 %1598
    %1602 = vset.pattern.permute.xlu0 0
    %1603 = vperm.xlu0 %1602, %v195
    %v1604 = vpop.permute.xlu0 %1603
    %1607 = vset.pattern.permute.xlu0 0
    %1608 = vperm.xlu0 %1607, %v196
    %v1609 = vpop.permute.xlu0 %1608
    %1612 = vset.pattern.permute.xlu0 0
    %1613 = vperm.xlu0 %1612, %v197
    %v1614 = vpop.permute.xlu0 %1613
    %1617 = vset.pattern.permute.xlu0 0
    %1618 = vperm.xlu0 %1617, %v198
    %v1619 = vpop.permute.xlu0 %1618
    %1622 = vset.pattern.permute.xlu0 0
    %1623 = vperm.xlu0 %1622, %v199
    %v1624 = vpop.permute.xlu0 %1623
    %1627 = vset.pattern.permute.xlu0 0
    %1628 = vperm.xlu0 %1627, %v200
    %v1629 = vpop.permute.xlu0 %1628
    %1632 = vset.pattern.permute.xlu0 0
    %1633 = vperm.xlu0 %1632, %v201
    %v1634 = vpop.permute.xlu0 %1633
    %1637 = vset.pattern.permute.xlu0 0
    %1638 = vperm.xlu0 %1637, %v202
    %v1639 = vpop.permute.xlu0 %1638
    %1642 = vset.pattern.permute.xlu0 0
    %1643 = vperm.xlu0 %1642, %v203
    %v1644 = vpop.permute.xlu0 %1643
    %1647 = vset.pattern.permute.xlu0 0
    %1648 = vperm.xlu0 %1647, %v204
    %v1649 = vpop.permute.xlu0 %1648
    %1652 = vset.pattern.permute.xlu0 0
    %1653 = vperm.xlu0 %1652, %v205
    %v1654 = vpop.permute.xlu0 %1653
    %1657 = vset.pattern.permute.xlu0 0
    %1658 = vperm.xlu0 %1657, %v206
    %v1659 = vpop.permute.xlu0 %1658
    %1662 = vset.pattern.permute.xlu0 0
    %1663 = vperm.xlu0 %1662, %v207
    %v1664 = vpop.permute.xlu0 %1663
    %1667 = vset.pattern.permute.xlu0 0
    %1668 = vperm.xlu0 %1667, %v208
    %v1669 = vpop.permute.xlu0 %1668
    %v1671 = vmul.f32 %v1529, %v1594
    %v1672 = vmul.f32 %v1532, %v1599
    %v1673 = vmul.f32 %v1537, %v1604
    %v1674 = vmul.f32 %v1540, %v1609
    %v1675 = vmul.f32 %v1545, %v1614
    %v1676 = vmul.f32 %v1548, %v1619
    %v1677 = vmul.f32 %v1553, %v1624
    %v1678 = vmul.f32 %v1556, %v1629
    %v1679 = vmul.f32 %v1561, %v1634
    %v1680 = vmul.f32 %v1564, %v1639
    %v1681 = vmul.f32 %v1569, %v1644
    %v1682 = vmul.f32 %v1572, %v1649
    %v1683 = vmul.f32 %v1577, %v1654
    %v1684 = vmul.f32 %v1580, %v1659
    %v1685 = vmul.f32 %v1585, %v1664
    %v1686 = vmul.f32 %v1588, %v1669
    %1688 = vset.pattern.permute.xlu0 0
    %1689 = vperm.xlu0 %1688, %v209
    %v1690 = vpop.permute.xlu0 %1689
    %1693 = vset.pattern.permute.xlu0 0
    %1694 = vperm.xlu0 %1693, %v210
    %v1695 = vpop.permute.xlu0 %1694
    %1698 = vset.pattern.permute.xlu0 0
    %1699 = vperm.xlu0 %1698, %v211
    %v1700 = vpop.permute.xlu0 %1699
    %1703 = vset.pattern.permute.xlu0 0
    %1704 = vperm.xlu0 %1703, %v212
    %v1705 = vpop.permute.xlu0 %1704
    %1708 = vset.pattern.permute.xlu0 0
    %1709 = vperm.xlu0 %1708, %v213
    %v1710 = vpop.permute.xlu0 %1709
    %1713 = vset.pattern.permute.xlu0 0
    %1714 = vperm.xlu0 %1713, %v214
    %v1715 = vpop.permute.xlu0 %1714
    %1718 = vset.pattern.permute.xlu0 0
    %1719 = vperm.xlu0 %1718, %v215
    %v1720 = vpop.permute.xlu0 %1719
    %1723 = vset.pattern.permute.xlu0 0
    %1724 = vperm.xlu0 %1723, %v216
    %v1725 = vpop.permute.xlu0 %1724
    %1728 = vset.pattern.permute.xlu0 0
    %1729 = vperm.xlu0 %1728, %v217
    %v1730 = vpop.permute.xlu0 %1729
    %1733 = vset.pattern.permute.xlu0 0
    %1734 = vperm.xlu0 %1733, %v218
    %v1735 = vpop.permute.xlu0 %1734
    %1738 = vset.pattern.permute.xlu0 0
    %1739 = vperm.xlu0 %1738, %v219
    %v1740 = vpop.permute.xlu0 %1739
    %1743 = vset.pattern.permute.xlu0 0
    %1744 = vperm.xlu0 %1743, %v220
    %v1745 = vpop.permute.xlu0 %1744
    %1748 = vset.pattern.permute.xlu0 0
    %1749 = vperm.xlu0 %1748, %v221
    %v1750 = vpop.permute.xlu0 %1749
    %1753 = vset.pattern.permute.xlu0 0
    %1754 = vperm.xlu0 %1753, %v222
    %v1755 = vpop.permute.xlu0 %1754
    %1758 = vset.pattern.permute.xlu0 0
    %1759 = vperm.xlu0 %1758, %v223
    %v1760 = vpop.permute.xlu0 %1759
    %1763 = vset.pattern.permute.xlu0 0
    %1764 = vperm.xlu0 %1763, %v224
    %v1765 = vpop.permute.xlu0 %1764
    %v1767 = vadd.f32 %v1671, %v1690
    %v1768 = vadd.f32 %v1672, %v1695
    %v1769 = vadd.f32 %v1673, %v1700
    %v1770 = vadd.f32 %v1674, %v1705
    %v1771 = vadd.f32 %v1675, %v1710
    %v1772 = vadd.f32 %v1676, %v1715
    %v1773 = vadd.f32 %v1677, %v1720
    %v1774 = vadd.f32 %v1678, %v1725
    %v1775 = vadd.f32 %v1679, %v1730
    %v1776 = vadd.f32 %v1680, %v1735
    %v1777 = vadd.f32 %v1681, %v1740
    %v1778 = vadd.f32 %v1682, %v1745
    %v1779 = vadd.f32 %v1683, %v1750
    %v1780 = vadd.f32 %v1684, %v1755
    %v1781 = vadd.f32 %v1685, %v1760
    %v1782 = vadd.f32 %v1686, %v1765
    %v1783 = vmax.f32 %v1767, 0.0
    %v1784 = vmax.f32 %v1768, 0.0
    %v1785 = vmax.f32 %v1769, 0.0
    %v1786 = vmax.f32 %v1770, 0.0
    %v1787 = vmax.f32 %v1771, 0.0
    %v1788 = vmax.f32 %v1772, 0.0
    %v1789 = vmax.f32 %v1773, 0.0
    %v1790 = vmax.f32 %v1774, 0.0
    %v1791 = vmax.f32 %v1775, 0.0
    %v1792 = vmax.f32 %v1776, 0.0
    %v1793 = vmax.f32 %v1777, 0.0
    %v1794 = vmax.f32 %v1778, 0.0
    %v1795 = vmax.f32 %v1779, 0.0
    %v1796 = vmax.f32 %v1780, 0.0
    %v1797 = vmax.f32 %v1781, 0.0
    %v1798 = vmax.f32 %v1782, 0.0
    %1800 = vset.pattern.permute.xlu0 0
    %1801 = vperm.xlu0 %1800, %v225
    %v1802 = vpop.permute.xlu0 %1801
    %1805 = vset.pattern.permute.xlu0 0
    %1806 = vperm.xlu0 %1805, %v226
    %v1807 = vpop.permute.xlu0 %1806
    %1810 = vset.pattern.permute.xlu0 0
    %1811 = vperm.xlu0 %1810, %v227
    %v1812 = vpop.permute.xlu0 %1811
    %1815 = vset.pattern.permute.xlu0 0
    %1816 = vperm.xlu0 %1815, %v228
    %v1817 = vpop.permute.xlu0 %1816
    %1820 = vset.pattern.permute.xlu0 0
    %1821 = vperm.xlu0 %1820, %v229
    %v1822 = vpop.permute.xlu0 %1821
    %1825 = vset.pattern.permute.xlu0 0
    %1826 = vperm.xlu0 %1825, %v230
    %v1827 = vpop.permute.xlu0 %1826
    %1830 = vset.pattern.permute.xlu0 0
    %1831 = vperm.xlu0 %1830, %v231
    %v1832 = vpop.permute.xlu0 %1831
    %1835 = vset.pattern.permute.xlu0 0
    %1836 = vperm.xlu0 %1835, %v232
    %v1837 = vpop.permute.xlu0 %1836
    %1840 = vset.pattern.permute.xlu0 0
    %1841 = vperm.xlu0 %1840, %v233
    %v1842 = vpop.permute.xlu0 %1841
    %1845 = vset.pattern.permute.xlu0 0
    %1846 = vperm.xlu0 %1845, %v234
    %v1847 = vpop.permute.xlu0 %1846
    %1850 = vset.pattern.permute.xlu0 0
    %1851 = vperm.xlu0 %1850, %v235
    %v1852 = vpop.permute.xlu0 %1851
    %1855 = vset.pattern.permute.xlu0 0
    %1856 = vperm.xlu0 %1855, %v236
    %v1857 = vpop.permute.xlu0 %1856
    %1860 = vset.pattern.permute.xlu0 0
    %1861 = vperm.xlu0 %1860, %v237
    %v1862 = vpop.permute.xlu0 %1861
    %1865 = vset.pattern.permute.xlu0 0
    %1866 = vperm.xlu0 %1865, %v238
    %v1867 = vpop.permute.xlu0 %1866
    %1870 = vset.pattern.permute.xlu0 0
    %1871 = vperm.xlu0 %1870, %v239
    %v1872 = vpop.permute.xlu0 %1871
    %1875 = vset.pattern.permute.xlu0 0
    %1876 = vperm.xlu0 %1875, %v240
    %v1877 = vpop.permute.xlu0 %1876
    %v1879 = vmul.f32 %v1783, %v1802
    %v1880 = vmul.f32 %v1784, %v1807
    %v1881 = vmul.f32 %v1785, %v1812
    %v1882 = vmul.f32 %v1786, %v1817
    %v1883 = vmul.f32 %v1787, %v1822
    %v1884 = vmul.f32 %v1788, %v1827
    %v1885 = vmul.f32 %v1789, %v1832
    %v1886 = vmul.f32 %v1790, %v1837
    %v1887 = vmul.f32 %v1791, %v1842
    %v1888 = vmul.f32 %v1792, %v1847
    %v1889 = vmul.f32 %v1793, %v1852
    %v1890 = vmul.f32 %v1794, %v1857
    %v1891 = vmul.f32 %v1795, %v1862
    %v1892 = vmul.f32 %v1796, %v1867
    %v1893 = vmul.f32 %v1797, %v1872
    %v1894 = vmul.f32 %v1798, %v1877
    %vm1895 = vcmask 400384
    %v1896 = vsel %vm1895, %v1879, 0.0
    %v1897 = vsel %vm1895, %v1880, 0.0
    %v1898 = vadd.f32 %v1896, %v1897
    %v1899 = vsel %vm1895, %v1881, 0.0
    %v1900 = vadd.f32 %v1898, %v1899
    %v1901 = vsel %vm1895, %v1882, 0.0
    %v1902 = vadd.f32 %v1900, %v1901
    %v1903 = vsel %vm1895, %v1883, 0.0
    %v1904 = vadd.f32 %v1902, %v1903
    %v1905 = vsel %vm1895, %v1884, 0.0
    %v1906 = vadd.f32 %v1904, %v1905
    %v1907 = vsel %vm1895, %v1885, 0.0
    %v1908 = vadd.f32 %v1906, %v1907
    %v1909 = vsel %vm1895, %v1886, 0.0
    %v1910 = vadd.f32 %v1908, %v1909
    %v1911 = vsel %vm1895, %v1887, 0.0
    %v1912 = vadd.f32 %v1910, %v1911
    %v1913 = vsel %vm1895, %v1888, 0.0
    %v1914 = vadd.f32 %v1912, %v1913
    %v1915 = vsel %vm1895, %v1889, 0.0
    %v1916 = vadd.f32 %v1914, %v1915
    %v1917 = vsel %vm1895, %v1890, 0.0
    %v1918 = vadd.f32 %v1916, %v1917
    %v1919 = vsel %vm1895, %v1891, 0.0
    %v1920 = vadd.f32 %v1918, %v1919
    %v1921 = vsel %vm1895, %v1892, 0.0
    %v1922 = vadd.f32 %v1920, %v1921
    %v1923 = vsel %vm1895, %v1893, 0.0
    %v1924 = vadd.f32 %v1922, %v1923
    %v1925 = vsel %vm1895, %v1894, 0.0
    %v1926 = vadd.f32 %v1924, %v1925
    %v1927 = vrot.slane %v1926, 4
    %v1928 = vadd.f32 %v1926, %v1927
    %v1929 = vrot.slane %v1928, 2
    %v1930 = vadd.f32 %v1928, %v1929
    %v1931 = vrot.slane %v1930, 1
    %v1932 = vadd.f32 %v1930, %v1931
    %v1933 = vstv %s242
    %v1934 = vadd.f32 %v1932, %v1933
    %v1935 = vmax.f32 %v1934, 0.0
    %v1936 = vmul.f32 %v1935, %v241
    %vm1937 = vcmask 393216
    %v1938 = vsel %vm1937, %v1936, 0.0
    %1939 = vadd.xlane.f32.xlu0 %v1938
    %v1940 = vpop.xlane.xlu0 %1939
    %v1941 = vstv %s243
    %v1942 = vadd.f32 %v1940, %v1941
    %vm1943 = vcmask 0
    %1944 = vst.msk [vmem:[%s10] sm:$0x1] %vm1943, %v1942
    %s1945 = scalar_lea.vmem %s0, 512
    %v1946 = vld [vmem:[%s1945] sm:$0xff]
    %v1947 = vld [vmem:[%s1945 + $0x8] sm:$0xff]
    %v1948 = vld [vmem:[%s1945 + $0x10] sm:$0xff]
    %v1949 = vld [vmem:[%s1945 + $0x18] sm:$0xff]
    %v1950 = vld [vmem:[%s1945 + $0x20] sm:$0xff]
    %v1951 = vld [vmem:[%s1945 + $0x28] sm:$0xff]
    %v1952 = vld [vmem:[%s1945 + $0x30] sm:$0xff]
    %v1953 = vld [vmem:[%s1945 + $0x38] sm:$0xff]
    %v1954 = vld [vmem:[%s1945 + $0x40] sm:$0xff]
    %v1955 = vld [vmem:[%s1945 + $0x48] sm:$0xff]
    %v1956 = vld [vmem:[%s1945 + $0x50] sm:$0xff]
    %v1957 = vld [vmem:[%s1945 + $0x58] sm:$0xff]
    %v1958 = vld [vmem:[%s1945 + $0x60] sm:$0xff]
    %v1959 = vld [vmem:[%s1945 + $0x68] sm:$0xff]
    %v1960 = vld [vmem:[%s1945 + $0x70] sm:$0xff]
    %v1961 = vld [vmem:[%s1945 + $0x78] sm:$0xff]
    %v1962 = vld [vmem:[%s1945 + $0x80] sm:$0xff]
    %v1963 = vld [vmem:[%s1945 + $0x88] sm:$0xff]
    %v1964 = vld [vmem:[%s1945 + $0x90] sm:$0xff]
    %v1965 = vld [vmem:[%s1945 + $0x98] sm:$0xff]
    %v1966 = vld [vmem:[%s1945 + $0xa0] sm:$0xff]
    %v1967 = vld [vmem:[%s1945 + $0xa8] sm:$0xff]
    %v1968 = vld [vmem:[%s1945 + $0xb0] sm:$0xff]
    %v1969 = vld [vmem:[%s1945 + $0xb8] sm:$0xff]
    %v1970 = vld [vmem:[%s1945 + $0xc0] sm:$0xff]
    %v1971 = vld [vmem:[%s1945 + $0xc8] sm:$0xff]
    %v1972 = vld [vmem:[%s1945 + $0xd0] sm:$0xff]
    %v1973 = vld [vmem:[%s1945 + $0xd8] sm:$0xff]
    %v1974 = vld [vmem:[%s1945 + $0xe0] sm:$0xff]
    %v1975 = vld [vmem:[%s1945 + $0xe8] sm:$0xff]
    %v1976 = vld [vmem:[%s1945 + $0xf0] sm:$0xff]
    %v1977 = vld [vmem:[%s1945 + $0xf8] sm:$0xff]
    %v1978 = vld [vmem:[%s1945 + $0x100] sm:$0xff]
    %v1979 = vld [vmem:[%s1945 + $0x108] sm:$0xff]
    %v1980 = vld [vmem:[%s1945 + $0x110] sm:$0xff]
    %v1981 = vld [vmem:[%s1945 + $0x118] sm:$0xff]
    %v1982 = vld [vmem:[%s1945 + $0x120] sm:$0xff]
    %v1983 = vld [vmem:[%s1945 + $0x128] sm:$0xff]
    %v1984 = vld [vmem:[%s1945 + $0x130] sm:$0xff]
    %v1985 = vld [vmem:[%s1945 + $0x138] sm:$0xff]
    %v1986 = vld [vmem:[%s1945 + $0x140] sm:$0xff]
    %v1987 = vld [vmem:[%s1945 + $0x148] sm:$0xff]
    %v1988 = vld [vmem:[%s1945 + $0x150] sm:$0xff]
    %v1989 = vld [vmem:[%s1945 + $0x158] sm:$0xff]
    %v1990 = vld [vmem:[%s1945 + $0x160] sm:$0xff]
    %v1991 = vld [vmem:[%s1945 + $0x168] sm:$0xff]
    %v1992 = vld [vmem:[%s1945 + $0x170] sm:$0xff]
    %v1993 = vld [vmem:[%s1945 + $0x178] sm:$0xff]
    %v1994 = vld [vmem:[%s1945 + $0x180] sm:$0xff]
    %v1995 = vld [vmem:[%s1945 + $0x188] sm:$0xff]
    %v1996 = vld [vmem:[%s1945 + $0x190] sm:$0xff]
    %v1997 = vld [vmem:[%s1945 + $0x198] sm:$0xff]
    %v1998 = vld [vmem:[%s1945 + $0x1a0] sm:$0xff]
    %v1999 = vld [vmem:[%s1945 + $0x1a8] sm:$0xff]
    %v2000 = vld [vmem:[%s1945 + $0x1b0] sm:$0xff]
    %v2001 = vld [vmem:[%s1945 + $0x1b8] sm:$0xff]
    %v2002 = vld [vmem:[%s1945 + $0x1c0] sm:$0xff]
    %v2003 = vld [vmem:[%s1945 + $0x1c8] sm:$0xff]
    %v2004 = vld [vmem:[%s1945 + $0x1d0] sm:$0xff]
    %v2005 = vld [vmem:[%s1945 + $0x1d8] sm:$0xff]
    %v2006 = vld [vmem:[%s1945 + $0x1e0] sm:$0xff]
    %v2007 = vld [vmem:[%s1945 + $0x1e8] sm:$0xff]
    %v2008 = vld [vmem:[%s1945 + $0x1f0] sm:$0xff]
    %v2009 = vld [vmem:[%s1945 + $0x1f8] sm:$0xff]
    %v2010 = vpack.c.bf16 %v1947, %v1946
    %v2011 = vpack.c.bf16 %v1949, %v1948
    %v2012 = vpack.c.bf16 %v1951, %v1950
    %v2013 = vpack.c.bf16 %v1953, %v1952
    %v2014 = vpack.c.bf16 %v1955, %v1954
    %v2015 = vpack.c.bf16 %v1957, %v1956
    %v2016 = vpack.c.bf16 %v1959, %v1958
    %v2017 = vpack.c.bf16 %v1961, %v1960
    %v2018 = vpack.c.bf16 %v1963, %v1962
    %v2019 = vpack.c.bf16 %v1965, %v1964
    %v2020 = vpack.c.bf16 %v1967, %v1966
    %v2021 = vpack.c.bf16 %v1969, %v1968
    %v2022 = vpack.c.bf16 %v1971, %v1970
    %v2023 = vpack.c.bf16 %v1973, %v1972
    %v2024 = vpack.c.bf16 %v1975, %v1974
    %v2025 = vpack.c.bf16 %v1977, %v1976
    %v2026 = vpack.c.bf16 %v1979, %v1978
    %v2027 = vpack.c.bf16 %v1981, %v1980
    %v2028 = vpack.c.bf16 %v1983, %v1982
    %v2029 = vpack.c.bf16 %v1985, %v1984
    %v2030 = vpack.c.bf16 %v1987, %v1986
    %v2031 = vpack.c.bf16 %v1989, %v1988
    %v2032 = vpack.c.bf16 %v1991, %v1990
    %v2033 = vpack.c.bf16 %v1993, %v1992
    %v2034 = vpack.c.bf16 %v1995, %v1994
    %v2035 = vpack.c.bf16 %v1997, %v1996
    %v2036 = vpack.c.bf16 %v1999, %v1998
    %v2037 = vpack.c.bf16 %v2001, %v2000
    %v2038 = vpack.c.bf16 %v2003, %v2002
    %v2039 = vpack.c.bf16 %v2005, %v2004
    %v2040 = vpack.c.bf16 %v2007, %v2006
    %v2041 = vpack.c.bf16 %v2009, %v2008
    %2042 = vmatprep.subr.bf16.mxu0 0
    %2043 = vmatpush1.bf16.msra.mxu0 %v2010
    %2044 = vmatprep.subr.bf16.mxu0 0
    %2045 = vmatpush1.bf16.msra.mxu0 %v2011
    %2046 = vmatprep.subr.bf16.mxu0 0
    %2047 = vmatpush1.bf16.msra.mxu0 %v2012
    %2048 = vmatprep.subr.bf16.mxu0 0
    %2049 = vmatpush1.bf16.msra.mxu0 %v2013
    %2050 = vmatprep.subr.bf16.mxu0 0
    %2051 = vmatpush1.bf16.msra.mxu0 %v2014
    %2052 = vmatprep.subr.bf16.mxu0 0
    %2053 = vmatpush1.bf16.msra.mxu0 %v2015
    %2054 = vmatprep.subr.bf16.mxu0 0
    %2055 = vmatpush1.bf16.msra.mxu0 %v2016
    %2056 = vmatprep.subr.bf16.mxu0 0
    %2057 = vmatpush1.bf16.msra.mxu0 %v2017
    %2058 = vmatprep.subr.bf16.mxu0 0
    %2059 = vmatpush1.bf16.msra.mxu0 %v2018
    %2060 = vmatprep.subr.bf16.mxu0 0
    %2061 = vmatpush1.bf16.msra.mxu0 %v2019
    %2062 = vmatprep.subr.bf16.mxu0 0
    %2063 = vmatpush1.bf16.msra.mxu0 %v2020
    %2064 = vmatprep.subr.bf16.mxu0 0
    %2065 = vmatpush1.bf16.msra.mxu0 %v2021
    %2066 = vmatprep.subr.bf16.mxu0 0
    %2067 = vmatpush1.bf16.msra.mxu0 %v2022
    %2068 = vmatprep.subr.bf16.mxu0 0
    %2069 = vmatpush1.bf16.msra.mxu0 %v2023
    %2070 = vmatprep.subr.bf16.mxu0 0
    %2071 = vmatpush1.bf16.msra.mxu0 %v2024
    %2072 = vmatprep.subr.bf16.mxu0 0
    %2073 = vmatpush1.bf16.msra.mxu0 %v2025
    %2074 = vmatprep.mubr.bf16.mxu0 %v533
    %2075 = vmatmul.mubr.bf16.gmra.mrb[0].mxu0 %v532
    %v2076 = vpop.f32.mrb[0].mxu0
    %v2077 = vadd.f32 0.0, %v2076
    %v2078 = vpop.f32.mrb[0].mxu0
    %v2079 = vpop.f32.mrb[0].mxu0
    %v2080 = vadd.f32 0.0, %v2079
    %v2081 = vpop.f32.mrb[0].mxu0
    %2082 = vmatprep.mubr.bf16.mxu0 %v537
    %2083 = vmatmul.mubr.bf16.gmra.mrb[0].mxu0 %v536
    %v2084 = vpop.f32.mrb[0].mxu0
    %v2085 = vadd.f32 0.0, %v2084
    %v2086 = vpop.f32.mrb[0].mxu0
    %v2087 = vpop.f32.mrb[0].mxu0
    %v2088 = vadd.f32 0.0, %v2087
    %v2089 = vpop.f32.mrb[0].mxu0
    %2090 = vmatprep.mubr.bf16.mxu0 %v541
    %2091 = vmatmul.mubr.bf16.gmra.mrb[0].mxu0 %v540
    %v2092 = vpop.f32.mrb[0].mxu0
    %v2093 = vadd.f32 0.0, %v2092
    %v2094 = vpop.f32.mrb[0].mxu0
    %v2095 = vpop.f32.mrb[0].mxu0
    %v2096 = vadd.f32 0.0, %v2095
    %v2097 = vpop.f32.mrb[0].mxu0
    %2098 = vmatprep.mubr.bf16.mxu0 %v545
    %2099 = vmatmul.mubr.bf16.gmra.mrb[0].mxu0 %v544
    %v2100 = vpop.f32.mrb[0].mxu0
    %v2101 = vadd.f32 0.0, %v2100
    %v2102 = vpop.f32.mrb[0].mxu0
    %v2103 = vpop.f32.mrb[0].mxu0
    %v2104 = vadd.f32 0.0, %v2103
    %v2105 = vpop.f32.mrb[0].mxu0
    %2106 = vmatprep.mubr.bf16.mxu0 %v549
    %2107 = vmatmul.mubr.bf16.gmra.mrb[0].mxu0 %v548
    %v2108 = vpop.f32.mrb[0].mxu0
    %v2109 = vadd.f32 0.0, %v2108
    %v2110 = vpop.f32.mrb[0].mxu0
    %v2111 = vpop.f32.mrb[0].mxu0
    %v2112 = vadd.f32 0.0, %v2111
    %v2113 = vpop.f32.mrb[0].mxu0
    %2114 = vmatprep.mubr.bf16.mxu0 %v553
    %2115 = vmatmul.mubr.bf16.gmra.mrb[0].mxu0 %v552
    %v2116 = vpop.f32.mrb[0].mxu0
    %v2117 = vadd.f32 0.0, %v2116
    %v2118 = vpop.f32.mrb[0].mxu0
    %v2119 = vpop.f32.mrb[0].mxu0
    %v2120 = vadd.f32 0.0, %v2119
    %v2121 = vpop.f32.mrb[0].mxu0
    %2122 = vmatprep.mubr.bf16.mxu0 %v557
    %2123 = vmatmul.mubr.bf16.gmra.mrb[0].mxu0 %v556
    %v2124 = vpop.f32.mrb[0].mxu0
    %v2125 = vadd.f32 0.0, %v2124
    %v2126 = vpop.f32.mrb[0].mxu0
    %v2127 = vpop.f32.mrb[0].mxu0
    %v2128 = vadd.f32 0.0, %v2127
    %v2129 = vpop.f32.mrb[0].mxu0
    %2130 = vmatprep.mubr.bf16.mxu0 %v561
    %2131 = vmatmul.mubr.bf16.gmra.mrb[0].mxu0 %v560
    %v2132 = vpop.f32.mrb[0].mxu0
    %v2133 = vadd.f32 0.0, %v2132
    %v2134 = vpop.f32.mrb[0].mxu0
    %v2135 = vpop.f32.mrb[0].mxu0
    %v2136 = vadd.f32 0.0, %v2135
    %v2137 = vpop.f32.mrb[0].mxu0
    %2138 = vmatprep.mubr.bf16.mxu0 %v565
    %2139 = vmatmul.mubr.bf16.gmra.mrb[0].mxu0 %v564
    %v2140 = vpop.f32.mrb[0].mxu0
    %v2141 = vadd.f32 0.0, %v2140
    %v2142 = vpop.f32.mrb[0].mxu0
    %v2143 = vpop.f32.mrb[0].mxu0
    %v2144 = vadd.f32 0.0, %v2143
    %v2145 = vpop.f32.mrb[0].mxu0
    %2146 = vmatprep.mubr.bf16.mxu0 %v569
    %2147 = vmatmul.mubr.bf16.gmra.mrb[0].mxu0 %v568
    %v2148 = vpop.f32.mrb[0].mxu0
    %v2149 = vadd.f32 0.0, %v2148
    %v2150 = vpop.f32.mrb[0].mxu0
    %v2151 = vpop.f32.mrb[0].mxu0
    %v2152 = vadd.f32 0.0, %v2151
    %v2153 = vpop.f32.mrb[0].mxu0
    %2154 = vmatprep.mubr.bf16.mxu0 %v573
    %2155 = vmatmul.mubr.bf16.gmra.mrb[0].mxu0 %v572
    %v2156 = vpop.f32.mrb[0].mxu0
    %v2157 = vadd.f32 0.0, %v2156
    %v2158 = vpop.f32.mrb[0].mxu0
    %v2159 = vpop.f32.mrb[0].mxu0
    %v2160 = vadd.f32 0.0, %v2159
    %v2161 = vpop.f32.mrb[0].mxu0
    %2162 = vmatprep.mubr.bf16.mxu0 %v577
    %2163 = vmatmul.mubr.bf16.gmra.mrb[0].mxu0 %v576
    %v2164 = vpop.f32.mrb[0].mxu0
    %v2165 = vadd.f32 0.0, %v2164
    %v2166 = vpop.f32.mrb[0].mxu0
    %v2167 = vpop.f32.mrb[0].mxu0
    %v2168 = vadd.f32 0.0, %v2167
    %v2169 = vpop.f32.mrb[0].mxu0
    %2170 = vmatprep.mubr.bf16.mxu0 %v581
    %2171 = vmatmul.mubr.bf16.gmra.mrb[0].mxu0 %v580
    %v2172 = vpop.f32.mrb[0].mxu0
    %v2173 = vadd.f32 0.0, %v2172
    %v2174 = vpop.f32.mrb[0].mxu0
    %v2175 = vpop.f32.mrb[0].mxu0
    %v2176 = vadd.f32 0.0, %v2175
    %v2177 = vpop.f32.mrb[0].mxu0
    %2178 = vmatprep.mubr.bf16.mxu0 %v585
    %2179 = vmatmul.mubr.bf16.gmra.mrb[0].mxu0 %v584
    %v2180 = vpop.f32.mrb[0].mxu0
    %v2181 = vadd.f32 0.0, %v2180
    %v2182 = vpop.f32.mrb[0].mxu0
    %v2183 = vpop.f32.mrb[0].mxu0
    %v2184 = vadd.f32 0.0, %v2183
    %v2185 = vpop.f32.mrb[0].mxu0
    %2186 = vmatprep.mubr.bf16.mxu0 %v589
    %2187 = vmatmul.mubr.bf16.gmra.mrb[0].mxu0 %v588
    %v2188 = vpop.f32.mrb[0].mxu0
    %v2189 = vadd.f32 0.0, %v2188
    %v2190 = vpop.f32.mrb[0].mxu0
    %v2191 = vpop.f32.mrb[0].mxu0
    %v2192 = vadd.f32 0.0, %v2191
    %v2193 = vpop.f32.mrb[0].mxu0
    %2194 = vmatprep.mubr.bf16.mxu0 %v593
    %2195 = vmatmul.mubr.bf16.gmra.mrb[0].mxu0 %v592
    %v2196 = vpop.f32.mrb[0].mxu0
    %v2197 = vadd.f32 0.0, %v2196
    %v2198 = vpop.f32.mrb[0].mxu0
    %v2199 = vpop.f32.mrb[0].mxu0
    %v2200 = vadd.f32 0.0, %v2199
    %v2201 = vpop.f32.mrb[0].mxu0
    %2202 = vdwg.mxu0
    %2203 = vmatprep.subr.bf16.mxu0 0
    %2204 = vmatpush1.bf16.msra.mxu0 %v2026
    %2205 = vmatprep.subr.bf16.mxu0 0
    %2206 = vmatpush1.bf16.msra.mxu0 %v2027
    %2207 = vmatprep.subr.bf16.mxu0 0
    %2208 = vmatpush1.bf16.msra.mxu0 %v2028
    %2209 = vmatprep.subr.bf16.mxu0 0
    %2210 = vmatpush1.bf16.msra.mxu0 %v2029
    %2211 = vmatprep.subr.bf16.mxu0 0
    %2212 = vmatpush1.bf16.msra.mxu0 %v2030
    %2213 = vmatprep.subr.bf16.mxu0 0
    %2214 = vmatpush1.bf16.msra.mxu0 %v2031
    %2215 = vmatprep.subr.bf16.mxu0 0
    %2216 = vmatpush1.bf16.msra.mxu0 %v2032
    %2217 = vmatprep.subr.bf16.mxu0 0
    %2218 = vmatpush1.bf16.msra.mxu0 %v2033
    %2219 = vmatprep.subr.bf16.mxu0 0
    %2220 = vmatpush1.bf16.msra.mxu0 %v2034
    %2221 = vmatprep.subr.bf16.mxu0 0
    %2222 = vmatpush1.bf16.msra.mxu0 %v2035
    %2223 = vmatprep.subr.bf16.mxu0 0
    %2224 = vmatpush1.bf16.msra.mxu0 %v2036
    %2225 = vmatprep.subr.bf16.mxu0 0
    %2226 = vmatpush1.bf16.msra.mxu0 %v2037
    %2227 = vmatprep.subr.bf16.mxu0 0
    %2228 = vmatpush1.bf16.msra.mxu0 %v2038
    %2229 = vmatprep.subr.bf16.mxu0 0
    %2230 = vmatpush1.bf16.msra.mxu0 %v2039
    %2231 = vmatprep.subr.bf16.mxu0 0
    %2232 = vmatpush1.bf16.msra.mxu0 %v2040
    %2233 = vmatprep.subr.bf16.mxu0 0
    %2234 = vmatpush1.bf16.msra.mxu0 %v2041
    %2235 = vmatprep.mubr.bf16.mxu0 %v535
    %2236 = vmatmul.mubr.bf16.gmra.mrb[0].mxu0 %v534
    %v2237 = vpop.f32.mrb[0].mxu0
    %v2238 = vadd.f32 %v2077, %v2237
    %v2239 = vpop.f32.mrb[0].mxu0
    %v2240 = vpop.f32.mrb[0].mxu0
    %v2241 = vadd.f32 %v2080, %v2240
    %v2242 = vpop.f32.mrb[0].mxu0
    %2243 = vmatprep.mubr.bf16.mxu0 %v539
    %2244 = vmatmul.mubr.bf16.gmra.mrb[0].mxu0 %v538
    %v2245 = vpop.f32.mrb[0].mxu0
    %v2246 = vadd.f32 %v2085, %v2245
    %v2247 = vpop.f32.mrb[0].mxu0
    %v2248 = vpop.f32.mrb[0].mxu0
    %v2249 = vadd.f32 %v2088, %v2248
    %v2250 = vpop.f32.mrb[0].mxu0
    %2251 = vmatprep.mubr.bf16.mxu0 %v543
    %2252 = vmatmul.mubr.bf16.gmra.mrb[0].mxu0 %v542
    %v2253 = vpop.f32.mrb[0].mxu0
    %v2254 = vadd.f32 %v2093, %v2253
    %v2255 = vpop.f32.mrb[0].mxu0
    %v2256 = vpop.f32.mrb[0].mxu0
    %v2257 = vadd.f32 %v2096, %v2256
    %v2258 = vpop.f32.mrb[0].mxu0
    %2259 = vmatprep.mubr.bf16.mxu0 %v547
    %2260 = vmatmul.mubr.bf16.gmra.mrb[0].mxu0 %v546
    %v2261 = vpop.f32.mrb[0].mxu0
    %v2262 = vadd.f32 %v2101, %v2261
    %v2263 = vpop.f32.mrb[0].mxu0
    %v2264 = vpop.f32.mrb[0].mxu0
    %v2265 = vadd.f32 %v2104, %v2264
    %v2266 = vpop.f32.mrb[0].mxu0
    %2267 = vmatprep.mubr.bf16.mxu0 %v551
    %2268 = vmatmul.mubr.bf16.gmra.mrb[0].mxu0 %v550
    %v2269 = vpop.f32.mrb[0].mxu0
    %v2270 = vadd.f32 %v2109, %v2269
    %v2271 = vpop.f32.mrb[0].mxu0
    %v2272 = vpop.f32.mrb[0].mxu0
    %v2273 = vadd.f32 %v2112, %v2272
    %v2274 = vpop.f32.mrb[0].mxu0
    %2275 = vmatprep.mubr.bf16.mxu0 %v555
    %2276 = vmatmul.mubr.bf16.gmra.mrb[0].mxu0 %v554
    %v2277 = vpop.f32.mrb[0].mxu0
    %v2278 = vadd.f32 %v2117, %v2277
    %v2279 = vpop.f32.mrb[0].mxu0
    %v2280 = vpop.f32.mrb[0].mxu0
    %v2281 = vadd.f32 %v2120, %v2280
    %v2282 = vpop.f32.mrb[0].mxu0
    %2283 = vmatprep.mubr.bf16.mxu0 %v559
    %2284 = vmatmul.mubr.bf16.gmra.mrb[0].mxu0 %v558
    %v2285 = vpop.f32.mrb[0].mxu0
    %v2286 = vadd.f32 %v2125, %v2285
    %v2287 = vpop.f32.mrb[0].mxu0
    %v2288 = vpop.f32.mrb[0].mxu0
    %v2289 = vadd.f32 %v2128, %v2288
    %v2290 = vpop.f32.mrb[0].mxu0
    %2291 = vmatprep.mubr.bf16.mxu0 %v563
    %2292 = vmatmul.mubr.bf16.gmra.mrb[0].mxu0 %v562
    %v2293 = vpop.f32.mrb[0].mxu0
    %v2294 = vadd.f32 %v2133, %v2293
    %v2295 = vpop.f32.mrb[0].mxu0
    %v2296 = vpop.f32.mrb[0].mxu0
    %v2297 = vadd.f32 %v2136, %v2296
    %v2298 = vpop.f32.mrb[0].mxu0
    %2299 = vmatprep.mubr.bf16.mxu0 %v567
    %2300 = vmatmul.mubr.bf16.gmra.mrb[0].mxu0 %v566
    %v2301 = vpop.f32.mrb[0].mxu0
    %v2302 = vadd.f32 %v2141, %v2301
    %v2303 = vpop.f32.mrb[0].mxu0
    %v2304 = vpop.f32.mrb[0].mxu0
    %v2305 = vadd.f32 %v2144, %v2304
    %v2306 = vpop.f32.mrb[0].mxu0
    %2307 = vmatprep.mubr.bf16.mxu0 %v571
    %2308 = vmatmul.mubr.bf16.gmra.mrb[0].mxu0 %v570
    %v2309 = vpop.f32.mrb[0].mxu0
    %v2310 = vadd.f32 %v2149, %v2309
    %v2311 = vpop.f32.mrb[0].mxu0
    %v2312 = vpop.f32.mrb[0].mxu0
    %v2313 = vadd.f32 %v2152, %v2312
    %v2314 = vpop.f32.mrb[0].mxu0
    %2315 = vmatprep.mubr.bf16.mxu0 %v575
    %2316 = vmatmul.mubr.bf16.gmra.mrb[0].mxu0 %v574
    %v2317 = vpop.f32.mrb[0].mxu0
    %v2318 = vadd.f32 %v2157, %v2317
    %v2319 = vpop.f32.mrb[0].mxu0
    %v2320 = vpop.f32.mrb[0].mxu0
    %v2321 = vadd.f32 %v2160, %v2320
    %v2322 = vpop.f32.mrb[0].mxu0
    %2323 = vmatprep.mubr.bf16.mxu0 %v579
    %2324 = vmatmul.mubr.bf16.gmra.mrb[0].mxu0 %v578
    %v2325 = vpop.f32.mrb[0].mxu0
    %v2326 = vadd.f32 %v2165, %v2325
    %v2327 = vpop.f32.mrb[0].mxu0
    %v2328 = vpop.f32.mrb[0].mxu0
    %v2329 = vadd.f32 %v2168, %v2328
    %v2330 = vpop.f32.mrb[0].mxu0
    %2331 = vmatprep.mubr.bf16.mxu0 %v583
    %2332 = vmatmul.mubr.bf16.gmra.mrb[0].mxu0 %v582
    %v2333 = vpop.f32.mrb[0].mxu0
    %v2334 = vadd.f32 %v2173, %v2333
    %v2335 = vpop.f32.mrb[0].mxu0
    %v2336 = vpop.f32.mrb[0].mxu0
    %v2337 = vadd.f32 %v2176, %v2336
    %v2338 = vpop.f32.mrb[0].mxu0
    %2339 = vmatprep.mubr.bf16.mxu0 %v587
    %2340 = vmatmul.mubr.bf16.gmra.mrb[0].mxu0 %v586
    %v2341 = vpop.f32.mrb[0].mxu0
    %v2342 = vadd.f32 %v2181, %v2341
    %v2343 = vpop.f32.mrb[0].mxu0
    %v2344 = vpop.f32.mrb[0].mxu0
    %v2345 = vadd.f32 %v2184, %v2344
    %v2346 = vpop.f32.mrb[0].mxu0
    %2347 = vmatprep.mubr.bf16.mxu0 %v591
    %2348 = vmatmul.mubr.bf16.gmra.mrb[0].mxu0 %v590
    %v2349 = vpop.f32.mrb[0].mxu0
    %v2350 = vadd.f32 %v2189, %v2349
    %v2351 = vpop.f32.mrb[0].mxu0
    %v2352 = vpop.f32.mrb[0].mxu0
    %v2353 = vadd.f32 %v2192, %v2352
    %v2354 = vpop.f32.mrb[0].mxu0
    %2355 = vmatprep.mubr.bf16.mxu0 %v595
    %2356 = vmatmul.mubr.bf16.gmra.mrb[0].mxu0 %v594
    %v2357 = vpop.f32.mrb[0].mxu0
    %v2358 = vadd.f32 %v2197, %v2357
    %v2359 = vpop.f32.mrb[0].mxu0
    %v2360 = vpop.f32.mrb[0].mxu0
    %v2361 = vadd.f32 %v2200, %v2360
    %v2362 = vpop.f32.mrb[0].mxu0
    %2363 = vdwg.mxu0
    %v2364 = vmul.f32 %v2238, %v985
    %v2365 = vmul.f32 %v2241, %v990
    %v2366 = vmul.f32 %v2246, %v995
    %v2367 = vmul.f32 %v2249, %v1000
    %v2368 = vmul.f32 %v2254, %v1005
    %v2369 = vmul.f32 %v2257, %v1010
    %v2370 = vmul.f32 %v2262, %v1015
    %v2371 = vmul.f32 %v2265, %v1020
    %v2372 = vmul.f32 %v2270, %v1025
    %v2373 = vmul.f32 %v2273, %v1030
    %v2374 = vmul.f32 %v2278, %v1035
    %v2375 = vmul.f32 %v2281, %v1040
    %v2376 = vmul.f32 %v2286, %v1045
    %v2377 = vmul.f32 %v2289, %v1050
    %v2378 = vmul.f32 %v2294, %v1055
    %v2379 = vmul.f32 %v2297, %v1060
    %v2380 = vmul.f32 %v2302, %v1065
    %v2381 = vmul.f32 %v2305, %v1070
    %v2382 = vmul.f32 %v2310, %v1075
    %v2383 = vmul.f32 %v2313, %v1080
    %v2384 = vmul.f32 %v2318, %v1085
    %v2385 = vmul.f32 %v2321, %v1090
    %v2386 = vmul.f32 %v2326, %v1095
    %v2387 = vmul.f32 %v2329, %v1100
    %v2388 = vmul.f32 %v2334, %v1105
    %v2389 = vmul.f32 %v2337, %v1110
    %v2390 = vmul.f32 %v2342, %v1115
    %v2391 = vmul.f32 %v2345, %v1120
    %v2392 = vmul.f32 %v2350, %v1125
    %v2393 = vmul.f32 %v2353, %v1130
    %v2394 = vmul.f32 %v2358, %v1135
    %v2395 = vmul.f32 %v2361, %v1140
    %v2396 = vadd.f32 %v2364, %v1177
    %v2397 = vadd.f32 %v2365, %v1182
    %v2398 = vadd.f32 %v2366, %v1187
    %v2399 = vadd.f32 %v2367, %v1192
    %v2400 = vadd.f32 %v2368, %v1197
    %v2401 = vadd.f32 %v2369, %v1202
    %v2402 = vadd.f32 %v2370, %v1207
    %v2403 = vadd.f32 %v2371, %v1212
    %v2404 = vadd.f32 %v2372, %v1217
    %v2405 = vadd.f32 %v2373, %v1222
    %v2406 = vadd.f32 %v2374, %v1227
    %v2407 = vadd.f32 %v2375, %v1232
    %v2408 = vadd.f32 %v2376, %v1237
    %v2409 = vadd.f32 %v2377, %v1242
    %v2410 = vadd.f32 %v2378, %v1247
    %v2411 = vadd.f32 %v2379, %v1252
    %v2412 = vadd.f32 %v2380, %v1257
    %v2413 = vadd.f32 %v2381, %v1262
    %v2414 = vadd.f32 %v2382, %v1267
    %v2415 = vadd.f32 %v2383, %v1272
    %v2416 = vadd.f32 %v2384, %v1277
    %v2417 = vadd.f32 %v2385, %v1282
    %v2418 = vadd.f32 %v2386, %v1287
    %v2419 = vadd.f32 %v2387, %v1292
    %v2420 = vadd.f32 %v2388, %v1297
    %v2421 = vadd.f32 %v2389, %v1302
    %v2422 = vadd.f32 %v2390, %v1307
    %v2423 = vadd.f32 %v2391, %v1312
    %v2424 = vadd.f32 %v2392, %v1317
    %v2425 = vadd.f32 %v2393, %v1322
    %v2426 = vadd.f32 %v2394, %v1327
    %v2427 = vadd.f32 %v2395, %v1332
    %v2428 = vmax.f32 %v2396, 0.0
    %v2429 = vmax.f32 %v2397, 0.0
    %v2430 = vmax.f32 %v2398, 0.0
    %v2431 = vmax.f32 %v2399, 0.0
    %v2432 = vmax.f32 %v2400, 0.0
    %v2433 = vmax.f32 %v2401, 0.0
    %v2434 = vmax.f32 %v2402, 0.0
    %v2435 = vmax.f32 %v2403, 0.0
    %v2436 = vmax.f32 %v2404, 0.0
    %v2437 = vmax.f32 %v2405, 0.0
    %v2438 = vmax.f32 %v2406, 0.0
    %v2439 = vmax.f32 %v2407, 0.0
    %v2440 = vmax.f32 %v2408, 0.0
    %v2441 = vmax.f32 %v2409, 0.0
    %v2442 = vmax.f32 %v2410, 0.0
    %v2443 = vmax.f32 %v2411, 0.0
    %v2444 = vmax.f32 %v2412, 0.0
    %v2445 = vmax.f32 %v2413, 0.0
    %v2446 = vmax.f32 %v2414, 0.0
    %v2447 = vmax.f32 %v2415, 0.0
    %v2448 = vmax.f32 %v2416, 0.0
    %v2449 = vmax.f32 %v2417, 0.0
    %v2450 = vmax.f32 %v2418, 0.0
    %v2451 = vmax.f32 %v2419, 0.0
    %v2452 = vmax.f32 %v2420, 0.0
    %v2453 = vmax.f32 %v2421, 0.0
    %v2454 = vmax.f32 %v2422, 0.0
    %v2455 = vmax.f32 %v2423, 0.0
    %v2456 = vmax.f32 %v2424, 0.0
    %v2457 = vmax.f32 %v2425, 0.0
    %v2458 = vmax.f32 %v2426, 0.0
    %v2459 = vmax.f32 %v2427, 0.0
    %v2460 = vpack.c.bf16 %v2429, %v2428
    %v2461 = vpack.c.bf16 %v2431, %v2430
    %v2462 = vpack.c.bf16 %v2433, %v2432
    %v2463 = vpack.c.bf16 %v2435, %v2434
    %v2464 = vpack.c.bf16 %v2437, %v2436
    %v2465 = vpack.c.bf16 %v2439, %v2438
    %v2466 = vpack.c.bf16 %v2441, %v2440
    %v2467 = vpack.c.bf16 %v2443, %v2442
    %v2468 = vpack.c.bf16 %v2445, %v2444
    %v2469 = vpack.c.bf16 %v2447, %v2446
    %v2470 = vpack.c.bf16 %v2449, %v2448
    %v2471 = vpack.c.bf16 %v2451, %v2450
    %v2472 = vpack.c.bf16 %v2453, %v2452
    %v2473 = vpack.c.bf16 %v2455, %v2454
    %v2474 = vpack.c.bf16 %v2457, %v2456
    %v2475 = vpack.c.bf16 %v2459, %v2458
    %2476 = vmatprep.subr.bf16.mxu0 0
    %2477 = vmatpush1.bf16.msra.mxu0 %v2460
    %2478 = vmatprep.subr.bf16.mxu0 0
    %2479 = vmatpush1.bf16.msra.mxu0 %v2461
    %2480 = vmatprep.subr.bf16.mxu0 0
    %2481 = vmatpush1.bf16.msra.mxu0 %v2462
    %2482 = vmatprep.subr.bf16.mxu0 0
    %2483 = vmatpush1.bf16.msra.mxu0 %v2463
    %2484 = vmatprep.subr.bf16.mxu0 0
    %2485 = vmatpush1.bf16.msra.mxu0 %v2464
    %2486 = vmatprep.subr.bf16.mxu0 0
    %2487 = vmatpush1.bf16.msra.mxu0 %v2465
    %2488 = vmatprep.subr.bf16.mxu0 0
    %2489 = vmatpush1.bf16.msra.mxu0 %v2466
    %2490 = vmatprep.subr.bf16.mxu0 0
    %2491 = vmatpush1.bf16.msra.mxu0 %v2467
    %2492 = vmatprep.subr.bf16.mxu0 0
    %2493 = vmatpush1.bf16.msra.mxu0 %v2468
    %2494 = vmatprep.subr.bf16.mxu0 0
    %2495 = vmatpush1.bf16.msra.mxu0 %v2469
    %2496 = vmatprep.subr.bf16.mxu0 0
    %2497 = vmatpush1.bf16.msra.mxu0 %v2470
    %2498 = vmatprep.subr.bf16.mxu0 0
    %2499 = vmatpush1.bf16.msra.mxu0 %v2471
    %2500 = vmatprep.subr.bf16.mxu0 0
    %2501 = vmatpush1.bf16.msra.mxu0 %v2472
    %2502 = vmatprep.subr.bf16.mxu0 0
    %2503 = vmatpush1.bf16.msra.mxu0 %v2473
    %2504 = vmatprep.subr.bf16.mxu0 0
    %2505 = vmatpush1.bf16.msra.mxu0 %v2474
    %2506 = vmatprep.subr.bf16.mxu0 0
    %2507 = vmatpush1.bf16.msra.mxu0 %v2475
    %2508 = vmatprep.mubr.bf16.mxu0 %v1463
    %2509 = vmatmul.mubr.bf16.gmra.mrb[0].mxu0 %v1462
    %v2510 = vpop.f32.mrb[0].mxu0
    %v2511 = vadd.f32 0.0, %v2510
    %v2512 = vpop.f32.mrb[0].mxu0
    %v2513 = vpop.f32.mrb[0].mxu0
    %v2514 = vadd.f32 0.0, %v2513
    %v2515 = vpop.f32.mrb[0].mxu0
    %2516 = vmatprep.mubr.bf16.mxu0 %v1465
    %2517 = vmatmul.mubr.bf16.gmra.mrb[0].mxu0 %v1464
    %v2518 = vpop.f32.mrb[0].mxu0
    %v2519 = vadd.f32 0.0, %v2518
    %v2520 = vpop.f32.mrb[0].mxu0
    %v2521 = vpop.f32.mrb[0].mxu0
    %v2522 = vadd.f32 0.0, %v2521
    %v2523 = vpop.f32.mrb[0].mxu0
    %2524 = vmatprep.mubr.bf16.mxu0 %v1467
    %2525 = vmatmul.mubr.bf16.gmra.mrb[0].mxu0 %v1466
    %v2526 = vpop.f32.mrb[0].mxu0
    %v2527 = vadd.f32 0.0, %v2526
    %v2528 = vpop.f32.mrb[0].mxu0
    %v2529 = vpop.f32.mrb[0].mxu0
    %v2530 = vadd.f32 0.0, %v2529
    %v2531 = vpop.f32.mrb[0].mxu0
    %2532 = vmatprep.mubr.bf16.mxu0 %v1469
    %2533 = vmatmul.mubr.bf16.gmra.mrb[0].mxu0 %v1468
    %v2534 = vpop.f32.mrb[0].mxu0
    %v2535 = vadd.f32 0.0, %v2534
    %v2536 = vpop.f32.mrb[0].mxu0
    %v2537 = vpop.f32.mrb[0].mxu0
    %v2538 = vadd.f32 0.0, %v2537
    %v2539 = vpop.f32.mrb[0].mxu0
    %2540 = vmatprep.mubr.bf16.mxu0 %v1471
    %2541 = vmatmul.mubr.bf16.gmra.mrb[0].mxu0 %v1470
    %v2542 = vpop.f32.mrb[0].mxu0
    %v2543 = vadd.f32 0.0, %v2542
    %v2544 = vpop.f32.mrb[0].mxu0
    %v2545 = vpop.f32.mrb[0].mxu0
    %v2546 = vadd.f32 0.0, %v2545
    %v2547 = vpop.f32.mrb[0].mxu0
    %2548 = vmatprep.mubr.bf16.mxu0 %v1473
    %2549 = vmatmul.mubr.bf16.gmra.mrb[0].mxu0 %v1472
    %v2550 = vpop.f32.mrb[0].mxu0
    %v2551 = vadd.f32 0.0, %v2550
    %v2552 = vpop.f32.mrb[0].mxu0
    %v2553 = vpop.f32.mrb[0].mxu0
    %v2554 = vadd.f32 0.0, %v2553
    %v2555 = vpop.f32.mrb[0].mxu0
    %2556 = vmatprep.mubr.bf16.mxu0 %v1475
    %2557 = vmatmul.mubr.bf16.gmra.mrb[0].mxu0 %v1474
    %v2558 = vpop.f32.mrb[0].mxu0
    %v2559 = vadd.f32 0.0, %v2558
    %v2560 = vpop.f32.mrb[0].mxu0
    %v2561 = vpop.f32.mrb[0].mxu0
    %v2562 = vadd.f32 0.0, %v2561
    %v2563 = vpop.f32.mrb[0].mxu0
    %2564 = vmatprep.mubr.bf16.mxu0 %v1477
    %2565 = vmatmul.mubr.bf16.gmra.mrb[0].mxu0 %v1476
    %v2566 = vpop.f32.mrb[0].mxu0
    %v2567 = vadd.f32 0.0, %v2566
    %v2568 = vpop.f32.mrb[0].mxu0
    %v2569 = vpop.f32.mrb[0].mxu0
    %v2570 = vadd.f32 0.0, %v2569
    %v2571 = vpop.f32.mrb[0].mxu0
    %2572 = vdwg.mxu0
    %v2573 = vmul.f32 %v2511, %v1594
    %v2574 = vmul.f32 %v2514, %v1599
    %v2575 = vmul.f32 %v2519, %v1604
    %v2576 = vmul.f32 %v2522, %v1609
    %v2577 = vmul.f32 %v2527, %v1614
    %v2578 = vmul.f32 %v2530, %v1619
    %v2579 = vmul.f32 %v2535, %v1624
    %v2580 = vmul.f32 %v2538, %v1629
    %v2581 = vmul.f32 %v2543, %v1634
    %v2582 = vmul.f32 %v2546, %v1639
    %v2583 = vmul.f32 %v2551, %v1644
    %v2584 = vmul.f32 %v2554, %v1649
    %v2585 = vmul.f32 %v2559, %v1654
    %v2586 = vmul.f32 %v2562, %v1659
    %v2587 = vmul.f32 %v2567, %v1664
    %v2588 = vmul.f32 %v2570, %v1669
    %v2589 = vadd.f32 %v2573, %v1690
    %v2590 = vadd.f32 %v2574, %v1695
    %v2591 = vadd.f32 %v2575, %v1700
    %v2592 = vadd.f32 %v2576, %v1705
    %v2593 = vadd.f32 %v2577, %v1710
    %v2594 = vadd.f32 %v2578, %v1715
    %v2595 = vadd.f32 %v2579, %v1720
    %v2596 = vadd.f32 %v2580, %v1725
    %v2597 = vadd.f32 %v2581, %v1730
    %v2598 = vadd.f32 %v2582, %v1735
    %v2599 = vadd.f32 %v2583, %v1740
    %v2600 = vadd.f32 %v2584, %v1745
    %v2601 = vadd.f32 %v2585, %v1750
    %v2602 = vadd.f32 %v2586, %v1755
    %v2603 = vadd.f32 %v2587, %v1760
    %v2604 = vadd.f32 %v2588, %v1765
    %v2605 = vmax.f32 %v2589, 0.0
    %v2606 = vmax.f32 %v2590, 0.0
    %v2607 = vmax.f32 %v2591, 0.0
    %v2608 = vmax.f32 %v2592, 0.0
    %v2609 = vmax.f32 %v2593, 0.0
    %v2610 = vmax.f32 %v2594, 0.0
    %v2611 = vmax.f32 %v2595, 0.0
    %v2612 = vmax.f32 %v2596, 0.0
    %v2613 = vmax.f32 %v2597, 0.0
    %v2614 = vmax.f32 %v2598, 0.0
    %v2615 = vmax.f32 %v2599, 0.0
    %v2616 = vmax.f32 %v2600, 0.0
    %v2617 = vmax.f32 %v2601, 0.0
    %v2618 = vmax.f32 %v2602, 0.0
    %v2619 = vmax.f32 %v2603, 0.0
    %v2620 = vmax.f32 %v2604, 0.0
    %v2621 = vmul.f32 %v2605, %v1802
    %v2622 = vmul.f32 %v2606, %v1807
    %v2623 = vmul.f32 %v2607, %v1812
    %v2624 = vmul.f32 %v2608, %v1817
    %v2625 = vmul.f32 %v2609, %v1822
    %v2626 = vmul.f32 %v2610, %v1827
    %v2627 = vmul.f32 %v2611, %v1832
    %v2628 = vmul.f32 %v2612, %v1837
    %v2629 = vmul.f32 %v2613, %v1842
    %v2630 = vmul.f32 %v2614, %v1847
    %v2631 = vmul.f32 %v2615, %v1852
    %v2632 = vmul.f32 %v2616, %v1857
    %v2633 = vmul.f32 %v2617, %v1862
    %v2634 = vmul.f32 %v2618, %v1867
    %v2635 = vmul.f32 %v2619, %v1872
    %v2636 = vmul.f32 %v2620, %v1877
    %v2637 = vsel %vm1895, %v2621, 0.0
    %v2638 = vsel %vm1895, %v2622, 0.0
    %v2639 = vadd.f32 %v2637, %v2638
    %v2640 = vsel %vm1895, %v2623, 0.0
    %v2641 = vadd.f32 %v2639, %v2640
    %v2642 = vsel %vm1895, %v2624, 0.0
    %v2643 = vadd.f32 %v2641, %v2642
    %v2644 = vsel %vm1895, %v2625, 0.0
    %v2645 = vadd.f32 %v2643, %v2644
    %v2646 = vsel %vm1895, %v2626, 0.0
    %v2647 = vadd.f32 %v2645, %v2646
    %v2648 = vsel %vm1895, %v2627, 0.0
    %v2649 = vadd.f32 %v2647, %v2648
    %v2650 = vsel %vm1895, %v2628, 0.0
    %v2651 = vadd.f32 %v2649, %v2650
    %v2652 = vsel %vm1895, %v2629, 0.0
    %v2653 = vadd.f32 %v2651, %v2652
    %v2654 = vsel %vm1895, %v2630, 0.0
    %v2655 = vadd.f32 %v2653, %v2654
    %v2656 = vsel %vm1895, %v2631, 0.0
    %v2657 = vadd.f32 %v2655, %v2656
    %v2658 = vsel %vm1895, %v2632, 0.0
    %v2659 = vadd.f32 %v2657, %v2658
    %v2660 = vsel %vm1895, %v2633, 0.0
    %v2661 = vadd.f32 %v2659, %v2660
    %v2662 = vsel %vm1895, %v2634, 0.0
    %v2663 = vadd.f32 %v2661, %v2662
    %v2664 = vsel %vm1895, %v2635, 0.0
    %v2665 = vadd.f32 %v2663, %v2664
    %v2666 = vsel %vm1895, %v2636, 0.0
    %v2667 = vadd.f32 %v2665, %v2666
    %v2668 = vrot.slane %v2667, 4
    %v2669 = vadd.f32 %v2667, %v2668
    %v2670 = vrot.slane %v2669, 2
    %v2671 = vadd.f32 %v2669, %v2670
    %v2672 = vrot.slane %v2671, 1
    %v2673 = vadd.f32 %v2671, %v2672
    %v2674 = vadd.f32 %v2673, %v1933
    %v2675 = vmax.f32 %v2674, 0.0
    %v2676 = vmul.f32 %v2675, %v241
    %v2677 = vsel %vm1937, %v2676, 0.0
    %2678 = vadd.xlane.f32.xlu0 %v2677
    %v2679 = vpop.xlane.xlu0 %2678
    %v2680 = vadd.f32 %v2679, %v1941
    %2681 = vst.msk [vmem:[%s10 + $0x1] sm:$0x1] %vm1943, %v2680
    %s2682 = scalar_lea.vmem %s0, 1024
    %v2683 = vld [vmem:[%s2682] sm:$0xff]
    %v2684 = vld [vmem:[%s2682 + $0x8] sm:$0xff]
    %v2685 = vld [vmem:[%s2682 + $0x10] sm:$0xff]
    %v2686 = vld [vmem:[%s2682 + $0x18] sm:$0xff]
    %v2687 = vld [vmem:[%s2682 + $0x20] sm:$0xff]
    %v2688 = vld [vmem:[%s2682 + $0x28] sm:$0xff]
    %v2689 = vld [vmem:[%s2682 + $0x30] sm:$0xff]
    %v2690 = vld [vmem:[%s2682 + $0x38] sm:$0xff]
    %v2691 = vld [vmem:[%s2682 + $0x40] sm:$0xff]
    %v2692 = vld [vmem:[%s2682 + $0x48] sm:$0xff]
    %v2693 = vld [vmem:[%s2682 + $0x50] sm:$0xff]
    %v2694 = vld [vmem:[%s2682 + $0x58] sm:$0xff]
    %v2695 = vld [vmem:[%s2682 + $0x60] sm:$0xff]
    %v2696 = vld [vmem:[%s2682 + $0x68] sm:$0xff]
    %v2697 = vld [vmem:[%s2682 + $0x70] sm:$0xff]
    %v2698 = vld [vmem:[%s2682 + $0x78] sm:$0xff]
    %v2699 = vld [vmem:[%s2682 + $0x80] sm:$0xff]
    %v2700 = vld [vmem:[%s2682 + $0x88] sm:$0xff]
    %v2701 = vld [vmem:[%s2682 + $0x90] sm:$0xff]
    %v2702 = vld [vmem:[%s2682 + $0x98] sm:$0xff]
    %v2703 = vld [vmem:[%s2682 + $0xa0] sm:$0xff]
    %v2704 = vld [vmem:[%s2682 + $0xa8] sm:$0xff]
    %v2705 = vld [vmem:[%s2682 + $0xb0] sm:$0xff]
    %v2706 = vld [vmem:[%s2682 + $0xb8] sm:$0xff]
    %v2707 = vld [vmem:[%s2682 + $0xc0] sm:$0xff]
    %v2708 = vld [vmem:[%s2682 + $0xc8] sm:$0xff]
    %v2709 = vld [vmem:[%s2682 + $0xd0] sm:$0xff]
    %v2710 = vld [vmem:[%s2682 + $0xd8] sm:$0xff]
    %v2711 = vld [vmem:[%s2682 + $0xe0] sm:$0xff]
    %v2712 = vld [vmem:[%s2682 + $0xe8] sm:$0xff]
    %v2713 = vld [vmem:[%s2682 + $0xf0] sm:$0xff]
    %v2714 = vld [vmem:[%s2682 + $0xf8] sm:$0xff]
    %v2715 = vld [vmem:[%s2682 + $0x100] sm:$0xff]
    %v2716 = vld [vmem:[%s2682 + $0x108] sm:$0xff]
    %v2717 = vld [vmem:[%s2682 + $0x110] sm:$0xff]
    %v2718 = vld [vmem:[%s2682 + $0x118] sm:$0xff]
    %v2719 = vld [vmem:[%s2682 + $0x120] sm:$0xff]
    %v2720 = vld [vmem:[%s2682 + $0x128] sm:$0xff]
    %v2721 = vld [vmem:[%s2682 + $0x130] sm:$0xff]
    %v2722 = vld [vmem:[%s2682 + $0x138] sm:$0xff]
    %v2723 = vld [vmem:[%s2682 + $0x140] sm:$0xff]
    %v2724 = vld [vmem:[%s2682 + $0x148] sm:$0xff]
    %v2725 = vld [vmem:[%s2682 + $0x150] sm:$0xff]
    %v2726 = vld [vmem:[%s2682 + $0x158] sm:$0xff]
    %v2727 = vld [vmem:[%s2682 + $0x160] sm:$0xff]
    %v2728 = vld [vmem:[%s2682 + $0x168] sm:$0xff]
    %v2729 = vld [vmem:[%s2682 + $0x170] sm:$0xff]
    %v2730 = vld [vmem:[%s2682 + $0x178] sm:$0xff]
    %v2731 = vld [vmem:[%s2682 + $0x180] sm:$0xff]
    %v2732 = vld [vmem:[%s2682 + $0x188] sm:$0xff]
    %v2733 = vld [vmem:[%s2682 + $0x190] sm:$0xff]
    %v2734 = vld [vmem:[%s2682 + $0x198] sm:$0xff]
    %v2735 = vld [vmem:[%s2682 + $0x1a0] sm:$0xff]
    %v2736 = vld [vmem:[%s2682 + $0x1a8] sm:$0xff]
    %v2737 = vld [vmem:[%s2682 + $0x1b0] sm:$0xff]
    %v2738 = vld [vmem:[%s2682 + $0x1b8] sm:$0xff]
    %v2739 = vld [vmem:[%s2682 + $0x1c0] sm:$0xff]
    %v2740 = vld [vmem:[%s2682 + $0x1c8] sm:$0xff]
    %v2741 = vld [vmem:[%s2682 + $0x1d0] sm:$0xff]
    %v2742 = vld [vmem:[%s2682 + $0x1d8] sm:$0xff]
    %v2743 = vld [vmem:[%s2682 + $0x1e0] sm:$0xff]
    %v2744 = vld [vmem:[%s2682 + $0x1e8] sm:$0xff]
    %v2745 = vld [vmem:[%s2682 + $0x1f0] sm:$0xff]
    %v2746 = vld [vmem:[%s2682 + $0x1f8] sm:$0xff]
    %v2747 = vpack.c.bf16 %v2684, %v2683
    %v2748 = vpack.c.bf16 %v2686, %v2685
    %v2749 = vpack.c.bf16 %v2688, %v2687
    %v2750 = vpack.c.bf16 %v2690, %v2689
    %v2751 = vpack.c.bf16 %v2692, %v2691
    %v2752 = vpack.c.bf16 %v2694, %v2693
    %v2753 = vpack.c.bf16 %v2696, %v2695
    %v2754 = vpack.c.bf16 %v2698, %v2697
    %v2755 = vpack.c.bf16 %v2700, %v2699
    %v2756 = vpack.c.bf16 %v2702, %v2701
    %v2757 = vpack.c.bf16 %v2704, %v2703
    %v2758 = vpack.c.bf16 %v2706, %v2705
    %v2759 = vpack.c.bf16 %v2708, %v2707
    %v2760 = vpack.c.bf16 %v2710, %v2709
    %v2761 = vpack.c.bf16 %v2712, %v2711
    %v2762 = vpack.c.bf16 %v2714, %v2713
    %v2763 = vpack.c.bf16 %v2716, %v2715
    %v2764 = vpack.c.bf16 %v2718, %v2717
    %v2765 = vpack.c.bf16 %v2720, %v2719
    %v2766 = vpack.c.bf16 %v2722, %v2721
    %v2767 = vpack.c.bf16 %v2724, %v2723
    %v2768 = vpack.c.bf16 %v2726, %v2725
    %v2769 = vpack.c.bf16 %v2728, %v2727
    %v2770 = vpack.c.bf16 %v2730, %v2729
    %v2771 = vpack.c.bf16 %v2732, %v2731
    %v2772 = vpack.c.bf16 %v2734, %v2733
    %v2773 = vpack.c.bf16 %v2736, %v2735
    %v2774 = vpack.c.bf16 %v2738, %v2737
    %v2775 = vpack.c.bf16 %v2740, %v2739
    %v2776 = vpack.c.bf16 %v2742, %v2741
    %v2777 = vpack.c.bf16 %v2744, %v2743
    %v2778 = vpack.c.bf16 %v2746, %v2745
    %2779 = vmatprep.subr.bf16.mxu0 0
    %2780 = vmatpush1.bf16.msra.mxu0 %v2747
    %2781 = vmatprep.subr.bf16.mxu0 0
    %2782 = vmatpush1.bf16.msra.mxu0 %v2748
    %2783 = vmatprep.subr.bf16.mxu0 0
    %2784 = vmatpush1.bf16.msra.mxu0 %v2749
    %2785 = vmatprep.subr.bf16.mxu0 0
    %2786 = vmatpush1.bf16.msra.mxu0 %v2750
    %2787 = vmatprep.subr.bf16.mxu0 0
    %2788 = vmatpush1.bf16.msra.mxu0 %v2751
    %2789 = vmatprep.subr.bf16.mxu0 0
    %2790 = vmatpush1.bf16.msra.mxu0 %v2752
    %2791 = vmatprep.subr.bf16.mxu0 0
    %2792 = vmatpush1.bf16.msra.mxu0 %v2753
    %2793 = vmatprep.subr.bf16.mxu0 0
    %2794 = vmatpush1.bf16.msra.mxu0 %v2754
    %2795 = vmatprep.subr.bf16.mxu0 0
    %2796 = vmatpush1.bf16.msra.mxu0 %v2755
    %2797 = vmatprep.subr.bf16.mxu0 0
    %2798 = vmatpush1.bf16.msra.mxu0 %v2756
    %2799 = vmatprep.subr.bf16.mxu0 0
    %2800 = vmatpush1.bf16.msra.mxu0 %v2757
    %2801 = vmatprep.subr.bf16.mxu0 0
    %2802 = vmatpush1.bf16.msra.mxu0 %v2758
    %2803 = vmatprep.subr.bf16.mxu0 0
    %2804 = vmatpush1.bf16.msra.mxu0 %v2759
    %2805 = vmatprep.subr.bf16.mxu0 0
    %2806 = vmatpush1.bf16.msra.mxu0 %v2760
    %2807 = vmatprep.subr.bf16.mxu0 0
    %2808 = vmatpush1.bf16.msra.mxu0 %v2761
    %2809 = vmatprep.subr.bf16.mxu0 0
    %2810 = vmatpush1.bf16.msra.mxu0 %v2762
    %2811 = vmatprep.mubr.bf16.mxu0 %v533
    %2812 = vmatmul.mubr.bf16.gmra.mrb[0].mxu0 %v532
    %v2813 = vpop.f32.mrb[0].mxu0
    %v2814 = vadd.f32 0.0, %v2813
    %v2815 = vpop.f32.mrb[0].mxu0
    %v2816 = vpop.f32.mrb[0].mxu0
    %v2817 = vadd.f32 0.0, %v2816
    %v2818 = vpop.f32.mrb[0].mxu0
    %2819 = vmatprep.mubr.bf16.mxu0 %v537
    %2820 = vmatmul.mubr.bf16.gmra.mrb[0].mxu0 %v536
    %v2821 = vpop.f32.mrb[0].mxu0
    %v2822 = vadd.f32 0.0, %v2821
    %v2823 = vpop.f32.mrb[0].mxu0
    %v2824 = vpop.f32.mrb[0].mxu0
    %v2825 = vadd.f32 0.0, %v2824
    %v2826 = vpop.f32.mrb[0].mxu0
    %2827 = vmatprep.mubr.bf16.mxu0 %v541
    %2828 = vmatmul.mubr.bf16.gmra.mrb[0].mxu0 %v540
    %v2829 = vpop.f32.mrb[0].mxu0
    %v2830 = vadd.f32 0.0, %v2829
    %v2831 = vpop.f32.mrb[0].mxu0
    %v2832 = vpop.f32.mrb[0].mxu0
    %v2833 = vadd.f32 0.0, %v2832
    %v2834 = vpop.f32.mrb[0].mxu0
    %2835 = vmatprep.mubr.bf16.mxu0 %v545
    %2836 = vmatmul.mubr.bf16.gmra.mrb[0].mxu0 %v544
    %v2837 = vpop.f32.mrb[0].mxu0
    %v2838 = vadd.f32 0.0, %v2837
    %v2839 = vpop.f32.mrb[0].mxu0
    %v2840 = vpop.f32.mrb[0].mxu0
    %v2841 = vadd.f32 0.0, %v2840
    %v2842 = vpop.f32.mrb[0].mxu0
    %2843 = vmatprep.mubr.bf16.mxu0 %v549
    %2844 = vmatmul.mubr.bf16.gmra.mrb[0].mxu0 %v548
    %v2845 = vpop.f32.mrb[0].mxu0
    %v2846 = vadd.f32 0.0, %v2845
    %v2847 = vpop.f32.mrb[0].mxu0
    %v2848 = vpop.f32.mrb[0].mxu0
    %v2849 = vadd.f32 0.0, %v2848
    %v2850 = vpop.f32.mrb[0].mxu0
    %2851 = vmatprep.mubr.bf16.mxu0 %v553
    %2852 = vmatmul.mubr.bf16.gmra.mrb[0].mxu0 %v552
    %v2853 = vpop.f32.mrb[0].mxu0
    %v2854 = vadd.f32 0.0, %v2853
    %v2855 = vpop.f32.mrb[0].mxu0
    %v2856 = vpop.f32.mrb[0].mxu0
    %v2857 = vadd.f32 0.0, %v2856
    %v2858 = vpop.f32.mrb[0].mxu0
    %2859 = vmatprep.mubr.bf16.mxu0 %v557
    %2860 = vmatmul.mubr.bf16.gmra.mrb[0].mxu0 %v556
    %v2861 = vpop.f32.mrb[0].mxu0
    %v2862 = vadd.f32 0.0, %v2861
    %v2863 = vpop.f32.mrb[0].mxu0
    %v2864 = vpop.f32.mrb[0].mxu0
    %v2865 = vadd.f32 0.0, %v2864
    %v2866 = vpop.f32.mrb[0].mxu0
    %2867 = vmatprep.mubr.bf16.mxu0 %v561
    %2868 = vmatmul.mubr.bf16.gmra.mrb[0].mxu0 %v560
    %v2869 = vpop.f32.mrb[0].mxu0
    %v2870 = vadd.f32 0.0, %v2869
    %v2871 = vpop.f32.mrb[0].mxu0
    %v2872 = vpop.f32.mrb[0].mxu0
    %v2873 = vadd.f32 0.0, %v2872
    %v2874 = vpop.f32.mrb[0].mxu0
    %2875 = vmatprep.mubr.bf16.mxu0 %v565
    %2876 = vmatmul.mubr.bf16.gmra.mrb[0].mxu0 %v564
    %v2877 = vpop.f32.mrb[0].mxu0
    %v2878 = vadd.f32 0.0, %v2877
    %v2879 = vpop.f32.mrb[0].mxu0
    %v2880 = vpop.f32.mrb[0].mxu0
    %v2881 = vadd.f32 0.0, %v2880
    %v2882 = vpop.f32.mrb[0].mxu0
    %2883 = vmatprep.mubr.bf16.mxu0 %v569
    %2884 = vmatmul.mubr.bf16.gmra.mrb[0].mxu0 %v568
    %v2885 = vpop.f32.mrb[0].mxu0
    %v2886 = vadd.f32 0.0, %v2885
    %v2887 = vpop.f32.mrb[0].mxu0
    %v2888 = vpop.f32.mrb[0].mxu0
    %v2889 = vadd.f32 0.0, %v2888
    %v2890 = vpop.f32.mrb[0].mxu0
    %2891 = vmatprep.mubr.bf16.mxu0 %v573
    %2892 = vmatmul.mubr.bf16.gmra.mrb[0].mxu0 %v572
    %v2893 = vpop.f32.mrb[0].mxu0
    %v2894 = vadd.f32 0.0, %v2893
    %v2895 = vpop.f32.mrb[0].mxu0
    %v2896 = vpop.f32.mrb[0].mxu0
    %v2897 = vadd.f32 0.0, %v2896
    %v2898 = vpop.f32.mrb[0].mxu0
    %2899 = vmatprep.mubr.bf16.mxu0 %v577
    %2900 = vmatmul.mubr.bf16.gmra.mrb[0].mxu0 %v576
    %v2901 = vpop.f32.mrb[0].mxu0
    %v2902 = vadd.f32 0.0, %v2901
    %v2903 = vpop.f32.mrb[0].mxu0
    %v2904 = vpop.f32.mrb[0].mxu0
    %v2905 = vadd.f32 0.0, %v2904
    %v2906 = vpop.f32.mrb[0].mxu0
    %2907 = vmatprep.mubr.bf16.mxu0 %v581
    %2908 = vmatmul.mubr.bf16.gmra.mrb[0].mxu0 %v580
    %v2909 = vpop.f32.mrb[0].mxu0
    %v2910 = vadd.f32 0.0, %v2909
    %v2911 = vpop.f32.mrb[0].mxu0
    %v2912 = vpop.f32.mrb[0].mxu0
    %v2913 = vadd.f32 0.0, %v2912
    %v2914 = vpop.f32.mrb[0].mxu0
    %2915 = vmatprep.mubr.bf16.mxu0 %v585
    %2916 = vmatmul.mubr.bf16.gmra.mrb[0].mxu0 %v584
    %v2917 = vpop.f32.mrb[0].mxu0
    %v2918 = vadd.f32 0.0, %v2917
    %v2919 = vpop.f32.mrb[0].mxu0
    %v2920 = vpop.f32.mrb[0].mxu0
    %v2921 = vadd.f32 0.0, %v2920
    %v2922 = vpop.f32.mrb[0].mxu0
    %2923 = vmatprep.mubr.bf16.mxu0 %v589
    %2924 = vmatmul.mubr.bf16.gmra.mrb[0].mxu0 %v588
    %v2925 = vpop.f32.mrb[0].mxu0
    %v2926 = vadd.f32 0.0, %v2925
    %v2927 = vpop.f32.mrb[0].mxu0
    %v2928 = vpop.f32.mrb[0].mxu0
    %v2929 = vadd.f32 0.0, %v2928
    %v2930 = vpop.f32.mrb[0].mxu0
    %2931 = vmatprep.mubr.bf16.mxu0 %v593
    %2932 = vmatmul.mubr.bf16.gmra.mrb[0].mxu0 %v592
    %v2933 = vpop.f32.mrb[0].mxu0
    %v2934 = vadd.f32 0.0, %v2933
    %v2935 = vpop.f32.mrb[0].mxu0
    %v2936 = vpop.f32.mrb[0].mxu0
    %v2937 = vadd.f32 0.0, %v2936
    %v2938 = vpop.f32.mrb[0].mxu0
    %2939 = vdwg.mxu0
    %2940 = vmatprep.subr.bf16.mxu0 0
    %2941 = vmatpush1.bf16.msra.mxu0 %v2763
    %2942 = vmatprep.subr.bf16.mxu0 0
    %2943 = vmatpush1.bf16.msra.mxu0 %v2764
    %2944 = vmatprep.subr.bf16.mxu0 0
    %2945 = vmatpush1.bf16.msra.mxu0 %v2765
    %2946 = vmatprep.subr.bf16.mxu0 0
    %2947 = vmatpush1.bf16.msra.mxu0 %v2766
    %2948 = vmatprep.subr.bf16.mxu0 0
    %2949 = vmatpush1.bf16.msra.mxu0 %v2767
    %2950 = vmatprep.subr.bf16.mxu0 0
    %2951 = vmatpush1.bf16.msra.mxu0 %v2768
    %2952 = vmatprep.subr.bf16.mxu0 0
    %2953 = vmatpush1.bf16.msra.mxu0 %v2769
    %2954 = vmatprep.subr.bf16.mxu0 0
    %2955 = vmatpush1.bf16.msra.mxu0 %v2770
    %2956 = vmatprep.subr.bf16.mxu0 0
    %2957 = vmatpush1.bf16.msra.mxu0 %v2771
    %2958 = vmatprep.subr.bf16.mxu0 0
    %2959 = vmatpush1.bf16.msra.mxu0 %v2772
    %2960 = vmatprep.subr.bf16.mxu0 0
    %2961 = vmatpush1.bf16.msra.mxu0 %v2773
    %2962 = vmatprep.subr.bf16.mxu0 0
    %2963 = vmatpush1.bf16.msra.mxu0 %v2774
    %2964 = vmatprep.subr.bf16.mxu0 0
    %2965 = vmatpush1.bf16.msra.mxu0 %v2775
    %2966 = vmatprep.subr.bf16.mxu0 0
    %2967 = vmatpush1.bf16.msra.mxu0 %v2776
    %2968 = vmatprep.subr.bf16.mxu0 0
    %2969 = vmatpush1.bf16.msra.mxu0 %v2777
    %2970 = vmatprep.subr.bf16.mxu0 0
    %2971 = vmatpush1.bf16.msra.mxu0 %v2778
    %2972 = vmatprep.mubr.bf16.mxu0 %v535
    %2973 = vmatmul.mubr.bf16.gmra.mrb[0].mxu0 %v534
    %v2974 = vpop.f32.mrb[0].mxu0
    %v2975 = vadd.f32 %v2814, %v2974
    %v2976 = vpop.f32.mrb[0].mxu0
    %v2977 = vpop.f32.mrb[0].mxu0
    %v2978 = vadd.f32 %v2817, %v2977
    %v2979 = vpop.f32.mrb[0].mxu0
    %2980 = vmatprep.mubr.bf16.mxu0 %v539
    %2981 = vmatmul.mubr.bf16.gmra.mrb[0].mxu0 %v538
    %v2982 = vpop.f32.mrb[0].mxu0
    %v2983 = vadd.f32 %v2822, %v2982
    %v2984 = vpop.f32.mrb[0].mxu0
    %v2985 = vpop.f32.mrb[0].mxu0
    %v2986 = vadd.f32 %v2825, %v2985
    %v2987 = vpop.f32.mrb[0].mxu0
    %2988 = vmatprep.mubr.bf16.mxu0 %v543
    %2989 = vmatmul.mubr.bf16.gmra.mrb[0].mxu0 %v542
    %v2990 = vpop.f32.mrb[0].mxu0
    %v2991 = vadd.f32 %v2830, %v2990
    %v2992 = vpop.f32.mrb[0].mxu0
    %v2993 = vpop.f32.mrb[0].mxu0
    %v2994 = vadd.f32 %v2833, %v2993
    %v2995 = vpop.f32.mrb[0].mxu0
    %2996 = vmatprep.mubr.bf16.mxu0 %v547
    %2997 = vmatmul.mubr.bf16.gmra.mrb[0].mxu0 %v546
    %v2998 = vpop.f32.mrb[0].mxu0
    %v2999 = vadd.f32 %v2838, %v2998
    %v3000 = vpop.f32.mrb[0].mxu0
    %v3001 = vpop.f32.mrb[0].mxu0
    %v3002 = vadd.f32 %v2841, %v3001
    %v3003 = vpop.f32.mrb[0].mxu0
    %3004 = vmatprep.mubr.bf16.mxu0 %v551
    %3005 = vmatmul.mubr.bf16.gmra.mrb[0].mxu0 %v550
    %v3006 = vpop.f32.mrb[0].mxu0
    %v3007 = vadd.f32 %v2846, %v3006
    %v3008 = vpop.f32.mrb[0].mxu0
    %v3009 = vpop.f32.mrb[0].mxu0
    %v3010 = vadd.f32 %v2849, %v3009
    %v3011 = vpop.f32.mrb[0].mxu0
    %3012 = vmatprep.mubr.bf16.mxu0 %v555
    %3013 = vmatmul.mubr.bf16.gmra.mrb[0].mxu0 %v554
    %v3014 = vpop.f32.mrb[0].mxu0
    %v3015 = vadd.f32 %v2854, %v3014
    %v3016 = vpop.f32.mrb[0].mxu0
    %v3017 = vpop.f32.mrb[0].mxu0
    %v3018 = vadd.f32 %v2857, %v3017
    %v3019 = vpop.f32.mrb[0].mxu0
    %3020 = vmatprep.mubr.bf16.mxu0 %v559
    %3021 = vmatmul.mubr.bf16.gmra.mrb[0].mxu0 %v558
    %v3022 = vpop.f32.mrb[0].mxu0
    %v3023 = vadd.f32 %v2862, %v3022
    %v3024 = vpop.f32.mrb[0].mxu0
    %v3025 = vpop.f32.mrb[0].mxu0
    %v3026 = vadd.f32 %v2865, %v3025
    %v3027 = vpop.f32.mrb[0].mxu0
    %3028 = vmatprep.mubr.bf16.mxu0 %v563
    %3029 = vmatmul.mubr.bf16.gmra.mrb[0].mxu0 %v562
    %v3030 = vpop.f32.mrb[0].mxu0
    %v3031 = vadd.f32 %v2870, %v3030
    %v3032 = vpop.f32.mrb[0].mxu0
    %v3033 = vpop.f32.mrb[0].mxu0
    %v3034 = vadd.f32 %v2873, %v3033
    %v3035 = vpop.f32.mrb[0].mxu0
    %3036 = vmatprep.mubr.bf16.mxu0 %v567
    %3037 = vmatmul.mubr.bf16.gmra.mrb[0].mxu0 %v566
    %v3038 = vpop.f32.mrb[0].mxu0
    %v3039 = vadd.f32 %v2878, %v3038
    %v3040 = vpop.f32.mrb[0].mxu0
    %v3041 = vpop.f32.mrb[0].mxu0
    %v3042 = vadd.f32 %v2881, %v3041
    %v3043 = vpop.f32.mrb[0].mxu0
    %3044 = vmatprep.mubr.bf16.mxu0 %v571
    %3045 = vmatmul.mubr.bf16.gmra.mrb[0].mxu0 %v570
    %v3046 = vpop.f32.mrb[0].mxu0
    %v3047 = vadd.f32 %v2886, %v3046
    %v3048 = vpop.f32.mrb[0].mxu0
    %v3049 = vpop.f32.mrb[0].mxu0
    %v3050 = vadd.f32 %v2889, %v3049
    %v3051 = vpop.f32.mrb[0].mxu0
    %3052 = vmatprep.mubr.bf16.mxu0 %v575
    %3053 = vmatmul.mubr.bf16.gmra.mrb[0].mxu0 %v574
    %v3054 = vpop.f32.mrb[0].mxu0
    %v3055 = vadd.f32 %v2894, %v3054
    %v3056 = vpop.f32.mrb[0].mxu0
    %v3057 = vpop.f32.mrb[0].mxu0
    %v3058 = vadd.f32 %v2897, %v3057
    %v3059 = vpop.f32.mrb[0].mxu0
    %3060 = vmatprep.mubr.bf16.mxu0 %v579
    %3061 = vmatmul.mubr.bf16.gmra.mrb[0].mxu0 %v578
    %v3062 = vpop.f32.mrb[0].mxu0
    %v3063 = vadd.f32 %v2902, %v3062
    %v3064 = vpop.f32.mrb[0].mxu0
    %v3065 = vpop.f32.mrb[0].mxu0
    %v3066 = vadd.f32 %v2905, %v3065
    %v3067 = vpop.f32.mrb[0].mxu0
    %3068 = vmatprep.mubr.bf16.mxu0 %v583
    %3069 = vmatmul.mubr.bf16.gmra.mrb[0].mxu0 %v582
    %v3070 = vpop.f32.mrb[0].mxu0
    %v3071 = vadd.f32 %v2910, %v3070
    %v3072 = vpop.f32.mrb[0].mxu0
    %v3073 = vpop.f32.mrb[0].mxu0
    %v3074 = vadd.f32 %v2913, %v3073
    %v3075 = vpop.f32.mrb[0].mxu0
    %3076 = vmatprep.mubr.bf16.mxu0 %v587
    %3077 = vmatmul.mubr.bf16.gmra.mrb[0].mxu0 %v586
    %v3078 = vpop.f32.mrb[0].mxu0
    %v3079 = vadd.f32 %v2918, %v3078
    %v3080 = vpop.f32.mrb[0].mxu0
    %v3081 = vpop.f32.mrb[0].mxu0
    %v3082 = vadd.f32 %v2921, %v3081
    %v3083 = vpop.f32.mrb[0].mxu0
    %3084 = vmatprep.mubr.bf16.mxu0 %v591
    %3085 = vmatmul.mubr.bf16.gmra.mrb[0].mxu0 %v590
    %v3086 = vpop.f32.mrb[0].mxu0
    %v3087 = vadd.f32 %v2926, %v3086
    %v3088 = vpop.f32.mrb[0].mxu0
    %v3089 = vpop.f32.mrb[0].mxu0
    %v3090 = vadd.f32 %v2929, %v3089
    %v3091 = vpop.f32.mrb[0].mxu0
    %3092 = vmatprep.mubr.bf16.mxu0 %v595
    %3093 = vmatmul.mubr.bf16.gmra.mrb[0].mxu0 %v594
    %v3094 = vpop.f32.mrb[0].mxu0
    %v3095 = vadd.f32 %v2934, %v3094
    %v3096 = vpop.f32.mrb[0].mxu0
    %v3097 = vpop.f32.mrb[0].mxu0
    %v3098 = vadd.f32 %v2937, %v3097
    %v3099 = vpop.f32.mrb[0].mxu0
    %3100 = vdwg.mxu0
    %v3101 = vmul.f32 %v2975, %v985
    %v3102 = vmul.f32 %v2978, %v990
    %v3103 = vmul.f32 %v2983, %v995
    %v3104 = vmul.f32 %v2986, %v1000
    %v3105 = vmul.f32 %v2991, %v1005
    %v3106 = vmul.f32 %v2994, %v1010
    %v3107 = vmul.f32 %v2999, %v1015
    %v3108 = vmul.f32 %v3002, %v1020
    %v3109 = vmul.f32 %v3007, %v1025
    %v3110 = vmul.f32 %v3010, %v1030
    %v3111 = vmul.f32 %v3015, %v1035
    %v3112 = vmul.f32 %v3018, %v1040
    %v3113 = vmul.f32 %v3023, %v1045
    %v3114 = vmul.f32 %v3026, %v1050
    %v3115 = vmul.f32 %v3031, %v1055
    %v3116 = vmul.f32 %v3034, %v1060
    %v3117 = vmul.f32 %v3039, %v1065
    %v3118 = vmul.f32 %v3042, %v1070
    %v3119 = vmul.f32 %v3047, %v1075
    %v3120 = vmul.f32 %v3050, %v1080
    %v3121 = vmul.f32 %v3055, %v1085
    %v3122 = vmul.f32 %v3058, %v1090
    %v3123 = vmul.f32 %v3063, %v1095
    %v3124 = vmul.f32 %v3066, %v1100
    %v3125 = vmul.f32 %v3071, %v1105
    %v3126 = vmul.f32 %v3074, %v1110
    %v3127 = vmul.f32 %v3079, %v1115
    %v3128 = vmul.f32 %v3082, %v1120
    %v3129 = vmul.f32 %v3087, %v1125
    %v3130 = vmul.f32 %v3090, %v1130
    %v3131 = vmul.f32 %v3095, %v1135
    %v3132 = vmul.f32 %v3098, %v1140
    %v3133 = vadd.f32 %v3101, %v1177
    %v3134 = vadd.f32 %v3102, %v1182
    %v3135 = vadd.f32 %v3103, %v1187
    %v3136 = vadd.f32 %v3104, %v1192
    %v3137 = vadd.f32 %v3105, %v1197
    %v3138 = vadd.f32 %v3106, %v1202
    %v3139 = vadd.f32 %v3107, %v1207
    %v3140 = vadd.f32 %v3108, %v1212
    %v3141 = vadd.f32 %v3109, %v1217
    %v3142 = vadd.f32 %v3110, %v1222
    %v3143 = vadd.f32 %v3111, %v1227
    %v3144 = vadd.f32 %v3112, %v1232
    %v3145 = vadd.f32 %v3113, %v1237
    %v3146 = vadd.f32 %v3114, %v1242
    %v3147 = vadd.f32 %v3115, %v1247
    %v3148 = vadd.f32 %v3116, %v1252
    %v3149 = vadd.f32 %v3117, %v1257
    %v3150 = vadd.f32 %v3118, %v1262
    %v3151 = vadd.f32 %v3119, %v1267
    %v3152 = vadd.f32 %v3120, %v1272
    %v3153 = vadd.f32 %v3121, %v1277
    %v3154 = vadd.f32 %v3122, %v1282
    %v3155 = vadd.f32 %v3123, %v1287
    %v3156 = vadd.f32 %v3124, %v1292
    %v3157 = vadd.f32 %v3125, %v1297
    %v3158 = vadd.f32 %v3126, %v1302
    %v3159 = vadd.f32 %v3127, %v1307
    %v3160 = vadd.f32 %v3128, %v1312
    %v3161 = vadd.f32 %v3129, %v1317
    %v3162 = vadd.f32 %v3130, %v1322
    %v3163 = vadd.f32 %v3131, %v1327
    %v3164 = vadd.f32 %v3132, %v1332
    %v3165 = vmax.f32 %v3133, 0.0
    %v3166 = vmax.f32 %v3134, 0.0
    %v3167 = vmax.f32 %v3135, 0.0
    %v3168 = vmax.f32 %v3136, 0.0
    %v3169 = vmax.f32 %v3137, 0.0
    %v3170 = vmax.f32 %v3138, 0.0
    %v3171 = vmax.f32 %v3139, 0.0
    %v3172 = vmax.f32 %v3140, 0.0
    %v3173 = vmax.f32 %v3141, 0.0
    %v3174 = vmax.f32 %v3142, 0.0
    %v3175 = vmax.f32 %v3143, 0.0
    %v3176 = vmax.f32 %v3144, 0.0
    %v3177 = vmax.f32 %v3145, 0.0
    %v3178 = vmax.f32 %v3146, 0.0
    %v3179 = vmax.f32 %v3147, 0.0
    %v3180 = vmax.f32 %v3148, 0.0
    %v3181 = vmax.f32 %v3149, 0.0
    %v3182 = vmax.f32 %v3150, 0.0
    %v3183 = vmax.f32 %v3151, 0.0
    %v3184 = vmax.f32 %v3152, 0.0
    %v3185 = vmax.f32 %v3153, 0.0
    %v3186 = vmax.f32 %v3154, 0.0
    %v3187 = vmax.f32 %v3155, 0.0
    %v3188 = vmax.f32 %v3156, 0.0
    %v3189 = vmax.f32 %v3157, 0.0
    %v3190 = vmax.f32 %v3158, 0.0
    %v3191 = vmax.f32 %v3159, 0.0
    %v3192 = vmax.f32 %v3160, 0.0
    %v3193 = vmax.f32 %v3161, 0.0
    %v3194 = vmax.f32 %v3162, 0.0
    %v3195 = vmax.f32 %v3163, 0.0
    %v3196 = vmax.f32 %v3164, 0.0
    %v3197 = vpack.c.bf16 %v3166, %v3165
    %v3198 = vpack.c.bf16 %v3168, %v3167
    %v3199 = vpack.c.bf16 %v3170, %v3169
    %v3200 = vpack.c.bf16 %v3172, %v3171
    %v3201 = vpack.c.bf16 %v3174, %v3173
    %v3202 = vpack.c.bf16 %v3176, %v3175
    %v3203 = vpack.c.bf16 %v3178, %v3177
    %v3204 = vpack.c.bf16 %v3180, %v3179
    %v3205 = vpack.c.bf16 %v3182, %v3181
    %v3206 = vpack.c.bf16 %v3184, %v3183
    %v3207 = vpack.c.bf16 %v3186, %v3185
    %v3208 = vpack.c.bf16 %v3188, %v3187
    %v3209 = vpack.c.bf16 %v3190, %v3189
    %v3210 = vpack.c.bf16 %v3192, %v3191
    %v3211 = vpack.c.bf16 %v3194, %v3193
    %v3212 = vpack.c.bf16 %v3196, %v3195
    %3213 = vmatprep.subr.bf16.mxu0 0
    %3214 = vmatpush1.bf16.msra.mxu0 %v3197
    %3215 = vmatprep.subr.bf16.mxu0 0
    %3216 = vmatpush1.bf16.msra.mxu0 %v3198
    %3217 = vmatprep.subr.bf16.mxu0 0
    %3218 = vmatpush1.bf16.msra.mxu0 %v3199
    %3219 = vmatprep.subr.bf16.mxu0 0
    %3220 = vmatpush1.bf16.msra.mxu0 %v3200
    %3221 = vmatprep.subr.bf16.mxu0 0
    %3222 = vmatpush1.bf16.msra.mxu0 %v3201
    %3223 = vmatprep.subr.bf16.mxu0 0
    %3224 = vmatpush1.bf16.msra.mxu0 %v3202
    %3225 = vmatprep.subr.bf16.mxu0 0
    %3226 = vmatpush1.bf16.msra.mxu0 %v3203
    %3227 = vmatprep.subr.bf16.mxu0 0
    %3228 = vmatpush1.bf16.msra.mxu0 %v3204
    %3229 = vmatprep.subr.bf16.mxu0 0
    %3230 = vmatpush1.bf16.msra.mxu0 %v3205
    %3231 = vmatprep.subr.bf16.mxu0 0
    %3232 = vmatpush1.bf16.msra.mxu0 %v3206
    %3233 = vmatprep.subr.bf16.mxu0 0
    %3234 = vmatpush1.bf16.msra.mxu0 %v3207
    %3235 = vmatprep.subr.bf16.mxu0 0
    %3236 = vmatpush1.bf16.msra.mxu0 %v3208
    %3237 = vmatprep.subr.bf16.mxu0 0
    %3238 = vmatpush1.bf16.msra.mxu0 %v3209
    %3239 = vmatprep.subr.bf16.mxu0 0
    %3240 = vmatpush1.bf16.msra.mxu0 %v3210
    %3241 = vmatprep.subr.bf16.mxu0 0
    %3242 = vmatpush1.bf16.msra.mxu0 %v3211
    %3243 = vmatprep.subr.bf16.mxu0 0
    %3244 = vmatpush1.bf16.msra.mxu0 %v3212
    %3245 = vmatprep.mubr.bf16.mxu0 %v1463
    %3246 = vmatmul.mubr.bf16.gmra.mrb[0].mxu0 %v1462
    %v3247 = vpop.f32.mrb[0].mxu0
    %v3248 = vadd.f32 0.0, %v3247
    %v3249 = vpop.f32.mrb[0].mxu0
    %v3250 = vpop.f32.mrb[0].mxu0
    %v3251 = vadd.f32 0.0, %v3250
    %v3252 = vpop.f32.mrb[0].mxu0
    %3253 = vmatprep.mubr.bf16.mxu0 %v1465
    %3254 = vmatmul.mubr.bf16.gmra.mrb[0].mxu0 %v1464
    %v3255 = vpop.f32.mrb[0].mxu0
    %v3256 = vadd.f32 0.0, %v3255
    %v3257 = vpop.f32.mrb[0].mxu0
    %v3258 = vpop.f32.mrb[0].mxu0
    %v3259 = vadd.f32 0.0, %v3258
    %v3260 = vpop.f32.mrb[0].mxu0
    %3261 = vmatprep.mubr.bf16.mxu0 %v1467
    %3262 = vmatmul.mubr.bf16.gmra.mrb[0].mxu0 %v1466
    %v3263 = vpop.f32.mrb[0].mxu0
    %v3264 = vadd.f32 0.0, %v3263
    %v3265 = vpop.f32.mrb[0].mxu0
    %v3266 = vpop.f32.mrb[0].mxu0
    %v3267 = vadd.f32 0.0, %v3266
    %v3268 = vpop.f32.mrb[0].mxu0
    %3269 = vmatprep.mubr.bf16.mxu0 %v1469
    %3270 = vmatmul.mubr.bf16.gmra.mrb[0].mxu0 %v1468
    %v3271 = vpop.f32.mrb[0].mxu0
    %v3272 = vadd.f32 0.0, %v3271
    %v3273 = vpop.f32.mrb[0].mxu0
    %v3274 = vpop.f32.mrb[0].mxu0
    %v3275 = vadd.f32 0.0, %v3274
    %v3276 = vpop.f32.mrb[0].mxu0
    %3277 = vmatprep.mubr.bf16.mxu0 %v1471
    %3278 = vmatmul.mubr.bf16.gmra.mrb[0].mxu0 %v1470
    %v3279 = vpop.f32.mrb[0].mxu0
    %v3280 = vadd.f32 0.0, %v3279
    %v3281 = vpop.f32.mrb[0].mxu0
    %v3282 = vpop.f32.mrb[0].mxu0
    %v3283 = vadd.f32 0.0, %v3282
    %v3284 = vpop.f32.mrb[0].mxu0
    %3285 = vmatprep.mubr.bf16.mxu0 %v1473
    %3286 = vmatmul.mubr.bf16.gmra.mrb[0].mxu0 %v1472
    %v3287 = vpop.f32.mrb[0].mxu0
    %v3288 = vadd.f32 0.0, %v3287
    %v3289 = vpop.f32.mrb[0].mxu0
    %v3290 = vpop.f32.mrb[0].mxu0
    %v3291 = vadd.f32 0.0, %v3290
    %v3292 = vpop.f32.mrb[0].mxu0
    %3293 = vmatprep.mubr.bf16.mxu0 %v1475
    %3294 = vmatmul.mubr.bf16.gmra.mrb[0].mxu0 %v1474
    %v3295 = vpop.f32.mrb[0].mxu0
    %v3296 = vadd.f32 0.0, %v3295
    %v3297 = vpop.f32.mrb[0].mxu0
    %v3298 = vpop.f32.mrb[0].mxu0
    %v3299 = vadd.f32 0.0, %v3298
    %v3300 = vpop.f32.mrb[0].mxu0
    %3301 = vmatprep.mubr.bf16.mxu0 %v1477
    %3302 = vmatmul.mubr.bf16.gmra.mrb[0].mxu0 %v1476
    %v3303 = vpop.f32.mrb[0].mxu0
    %v3304 = vadd.f32 0.0, %v3303
    %v3305 = vpop.f32.mrb[0].mxu0
    %v3306 = vpop.f32.mrb[0].mxu0
    %v3307 = vadd.f32 0.0, %v3306
    %v3308 = vpop.f32.mrb[0].mxu0
    %3309 = vdwg.mxu0
    %v3310 = vmul.f32 %v3248, %v1594
    %v3311 = vmul.f32 %v3251, %v1599
    %v3312 = vmul.f32 %v3256, %v1604
    %v3313 = vmul.f32 %v3259, %v1609
    %v3314 = vmul.f32 %v3264, %v1614
    %v3315 = vmul.f32 %v3267, %v1619
    %v3316 = vmul.f32 %v3272, %v1624
    %v3317 = vmul.f32 %v3275, %v1629
    %v3318 = vmul.f32 %v3280, %v1634
    %v3319 = vmul.f32 %v3283, %v1639
    %v3320 = vmul.f32 %v3288, %v1644
    %v3321 = vmul.f32 %v3291, %v1649
    %v3322 = vmul.f32 %v3296, %v1654
    %v3323 = vmul.f32 %v3299, %v1659
    %v3324 = vmul.f32 %v3304, %v1664
    %v3325 = vmul.f32 %v3307, %v1669
    %v3326 = vadd.f32 %v3310, %v1690
    %v3327 = vadd.f32 %v3311, %v1695
    %v3328 = vadd.f32 %v3312, %v1700
    %v3329 = vadd.f32 %v3313, %v1705
    %v3330 = vadd.f32 %v3314, %v1710
    %v3331 = vadd.f32 %v3315, %v1715
    %v3332 = vadd.f32 %v3316, %v1720
    %v3333 = vadd.f32 %v3317, %v1725
    %v3334 = vadd.f32 %v3318, %v1730
    %v3335 = vadd.f32 %v3319, %v1735
    %v3336 = vadd.f32 %v3320, %v1740
    %v3337 = vadd.f32 %v3321, %v1745
    %v3338 = vadd.f32 %v3322, %v1750
    %v3339 = vadd.f32 %v3323, %v1755
    %v3340 = vadd.f32 %v3324, %v1760
    %v3341 = vadd.f32 %v3325, %v1765
    %v3342 = vmax.f32 %v3326, 0.0
    %v3343 = vmax.f32 %v3327, 0.0
    %v3344 = vmax.f32 %v3328, 0.0
    %v3345 = vmax.f32 %v3329, 0.0
    %v3346 = vmax.f32 %v3330, 0.0
    %v3347 = vmax.f32 %v3331, 0.0
    %v3348 = vmax.f32 %v3332, 0.0
    %v3349 = vmax.f32 %v3333, 0.0
    %v3350 = vmax.f32 %v3334, 0.0
    %v3351 = vmax.f32 %v3335, 0.0
    %v3352 = vmax.f32 %v3336, 0.0
    %v3353 = vmax.f32 %v3337, 0.0
    %v3354 = vmax.f32 %v3338, 0.0
    %v3355 = vmax.f32 %v3339, 0.0
    %v3356 = vmax.f32 %v3340, 0.0
    %v3357 = vmax.f32 %v3341, 0.0
    %v3358 = vmul.f32 %v3342, %v1802
    %v3359 = vmul.f32 %v3343, %v1807
    %v3360 = vmul.f32 %v3344, %v1812
    %v3361 = vmul.f32 %v3345, %v1817
    %v3362 = vmul.f32 %v3346, %v1822
    %v3363 = vmul.f32 %v3347, %v1827
    %v3364 = vmul.f32 %v3348, %v1832
    %v3365 = vmul.f32 %v3349, %v1837
    %v3366 = vmul.f32 %v3350, %v1842
    %v3367 = vmul.f32 %v3351, %v1847
    %v3368 = vmul.f32 %v3352, %v1852
    %v3369 = vmul.f32 %v3353, %v1857
    %v3370 = vmul.f32 %v3354, %v1862
    %v3371 = vmul.f32 %v3355, %v1867
    %v3372 = vmul.f32 %v3356, %v1872
    %v3373 = vmul.f32 %v3357, %v1877
    %v3374 = vsel %vm1895, %v3358, 0.0
    %v3375 = vsel %vm1895, %v3359, 0.0
    %v3376 = vadd.f32 %v3374, %v3375
    %v3377 = vsel %vm1895, %v3360, 0.0
    %v3378 = vadd.f32 %v3376, %v3377
    %v3379 = vsel %vm1895, %v3361, 0.0
    %v3380 = vadd.f32 %v3378, %v3379
    %v3381 = vsel %vm1895, %v3362, 0.0
    %v3382 = vadd.f32 %v3380, %v3381
    %v3383 = vsel %vm1895, %v3363, 0.0
    %v3384 = vadd.f32 %v3382, %v3383
    %v3385 = vsel %vm1895, %v3364, 0.0
    %v3386 = vadd.f32 %v3384, %v3385
    %v3387 = vsel %vm1895, %v3365, 0.0
    %v3388 = vadd.f32 %v3386, %v3387
    %v3389 = vsel %vm1895, %v3366, 0.0
    %v3390 = vadd.f32 %v3388, %v3389
    %v3391 = vsel %vm1895, %v3367, 0.0
    %v3392 = vadd.f32 %v3390, %v3391
    %v3393 = vsel %vm1895, %v3368, 0.0
    %v3394 = vadd.f32 %v3392, %v3393
    %v3395 = vsel %vm1895, %v3369, 0.0
    %v3396 = vadd.f32 %v3394, %v3395
    %v3397 = vsel %vm1895, %v3370, 0.0
    %v3398 = vadd.f32 %v3396, %v3397
    %v3399 = vsel %vm1895, %v3371, 0.0
    %v3400 = vadd.f32 %v3398, %v3399
    %v3401 = vsel %vm1895, %v3372, 0.0
    %v3402 = vadd.f32 %v3400, %v3401
    %v3403 = vsel %vm1895, %v3373, 0.0
    %v3404 = vadd.f32 %v3402, %v3403
    %v3405 = vrot.slane %v3404, 4
    %v3406 = vadd.f32 %v3404, %v3405
    %v3407 = vrot.slane %v3406, 2
    %v3408 = vadd.f32 %v3406, %v3407
    %v3409 = vrot.slane %v3408, 1
    %v3410 = vadd.f32 %v3408, %v3409
    %v3411 = vadd.f32 %v3410, %v1933
    %v3412 = vmax.f32 %v3411, 0.0
    %v3413 = vmul.f32 %v3412, %v241
    %v3414 = vsel %vm1937, %v3413, 0.0
    %3415 = vadd.xlane.f32.xlu0 %v3414
    %v3416 = vpop.xlane.xlu0 %3415
    %v3417 = vadd.f32 %v3416, %v1941
    %3418 = vst.msk [vmem:[%s10 + $0x2] sm:$0x1] %vm1943, %v3417
    %s3419 = scalar_lea.vmem %s0, 1536
    %v3420 = vld [vmem:[%s3419] sm:$0xff]
    %v3421 = vld [vmem:[%s3419 + $0x8] sm:$0xff]
    %v3422 = vld [vmem:[%s3419 + $0x10] sm:$0xff]
    %v3423 = vld [vmem:[%s3419 + $0x18] sm:$0xff]
    %v3424 = vld [vmem:[%s3419 + $0x20] sm:$0xff]
    %v3425 = vld [vmem:[%s3419 + $0x28] sm:$0xff]
    %v3426 = vld [vmem:[%s3419 + $0x30] sm:$0xff]
    %v3427 = vld [vmem:[%s3419 + $0x38] sm:$0xff]
    %v3428 = vld [vmem:[%s3419 + $0x40] sm:$0xff]
    %v3429 = vld [vmem:[%s3419 + $0x48] sm:$0xff]
    %v3430 = vld [vmem:[%s3419 + $0x50] sm:$0xff]
    %v3431 = vld [vmem:[%s3419 + $0x58] sm:$0xff]
    %v3432 = vld [vmem:[%s3419 + $0x60] sm:$0xff]
    %v3433 = vld [vmem:[%s3419 + $0x68] sm:$0xff]
    %v3434 = vld [vmem:[%s3419 + $0x70] sm:$0xff]
    %v3435 = vld [vmem:[%s3419 + $0x78] sm:$0xff]
    %v3436 = vld [vmem:[%s3419 + $0x80] sm:$0xff]
    %v3437 = vld [vmem:[%s3419 + $0x88] sm:$0xff]
    %v3438 = vld [vmem:[%s3419 + $0x90] sm:$0xff]
    %v3439 = vld [vmem:[%s3419 + $0x98] sm:$0xff]
    %v3440 = vld [vmem:[%s3419 + $0xa0] sm:$0xff]
    %v3441 = vld [vmem:[%s3419 + $0xa8] sm:$0xff]
    %v3442 = vld [vmem:[%s3419 + $0xb0] sm:$0xff]
    %v3443 = vld [vmem:[%s3419 + $0xb8] sm:$0xff]
    %v3444 = vld [vmem:[%s3419 + $0xc0] sm:$0xff]
    %v3445 = vld [vmem:[%s3419 + $0xc8] sm:$0xff]
    %v3446 = vld [vmem:[%s3419 + $0xd0] sm:$0xff]
    %v3447 = vld [vmem:[%s3419 + $0xd8] sm:$0xff]
    %v3448 = vld [vmem:[%s3419 + $0xe0] sm:$0xff]
    %v3449 = vld [vmem:[%s3419 + $0xe8] sm:$0xff]
    %v3450 = vld [vmem:[%s3419 + $0xf0] sm:$0xff]
    %v3451 = vld [vmem:[%s3419 + $0xf8] sm:$0xff]
    %v3452 = vld [vmem:[%s3419 + $0x100] sm:$0xff]
    %v3453 = vld [vmem:[%s3419 + $0x108] sm:$0xff]
    %v3454 = vld [vmem:[%s3419 + $0x110] sm:$0xff]
    %v3455 = vld [vmem:[%s3419 + $0x118] sm:$0xff]
    %v3456 = vld [vmem:[%s3419 + $0x120] sm:$0xff]
    %v3457 = vld [vmem:[%s3419 + $0x128] sm:$0xff]
    %v3458 = vld [vmem:[%s3419 + $0x130] sm:$0xff]
    %v3459 = vld [vmem:[%s3419 + $0x138] sm:$0xff]
    %v3460 = vld [vmem:[%s3419 + $0x140] sm:$0xff]
    %v3461 = vld [vmem:[%s3419 + $0x148] sm:$0xff]
    %v3462 = vld [vmem:[%s3419 + $0x150] sm:$0xff]
    %v3463 = vld [vmem:[%s3419 + $0x158] sm:$0xff]
    %v3464 = vld [vmem:[%s3419 + $0x160] sm:$0xff]
    %v3465 = vld [vmem:[%s3419 + $0x168] sm:$0xff]
    %v3466 = vld [vmem:[%s3419 + $0x170] sm:$0xff]
    %v3467 = vld [vmem:[%s3419 + $0x178] sm:$0xff]
    %v3468 = vld [vmem:[%s3419 + $0x180] sm:$0xff]
    %v3469 = vld [vmem:[%s3419 + $0x188] sm:$0xff]
    %v3470 = vld [vmem:[%s3419 + $0x190] sm:$0xff]
    %v3471 = vld [vmem:[%s3419 + $0x198] sm:$0xff]
    %v3472 = vld [vmem:[%s3419 + $0x1a0] sm:$0xff]
    %v3473 = vld [vmem:[%s3419 + $0x1a8] sm:$0xff]
    %v3474 = vld [vmem:[%s3419 + $0x1b0] sm:$0xff]
    %v3475 = vld [vmem:[%s3419 + $0x1b8] sm:$0xff]
    %v3476 = vld [vmem:[%s3419 + $0x1c0] sm:$0xff]
    %v3477 = vld [vmem:[%s3419 + $0x1c8] sm:$0xff]
    %v3478 = vld [vmem:[%s3419 + $0x1d0] sm:$0xff]
    %v3479 = vld [vmem:[%s3419 + $0x1d8] sm:$0xff]
    %v3480 = vld [vmem:[%s3419 + $0x1e0] sm:$0xff]
    %v3481 = vld [vmem:[%s3419 + $0x1e8] sm:$0xff]
    %v3482 = vld [vmem:[%s3419 + $0x1f0] sm:$0xff]
    %v3483 = vld [vmem:[%s3419 + $0x1f8] sm:$0xff]
    %v3484 = vpack.c.bf16 %v3421, %v3420
    %v3485 = vpack.c.bf16 %v3423, %v3422
    %v3486 = vpack.c.bf16 %v3425, %v3424
    %v3487 = vpack.c.bf16 %v3427, %v3426
    %v3488 = vpack.c.bf16 %v3429, %v3428
    %v3489 = vpack.c.bf16 %v3431, %v3430
    %v3490 = vpack.c.bf16 %v3433, %v3432
    %v3491 = vpack.c.bf16 %v3435, %v3434
    %v3492 = vpack.c.bf16 %v3437, %v3436
    %v3493 = vpack.c.bf16 %v3439, %v3438
    %v3494 = vpack.c.bf16 %v3441, %v3440
    %v3495 = vpack.c.bf16 %v3443, %v3442
    %v3496 = vpack.c.bf16 %v3445, %v3444
    %v3497 = vpack.c.bf16 %v3447, %v3446
    %v3498 = vpack.c.bf16 %v3449, %v3448
    %v3499 = vpack.c.bf16 %v3451, %v3450
    %v3500 = vpack.c.bf16 %v3453, %v3452
    %v3501 = vpack.c.bf16 %v3455, %v3454
    %v3502 = vpack.c.bf16 %v3457, %v3456
    %v3503 = vpack.c.bf16 %v3459, %v3458
    %v3504 = vpack.c.bf16 %v3461, %v3460
    %v3505 = vpack.c.bf16 %v3463, %v3462
    %v3506 = vpack.c.bf16 %v3465, %v3464
    %v3507 = vpack.c.bf16 %v3467, %v3466
    %v3508 = vpack.c.bf16 %v3469, %v3468
    %v3509 = vpack.c.bf16 %v3471, %v3470
    %v3510 = vpack.c.bf16 %v3473, %v3472
    %v3511 = vpack.c.bf16 %v3475, %v3474
    %v3512 = vpack.c.bf16 %v3477, %v3476
    %v3513 = vpack.c.bf16 %v3479, %v3478
    %v3514 = vpack.c.bf16 %v3481, %v3480
    %v3515 = vpack.c.bf16 %v3483, %v3482
    %3516 = vmatprep.subr.bf16.mxu0 0
    %3517 = vmatpush1.bf16.msra.mxu0 %v3484
    %3518 = vmatprep.subr.bf16.mxu0 0
    %3519 = vmatpush1.bf16.msra.mxu0 %v3485
    %3520 = vmatprep.subr.bf16.mxu0 0
    %3521 = vmatpush1.bf16.msra.mxu0 %v3486
    %3522 = vmatprep.subr.bf16.mxu0 0
    %3523 = vmatpush1.bf16.msra.mxu0 %v3487
    %3524 = vmatprep.subr.bf16.mxu0 0
    %3525 = vmatpush1.bf16.msra.mxu0 %v3488
    %3526 = vmatprep.subr.bf16.mxu0 0
    %3527 = vmatpush1.bf16.msra.mxu0 %v3489
    %3528 = vmatprep.subr.bf16.mxu0 0
    %3529 = vmatpush1.bf16.msra.mxu0 %v3490
    %3530 = vmatprep.subr.bf16.mxu0 0
    %3531 = vmatpush1.bf16.msra.mxu0 %v3491
    %3532 = vmatprep.subr.bf16.mxu0 0
    %3533 = vmatpush1.bf16.msra.mxu0 %v3492
    %3534 = vmatprep.subr.bf16.mxu0 0
    %3535 = vmatpush1.bf16.msra.mxu0 %v3493
    %3536 = vmatprep.subr.bf16.mxu0 0
    %3537 = vmatpush1.bf16.msra.mxu0 %v3494
    %3538 = vmatprep.subr.bf16.mxu0 0
    %3539 = vmatpush1.bf16.msra.mxu0 %v3495
    %3540 = vmatprep.subr.bf16.mxu0 0
    %3541 = vmatpush1.bf16.msra.mxu0 %v3496
    %3542 = vmatprep.subr.bf16.mxu0 0
    %3543 = vmatpush1.bf16.msra.mxu0 %v3497
    %3544 = vmatprep.subr.bf16.mxu0 0
    %3545 = vmatpush1.bf16.msra.mxu0 %v3498
    %3546 = vmatprep.subr.bf16.mxu0 0
    %3547 = vmatpush1.bf16.msra.mxu0 %v3499
    %3548 = vmatprep.mubr.bf16.mxu0 %v533
    %3549 = vmatmul.mubr.bf16.gmra.mrb[0].mxu0 %v532
    %v3550 = vpop.f32.mrb[0].mxu0
    %v3551 = vadd.f32 0.0, %v3550
    %v3552 = vpop.f32.mrb[0].mxu0
    %v3553 = vpop.f32.mrb[0].mxu0
    %v3554 = vadd.f32 0.0, %v3553
    %v3555 = vpop.f32.mrb[0].mxu0
    %3556 = vmatprep.mubr.bf16.mxu0 %v537
    %3557 = vmatmul.mubr.bf16.gmra.mrb[0].mxu0 %v536
    %v3558 = vpop.f32.mrb[0].mxu0
    %v3559 = vadd.f32 0.0, %v3558
    %v3560 = vpop.f32.mrb[0].mxu0
    %v3561 = vpop.f32.mrb[0].mxu0
    %v3562 = vadd.f32 0.0, %v3561
    %v3563 = vpop.f32.mrb[0].mxu0
    %3564 = vmatprep.mubr.bf16.mxu0 %v541
    %3565 = vmatmul.mubr.bf16.gmra.mrb[0].mxu0 %v540
    %v3566 = vpop.f32.mrb[0].mxu0
    %v3567 = vadd.f32 0.0, %v3566
    %v3568 = vpop.f32.mrb[0].mxu0
    %v3569 = vpop.f32.mrb[0].mxu0
    %v3570 = vadd.f32 0.0, %v3569
    %v3571 = vpop.f32.mrb[0].mxu0
    %3572 = vmatprep.mubr.bf16.mxu0 %v545
    %3573 = vmatmul.mubr.bf16.gmra.mrb[0].mxu0 %v544
    %v3574 = vpop.f32.mrb[0].mxu0
    %v3575 = vadd.f32 0.0, %v3574
    %v3576 = vpop.f32.mrb[0].mxu0
    %v3577 = vpop.f32.mrb[0].mxu0
    %v3578 = vadd.f32 0.0, %v3577
    %v3579 = vpop.f32.mrb[0].mxu0
    %3580 = vmatprep.mubr.bf16.mxu0 %v549
    %3581 = vmatmul.mubr.bf16.gmra.mrb[0].mxu0 %v548
    %v3582 = vpop.f32.mrb[0].mxu0
    %v3583 = vadd.f32 0.0, %v3582
    %v3584 = vpop.f32.mrb[0].mxu0
    %v3585 = vpop.f32.mrb[0].mxu0
    %v3586 = vadd.f32 0.0, %v3585
    %v3587 = vpop.f32.mrb[0].mxu0
    %3588 = vmatprep.mubr.bf16.mxu0 %v553
    %3589 = vmatmul.mubr.bf16.gmra.mrb[0].mxu0 %v552
    %v3590 = vpop.f32.mrb[0].mxu0
    %v3591 = vadd.f32 0.0, %v3590
    %v3592 = vpop.f32.mrb[0].mxu0
    %v3593 = vpop.f32.mrb[0].mxu0
    %v3594 = vadd.f32 0.0, %v3593
    %v3595 = vpop.f32.mrb[0].mxu0
    %3596 = vmatprep.mubr.bf16.mxu0 %v557
    %3597 = vmatmul.mubr.bf16.gmra.mrb[0].mxu0 %v556
    %v3598 = vpop.f32.mrb[0].mxu0
    %v3599 = vadd.f32 0.0, %v3598
    %v3600 = vpop.f32.mrb[0].mxu0
    %v3601 = vpop.f32.mrb[0].mxu0
    %v3602 = vadd.f32 0.0, %v3601
    %v3603 = vpop.f32.mrb[0].mxu0
    %3604 = vmatprep.mubr.bf16.mxu0 %v561
    %3605 = vmatmul.mubr.bf16.gmra.mrb[0].mxu0 %v560
    %v3606 = vpop.f32.mrb[0].mxu0
    %v3607 = vadd.f32 0.0, %v3606
    %v3608 = vpop.f32.mrb[0].mxu0
    %v3609 = vpop.f32.mrb[0].mxu0
    %v3610 = vadd.f32 0.0, %v3609
    %v3611 = vpop.f32.mrb[0].mxu0
    %3612 = vmatprep.mubr.bf16.mxu0 %v565
    %3613 = vmatmul.mubr.bf16.gmra.mrb[0].mxu0 %v564
    %v3614 = vpop.f32.mrb[0].mxu0
    %v3615 = vadd.f32 0.0, %v3614
    %v3616 = vpop.f32.mrb[0].mxu0
    %v3617 = vpop.f32.mrb[0].mxu0
    %v3618 = vadd.f32 0.0, %v3617
    %v3619 = vpop.f32.mrb[0].mxu0
    %3620 = vmatprep.mubr.bf16.mxu0 %v569
    %3621 = vmatmul.mubr.bf16.gmra.mrb[0].mxu0 %v568
    %v3622 = vpop.f32.mrb[0].mxu0
    %v3623 = vadd.f32 0.0, %v3622
    %v3624 = vpop.f32.mrb[0].mxu0
    %v3625 = vpop.f32.mrb[0].mxu0
    %v3626 = vadd.f32 0.0, %v3625
    %v3627 = vpop.f32.mrb[0].mxu0
    %3628 = vmatprep.mubr.bf16.mxu0 %v573
    %3629 = vmatmul.mubr.bf16.gmra.mrb[0].mxu0 %v572
    %v3630 = vpop.f32.mrb[0].mxu0
    %v3631 = vadd.f32 0.0, %v3630
    %v3632 = vpop.f32.mrb[0].mxu0
    %v3633 = vpop.f32.mrb[0].mxu0
    %v3634 = vadd.f32 0.0, %v3633
    %v3635 = vpop.f32.mrb[0].mxu0
    %3636 = vmatprep.mubr.bf16.mxu0 %v577
    %3637 = vmatmul.mubr.bf16.gmra.mrb[0].mxu0 %v576
    %v3638 = vpop.f32.mrb[0].mxu0
    %v3639 = vadd.f32 0.0, %v3638
    %v3640 = vpop.f32.mrb[0].mxu0
    %v3641 = vpop.f32.mrb[0].mxu0
    %v3642 = vadd.f32 0.0, %v3641
    %v3643 = vpop.f32.mrb[0].mxu0
    %3644 = vmatprep.mubr.bf16.mxu0 %v581
    %3645 = vmatmul.mubr.bf16.gmra.mrb[0].mxu0 %v580
    %v3646 = vpop.f32.mrb[0].mxu0
    %v3647 = vadd.f32 0.0, %v3646
    %v3648 = vpop.f32.mrb[0].mxu0
    %v3649 = vpop.f32.mrb[0].mxu0
    %v3650 = vadd.f32 0.0, %v3649
    %v3651 = vpop.f32.mrb[0].mxu0
    %3652 = vmatprep.mubr.bf16.mxu0 %v585
    %3653 = vmatmul.mubr.bf16.gmra.mrb[0].mxu0 %v584
    %v3654 = vpop.f32.mrb[0].mxu0
    %v3655 = vadd.f32 0.0, %v3654
    %v3656 = vpop.f32.mrb[0].mxu0
    %v3657 = vpop.f32.mrb[0].mxu0
    %v3658 = vadd.f32 0.0, %v3657
    %v3659 = vpop.f32.mrb[0].mxu0
    %3660 = vmatprep.mubr.bf16.mxu0 %v589
    %3661 = vmatmul.mubr.bf16.gmra.mrb[0].mxu0 %v588
    %v3662 = vpop.f32.mrb[0].mxu0
    %v3663 = vadd.f32 0.0, %v3662
    %v3664 = vpop.f32.mrb[0].mxu0
    %v3665 = vpop.f32.mrb[0].mxu0
    %v3666 = vadd.f32 0.0, %v3665
    %v3667 = vpop.f32.mrb[0].mxu0
    %3668 = vmatprep.mubr.bf16.mxu0 %v593
    %3669 = vmatmul.mubr.bf16.gmra.mrb[0].mxu0 %v592
    %v3670 = vpop.f32.mrb[0].mxu0
    %v3671 = vadd.f32 0.0, %v3670
    %v3672 = vpop.f32.mrb[0].mxu0
    %v3673 = vpop.f32.mrb[0].mxu0
    %v3674 = vadd.f32 0.0, %v3673
    %v3675 = vpop.f32.mrb[0].mxu0
    %3676 = vdwg.mxu0
    %3677 = vmatprep.subr.bf16.mxu0 0
    %3678 = vmatpush1.bf16.msra.mxu0 %v3500
    %3679 = vmatprep.subr.bf16.mxu0 0
    %3680 = vmatpush1.bf16.msra.mxu0 %v3501
    %3681 = vmatprep.subr.bf16.mxu0 0
    %3682 = vmatpush1.bf16.msra.mxu0 %v3502
    %3683 = vmatprep.subr.bf16.mxu0 0
    %3684 = vmatpush1.bf16.msra.mxu0 %v3503
    %3685 = vmatprep.subr.bf16.mxu0 0
    %3686 = vmatpush1.bf16.msra.mxu0 %v3504
    %3687 = vmatprep.subr.bf16.mxu0 0
    %3688 = vmatpush1.bf16.msra.mxu0 %v3505
    %3689 = vmatprep.subr.bf16.mxu0 0
    %3690 = vmatpush1.bf16.msra.mxu0 %v3506
    %3691 = vmatprep.subr.bf16.mxu0 0
    %3692 = vmatpush1.bf16.msra.mxu0 %v3507
    %3693 = vmatprep.subr.bf16.mxu0 0
    %3694 = vmatpush1.bf16.msra.mxu0 %v3508
    %3695 = vmatprep.subr.bf16.mxu0 0
    %3696 = vmatpush1.bf16.msra.mxu0 %v3509
    %3697 = vmatprep.subr.bf16.mxu0 0
    %3698 = vmatpush1.bf16.msra.mxu0 %v3510
    %3699 = vmatprep.subr.bf16.mxu0 0
    %3700 = vmatpush1.bf16.msra.mxu0 %v3511
    %3701 = vmatprep.subr.bf16.mxu0 0
    %3702 = vmatpush1.bf16.msra.mxu0 %v3512
    %3703 = vmatprep.subr.bf16.mxu0 0
    %3704 = vmatpush1.bf16.msra.mxu0 %v3513
    %3705 = vmatprep.subr.bf16.mxu0 0
    %3706 = vmatpush1.bf16.msra.mxu0 %v3514
    %3707 = vmatprep.subr.bf16.mxu0 0
    %3708 = vmatpush1.bf16.msra.mxu0 %v3515
    %3709 = vmatprep.mubr.bf16.mxu0 %v535
    %3710 = vmatmul.mubr.bf16.gmra.mrb[0].mxu0 %v534
    %v3711 = vpop.f32.mrb[0].mxu0
    %v3712 = vadd.f32 %v3551, %v3711
    %v3713 = vpop.f32.mrb[0].mxu0
    %v3714 = vpop.f32.mrb[0].mxu0
    %v3715 = vadd.f32 %v3554, %v3714
    %v3716 = vpop.f32.mrb[0].mxu0
    %3717 = vmatprep.mubr.bf16.mxu0 %v539
    %3718 = vmatmul.mubr.bf16.gmra.mrb[0].mxu0 %v538
    %v3719 = vpop.f32.mrb[0].mxu0
    %v3720 = vadd.f32 %v3559, %v3719
    %v3721 = vpop.f32.mrb[0].mxu0
    %v3722 = vpop.f32.mrb[0].mxu0
    %v3723 = vadd.f32 %v3562, %v3722
    %v3724 = vpop.f32.mrb[0].mxu0
    %3725 = vmatprep.mubr.bf16.mxu0 %v543
    %3726 = vmatmul.mubr.bf16.gmra.mrb[0].mxu0 %v542
    %v3727 = vpop.f32.mrb[0].mxu0
    %v3728 = vadd.f32 %v3567, %v3727
    %v3729 = vpop.f32.mrb[0].mxu0
    %v3730 = vpop.f32.mrb[0].mxu0
    %v3731 = vadd.f32 %v3570, %v3730
    %v3732 = vpop.f32.mrb[0].mxu0
    %3733 = vmatprep.mubr.bf16.mxu0 %v547
    %3734 = vmatmul.mubr.bf16.gmra.mrb[0].mxu0 %v546
    %v3735 = vpop.f32.mrb[0].mxu0
    %v3736 = vadd.f32 %v3575, %v3735
    %v3737 = vpop.f32.mrb[0].mxu0
    %v3738 = vpop.f32.mrb[0].mxu0
    %v3739 = vadd.f32 %v3578, %v3738
    %v3740 = vpop.f32.mrb[0].mxu0
    %3741 = vmatprep.mubr.bf16.mxu0 %v551
    %3742 = vmatmul.mubr.bf16.gmra.mrb[0].mxu0 %v550
    %v3743 = vpop.f32.mrb[0].mxu0
    %v3744 = vadd.f32 %v3583, %v3743
    %v3745 = vpop.f32.mrb[0].mxu0
    %v3746 = vpop.f32.mrb[0].mxu0
    %v3747 = vadd.f32 %v3586, %v3746
    %v3748 = vpop.f32.mrb[0].mxu0
    %3749 = vmatprep.mubr.bf16.mxu0 %v555
    %3750 = vmatmul.mubr.bf16.gmra.mrb[0].mxu0 %v554
    %v3751 = vpop.f32.mrb[0].mxu0
    %v3752 = vadd.f32 %v3591, %v3751
    %v3753 = vpop.f32.mrb[0].mxu0
    %v3754 = vpop.f32.mrb[0].mxu0
    %v3755 = vadd.f32 %v3594, %v3754
    %v3756 = vpop.f32.mrb[0].mxu0
    %3757 = vmatprep.mubr.bf16.mxu0 %v559
    %3758 = vmatmul.mubr.bf16.gmra.mrb[0].mxu0 %v558
    %v3759 = vpop.f32.mrb[0].mxu0
    %v3760 = vadd.f32 %v3599, %v3759
    %v3761 = vpop.f32.mrb[0].mxu0
    %v3762 = vpop.f32.mrb[0].mxu0
    %v3763 = vadd.f32 %v3602, %v3762
    %v3764 = vpop.f32.mrb[0].mxu0
    %3765 = vmatprep.mubr.bf16.mxu0 %v563
    %3766 = vmatmul.mubr.bf16.gmra.mrb[0].mxu0 %v562
    %v3767 = vpop.f32.mrb[0].mxu0
    %v3768 = vadd.f32 %v3607, %v3767
    %v3769 = vpop.f32.mrb[0].mxu0
    %v3770 = vpop.f32.mrb[0].mxu0
    %v3771 = vadd.f32 %v3610, %v3770
    %v3772 = vpop.f32.mrb[0].mxu0
    %3773 = vmatprep.mubr.bf16.mxu0 %v567
    %3774 = vmatmul.mubr.bf16.gmra.mrb[0].mxu0 %v566
    %v3775 = vpop.f32.mrb[0].mxu0
    %v3776 = vadd.f32 %v3615, %v3775
    %v3777 = vpop.f32.mrb[0].mxu0
    %v3778 = vpop.f32.mrb[0].mxu0
    %v3779 = vadd.f32 %v3618, %v3778
    %v3780 = vpop.f32.mrb[0].mxu0
    %3781 = vmatprep.mubr.bf16.mxu0 %v571
    %3782 = vmatmul.mubr.bf16.gmra.mrb[0].mxu0 %v570
    %v3783 = vpop.f32.mrb[0].mxu0
    %v3784 = vadd.f32 %v3623, %v3783
    %v3785 = vpop.f32.mrb[0].mxu0
    %v3786 = vpop.f32.mrb[0].mxu0
    %v3787 = vadd.f32 %v3626, %v3786
    %v3788 = vpop.f32.mrb[0].mxu0
    %3789 = vmatprep.mubr.bf16.mxu0 %v575
    %3790 = vmatmul.mubr.bf16.gmra.mrb[0].mxu0 %v574
    %v3791 = vpop.f32.mrb[0].mxu0
    %v3792 = vadd.f32 %v3631, %v3791
    %v3793 = vpop.f32.mrb[0].mxu0
    %v3794 = vpop.f32.mrb[0].mxu0
    %v3795 = vadd.f32 %v3634, %v3794
    %v3796 = vpop.f32.mrb[0].mxu0
    %3797 = vmatprep.mubr.bf16.mxu0 %v579
    %3798 = vmatmul.mubr.bf16.gmra.mrb[0].mxu0 %v578
    %v3799 = vpop.f32.mrb[0].mxu0
    %v3800 = vadd.f32 %v3639, %v3799
    %v3801 = vpop.f32.mrb[0].mxu0
    %v3802 = vpop.f32.mrb[0].mxu0
    %v3803 = vadd.f32 %v3642, %v3802
    %v3804 = vpop.f32.mrb[0].mxu0
    %3805 = vmatprep.mubr.bf16.mxu0 %v583
    %3806 = vmatmul.mubr.bf16.gmra.mrb[0].mxu0 %v582
    %v3807 = vpop.f32.mrb[0].mxu0
    %v3808 = vadd.f32 %v3647, %v3807
    %v3809 = vpop.f32.mrb[0].mxu0
    %v3810 = vpop.f32.mrb[0].mxu0
    %v3811 = vadd.f32 %v3650, %v3810
    %v3812 = vpop.f32.mrb[0].mxu0
    %3813 = vmatprep.mubr.bf16.mxu0 %v587
    %3814 = vmatmul.mubr.bf16.gmra.mrb[0].mxu0 %v586
    %v3815 = vpop.f32.mrb[0].mxu0
    %v3816 = vadd.f32 %v3655, %v3815
    %v3817 = vpop.f32.mrb[0].mxu0
    %v3818 = vpop.f32.mrb[0].mxu0
    %v3819 = vadd.f32 %v3658, %v3818
    %v3820 = vpop.f32.mrb[0].mxu0
    %3821 = vmatprep.mubr.bf16.mxu0 %v591
    %3822 = vmatmul.mubr.bf16.gmra.mrb[0].mxu0 %v590
    %v3823 = vpop.f32.mrb[0].mxu0
    %v3824 = vadd.f32 %v3663, %v3823
    %v3825 = vpop.f32.mrb[0].mxu0
    %v3826 = vpop.f32.mrb[0].mxu0
    %v3827 = vadd.f32 %v3666, %v3826
    %v3828 = vpop.f32.mrb[0].mxu0
    %3829 = vmatprep.mubr.bf16.mxu0 %v595
    %3830 = vmatmul.mubr.bf16.gmra.mrb[0].mxu0 %v594
    %v3831 = vpop.f32.mrb[0].mxu0
    %v3832 = vadd.f32 %v3671, %v3831
    %v3833 = vpop.f32.mrb[0].mxu0
    %v3834 = vpop.f32.mrb[0].mxu0
    %v3835 = vadd.f32 %v3674, %v3834
    %v3836 = vpop.f32.mrb[0].mxu0
    %3837 = vdwg.mxu0
    %v3838 = vmul.f32 %v3712, %v985
    %v3839 = vmul.f32 %v3715, %v990
    %v3840 = vmul.f32 %v3720, %v995
    %v3841 = vmul.f32 %v3723, %v1000
    %v3842 = vmul.f32 %v3728, %v1005
    %v3843 = vmul.f32 %v3731, %v1010
    %v3844 = vmul.f32 %v3736, %v1015
    %v3845 = vmul.f32 %v3739, %v1020
    %v3846 = vmul.f32 %v3744, %v1025
    %v3847 = vmul.f32 %v3747, %v1030
    %v3848 = vmul.f32 %v3752, %v1035
    %v3849 = vmul.f32 %v3755, %v1040
    %v3850 = vmul.f32 %v3760, %v1045
    %v3851 = vmul.f32 %v3763, %v1050
    %v3852 = vmul.f32 %v3768, %v1055
    %v3853 = vmul.f32 %v3771, %v1060
    %v3854 = vmul.f32 %v3776, %v1065
    %v3855 = vmul.f32 %v3779, %v1070
    %v3856 = vmul.f32 %v3784, %v1075
    %v3857 = vmul.f32 %v3787, %v1080
    %v3858 = vmul.f32 %v3792, %v1085
    %v3859 = vmul.f32 %v3795, %v1090
    %v3860 = vmul.f32 %v3800, %v1095
    %v3861 = vmul.f32 %v3803, %v1100
    %v3862 = vmul.f32 %v3808, %v1105
    %v3863 = vmul.f32 %v3811, %v1110
    %v3864 = vmul.f32 %v3816, %v1115
    %v3865 = vmul.f32 %v3819, %v1120
    %v3866 = vmul.f32 %v3824, %v1125
    %v3867 = vmul.f32 %v3827, %v1130
    %v3868 = vmul.f32 %v3832, %v1135
    %v3869 = vmul.f32 %v3835, %v1140
    %v3870 = vadd.f32 %v3838, %v1177
    %v3871 = vadd.f32 %v3839, %v1182
    %v3872 = vadd.f32 %v3840, %v1187
    %v3873 = vadd.f32 %v3841, %v1192
    %v3874 = vadd.f32 %v3842, %v1197
    %v3875 = vadd.f32 %v3843, %v1202
    %v3876 = vadd.f32 %v3844, %v1207
    %v3877 = vadd.f32 %v3845, %v1212
    %v3878 = vadd.f32 %v3846, %v1217
    %v3879 = vadd.f32 %v3847, %v1222
    %v3880 = vadd.f32 %v3848, %v1227
    %v3881 = vadd.f32 %v3849, %v1232
    %v3882 = vadd.f32 %v3850, %v1237
    %v3883 = vadd.f32 %v3851, %v1242
    %v3884 = vadd.f32 %v3852, %v1247
    %v3885 = vadd.f32 %v3853, %v1252
    %v3886 = vadd.f32 %v3854, %v1257
    %v3887 = vadd.f32 %v3855, %v1262
    %v3888 = vadd.f32 %v3856, %v1267
    %v3889 = vadd.f32 %v3857, %v1272
    %v3890 = vadd.f32 %v3858, %v1277
    %v3891 = vadd.f32 %v3859, %v1282
    %v3892 = vadd.f32 %v3860, %v1287
    %v3893 = vadd.f32 %v3861, %v1292
    %v3894 = vadd.f32 %v3862, %v1297
    %v3895 = vadd.f32 %v3863, %v1302
    %v3896 = vadd.f32 %v3864, %v1307
    %v3897 = vadd.f32 %v3865, %v1312
    %v3898 = vadd.f32 %v3866, %v1317
    %v3899 = vadd.f32 %v3867, %v1322
    %v3900 = vadd.f32 %v3868, %v1327
    %v3901 = vadd.f32 %v3869, %v1332
    %v3902 = vmax.f32 %v3870, 0.0
    %v3903 = vmax.f32 %v3871, 0.0
    %v3904 = vmax.f32 %v3872, 0.0
    %v3905 = vmax.f32 %v3873, 0.0
    %v3906 = vmax.f32 %v3874, 0.0
    %v3907 = vmax.f32 %v3875, 0.0
    %v3908 = vmax.f32 %v3876, 0.0
    %v3909 = vmax.f32 %v3877, 0.0
    %v3910 = vmax.f32 %v3878, 0.0
    %v3911 = vmax.f32 %v3879, 0.0
    %v3912 = vmax.f32 %v3880, 0.0
    %v3913 = vmax.f32 %v3881, 0.0
    %v3914 = vmax.f32 %v3882, 0.0
    %v3915 = vmax.f32 %v3883, 0.0
    %v3916 = vmax.f32 %v3884, 0.0
    %v3917 = vmax.f32 %v3885, 0.0
    %v3918 = vmax.f32 %v3886, 0.0
    %v3919 = vmax.f32 %v3887, 0.0
    %v3920 = vmax.f32 %v3888, 0.0
    %v3921 = vmax.f32 %v3889, 0.0
    %v3922 = vmax.f32 %v3890, 0.0
    %v3923 = vmax.f32 %v3891, 0.0
    %v3924 = vmax.f32 %v3892, 0.0
    %v3925 = vmax.f32 %v3893, 0.0
    %v3926 = vmax.f32 %v3894, 0.0
    %v3927 = vmax.f32 %v3895, 0.0
    %v3928 = vmax.f32 %v3896, 0.0
    %v3929 = vmax.f32 %v3897, 0.0
    %v3930 = vmax.f32 %v3898, 0.0
    %v3931 = vmax.f32 %v3899, 0.0
    %v3932 = vmax.f32 %v3900, 0.0
    %v3933 = vmax.f32 %v3901, 0.0
    %v3934 = vpack.c.bf16 %v3903, %v3902
    %v3935 = vpack.c.bf16 %v3905, %v3904
    %v3936 = vpack.c.bf16 %v3907, %v3906
    %v3937 = vpack.c.bf16 %v3909, %v3908
    %v3938 = vpack.c.bf16 %v3911, %v3910
    %v3939 = vpack.c.bf16 %v3913, %v3912
    %v3940 = vpack.c.bf16 %v3915, %v3914
    %v3941 = vpack.c.bf16 %v3917, %v3916
    %v3942 = vpack.c.bf16 %v3919, %v3918
    %v3943 = vpack.c.bf16 %v3921, %v3920
    %v3944 = vpack.c.bf16 %v3923, %v3922
    %v3945 = vpack.c.bf16 %v3925, %v3924
    %v3946 = vpack.c.bf16 %v3927, %v3926
    %v3947 = vpack.c.bf16 %v3929, %v3928
    %v3948 = vpack.c.bf16 %v3931, %v3930
    %v3949 = vpack.c.bf16 %v3933, %v3932
    %3950 = vmatprep.subr.bf16.mxu0 0
    %3951 = vmatpush1.bf16.msra.mxu0 %v3934
    %3952 = vmatprep.subr.bf16.mxu0 0
    %3953 = vmatpush1.bf16.msra.mxu0 %v3935
    %3954 = vmatprep.subr.bf16.mxu0 0
    %3955 = vmatpush1.bf16.msra.mxu0 %v3936
    %3956 = vmatprep.subr.bf16.mxu0 0
    %3957 = vmatpush1.bf16.msra.mxu0 %v3937
    %3958 = vmatprep.subr.bf16.mxu0 0
    %3959 = vmatpush1.bf16.msra.mxu0 %v3938
    %3960 = vmatprep.subr.bf16.mxu0 0
    %3961 = vmatpush1.bf16.msra.mxu0 %v3939
    %3962 = vmatprep.subr.bf16.mxu0 0
    %3963 = vmatpush1.bf16.msra.mxu0 %v3940
    %3964 = vmatprep.subr.bf16.mxu0 0
    %3965 = vmatpush1.bf16.msra.mxu0 %v3941
    %3966 = vmatprep.subr.bf16.mxu0 0
    %3967 = vmatpush1.bf16.msra.mxu0 %v3942
    %3968 = vmatprep.subr.bf16.mxu0 0
    %3969 = vmatpush1.bf16.msra.mxu0 %v3943
    %3970 = vmatprep.subr.bf16.mxu0 0
    %3971 = vmatpush1.bf16.msra.mxu0 %v3944
    %3972 = vmatprep.subr.bf16.mxu0 0
    %3973 = vmatpush1.bf16.msra.mxu0 %v3945
    %3974 = vmatprep.subr.bf16.mxu0 0
    %3975 = vmatpush1.bf16.msra.mxu0 %v3946
    %3976 = vmatprep.subr.bf16.mxu0 0
    %3977 = vmatpush1.bf16.msra.mxu0 %v3947
    %3978 = vmatprep.subr.bf16.mxu0 0
    %3979 = vmatpush1.bf16.msra.mxu0 %v3948
    %3980 = vmatprep.subr.bf16.mxu0 0
    %3981 = vmatpush1.bf16.msra.mxu0 %v3949
    %3982 = vmatprep.mubr.bf16.mxu0 %v1463
    %3983 = vmatmul.mubr.bf16.gmra.mrb[0].mxu0 %v1462
    %v3984 = vpop.f32.mrb[0].mxu0
    %v3985 = vadd.f32 0.0, %v3984
    %v3986 = vpop.f32.mrb[0].mxu0
    %v3987 = vpop.f32.mrb[0].mxu0
    %v3988 = vadd.f32 0.0, %v3987
    %v3989 = vpop.f32.mrb[0].mxu0
    %3990 = vmatprep.mubr.bf16.mxu0 %v1465
    %3991 = vmatmul.mubr.bf16.gmra.mrb[0].mxu0 %v1464
    %v3992 = vpop.f32.mrb[0].mxu0
    %v3993 = vadd.f32 0.0, %v3992
    %v3994 = vpop.f32.mrb[0].mxu0
    %v3995 = vpop.f32.mrb[0].mxu0
    %v3996 = vadd.f32 0.0, %v3995
    %v3997 = vpop.f32.mrb[0].mxu0
    %3998 = vmatprep.mubr.bf16.mxu0 %v1467
    %3999 = vmatmul.mubr.bf16.gmra.mrb[0].mxu0 %v1466
    %v4000 = vpop.f32.mrb[0].mxu0
    %v4001 = vadd.f32 0.0, %v4000
    %v4002 = vpop.f32.mrb[0].mxu0
    %v4003 = vpop.f32.mrb[0].mxu0
    %v4004 = vadd.f32 0.0, %v4003
    %v4005 = vpop.f32.mrb[0].mxu0
    %4006 = vmatprep.mubr.bf16.mxu0 %v1469
    %4007 = vmatmul.mubr.bf16.gmra.mrb[0].mxu0 %v1468
    %v4008 = vpop.f32.mrb[0].mxu0
    %v4009 = vadd.f32 0.0, %v4008
    %v4010 = vpop.f32.mrb[0].mxu0
    %v4011 = vpop.f32.mrb[0].mxu0
    %v4012 = vadd.f32 0.0, %v4011
    %v4013 = vpop.f32.mrb[0].mxu0
    %4014 = vmatprep.mubr.bf16.mxu0 %v1471
    %4015 = vmatmul.mubr.bf16.gmra.mrb[0].mxu0 %v1470
    %v4016 = vpop.f32.mrb[0].mxu0
    %v4017 = vadd.f32 0.0, %v4016
    %v4018 = vpop.f32.mrb[0].mxu0
    %v4019 = vpop.f32.mrb[0].mxu0
    %v4020 = vadd.f32 0.0, %v4019
    %v4021 = vpop.f32.mrb[0].mxu0
    %4022 = vmatprep.mubr.bf16.mxu0 %v1473
    %4023 = vmatmul.mubr.bf16.gmra.mrb[0].mxu0 %v1472
    %v4024 = vpop.f32.mrb[0].mxu0
    %v4025 = vadd.f32 0.0, %v4024
    %v4026 = vpop.f32.mrb[0].mxu0
    %v4027 = vpop.f32.mrb[0].mxu0
    %v4028 = vadd.f32 0.0, %v4027
    %v4029 = vpop.f32.mrb[0].mxu0
    %4030 = vmatprep.mubr.bf16.mxu0 %v1475
    %4031 = vmatmul.mubr.bf16.gmra.mrb[0].mxu0 %v1474
    %v4032 = vpop.f32.mrb[0].mxu0
    %v4033 = vadd.f32 0.0, %v4032
    %v4034 = vpop.f32.mrb[0].mxu0
    %v4035 = vpop.f32.mrb[0].mxu0
    %v4036 = vadd.f32 0.0, %v4035
    %v4037 = vpop.f32.mrb[0].mxu0
    %4038 = vmatprep.mubr.bf16.mxu0 %v1477
    %4039 = vmatmul.mubr.bf16.gmra.mrb[0].mxu0 %v1476
    %v4040 = vpop.f32.mrb[0].mxu0
    %v4041 = vadd.f32 0.0, %v4040
    %v4042 = vpop.f32.mrb[0].mxu0
    %v4043 = vpop.f32.mrb[0].mxu0
    %v4044 = vadd.f32 0.0, %v4043
    %v4045 = vpop.f32.mrb[0].mxu0
    %4046 = vdwg.mxu0
    %v4047 = vmul.f32 %v3985, %v1594
    %v4048 = vmul.f32 %v3988, %v1599
    %v4049 = vmul.f32 %v3993, %v1604
    %v4050 = vmul.f32 %v3996, %v1609
    %v4051 = vmul.f32 %v4001, %v1614
    %v4052 = vmul.f32 %v4004, %v1619
    %v4053 = vmul.f32 %v4009, %v1624
    %v4054 = vmul.f32 %v4012, %v1629
    %v4055 = vmul.f32 %v4017, %v1634
    %v4056 = vmul.f32 %v4020, %v1639
    %v4057 = vmul.f32 %v4025, %v1644
    %v4058 = vmul.f32 %v4028, %v1649
    %v4059 = vmul.f32 %v4033, %v1654
    %v4060 = vmul.f32 %v4036, %v1659
    %v4061 = vmul.f32 %v4041, %v1664
    %v4062 = vmul.f32 %v4044, %v1669
    %v4063 = vadd.f32 %v4047, %v1690
    %v4064 = vadd.f32 %v4048, %v1695
    %v4065 = vadd.f32 %v4049, %v1700
    %v4066 = vadd.f32 %v4050, %v1705
    %v4067 = vadd.f32 %v4051, %v1710
    %v4068 = vadd.f32 %v4052, %v1715
    %v4069 = vadd.f32 %v4053, %v1720
    %v4070 = vadd.f32 %v4054, %v1725
    %v4071 = vadd.f32 %v4055, %v1730
    %v4072 = vadd.f32 %v4056, %v1735
    %v4073 = vadd.f32 %v4057, %v1740
    %v4074 = vadd.f32 %v4058, %v1745
    %v4075 = vadd.f32 %v4059, %v1750
    %v4076 = vadd.f32 %v4060, %v1755
    %v4077 = vadd.f32 %v4061, %v1760
    %v4078 = vadd.f32 %v4062, %v1765
    %v4079 = vmax.f32 %v4063, 0.0
    %v4080 = vmax.f32 %v4064, 0.0
    %v4081 = vmax.f32 %v4065, 0.0
    %v4082 = vmax.f32 %v4066, 0.0
    %v4083 = vmax.f32 %v4067, 0.0
    %v4084 = vmax.f32 %v4068, 0.0
    %v4085 = vmax.f32 %v4069, 0.0
    %v4086 = vmax.f32 %v4070, 0.0
    %v4087 = vmax.f32 %v4071, 0.0
    %v4088 = vmax.f32 %v4072, 0.0
    %v4089 = vmax.f32 %v4073, 0.0
    %v4090 = vmax.f32 %v4074, 0.0
    %v4091 = vmax.f32 %v4075, 0.0
    %v4092 = vmax.f32 %v4076, 0.0
    %v4093 = vmax.f32 %v4077, 0.0
    %v4094 = vmax.f32 %v4078, 0.0
    %v4095 = vmul.f32 %v4079, %v1802
    %v4096 = vmul.f32 %v4080, %v1807
    %v4097 = vmul.f32 %v4081, %v1812
    %v4098 = vmul.f32 %v4082, %v1817
    %v4099 = vmul.f32 %v4083, %v1822
    %v4100 = vmul.f32 %v4084, %v1827
    %v4101 = vmul.f32 %v4085, %v1832
    %v4102 = vmul.f32 %v4086, %v1837
    %v4103 = vmul.f32 %v4087, %v1842
    %v4104 = vmul.f32 %v4088, %v1847
    %v4105 = vmul.f32 %v4089, %v1852
    %v4106 = vmul.f32 %v4090, %v1857
    %v4107 = vmul.f32 %v4091, %v1862
    %v4108 = vmul.f32 %v4092, %v1867
    %v4109 = vmul.f32 %v4093, %v1872
    %v4110 = vmul.f32 %v4094, %v1877
    %v4111 = vsel %vm1895, %v4095, 0.0
    %v4112 = vsel %vm1895, %v4096, 0.0
    %v4113 = vadd.f32 %v4111, %v4112
    %v4114 = vsel %vm1895, %v4097, 0.0
    %v4115 = vadd.f32 %v4113, %v4114
    %v4116 = vsel %vm1895, %v4098, 0.0
    %v4117 = vadd.f32 %v4115, %v4116
    %v4118 = vsel %vm1895, %v4099, 0.0
    %v4119 = vadd.f32 %v4117, %v4118
    %v4120 = vsel %vm1895, %v4100, 0.0
    %v4121 = vadd.f32 %v4119, %v4120
    %v4122 = vsel %vm1895, %v4101, 0.0
    %v4123 = vadd.f32 %v4121, %v4122
    %v4124 = vsel %vm1895, %v4102, 0.0
    %v4125 = vadd.f32 %v4123, %v4124
    %v4126 = vsel %vm1895, %v4103, 0.0
    %v4127 = vadd.f32 %v4125, %v4126
    %v4128 = vsel %vm1895, %v4104, 0.0
    %v4129 = vadd.f32 %v4127, %v4128
    %v4130 = vsel %vm1895, %v4105, 0.0
    %v4131 = vadd.f32 %v4129, %v4130
    %v4132 = vsel %vm1895, %v4106, 0.0
    %v4133 = vadd.f32 %v4131, %v4132
    %v4134 = vsel %vm1895, %v4107, 0.0
    %v4135 = vadd.f32 %v4133, %v4134
    %v4136 = vsel %vm1895, %v4108, 0.0
    %v4137 = vadd.f32 %v4135, %v4136
    %v4138 = vsel %vm1895, %v4109, 0.0
    %v4139 = vadd.f32 %v4137, %v4138
    %v4140 = vsel %vm1895, %v4110, 0.0
    %v4141 = vadd.f32 %v4139, %v4140
    %v4142 = vrot.slane %v4141, 4
    %v4143 = vadd.f32 %v4141, %v4142
    %v4144 = vrot.slane %v4143, 2
    %v4145 = vadd.f32 %v4143, %v4144
    %v4146 = vrot.slane %v4145, 1
    %v4147 = vadd.f32 %v4145, %v4146
    %v4148 = vadd.f32 %v4147, %v1933
    %v4149 = vmax.f32 %v4148, 0.0
    %v4150 = vmul.f32 %v4149, %v241
    %v4151 = vsel %vm1937, %v4150, 0.0
    %4152 = vadd.xlane.f32.xlu0 %v4151
    %v4153 = vpop.xlane.xlu0 %4152
    %v4154 = vadd.f32 %v4153, %v1941
    %4155 = vst.msk [vmem:[%s10 + $0x3] sm:$0x1] %vm1943, %v4154
    %s4156 = scalar_lea.vmem %s0, 2048
    %v4157 = vld [vmem:[%s4156] sm:$0xff]
    %v4158 = vld [vmem:[%s4156 + $0x8] sm:$0xff]
    %v4159 = vld [vmem:[%s4156 + $0x10] sm:$0xff]
    %v4160 = vld [vmem:[%s4156 + $0x18] sm:$0xff]
    %v4161 = vld [vmem:[%s4156 + $0x20] sm:$0xff]
    %v4162 = vld [vmem:[%s4156 + $0x28] sm:$0xff]
    %v4163 = vld [vmem:[%s4156 + $0x30] sm:$0xff]
    %v4164 = vld [vmem:[%s4156 + $0x38] sm:$0xff]
    %v4165 = vld [vmem:[%s4156 + $0x40] sm:$0xff]
    %v4166 = vld [vmem:[%s4156 + $0x48] sm:$0xff]
    %v4167 = vld [vmem:[%s4156 + $0x50] sm:$0xff]
    %v4168 = vld [vmem:[%s4156 + $0x58] sm:$0xff]
    %v4169 = vld [vmem:[%s4156 + $0x60] sm:$0xff]
    %v4170 = vld [vmem:[%s4156 + $0x68] sm:$0xff]
    %v4171 = vld [vmem:[%s4156 + $0x70] sm:$0xff]
    %v4172 = vld [vmem:[%s4156 + $0x78] sm:$0xff]
    %v4173 = vld [vmem:[%s4156 + $0x80] sm:$0xff]
    %v4174 = vld [vmem:[%s4156 + $0x88] sm:$0xff]
    %v4175 = vld [vmem:[%s4156 + $0x90] sm:$0xff]
    %v4176 = vld [vmem:[%s4156 + $0x98] sm:$0xff]
    %v4177 = vld [vmem:[%s4156 + $0xa0] sm:$0xff]
    %v4178 = vld [vmem:[%s4156 + $0xa8] sm:$0xff]
    %v4179 = vld [vmem:[%s4156 + $0xb0] sm:$0xff]
    %v4180 = vld [vmem:[%s4156 + $0xb8] sm:$0xff]
    %v4181 = vld [vmem:[%s4156 + $0xc0] sm:$0xff]
    %v4182 = vld [vmem:[%s4156 + $0xc8] sm:$0xff]
    %v4183 = vld [vmem:[%s4156 + $0xd0] sm:$0xff]
    %v4184 = vld [vmem:[%s4156 + $0xd8] sm:$0xff]
    %v4185 = vld [vmem:[%s4156 + $0xe0] sm:$0xff]
    %v4186 = vld [vmem:[%s4156 + $0xe8] sm:$0xff]
    %v4187 = vld [vmem:[%s4156 + $0xf0] sm:$0xff]
    %v4188 = vld [vmem:[%s4156 + $0xf8] sm:$0xff]
    %v4189 = vld [vmem:[%s4156 + $0x100] sm:$0xff]
    %v4190 = vld [vmem:[%s4156 + $0x108] sm:$0xff]
    %v4191 = vld [vmem:[%s4156 + $0x110] sm:$0xff]
    %v4192 = vld [vmem:[%s4156 + $0x118] sm:$0xff]
    %v4193 = vld [vmem:[%s4156 + $0x120] sm:$0xff]
    %v4194 = vld [vmem:[%s4156 + $0x128] sm:$0xff]
    %v4195 = vld [vmem:[%s4156 + $0x130] sm:$0xff]
    %v4196 = vld [vmem:[%s4156 + $0x138] sm:$0xff]
    %v4197 = vld [vmem:[%s4156 + $0x140] sm:$0xff]
    %v4198 = vld [vmem:[%s4156 + $0x148] sm:$0xff]
    %v4199 = vld [vmem:[%s4156 + $0x150] sm:$0xff]
    %v4200 = vld [vmem:[%s4156 + $0x158] sm:$0xff]
    %v4201 = vld [vmem:[%s4156 + $0x160] sm:$0xff]
    %v4202 = vld [vmem:[%s4156 + $0x168] sm:$0xff]
    %v4203 = vld [vmem:[%s4156 + $0x170] sm:$0xff]
    %v4204 = vld [vmem:[%s4156 + $0x178] sm:$0xff]
    %v4205 = vld [vmem:[%s4156 + $0x180] sm:$0xff]
    %v4206 = vld [vmem:[%s4156 + $0x188] sm:$0xff]
    %v4207 = vld [vmem:[%s4156 + $0x190] sm:$0xff]
    %v4208 = vld [vmem:[%s4156 + $0x198] sm:$0xff]
    %v4209 = vld [vmem:[%s4156 + $0x1a0] sm:$0xff]
    %v4210 = vld [vmem:[%s4156 + $0x1a8] sm:$0xff]
    %v4211 = vld [vmem:[%s4156 + $0x1b0] sm:$0xff]
    %v4212 = vld [vmem:[%s4156 + $0x1b8] sm:$0xff]
    %v4213 = vld [vmem:[%s4156 + $0x1c0] sm:$0xff]
    %v4214 = vld [vmem:[%s4156 + $0x1c8] sm:$0xff]
    %v4215 = vld [vmem:[%s4156 + $0x1d0] sm:$0xff]
    %v4216 = vld [vmem:[%s4156 + $0x1d8] sm:$0xff]
    %v4217 = vld [vmem:[%s4156 + $0x1e0] sm:$0xff]
    %v4218 = vld [vmem:[%s4156 + $0x1e8] sm:$0xff]
    %v4219 = vld [vmem:[%s4156 + $0x1f0] sm:$0xff]
    %v4220 = vld [vmem:[%s4156 + $0x1f8] sm:$0xff]
    %v4221 = vpack.c.bf16 %v4158, %v4157
    %v4222 = vpack.c.bf16 %v4160, %v4159
    %v4223 = vpack.c.bf16 %v4162, %v4161
    %v4224 = vpack.c.bf16 %v4164, %v4163
    %v4225 = vpack.c.bf16 %v4166, %v4165
    %v4226 = vpack.c.bf16 %v4168, %v4167
    %v4227 = vpack.c.bf16 %v4170, %v4169
    %v4228 = vpack.c.bf16 %v4172, %v4171
    %v4229 = vpack.c.bf16 %v4174, %v4173
    %v4230 = vpack.c.bf16 %v4176, %v4175
    %v4231 = vpack.c.bf16 %v4178, %v4177
    %v4232 = vpack.c.bf16 %v4180, %v4179
    %v4233 = vpack.c.bf16 %v4182, %v4181
    %v4234 = vpack.c.bf16 %v4184, %v4183
    %v4235 = vpack.c.bf16 %v4186, %v4185
    %v4236 = vpack.c.bf16 %v4188, %v4187
    %v4237 = vpack.c.bf16 %v4190, %v4189
    %v4238 = vpack.c.bf16 %v4192, %v4191
    %v4239 = vpack.c.bf16 %v4194, %v4193
    %v4240 = vpack.c.bf16 %v4196, %v4195
    %v4241 = vpack.c.bf16 %v4198, %v4197
    %v4242 = vpack.c.bf16 %v4200, %v4199
    %v4243 = vpack.c.bf16 %v4202, %v4201
    %v4244 = vpack.c.bf16 %v4204, %v4203
    %v4245 = vpack.c.bf16 %v4206, %v4205
    %v4246 = vpack.c.bf16 %v4208, %v4207
    %v4247 = vpack.c.bf16 %v4210, %v4209
    %v4248 = vpack.c.bf16 %v4212, %v4211
    %v4249 = vpack.c.bf16 %v4214, %v4213
    %v4250 = vpack.c.bf16 %v4216, %v4215
    %v4251 = vpack.c.bf16 %v4218, %v4217
    %v4252 = vpack.c.bf16 %v4220, %v4219
    %4253 = vmatprep.subr.bf16.mxu0 0
    %4254 = vmatpush1.bf16.msra.mxu0 %v4221
    %4255 = vmatprep.subr.bf16.mxu0 0
    %4256 = vmatpush1.bf16.msra.mxu0 %v4222
    %4257 = vmatprep.subr.bf16.mxu0 0
    %4258 = vmatpush1.bf16.msra.mxu0 %v4223
    %4259 = vmatprep.subr.bf16.mxu0 0
    %4260 = vmatpush1.bf16.msra.mxu0 %v4224
    %4261 = vmatprep.subr.bf16.mxu0 0
    %4262 = vmatpush1.bf16.msra.mxu0 %v4225
    %4263 = vmatprep.subr.bf16.mxu0 0
    %4264 = vmatpush1.bf16.msra.mxu0 %v4226
    %4265 = vmatprep.subr.bf16.mxu0 0
    %4266 = vmatpush1.bf16.msra.mxu0 %v4227
    %4267 = vmatprep.subr.bf16.mxu0 0
    %4268 = vmatpush1.bf16.msra.mxu0 %v4228
    %4269 = vmatprep.subr.bf16.mxu0 0
    %4270 = vmatpush1.bf16.msra.mxu0 %v4229
    %4271 = vmatprep.subr.bf16.mxu0 0
    %4272 = vmatpush1.bf16.msra.mxu0 %v4230
    %4273 = vmatprep.subr.bf16.mxu0 0
    %4274 = vmatpush1.bf16.msra.mxu0 %v4231
    %4275 = vmatprep.subr.bf16.mxu0 0
    %4276 = vmatpush1.bf16.msra.mxu0 %v4232
    %4277 = vmatprep.subr.bf16.mxu0 0
    %4278 = vmatpush1.bf16.msra.mxu0 %v4233
    %4279 = vmatprep.subr.bf16.mxu0 0
    %4280 = vmatpush1.bf16.msra.mxu0 %v4234
    %4281 = vmatprep.subr.bf16.mxu0 0
    %4282 = vmatpush1.bf16.msra.mxu0 %v4235
    %4283 = vmatprep.subr.bf16.mxu0 0
    %4284 = vmatpush1.bf16.msra.mxu0 %v4236
    %4285 = vmatprep.mubr.bf16.mxu0 %v533
    %4286 = vmatmul.mubr.bf16.gmra.mrb[0].mxu0 %v532
    %v4287 = vpop.f32.mrb[0].mxu0
    %v4288 = vadd.f32 0.0, %v4287
    %v4289 = vpop.f32.mrb[0].mxu0
    %v4290 = vpop.f32.mrb[0].mxu0
    %v4291 = vadd.f32 0.0, %v4290
    %v4292 = vpop.f32.mrb[0].mxu0
    %4293 = vmatprep.mubr.bf16.mxu0 %v537
    %4294 = vmatmul.mubr.bf16.gmra.mrb[0].mxu0 %v536
    %v4295 = vpop.f32.mrb[0].mxu0
    %v4296 = vadd.f32 0.0, %v4295
    %v4297 = vpop.f32.mrb[0].mxu0
    %v4298 = vpop.f32.mrb[0].mxu0
    %v4299 = vadd.f32 0.0, %v4298
    %v4300 = vpop.f32.mrb[0].mxu0
    %4301 = vmatprep.mubr.bf16.mxu0 %v541
    %4302 = vmatmul.mubr.bf16.gmra.mrb[0].mxu0 %v540
    %v4303 = vpop.f32.mrb[0].mxu0
    %v4304 = vadd.f32 0.0, %v4303
    %v4305 = vpop.f32.mrb[0].mxu0
    %v4306 = vpop.f32.mrb[0].mxu0
    %v4307 = vadd.f32 0.0, %v4306
    %v4308 = vpop.f32.mrb[0].mxu0
    %4309 = vmatprep.mubr.bf16.mxu0 %v545
    %4310 = vmatmul.mubr.bf16.gmra.mrb[0].mxu0 %v544
    %v4311 = vpop.f32.mrb[0].mxu0
    %v4312 = vadd.f32 0.0, %v4311
    %v4313 = vpop.f32.mrb[0].mxu0
    %v4314 = vpop.f32.mrb[0].mxu0
    %v4315 = vadd.f32 0.0, %v4314
    %v4316 = vpop.f32.mrb[0].mxu0
    %4317 = vmatprep.mubr.bf16.mxu0 %v549
    %4318 = vmatmul.mubr.bf16.gmra.mrb[0].mxu0 %v548
    %v4319 = vpop.f32.mrb[0].mxu0
    %v4320 = vadd.f32 0.0, %v4319
    %v4321 = vpop.f32.mrb[0].mxu0
    %v4322 = vpop.f32.mrb[0].mxu0
    %v4323 = vadd.f32 0.0, %v4322
    %v4324 = vpop.f32.mrb[0].mxu0
    %4325 = vmatprep.mubr.bf16.mxu0 %v553
    %4326 = vmatmul.mubr.bf16.gmra.mrb[0].mxu0 %v552
    %v4327 = vpop.f32.mrb[0].mxu0
    %v4328 = vadd.f32 0.0, %v4327
    %v4329 = vpop.f32.mrb[0].mxu0
    %v4330 = vpop.f32.mrb[0].mxu0
    %v4331 = vadd.f32 0.0, %v4330
    %v4332 = vpop.f32.mrb[0].mxu0
    %4333 = vmatprep.mubr.bf16.mxu0 %v557
    %4334 = vmatmul.mubr.bf16.gmra.mrb[0].mxu0 %v556
    %v4335 = vpop.f32.mrb[0].mxu0
    %v4336 = vadd.f32 0.0, %v4335
    %v4337 = vpop.f32.mrb[0].mxu0
    %v4338 = vpop.f32.mrb[0].mxu0
    %v4339 = vadd.f32 0.0, %v4338
    %v4340 = vpop.f32.mrb[0].mxu0
    %4341 = vmatprep.mubr.bf16.mxu0 %v561
    %4342 = vmatmul.mubr.bf16.gmra.mrb[0].mxu0 %v560
    %v4343 = vpop.f32.mrb[0].mxu0
    %v4344 = vadd.f32 0.0, %v4343
    %v4345 = vpop.f32.mrb[0].mxu0
    %v4346 = vpop.f32.mrb[0].mxu0
    %v4347 = vadd.f32 0.0, %v4346
    %v4348 = vpop.f32.mrb[0].mxu0
    %4349 = vmatprep.mubr.bf16.mxu0 %v565
    %4350 = vmatmul.mubr.bf16.gmra.mrb[0].mxu0 %v564
    %v4351 = vpop.f32.mrb[0].mxu0
    %v4352 = vadd.f32 0.0, %v4351
    %v4353 = vpop.f32.mrb[0].mxu0
    %v4354 = vpop.f32.mrb[0].mxu0
    %v4355 = vadd.f32 0.0, %v4354
    %v4356 = vpop.f32.mrb[0].mxu0
    %4357 = vmatprep.mubr.bf16.mxu0 %v569
    %4358 = vmatmul.mubr.bf16.gmra.mrb[0].mxu0 %v568
    %v4359 = vpop.f32.mrb[0].mxu0
    %v4360 = vadd.f32 0.0, %v4359
    %v4361 = vpop.f32.mrb[0].mxu0
    %v4362 = vpop.f32.mrb[0].mxu0
    %v4363 = vadd.f32 0.0, %v4362
    %v4364 = vpop.f32.mrb[0].mxu0
    %4365 = vmatprep.mubr.bf16.mxu0 %v573
    %4366 = vmatmul.mubr.bf16.gmra.mrb[0].mxu0 %v572
    %v4367 = vpop.f32.mrb[0].mxu0
    %v4368 = vadd.f32 0.0, %v4367
    %v4369 = vpop.f32.mrb[0].mxu0
    %v4370 = vpop.f32.mrb[0].mxu0
    %v4371 = vadd.f32 0.0, %v4370
    %v4372 = vpop.f32.mrb[0].mxu0
    %4373 = vmatprep.mubr.bf16.mxu0 %v577
    %4374 = vmatmul.mubr.bf16.gmra.mrb[0].mxu0 %v576
    %v4375 = vpop.f32.mrb[0].mxu0
    %v4376 = vadd.f32 0.0, %v4375
    %v4377 = vpop.f32.mrb[0].mxu0
    %v4378 = vpop.f32.mrb[0].mxu0
    %v4379 = vadd.f32 0.0, %v4378
    %v4380 = vpop.f32.mrb[0].mxu0
    %4381 = vmatprep.mubr.bf16.mxu0 %v581
    %4382 = vmatmul.mubr.bf16.gmra.mrb[0].mxu0 %v580
    %v4383 = vpop.f32.mrb[0].mxu0
    %v4384 = vadd.f32 0.0, %v4383
    %v4385 = vpop.f32.mrb[0].mxu0
    %v4386 = vpop.f32.mrb[0].mxu0
    %v4387 = vadd.f32 0.0, %v4386
    %v4388 = vpop.f32.mrb[0].mxu0
    %4389 = vmatprep.mubr.bf16.mxu0 %v585
    %4390 = vmatmul.mubr.bf16.gmra.mrb[0].mxu0 %v584
    %v4391 = vpop.f32.mrb[0].mxu0
    %v4392 = vadd.f32 0.0, %v4391
    %v4393 = vpop.f32.mrb[0].mxu0
    %v4394 = vpop.f32.mrb[0].mxu0
    %v4395 = vadd.f32 0.0, %v4394
    %v4396 = vpop.f32.mrb[0].mxu0
    %4397 = vmatprep.mubr.bf16.mxu0 %v589
    %4398 = vmatmul.mubr.bf16.gmra.mrb[0].mxu0 %v588
    %v4399 = vpop.f32.mrb[0].mxu0
    %v4400 = vadd.f32 0.0, %v4399
    %v4401 = vpop.f32.mrb[0].mxu0
    %v4402 = vpop.f32.mrb[0].mxu0
    %v4403 = vadd.f32 0.0, %v4402
    %v4404 = vpop.f32.mrb[0].mxu0
    %4405 = vmatprep.mubr.bf16.mxu0 %v593
    %4406 = vmatmul.mubr.bf16.gmra.mrb[0].mxu0 %v592
    %v4407 = vpop.f32.mrb[0].mxu0
    %v4408 = vadd.f32 0.0, %v4407
    %v4409 = vpop.f32.mrb[0].mxu0
    %v4410 = vpop.f32.mrb[0].mxu0
    %v4411 = vadd.f32 0.0, %v4410
    %v4412 = vpop.f32.mrb[0].mxu0
    %4413 = vdwg.mxu0
    %4414 = vmatprep.subr.bf16.mxu0 0
    %4415 = vmatpush1.bf16.msra.mxu0 %v4237
    %4416 = vmatprep.subr.bf16.mxu0 0
    %4417 = vmatpush1.bf16.msra.mxu0 %v4238
    %4418 = vmatprep.subr.bf16.mxu0 0
    %4419 = vmatpush1.bf16.msra.mxu0 %v4239
    %4420 = vmatprep.subr.bf16.mxu0 0
    %4421 = vmatpush1.bf16.msra.mxu0 %v4240
    %4422 = vmatprep.subr.bf16.mxu0 0
    %4423 = vmatpush1.bf16.msra.mxu0 %v4241
    %4424 = vmatprep.subr.bf16.mxu0 0
    %4425 = vmatpush1.bf16.msra.mxu0 %v4242
    %4426 = vmatprep.subr.bf16.mxu0 0
    %4427 = vmatpush1.bf16.msra.mxu0 %v4243
    %4428 = vmatprep.subr.bf16.mxu0 0
    %4429 = vmatpush1.bf16.msra.mxu0 %v4244
    %4430 = vmatprep.subr.bf16.mxu0 0
    %4431 = vmatpush1.bf16.msra.mxu0 %v4245
    %4432 = vmatprep.subr.bf16.mxu0 0
    %4433 = vmatpush1.bf16.msra.mxu0 %v4246
    %4434 = vmatprep.subr.bf16.mxu0 0
    %4435 = vmatpush1.bf16.msra.mxu0 %v4247
    %4436 = vmatprep.subr.bf16.mxu0 0
    %4437 = vmatpush1.bf16.msra.mxu0 %v4248
    %4438 = vmatprep.subr.bf16.mxu0 0
    %4439 = vmatpush1.bf16.msra.mxu0 %v4249
    %4440 = vmatprep.subr.bf16.mxu0 0
    %4441 = vmatpush1.bf16.msra.mxu0 %v4250
    %4442 = vmatprep.subr.bf16.mxu0 0
    %4443 = vmatpush1.bf16.msra.mxu0 %v4251
    %4444 = vmatprep.subr.bf16.mxu0 0
    %4445 = vmatpush1.bf16.msra.mxu0 %v4252
    %4446 = vmatprep.mubr.bf16.mxu0 %v535
    %4447 = vmatmul.mubr.bf16.gmra.mrb[0].mxu0 %v534
    %v4448 = vpop.f32.mrb[0].mxu0
    %v4449 = vadd.f32 %v4288, %v4448
    %v4450 = vpop.f32.mrb[0].mxu0
    %v4451 = vpop.f32.mrb[0].mxu0
    %v4452 = vadd.f32 %v4291, %v4451
    %v4453 = vpop.f32.mrb[0].mxu0
    %4454 = vmatprep.mubr.bf16.mxu0 %v539
    %4455 = vmatmul.mubr.bf16.gmra.mrb[0].mxu0 %v538
    %v4456 = vpop.f32.mrb[0].mxu0
    %v4457 = vadd.f32 %v4296, %v4456
    %v4458 = vpop.f32.mrb[0].mxu0
    %v4459 = vpop.f32.mrb[0].mxu0
    %v4460 = vadd.f32 %v4299, %v4459
    %v4461 = vpop.f32.mrb[0].mxu0
    %4462 = vmatprep.mubr.bf16.mxu0 %v543
    %4463 = vmatmul.mubr.bf16.gmra.mrb[0].mxu0 %v542
    %v4464 = vpop.f32.mrb[0].mxu0
    %v4465 = vadd.f32 %v4304, %v4464
    %v4466 = vpop.f32.mrb[0].mxu0
    %v4467 = vpop.f32.mrb[0].mxu0
    %v4468 = vadd.f32 %v4307, %v4467
    %v4469 = vpop.f32.mrb[0].mxu0
    %4470 = vmatprep.mubr.bf16.mxu0 %v547
    %4471 = vmatmul.mubr.bf16.gmra.mrb[0].mxu0 %v546
    %v4472 = vpop.f32.mrb[0].mxu0
    %v4473 = vadd.f32 %v4312, %v4472
    %v4474 = vpop.f32.mrb[0].mxu0
    %v4475 = vpop.f32.mrb[0].mxu0
    %v4476 = vadd.f32 %v4315, %v4475
    %v4477 = vpop.f32.mrb[0].mxu0
    %4478 = vmatprep.mubr.bf16.mxu0 %v551
    %4479 = vmatmul.mubr.bf16.gmra.mrb[0].mxu0 %v550
    %v4480 = vpop.f32.mrb[0].mxu0
    %v4481 = vadd.f32 %v4320, %v4480
    %v4482 = vpop.f32.mrb[0].mxu0
    %v4483 = vpop.f32.mrb[0].mxu0
    %v4484 = vadd.f32 %v4323, %v4483
    %v4485 = vpop.f32.mrb[0].mxu0
    %4486 = vmatprep.mubr.bf16.mxu0 %v555
    %4487 = vmatmul.mubr.bf16.gmra.mrb[0].mxu0 %v554
    %v4488 = vpop.f32.mrb[0].mxu0
    %v4489 = vadd.f32 %v4328, %v4488
    %v4490 = vpop.f32.mrb[0].mxu0
    %v4491 = vpop.f32.mrb[0].mxu0
    %v4492 = vadd.f32 %v4331, %v4491
    %v4493 = vpop.f32.mrb[0].mxu0
    %4494 = vmatprep.mubr.bf16.mxu0 %v559
    %4495 = vmatmul.mubr.bf16.gmra.mrb[0].mxu0 %v558
    %v4496 = vpop.f32.mrb[0].mxu0
    %v4497 = vadd.f32 %v4336, %v4496
    %v4498 = vpop.f32.mrb[0].mxu0
    %v4499 = vpop.f32.mrb[0].mxu0
    %v4500 = vadd.f32 %v4339, %v4499
    %v4501 = vpop.f32.mrb[0].mxu0
    %4502 = vmatprep.mubr.bf16.mxu0 %v563
    %4503 = vmatmul.mubr.bf16.gmra.mrb[0].mxu0 %v562
    %v4504 = vpop.f32.mrb[0].mxu0
    %v4505 = vadd.f32 %v4344, %v4504
    %v4506 = vpop.f32.mrb[0].mxu0
    %v4507 = vpop.f32.mrb[0].mxu0
    %v4508 = vadd.f32 %v4347, %v4507
    %v4509 = vpop.f32.mrb[0].mxu0
    %4510 = vmatprep.mubr.bf16.mxu0 %v567
    %4511 = vmatmul.mubr.bf16.gmra.mrb[0].mxu0 %v566
    %v4512 = vpop.f32.mrb[0].mxu0
    %v4513 = vadd.f32 %v4352, %v4512
    %v4514 = vpop.f32.mrb[0].mxu0
    %v4515 = vpop.f32.mrb[0].mxu0
    %v4516 = vadd.f32 %v4355, %v4515
    %v4517 = vpop.f32.mrb[0].mxu0
    %4518 = vmatprep.mubr.bf16.mxu0 %v571
    %4519 = vmatmul.mubr.bf16.gmra.mrb[0].mxu0 %v570
    %v4520 = vpop.f32.mrb[0].mxu0
    %v4521 = vadd.f32 %v4360, %v4520
    %v4522 = vpop.f32.mrb[0].mxu0
    %v4523 = vpop.f32.mrb[0].mxu0
    %v4524 = vadd.f32 %v4363, %v4523
    %v4525 = vpop.f32.mrb[0].mxu0
    %4526 = vmatprep.mubr.bf16.mxu0 %v575
    %4527 = vmatmul.mubr.bf16.gmra.mrb[0].mxu0 %v574
    %v4528 = vpop.f32.mrb[0].mxu0
    %v4529 = vadd.f32 %v4368, %v4528
    %v4530 = vpop.f32.mrb[0].mxu0
    %v4531 = vpop.f32.mrb[0].mxu0
    %v4532 = vadd.f32 %v4371, %v4531
    %v4533 = vpop.f32.mrb[0].mxu0
    %4534 = vmatprep.mubr.bf16.mxu0 %v579
    %4535 = vmatmul.mubr.bf16.gmra.mrb[0].mxu0 %v578
    %v4536 = vpop.f32.mrb[0].mxu0
    %v4537 = vadd.f32 %v4376, %v4536
    %v4538 = vpop.f32.mrb[0].mxu0
    %v4539 = vpop.f32.mrb[0].mxu0
    %v4540 = vadd.f32 %v4379, %v4539
    %v4541 = vpop.f32.mrb[0].mxu0
    %4542 = vmatprep.mubr.bf16.mxu0 %v583
    %4543 = vmatmul.mubr.bf16.gmra.mrb[0].mxu0 %v582
    %v4544 = vpop.f32.mrb[0].mxu0
    %v4545 = vadd.f32 %v4384, %v4544
    %v4546 = vpop.f32.mrb[0].mxu0
    %v4547 = vpop.f32.mrb[0].mxu0
    %v4548 = vadd.f32 %v4387, %v4547
    %v4549 = vpop.f32.mrb[0].mxu0
    %4550 = vmatprep.mubr.bf16.mxu0 %v587
    %4551 = vmatmul.mubr.bf16.gmra.mrb[0].mxu0 %v586
    %v4552 = vpop.f32.mrb[0].mxu0
    %v4553 = vadd.f32 %v4392, %v4552
    %v4554 = vpop.f32.mrb[0].mxu0
    %v4555 = vpop.f32.mrb[0].mxu0
    %v4556 = vadd.f32 %v4395, %v4555
    %v4557 = vpop.f32.mrb[0].mxu0
    %4558 = vmatprep.mubr.bf16.mxu0 %v591
    %4559 = vmatmul.mubr.bf16.gmra.mrb[0].mxu0 %v590
    %v4560 = vpop.f32.mrb[0].mxu0
    %v4561 = vadd.f32 %v4400, %v4560
    %v4562 = vpop.f32.mrb[0].mxu0
    %v4563 = vpop.f32.mrb[0].mxu0
    %v4564 = vadd.f32 %v4403, %v4563
    %v4565 = vpop.f32.mrb[0].mxu0
    %4566 = vmatprep.mubr.bf16.mxu0 %v595
    %4567 = vmatmul.mubr.bf16.gmra.mrb[0].mxu0 %v594
    %v4568 = vpop.f32.mrb[0].mxu0
    %v4569 = vadd.f32 %v4408, %v4568
    %v4570 = vpop.f32.mrb[0].mxu0
    %v4571 = vpop.f32.mrb[0].mxu0
    %v4572 = vadd.f32 %v4411, %v4571
    %v4573 = vpop.f32.mrb[0].mxu0
    %4574 = vdwg.mxu0
    %v4575 = vmul.f32 %v4449, %v985
    %v4576 = vmul.f32 %v4452, %v990
    %v4577 = vmul.f32 %v4457, %v995
    %v4578 = vmul.f32 %v4460, %v1000
    %v4579 = vmul.f32 %v4465, %v1005
    %v4580 = vmul.f32 %v4468, %v1010
    %v4581 = vmul.f32 %v4473, %v1015
    %v4582 = vmul.f32 %v4476, %v1020
    %v4583 = vmul.f32 %v4481, %v1025
    %v4584 = vmul.f32 %v4484, %v1030
    %v4585 = vmul.f32 %v4489, %v1035
    %v4586 = vmul.f32 %v4492, %v1040
    %v4587 = vmul.f32 %v4497, %v1045
    %v4588 = vmul.f32 %v4500, %v1050
    %v4589 = vmul.f32 %v4505, %v1055
    %v4590 = vmul.f32 %v4508, %v1060
    %v4591 = vmul.f32 %v4513, %v1065
    %v4592 = vmul.f32 %v4516, %v1070
    %v4593 = vmul.f32 %v4521, %v1075
    %v4594 = vmul.f32 %v4524, %v1080
    %v4595 = vmul.f32 %v4529, %v1085
    %v4596 = vmul.f32 %v4532, %v1090
    %v4597 = vmul.f32 %v4537, %v1095
    %v4598 = vmul.f32 %v4540, %v1100
    %v4599 = vmul.f32 %v4545, %v1105
    %v4600 = vmul.f32 %v4548, %v1110
    %v4601 = vmul.f32 %v4553, %v1115
    %v4602 = vmul.f32 %v4556, %v1120
    %v4603 = vmul.f32 %v4561, %v1125
    %v4604 = vmul.f32 %v4564, %v1130
    %v4605 = vmul.f32 %v4569, %v1135
    %v4606 = vmul.f32 %v4572, %v1140
    %v4607 = vadd.f32 %v4575, %v1177
    %v4608 = vadd.f32 %v4576, %v1182
    %v4609 = vadd.f32 %v4577, %v1187
    %v4610 = vadd.f32 %v4578, %v1192
    %v4611 = vadd.f32 %v4579, %v1197
    %v4612 = vadd.f32 %v4580, %v1202
    %v4613 = vadd.f32 %v4581, %v1207
    %v4614 = vadd.f32 %v4582, %v1212
    %v4615 = vadd.f32 %v4583, %v1217
    %v4616 = vadd.f32 %v4584, %v1222
    %v4617 = vadd.f32 %v4585, %v1227
    %v4618 = vadd.f32 %v4586, %v1232
    %v4619 = vadd.f32 %v4587, %v1237
    %v4620 = vadd.f32 %v4588, %v1242
    %v4621 = vadd.f32 %v4589, %v1247
    %v4622 = vadd.f32 %v4590, %v1252
    %v4623 = vadd.f32 %v4591, %v1257
    %v4624 = vadd.f32 %v4592, %v1262
    %v4625 = vadd.f32 %v4593, %v1267
    %v4626 = vadd.f32 %v4594, %v1272
    %v4627 = vadd.f32 %v4595, %v1277
    %v4628 = vadd.f32 %v4596, %v1282
    %v4629 = vadd.f32 %v4597, %v1287
    %v4630 = vadd.f32 %v4598, %v1292
    %v4631 = vadd.f32 %v4599, %v1297
    %v4632 = vadd.f32 %v4600, %v1302
    %v4633 = vadd.f32 %v4601, %v1307
    %v4634 = vadd.f32 %v4602, %v1312
    %v4635 = vadd.f32 %v4603, %v1317
    %v4636 = vadd.f32 %v4604, %v1322
    %v4637 = vadd.f32 %v4605, %v1327
    %v4638 = vadd.f32 %v4606, %v1332
    %v4639 = vmax.f32 %v4607, 0.0
    %v4640 = vmax.f32 %v4608, 0.0
    %v4641 = vmax.f32 %v4609, 0.0
    %v4642 = vmax.f32 %v4610, 0.0
    %v4643 = vmax.f32 %v4611, 0.0
    %v4644 = vmax.f32 %v4612, 0.0
    %v4645 = vmax.f32 %v4613, 0.0
    %v4646 = vmax.f32 %v4614, 0.0
    %v4647 = vmax.f32 %v4615, 0.0
    %v4648 = vmax.f32 %v4616, 0.0
    %v4649 = vmax.f32 %v4617, 0.0
    %v4650 = vmax.f32 %v4618, 0.0
    %v4651 = vmax.f32 %v4619, 0.0
    %v4652 = vmax.f32 %v4620, 0.0
    %v4653 = vmax.f32 %v4621, 0.0
    %v4654 = vmax.f32 %v4622, 0.0
    %v4655 = vmax.f32 %v4623, 0.0
    %v4656 = vmax.f32 %v4624, 0.0
    %v4657 = vmax.f32 %v4625, 0.0
    %v4658 = vmax.f32 %v4626, 0.0
    %v4659 = vmax.f32 %v4627, 0.0
    %v4660 = vmax.f32 %v4628, 0.0
    %v4661 = vmax.f32 %v4629, 0.0
    %v4662 = vmax.f32 %v4630, 0.0
    %v4663 = vmax.f32 %v4631, 0.0
    %v4664 = vmax.f32 %v4632, 0.0
    %v4665 = vmax.f32 %v4633, 0.0
    %v4666 = vmax.f32 %v4634, 0.0
    %v4667 = vmax.f32 %v4635, 0.0
    %v4668 = vmax.f32 %v4636, 0.0
    %v4669 = vmax.f32 %v4637, 0.0
    %v4670 = vmax.f32 %v4638, 0.0
    %v4671 = vpack.c.bf16 %v4640, %v4639
    %v4672 = vpack.c.bf16 %v4642, %v4641
    %v4673 = vpack.c.bf16 %v4644, %v4643
    %v4674 = vpack.c.bf16 %v4646, %v4645
    %v4675 = vpack.c.bf16 %v4648, %v4647
    %v4676 = vpack.c.bf16 %v4650, %v4649
    %v4677 = vpack.c.bf16 %v4652, %v4651
    %v4678 = vpack.c.bf16 %v4654, %v4653
    %v4679 = vpack.c.bf16 %v4656, %v4655
    %v4680 = vpack.c.bf16 %v4658, %v4657
    %v4681 = vpack.c.bf16 %v4660, %v4659
    %v4682 = vpack.c.bf16 %v4662, %v4661
    %v4683 = vpack.c.bf16 %v4664, %v4663
    %v4684 = vpack.c.bf16 %v4666, %v4665
    %v4685 = vpack.c.bf16 %v4668, %v4667
    %v4686 = vpack.c.bf16 %v4670, %v4669
    %4687 = vmatprep.subr.bf16.mxu0 0
    %4688 = vmatpush1.bf16.msra.mxu0 %v4671
    %4689 = vmatprep.subr.bf16.mxu0 0
    %4690 = vmatpush1.bf16.msra.mxu0 %v4672
    %4691 = vmatprep.subr.bf16.mxu0 0
    %4692 = vmatpush1.bf16.msra.mxu0 %v4673
    %4693 = vmatprep.subr.bf16.mxu0 0
    %4694 = vmatpush1.bf16.msra.mxu0 %v4674
    %4695 = vmatprep.subr.bf16.mxu0 0
    %4696 = vmatpush1.bf16.msra.mxu0 %v4675
    %4697 = vmatprep.subr.bf16.mxu0 0
    %4698 = vmatpush1.bf16.msra.mxu0 %v4676
    %4699 = vmatprep.subr.bf16.mxu0 0
    %4700 = vmatpush1.bf16.msra.mxu0 %v4677
    %4701 = vmatprep.subr.bf16.mxu0 0
    %4702 = vmatpush1.bf16.msra.mxu0 %v4678
    %4703 = vmatprep.subr.bf16.mxu0 0
    %4704 = vmatpush1.bf16.msra.mxu0 %v4679
    %4705 = vmatprep.subr.bf16.mxu0 0
    %4706 = vmatpush1.bf16.msra.mxu0 %v4680
    %4707 = vmatprep.subr.bf16.mxu0 0
    %4708 = vmatpush1.bf16.msra.mxu0 %v4681
    %4709 = vmatprep.subr.bf16.mxu0 0
    %4710 = vmatpush1.bf16.msra.mxu0 %v4682
    %4711 = vmatprep.subr.bf16.mxu0 0
    %4712 = vmatpush1.bf16.msra.mxu0 %v4683
    %4713 = vmatprep.subr.bf16.mxu0 0
    %4714 = vmatpush1.bf16.msra.mxu0 %v4684
    %4715 = vmatprep.subr.bf16.mxu0 0
    %4716 = vmatpush1.bf16.msra.mxu0 %v4685
    %4717 = vmatprep.subr.bf16.mxu0 0
    %4718 = vmatpush1.bf16.msra.mxu0 %v4686
    %4719 = vmatprep.mubr.bf16.mxu0 %v1463
    %4720 = vmatmul.mubr.bf16.gmra.mrb[0].mxu0 %v1462
    %v4721 = vpop.f32.mrb[0].mxu0
    %v4722 = vadd.f32 0.0, %v4721
    %v4723 = vpop.f32.mrb[0].mxu0
    %v4724 = vpop.f32.mrb[0].mxu0
    %v4725 = vadd.f32 0.0, %v4724
    %v4726 = vpop.f32.mrb[0].mxu0
    %4727 = vmatprep.mubr.bf16.mxu0 %v1465
    %4728 = vmatmul.mubr.bf16.gmra.mrb[0].mxu0 %v1464
    %v4729 = vpop.f32.mrb[0].mxu0
    %v4730 = vadd.f32 0.0, %v4729
    %v4731 = vpop.f32.mrb[0].mxu0
    %v4732 = vpop.f32.mrb[0].mxu0
    %v4733 = vadd.f32 0.0, %v4732
    %v4734 = vpop.f32.mrb[0].mxu0
    %4735 = vmatprep.mubr.bf16.mxu0 %v1467
    %4736 = vmatmul.mubr.bf16.gmra.mrb[0].mxu0 %v1466
    %v4737 = vpop.f32.mrb[0].mxu0
    %v4738 = vadd.f32 0.0, %v4737
    %v4739 = vpop.f32.mrb[0].mxu0
    %v4740 = vpop.f32.mrb[0].mxu0
    %v4741 = vadd.f32 0.0, %v4740
    %v4742 = vpop.f32.mrb[0].mxu0
    %4743 = vmatprep.mubr.bf16.mxu0 %v1469
    %4744 = vmatmul.mubr.bf16.gmra.mrb[0].mxu0 %v1468
    %v4745 = vpop.f32.mrb[0].mxu0
    %v4746 = vadd.f32 0.0, %v4745
    %v4747 = vpop.f32.mrb[0].mxu0
    %v4748 = vpop.f32.mrb[0].mxu0
    %v4749 = vadd.f32 0.0, %v4748
    %v4750 = vpop.f32.mrb[0].mxu0
    %4751 = vmatprep.mubr.bf16.mxu0 %v1471
    %4752 = vmatmul.mubr.bf16.gmra.mrb[0].mxu0 %v1470
    %v4753 = vpop.f32.mrb[0].mxu0
    %v4754 = vadd.f32 0.0, %v4753
    %v4755 = vpop.f32.mrb[0].mxu0
    %v4756 = vpop.f32.mrb[0].mxu0
    %v4757 = vadd.f32 0.0, %v4756
    %v4758 = vpop.f32.mrb[0].mxu0
    %4759 = vmatprep.mubr.bf16.mxu0 %v1473
    %4760 = vmatmul.mubr.bf16.gmra.mrb[0].mxu0 %v1472
    %v4761 = vpop.f32.mrb[0].mxu0
    %v4762 = vadd.f32 0.0, %v4761
    %v4763 = vpop.f32.mrb[0].mxu0
    %v4764 = vpop.f32.mrb[0].mxu0
    %v4765 = vadd.f32 0.0, %v4764
    %v4766 = vpop.f32.mrb[0].mxu0
    %4767 = vmatprep.mubr.bf16.mxu0 %v1475
    %4768 = vmatmul.mubr.bf16.gmra.mrb[0].mxu0 %v1474
    %v4769 = vpop.f32.mrb[0].mxu0
    %v4770 = vadd.f32 0.0, %v4769
    %v4771 = vpop.f32.mrb[0].mxu0
    %v4772 = vpop.f32.mrb[0].mxu0
    %v4773 = vadd.f32 0.0, %v4772
    %v4774 = vpop.f32.mrb[0].mxu0
    %4775 = vmatprep.mubr.bf16.mxu0 %v1477
    %4776 = vmatmul.mubr.bf16.gmra.mrb[0].mxu0 %v1476
    %v4777 = vpop.f32.mrb[0].mxu0
    %v4778 = vadd.f32 0.0, %v4777
    %v4779 = vpop.f32.mrb[0].mxu0
    %v4780 = vpop.f32.mrb[0].mxu0
    %v4781 = vadd.f32 0.0, %v4780
    %v4782 = vpop.f32.mrb[0].mxu0
    %4783 = vdwg.mxu0
    %v4784 = vmul.f32 %v4722, %v1594
    %v4785 = vmul.f32 %v4725, %v1599
    %v4786 = vmul.f32 %v4730, %v1604
    %v4787 = vmul.f32 %v4733, %v1609
    %v4788 = vmul.f32 %v4738, %v1614
    %v4789 = vmul.f32 %v4741, %v1619
    %v4790 = vmul.f32 %v4746, %v1624
    %v4791 = vmul.f32 %v4749, %v1629
    %v4792 = vmul.f32 %v4754, %v1634
    %v4793 = vmul.f32 %v4757, %v1639
    %v4794 = vmul.f32 %v4762, %v1644
    %v4795 = vmul.f32 %v4765, %v1649
    %v4796 = vmul.f32 %v4770, %v1654
    %v4797 = vmul.f32 %v4773, %v1659
    %v4798 = vmul.f32 %v4778, %v1664
    %v4799 = vmul.f32 %v4781, %v1669
    %v4800 = vadd.f32 %v4784, %v1690
    %v4801 = vadd.f32 %v4785, %v1695
    %v4802 = vadd.f32 %v4786, %v1700
    %v4803 = vadd.f32 %v4787, %v1705
    %v4804 = vadd.f32 %v4788, %v1710
    %v4805 = vadd.f32 %v4789, %v1715
    %v4806 = vadd.f32 %v4790, %v1720
    %v4807 = vadd.f32 %v4791, %v1725
    %v4808 = vadd.f32 %v4792, %v1730
    %v4809 = vadd.f32 %v4793, %v1735
    %v4810 = vadd.f32 %v4794, %v1740
    %v4811 = vadd.f32 %v4795, %v1745
    %v4812 = vadd.f32 %v4796, %v1750
    %v4813 = vadd.f32 %v4797, %v1755
    %v4814 = vadd.f32 %v4798, %v1760
    %v4815 = vadd.f32 %v4799, %v1765
    %v4816 = vmax.f32 %v4800, 0.0
    %v4817 = vmax.f32 %v4801, 0.0
    %v4818 = vmax.f32 %v4802, 0.0
    %v4819 = vmax.f32 %v4803, 0.0
    %v4820 = vmax.f32 %v4804, 0.0
    %v4821 = vmax.f32 %v4805, 0.0
    %v4822 = vmax.f32 %v4806, 0.0
    %v4823 = vmax.f32 %v4807, 0.0
    %v4824 = vmax.f32 %v4808, 0.0
    %v4825 = vmax.f32 %v4809, 0.0
    %v4826 = vmax.f32 %v4810, 0.0
    %v4827 = vmax.f32 %v4811, 0.0
    %v4828 = vmax.f32 %v4812, 0.0
    %v4829 = vmax.f32 %v4813, 0.0
    %v4830 = vmax.f32 %v4814, 0.0
    %v4831 = vmax.f32 %v4815, 0.0
    %v4832 = vmul.f32 %v4816, %v1802
    %v4833 = vmul.f32 %v4817, %v1807
    %v4834 = vmul.f32 %v4818, %v1812
    %v4835 = vmul.f32 %v4819, %v1817
    %v4836 = vmul.f32 %v4820, %v1822
    %v4837 = vmul.f32 %v4821, %v1827
    %v4838 = vmul.f32 %v4822, %v1832
    %v4839 = vmul.f32 %v4823, %v1837
    %v4840 = vmul.f32 %v4824, %v1842
    %v4841 = vmul.f32 %v4825, %v1847
    %v4842 = vmul.f32 %v4826, %v1852
    %v4843 = vmul.f32 %v4827, %v1857
    %v4844 = vmul.f32 %v4828, %v1862
    %v4845 = vmul.f32 %v4829, %v1867
    %v4846 = vmul.f32 %v4830, %v1872
    %v4847 = vmul.f32 %v4831, %v1877
    %v4848 = vsel %vm1895, %v4832, 0.0
    %v4849 = vsel %vm1895, %v4833, 0.0
    %v4850 = vadd.f32 %v4848, %v4849
    %v4851 = vsel %vm1895, %v4834, 0.0
    %v4852 = vadd.f32 %v4850, %v4851
    %v4853 = vsel %vm1895, %v4835, 0.0
    %v4854 = vadd.f32 %v4852, %v4853
    %v4855 = vsel %vm1895, %v4836, 0.0
    %v4856 = vadd.f32 %v4854, %v4855
    %v4857 = vsel %vm1895, %v4837, 0.0
    %v4858 = vadd.f32 %v4856, %v4857
    %v4859 = vsel %vm1895, %v4838, 0.0
    %v4860 = vadd.f32 %v4858, %v4859
    %v4861 = vsel %vm1895, %v4839, 0.0
    %v4862 = vadd.f32 %v4860, %v4861
    %v4863 = vsel %vm1895, %v4840, 0.0
    %v4864 = vadd.f32 %v4862, %v4863
    %v4865 = vsel %vm1895, %v4841, 0.0
    %v4866 = vadd.f32 %v4864, %v4865
    %v4867 = vsel %vm1895, %v4842, 0.0
    %v4868 = vadd.f32 %v4866, %v4867
    %v4869 = vsel %vm1895, %v4843, 0.0
    %v4870 = vadd.f32 %v4868, %v4869
    %v4871 = vsel %vm1895, %v4844, 0.0
    %v4872 = vadd.f32 %v4870, %v4871
    %v4873 = vsel %vm1895, %v4845, 0.0
    %v4874 = vadd.f32 %v4872, %v4873
    %v4875 = vsel %vm1895, %v4846, 0.0
    %v4876 = vadd.f32 %v4874, %v4875
    %v4877 = vsel %vm1895, %v4847, 0.0
    %v4878 = vadd.f32 %v4876, %v4877
    %v4879 = vrot.slane %v4878, 4
    %v4880 = vadd.f32 %v4878, %v4879
    %v4881 = vrot.slane %v4880, 2
    %v4882 = vadd.f32 %v4880, %v4881
    %v4883 = vrot.slane %v4882, 1
    %v4884 = vadd.f32 %v4882, %v4883
    %v4885 = vadd.f32 %v4884, %v1933
    %v4886 = vmax.f32 %v4885, 0.0
    %v4887 = vmul.f32 %v4886, %v241
    %v4888 = vsel %vm1937, %v4887, 0.0
    %4889 = vadd.xlane.f32.xlu0 %v4888
    %v4890 = vpop.xlane.xlu0 %4889
    %v4891 = vadd.f32 %v4890, %v1941
    %4892 = vst.msk [vmem:[%s10 + $0x4] sm:$0x1] %vm1943, %v4891
    %s4893 = scalar_lea.vmem %s0, 2560
    %v4894 = vld [vmem:[%s4893] sm:$0xff]
    %v4895 = vld [vmem:[%s4893 + $0x8] sm:$0xff]
    %v4896 = vld [vmem:[%s4893 + $0x10] sm:$0xff]
    %v4897 = vld [vmem:[%s4893 + $0x18] sm:$0xff]
    %v4898 = vld [vmem:[%s4893 + $0x20] sm:$0xff]
    %v4899 = vld [vmem:[%s4893 + $0x28] sm:$0xff]
    %v4900 = vld [vmem:[%s4893 + $0x30] sm:$0xff]
    %v4901 = vld [vmem:[%s4893 + $0x38] sm:$0xff]
    %v4902 = vld [vmem:[%s4893 + $0x40] sm:$0xff]
    %v4903 = vld [vmem:[%s4893 + $0x48] sm:$0xff]
    %v4904 = vld [vmem:[%s4893 + $0x50] sm:$0xff]
    %v4905 = vld [vmem:[%s4893 + $0x58] sm:$0xff]
    %v4906 = vld [vmem:[%s4893 + $0x60] sm:$0xff]
    %v4907 = vld [vmem:[%s4893 + $0x68] sm:$0xff]
    %v4908 = vld [vmem:[%s4893 + $0x70] sm:$0xff]
    %v4909 = vld [vmem:[%s4893 + $0x78] sm:$0xff]
    %v4910 = vld [vmem:[%s4893 + $0x80] sm:$0xff]
    %v4911 = vld [vmem:[%s4893 + $0x88] sm:$0xff]
    %v4912 = vld [vmem:[%s4893 + $0x90] sm:$0xff]
    %v4913 = vld [vmem:[%s4893 + $0x98] sm:$0xff]
    %v4914 = vld [vmem:[%s4893 + $0xa0] sm:$0xff]
    %v4915 = vld [vmem:[%s4893 + $0xa8] sm:$0xff]
    %v4916 = vld [vmem:[%s4893 + $0xb0] sm:$0xff]
    %v4917 = vld [vmem:[%s4893 + $0xb8] sm:$0xff]
    %v4918 = vld [vmem:[%s4893 + $0xc0] sm:$0xff]
    %v4919 = vld [vmem:[%s4893 + $0xc8] sm:$0xff]
    %v4920 = vld [vmem:[%s4893 + $0xd0] sm:$0xff]
    %v4921 = vld [vmem:[%s4893 + $0xd8] sm:$0xff]
    %v4922 = vld [vmem:[%s4893 + $0xe0] sm:$0xff]
    %v4923 = vld [vmem:[%s4893 + $0xe8] sm:$0xff]
    %v4924 = vld [vmem:[%s4893 + $0xf0] sm:$0xff]
    %v4925 = vld [vmem:[%s4893 + $0xf8] sm:$0xff]
    %v4926 = vld [vmem:[%s4893 + $0x100] sm:$0xff]
    %v4927 = vld [vmem:[%s4893 + $0x108] sm:$0xff]
    %v4928 = vld [vmem:[%s4893 + $0x110] sm:$0xff]
    %v4929 = vld [vmem:[%s4893 + $0x118] sm:$0xff]
    %v4930 = vld [vmem:[%s4893 + $0x120] sm:$0xff]
    %v4931 = vld [vmem:[%s4893 + $0x128] sm:$0xff]
    %v4932 = vld [vmem:[%s4893 + $0x130] sm:$0xff]
    %v4933 = vld [vmem:[%s4893 + $0x138] sm:$0xff]
    %v4934 = vld [vmem:[%s4893 + $0x140] sm:$0xff]
    %v4935 = vld [vmem:[%s4893 + $0x148] sm:$0xff]
    %v4936 = vld [vmem:[%s4893 + $0x150] sm:$0xff]
    %v4937 = vld [vmem:[%s4893 + $0x158] sm:$0xff]
    %v4938 = vld [vmem:[%s4893 + $0x160] sm:$0xff]
    %v4939 = vld [vmem:[%s4893 + $0x168] sm:$0xff]
    %v4940 = vld [vmem:[%s4893 + $0x170] sm:$0xff]
    %v4941 = vld [vmem:[%s4893 + $0x178] sm:$0xff]
    %v4942 = vld [vmem:[%s4893 + $0x180] sm:$0xff]
    %v4943 = vld [vmem:[%s4893 + $0x188] sm:$0xff]
    %v4944 = vld [vmem:[%s4893 + $0x190] sm:$0xff]
    %v4945 = vld [vmem:[%s4893 + $0x198] sm:$0xff]
    %v4946 = vld [vmem:[%s4893 + $0x1a0] sm:$0xff]
    %v4947 = vld [vmem:[%s4893 + $0x1a8] sm:$0xff]
    %v4948 = vld [vmem:[%s4893 + $0x1b0] sm:$0xff]
    %v4949 = vld [vmem:[%s4893 + $0x1b8] sm:$0xff]
    %v4950 = vld [vmem:[%s4893 + $0x1c0] sm:$0xff]
    %v4951 = vld [vmem:[%s4893 + $0x1c8] sm:$0xff]
    %v4952 = vld [vmem:[%s4893 + $0x1d0] sm:$0xff]
    %v4953 = vld [vmem:[%s4893 + $0x1d8] sm:$0xff]
    %v4954 = vld [vmem:[%s4893 + $0x1e0] sm:$0xff]
    %v4955 = vld [vmem:[%s4893 + $0x1e8] sm:$0xff]
    %v4956 = vld [vmem:[%s4893 + $0x1f0] sm:$0xff]
    %v4957 = vld [vmem:[%s4893 + $0x1f8] sm:$0xff]
    %v4958 = vpack.c.bf16 %v4895, %v4894
    %v4959 = vpack.c.bf16 %v4897, %v4896
    %v4960 = vpack.c.bf16 %v4899, %v4898
    %v4961 = vpack.c.bf16 %v4901, %v4900
    %v4962 = vpack.c.bf16 %v4903, %v4902
    %v4963 = vpack.c.bf16 %v4905, %v4904
    %v4964 = vpack.c.bf16 %v4907, %v4906
    %v4965 = vpack.c.bf16 %v4909, %v4908
    %v4966 = vpack.c.bf16 %v4911, %v4910
    %v4967 = vpack.c.bf16 %v4913, %v4912
    %v4968 = vpack.c.bf16 %v4915, %v4914
    %v4969 = vpack.c.bf16 %v4917, %v4916
    %v4970 = vpack.c.bf16 %v4919, %v4918
    %v4971 = vpack.c.bf16 %v4921, %v4920
    %v4972 = vpack.c.bf16 %v4923, %v4922
    %v4973 = vpack.c.bf16 %v4925, %v4924
    %v4974 = vpack.c.bf16 %v4927, %v4926
    %v4975 = vpack.c.bf16 %v4929, %v4928
    %v4976 = vpack.c.bf16 %v4931, %v4930
    %v4977 = vpack.c.bf16 %v4933, %v4932
    %v4978 = vpack.c.bf16 %v4935, %v4934
    %v4979 = vpack.c.bf16 %v4937, %v4936
    %v4980 = vpack.c.bf16 %v4939, %v4938
    %v4981 = vpack.c.bf16 %v4941, %v4940
    %v4982 = vpack.c.bf16 %v4943, %v4942
    %v4983 = vpack.c.bf16 %v4945, %v4944
    %v4984 = vpack.c.bf16 %v4947, %v4946
    %v4985 = vpack.c.bf16 %v4949, %v4948
    %v4986 = vpack.c.bf16 %v4951, %v4950
    %v4987 = vpack.c.bf16 %v4953, %v4952
    %v4988 = vpack.c.bf16 %v4955, %v4954
    %v4989 = vpack.c.bf16 %v4957, %v4956
    %4990 = vmatprep.subr.bf16.mxu0 0
    %4991 = vmatpush1.bf16.msra.mxu0 %v4958
    %4992 = vmatprep.subr.bf16.mxu0 0
    %4993 = vmatpush1.bf16.msra.mxu0 %v4959
    %4994 = vmatprep.subr.bf16.mxu0 0
    %4995 = vmatpush1.bf16.msra.mxu0 %v4960
    %4996 = vmatprep.subr.bf16.mxu0 0
    %4997 = vmatpush1.bf16.msra.mxu0 %v4961
    %4998 = vmatprep.subr.bf16.mxu0 0
    %4999 = vmatpush1.bf16.msra.mxu0 %v4962
    %5000 = vmatprep.subr.bf16.mxu0 0
    %5001 = vmatpush1.bf16.msra.mxu0 %v4963
    %5002 = vmatprep.subr.bf16.mxu0 0
    %5003 = vmatpush1.bf16.msra.mxu0 %v4964
    %5004 = vmatprep.subr.bf16.mxu0 0
    %5005 = vmatpush1.bf16.msra.mxu0 %v4965
    %5006 = vmatprep.subr.bf16.mxu0 0
    %5007 = vmatpush1.bf16.msra.mxu0 %v4966
    %5008 = vmatprep.subr.bf16.mxu0 0
    %5009 = vmatpush1.bf16.msra.mxu0 %v4967
    %5010 = vmatprep.subr.bf16.mxu0 0
    %5011 = vmatpush1.bf16.msra.mxu0 %v4968
    %5012 = vmatprep.subr.bf16.mxu0 0
    %5013 = vmatpush1.bf16.msra.mxu0 %v4969
    %5014 = vmatprep.subr.bf16.mxu0 0
    %5015 = vmatpush1.bf16.msra.mxu0 %v4970
    %5016 = vmatprep.subr.bf16.mxu0 0
    %5017 = vmatpush1.bf16.msra.mxu0 %v4971
    %5018 = vmatprep.subr.bf16.mxu0 0
    %5019 = vmatpush1.bf16.msra.mxu0 %v4972
    %5020 = vmatprep.subr.bf16.mxu0 0
    %5021 = vmatpush1.bf16.msra.mxu0 %v4973
    %5022 = vmatprep.mubr.bf16.mxu0 %v533
    %5023 = vmatmul.mubr.bf16.gmra.mrb[0].mxu0 %v532
    %v5024 = vpop.f32.mrb[0].mxu0
    %v5025 = vadd.f32 0.0, %v5024
    %v5026 = vpop.f32.mrb[0].mxu0
    %v5027 = vpop.f32.mrb[0].mxu0
    %v5028 = vadd.f32 0.0, %v5027
    %v5029 = vpop.f32.mrb[0].mxu0
    %5030 = vmatprep.mubr.bf16.mxu0 %v537
    %5031 = vmatmul.mubr.bf16.gmra.mrb[0].mxu0 %v536
    %v5032 = vpop.f32.mrb[0].mxu0
    %v5033 = vadd.f32 0.0, %v5032
    %v5034 = vpop.f32.mrb[0].mxu0
    %v5035 = vpop.f32.mrb[0].mxu0
    %v5036 = vadd.f32 0.0, %v5035
    %v5037 = vpop.f32.mrb[0].mxu0
    %5038 = vmatprep.mubr.bf16.mxu0 %v541
    %5039 = vmatmul.mubr.bf16.gmra.mrb[0].mxu0 %v540
    %v5040 = vpop.f32.mrb[0].mxu0
    %v5041 = vadd.f32 0.0, %v5040
    %v5042 = vpop.f32.mrb[0].mxu0
    %v5043 = vpop.f32.mrb[0].mxu0
    %v5044 = vadd.f32 0.0, %v5043
    %v5045 = vpop.f32.mrb[0].mxu0
    %5046 = vmatprep.mubr.bf16.mxu0 %v545
    %5047 = vmatmul.mubr.bf16.gmra.mrb[0].mxu0 %v544
    %v5048 = vpop.f32.mrb[0].mxu0
    %v5049 = vadd.f32 0.0, %v5048
    %v5050 = vpop.f32.mrb[0].mxu0
    %v5051 = vpop.f32.mrb[0].mxu0
    %v5052 = vadd.f32 0.0, %v5051
    %v5053 = vpop.f32.mrb[0].mxu0
    %5054 = vmatprep.mubr.bf16.mxu0 %v549
    %5055 = vmatmul.mubr.bf16.gmra.mrb[0].mxu0 %v548
    %v5056 = vpop.f32.mrb[0].mxu0
    %v5057 = vadd.f32 0.0, %v5056
    %v5058 = vpop.f32.mrb[0].mxu0
    %v5059 = vpop.f32.mrb[0].mxu0
    %v5060 = vadd.f32 0.0, %v5059
    %v5061 = vpop.f32.mrb[0].mxu0
    %5062 = vmatprep.mubr.bf16.mxu0 %v553
    %5063 = vmatmul.mubr.bf16.gmra.mrb[0].mxu0 %v552
    %v5064 = vpop.f32.mrb[0].mxu0
    %v5065 = vadd.f32 0.0, %v5064
    %v5066 = vpop.f32.mrb[0].mxu0
    %v5067 = vpop.f32.mrb[0].mxu0
    %v5068 = vadd.f32 0.0, %v5067
    %v5069 = vpop.f32.mrb[0].mxu0
    %5070 = vmatprep.mubr.bf16.mxu0 %v557
    %5071 = vmatmul.mubr.bf16.gmra.mrb[0].mxu0 %v556
    %v5072 = vpop.f32.mrb[0].mxu0
    %v5073 = vadd.f32 0.0, %v5072
    %v5074 = vpop.f32.mrb[0].mxu0
    %v5075 = vpop.f32.mrb[0].mxu0
    %v5076 = vadd.f32 0.0, %v5075
    %v5077 = vpop.f32.mrb[0].mxu0
    %5078 = vmatprep.mubr.bf16.mxu0 %v561
    %5079 = vmatmul.mubr.bf16.gmra.mrb[0].mxu0 %v560
    %v5080 = vpop.f32.mrb[0].mxu0
    %v5081 = vadd.f32 0.0, %v5080
    %v5082 = vpop.f32.mrb[0].mxu0
    %v5083 = vpop.f32.mrb[0].mxu0
    %v5084 = vadd.f32 0.0, %v5083
    %v5085 = vpop.f32.mrb[0].mxu0
    %5086 = vmatprep.mubr.bf16.mxu0 %v565
    %5087 = vmatmul.mubr.bf16.gmra.mrb[0].mxu0 %v564
    %v5088 = vpop.f32.mrb[0].mxu0
    %v5089 = vadd.f32 0.0, %v5088
    %v5090 = vpop.f32.mrb[0].mxu0
    %v5091 = vpop.f32.mrb[0].mxu0
    %v5092 = vadd.f32 0.0, %v5091
    %v5093 = vpop.f32.mrb[0].mxu0
    %5094 = vmatprep.mubr.bf16.mxu0 %v569
    %5095 = vmatmul.mubr.bf16.gmra.mrb[0].mxu0 %v568
    %v5096 = vpop.f32.mrb[0].mxu0
    %v5097 = vadd.f32 0.0, %v5096
    %v5098 = vpop.f32.mrb[0].mxu0
    %v5099 = vpop.f32.mrb[0].mxu0
    %v5100 = vadd.f32 0.0, %v5099
    %v5101 = vpop.f32.mrb[0].mxu0
    %5102 = vmatprep.mubr.bf16.mxu0 %v573
    %5103 = vmatmul.mubr.bf16.gmra.mrb[0].mxu0 %v572
    %v5104 = vpop.f32.mrb[0].mxu0
    %v5105 = vadd.f32 0.0, %v5104
    %v5106 = vpop.f32.mrb[0].mxu0
    %v5107 = vpop.f32.mrb[0].mxu0
    %v5108 = vadd.f32 0.0, %v5107
    %v5109 = vpop.f32.mrb[0].mxu0
    %5110 = vmatprep.mubr.bf16.mxu0 %v577
    %5111 = vmatmul.mubr.bf16.gmra.mrb[0].mxu0 %v576
    %v5112 = vpop.f32.mrb[0].mxu0
    %v5113 = vadd.f32 0.0, %v5112
    %v5114 = vpop.f32.mrb[0].mxu0
    %v5115 = vpop.f32.mrb[0].mxu0
    %v5116 = vadd.f32 0.0, %v5115
    %v5117 = vpop.f32.mrb[0].mxu0
    %5118 = vmatprep.mubr.bf16.mxu0 %v581
    %5119 = vmatmul.mubr.bf16.gmra.mrb[0].mxu0 %v580
    %v5120 = vpop.f32.mrb[0].mxu0
    %v5121 = vadd.f32 0.0, %v5120
    %v5122 = vpop.f32.mrb[0].mxu0
    %v5123 = vpop.f32.mrb[0].mxu0
    %v5124 = vadd.f32 0.0, %v5123
    %v5125 = vpop.f32.mrb[0].mxu0
    %5126 = vmatprep.mubr.bf16.mxu0 %v585
    %5127 = vmatmul.mubr.bf16.gmra.mrb[0].mxu0 %v584
    %v5128 = vpop.f32.mrb[0].mxu0
    %v5129 = vadd.f32 0.0, %v5128
    %v5130 = vpop.f32.mrb[0].mxu0
    %v5131 = vpop.f32.mrb[0].mxu0
    %v5132 = vadd.f32 0.0, %v5131
    %v5133 = vpop.f32.mrb[0].mxu0
    %5134 = vmatprep.mubr.bf16.mxu0 %v589
    %5135 = vmatmul.mubr.bf16.gmra.mrb[0].mxu0 %v588
    %v5136 = vpop.f32.mrb[0].mxu0
    %v5137 = vadd.f32 0.0, %v5136
    %v5138 = vpop.f32.mrb[0].mxu0
    %v5139 = vpop.f32.mrb[0].mxu0
    %v5140 = vadd.f32 0.0, %v5139
    %v5141 = vpop.f32.mrb[0].mxu0
    %5142 = vmatprep.mubr.bf16.mxu0 %v593
    %5143 = vmatmul.mubr.bf16.gmra.mrb[0].mxu0 %v592
    %v5144 = vpop.f32.mrb[0].mxu0
    %v5145 = vadd.f32 0.0, %v5144
    %v5146 = vpop.f32.mrb[0].mxu0
    %v5147 = vpop.f32.mrb[0].mxu0
    %v5148 = vadd.f32 0.0, %v5147
    %v5149 = vpop.f32.mrb[0].mxu0
    %5150 = vdwg.mxu0
    %5151 = vmatprep.subr.bf16.mxu0 0
    %5152 = vmatpush1.bf16.msra.mxu0 %v4974
    %5153 = vmatprep.subr.bf16.mxu0 0
    %5154 = vmatpush1.bf16.msra.mxu0 %v4975
    %5155 = vmatprep.subr.bf16.mxu0 0
    %5156 = vmatpush1.bf16.msra.mxu0 %v4976
    %5157 = vmatprep.subr.bf16.mxu0 0
    %5158 = vmatpush1.bf16.msra.mxu0 %v4977
    %5159 = vmatprep.subr.bf16.mxu0 0
    %5160 = vmatpush1.bf16.msra.mxu0 %v4978
    %5161 = vmatprep.subr.bf16.mxu0 0
    %5162 = vmatpush1.bf16.msra.mxu0 %v4979
    %5163 = vmatprep.subr.bf16.mxu0 0
    %5164 = vmatpush1.bf16.msra.mxu0 %v4980
    %5165 = vmatprep.subr.bf16.mxu0 0
    %5166 = vmatpush1.bf16.msra.mxu0 %v4981
    %5167 = vmatprep.subr.bf16.mxu0 0
    %5168 = vmatpush1.bf16.msra.mxu0 %v4982
    %5169 = vmatprep.subr.bf16.mxu0 0
    %5170 = vmatpush1.bf16.msra.mxu0 %v4983
    %5171 = vmatprep.subr.bf16.mxu0 0
    %5172 = vmatpush1.bf16.msra.mxu0 %v4984
    %5173 = vmatprep.subr.bf16.mxu0 0
    %5174 = vmatpush1.bf16.msra.mxu0 %v4985
    %5175 = vmatprep.subr.bf16.mxu0 0
    %5176 = vmatpush1.bf16.msra.mxu0 %v4986
    %5177 = vmatprep.subr.bf16.mxu0 0
    %5178 = vmatpush1.bf16.msra.mxu0 %v4987
    %5179 = vmatprep.subr.bf16.mxu0 0
    %5180 = vmatpush1.bf16.msra.mxu0 %v4988
    %5181 = vmatprep.subr.bf16.mxu0 0
    %5182 = vmatpush1.bf16.msra.mxu0 %v4989
    %5183 = vmatprep.mubr.bf16.mxu0 %v535
    %5184 = vmatmul.mubr.bf16.gmra.mrb[0].mxu0 %v534
    %v5185 = vpop.f32.mrb[0].mxu0
    %v5186 = vadd.f32 %v5025, %v5185
    %v5187 = vpop.f32.mrb[0].mxu0
    %v5188 = vpop.f32.mrb[0].mxu0
    %v5189 = vadd.f32 %v5028, %v5188
    %v5190 = vpop.f32.mrb[0].mxu0
    %5191 = vmatprep.mubr.bf16.mxu0 %v539
    %5192 = vmatmul.mubr.bf16.gmra.mrb[0].mxu0 %v538
    %v5193 = vpop.f32.mrb[0].mxu0
    %v5194 = vadd.f32 %v5033, %v5193
    %v5195 = vpop.f32.mrb[0].mxu0
    %v5196 = vpop.f32.mrb[0].mxu0
    %v5197 = vadd.f32 %v5036, %v5196
    %v5198 = vpop.f32.mrb[0].mxu0
    %5199 = vmatprep.mubr.bf16.mxu0 %v543
    %5200 = vmatmul.mubr.bf16.gmra.mrb[0].mxu0 %v542
    %v5201 = vpop.f32.mrb[0].mxu0
    %v5202 = vadd.f32 %v5041, %v5201
    %v5203 = vpop.f32.mrb[0].mxu0
    %v5204 = vpop.f32.mrb[0].mxu0
    %v5205 = vadd.f32 %v5044, %v5204
    %v5206 = vpop.f32.mrb[0].mxu0
    %5207 = vmatprep.mubr.bf16.mxu0 %v547
    %5208 = vmatmul.mubr.bf16.gmra.mrb[0].mxu0 %v546
    %v5209 = vpop.f32.mrb[0].mxu0
    %v5210 = vadd.f32 %v5049, %v5209
    %v5211 = vpop.f32.mrb[0].mxu0
    %v5212 = vpop.f32.mrb[0].mxu0
    %v5213 = vadd.f32 %v5052, %v5212
    %v5214 = vpop.f32.mrb[0].mxu0
    %5215 = vmatprep.mubr.bf16.mxu0 %v551
    %5216 = vmatmul.mubr.bf16.gmra.mrb[0].mxu0 %v550
    %v5217 = vpop.f32.mrb[0].mxu0
    %v5218 = vadd.f32 %v5057, %v5217
    %v5219 = vpop.f32.mrb[0].mxu0
    %v5220 = vpop.f32.mrb[0].mxu0
    %v5221 = vadd.f32 %v5060, %v5220
    %v5222 = vpop.f32.mrb[0].mxu0
    %5223 = vmatprep.mubr.bf16.mxu0 %v555
    %5224 = vmatmul.mubr.bf16.gmra.mrb[0].mxu0 %v554
    %v5225 = vpop.f32.mrb[0].mxu0
    %v5226 = vadd.f32 %v5065, %v5225
    %v5227 = vpop.f32.mrb[0].mxu0
    %v5228 = vpop.f32.mrb[0].mxu0
    %v5229 = vadd.f32 %v5068, %v5228
    %v5230 = vpop.f32.mrb[0].mxu0
    %5231 = vmatprep.mubr.bf16.mxu0 %v559
    %5232 = vmatmul.mubr.bf16.gmra.mrb[0].mxu0 %v558
    %v5233 = vpop.f32.mrb[0].mxu0
    %v5234 = vadd.f32 %v5073, %v5233
    %v5235 = vpop.f32.mrb[0].mxu0
    %v5236 = vpop.f32.mrb[0].mxu0
    %v5237 = vadd.f32 %v5076, %v5236
    %v5238 = vpop.f32.mrb[0].mxu0
    %5239 = vmatprep.mubr.bf16.mxu0 %v563
    %5240 = vmatmul.mubr.bf16.gmra.mrb[0].mxu0 %v562
    %v5241 = vpop.f32.mrb[0].mxu0
    %v5242 = vadd.f32 %v5081, %v5241
    %v5243 = vpop.f32.mrb[0].mxu0
    %v5244 = vpop.f32.mrb[0].mxu0
    %v5245 = vadd.f32 %v5084, %v5244
    %v5246 = vpop.f32.mrb[0].mxu0
    %5247 = vmatprep.mubr.bf16.mxu0 %v567
    %5248 = vmatmul.mubr.bf16.gmra.mrb[0].mxu0 %v566
    %v5249 = vpop.f32.mrb[0].mxu0
    %v5250 = vadd.f32 %v5089, %v5249
    %v5251 = vpop.f32.mrb[0].mxu0
    %v5252 = vpop.f32.mrb[0].mxu0
    %v5253 = vadd.f32 %v5092, %v5252
    %v5254 = vpop.f32.mrb[0].mxu0
    %5255 = vmatprep.mubr.bf16.mxu0 %v571
    %5256 = vmatmul.mubr.bf16.gmra.mrb[0].mxu0 %v570
    %v5257 = vpop.f32.mrb[0].mxu0
    %v5258 = vadd.f32 %v5097, %v5257
    %v5259 = vpop.f32.mrb[0].mxu0
    %v5260 = vpop.f32.mrb[0].mxu0
    %v5261 = vadd.f32 %v5100, %v5260
    %v5262 = vpop.f32.mrb[0].mxu0
    %5263 = vmatprep.mubr.bf16.mxu0 %v575
    %5264 = vmatmul.mubr.bf16.gmra.mrb[0].mxu0 %v574
    %v5265 = vpop.f32.mrb[0].mxu0
    %v5266 = vadd.f32 %v5105, %v5265
    %v5267 = vpop.f32.mrb[0].mxu0
    %v5268 = vpop.f32.mrb[0].mxu0
    %v5269 = vadd.f32 %v5108, %v5268
    %v5270 = vpop.f32.mrb[0].mxu0
    %5271 = vmatprep.mubr.bf16.mxu0 %v579
    %5272 = vmatmul.mubr.bf16.gmra.mrb[0].mxu0 %v578
    %v5273 = vpop.f32.mrb[0].mxu0
    %v5274 = vadd.f32 %v5113, %v5273
    %v5275 = vpop.f32.mrb[0].mxu0
    %v5276 = vpop.f32.mrb[0].mxu0
    %v5277 = vadd.f32 %v5116, %v5276
    %v5278 = vpop.f32.mrb[0].mxu0
    %5279 = vmatprep.mubr.bf16.mxu0 %v583
    %5280 = vmatmul.mubr.bf16.gmra.mrb[0].mxu0 %v582
    %v5281 = vpop.f32.mrb[0].mxu0
    %v5282 = vadd.f32 %v5121, %v5281
    %v5283 = vpop.f32.mrb[0].mxu0
    %v5284 = vpop.f32.mrb[0].mxu0
    %v5285 = vadd.f32 %v5124, %v5284
    %v5286 = vpop.f32.mrb[0].mxu0
    %5287 = vmatprep.mubr.bf16.mxu0 %v587
    %5288 = vmatmul.mubr.bf16.gmra.mrb[0].mxu0 %v586
    %v5289 = vpop.f32.mrb[0].mxu0
    %v5290 = vadd.f32 %v5129, %v5289
    %v5291 = vpop.f32.mrb[0].mxu0
    %v5292 = vpop.f32.mrb[0].mxu0
    %v5293 = vadd.f32 %v5132, %v5292
    %v5294 = vpop.f32.mrb[0].mxu0
    %5295 = vmatprep.mubr.bf16.mxu0 %v591
    %5296 = vmatmul.mubr.bf16.gmra.mrb[0].mxu0 %v590
    %v5297 = vpop.f32.mrb[0].mxu0
    %v5298 = vadd.f32 %v5137, %v5297
    %v5299 = vpop.f32.mrb[0].mxu0
    %v5300 = vpop.f32.mrb[0].mxu0
    %v5301 = vadd.f32 %v5140, %v5300
    %v5302 = vpop.f32.mrb[0].mxu0
    %5303 = vmatprep.mubr.bf16.mxu0 %v595
    %5304 = vmatmul.mubr.bf16.gmra.mrb[0].mxu0 %v594
    %v5305 = vpop.f32.mrb[0].mxu0
    %v5306 = vadd.f32 %v5145, %v5305
    %v5307 = vpop.f32.mrb[0].mxu0
    %v5308 = vpop.f32.mrb[0].mxu0
    %v5309 = vadd.f32 %v5148, %v5308
    %v5310 = vpop.f32.mrb[0].mxu0
    %5311 = vdwg.mxu0
    %v5312 = vmul.f32 %v5186, %v985
    %v5313 = vmul.f32 %v5189, %v990
    %v5314 = vmul.f32 %v5194, %v995
    %v5315 = vmul.f32 %v5197, %v1000
    %v5316 = vmul.f32 %v5202, %v1005
    %v5317 = vmul.f32 %v5205, %v1010
    %v5318 = vmul.f32 %v5210, %v1015
    %v5319 = vmul.f32 %v5213, %v1020
    %v5320 = vmul.f32 %v5218, %v1025
    %v5321 = vmul.f32 %v5221, %v1030
    %v5322 = vmul.f32 %v5226, %v1035
    %v5323 = vmul.f32 %v5229, %v1040
    %v5324 = vmul.f32 %v5234, %v1045
    %v5325 = vmul.f32 %v5237, %v1050
    %v5326 = vmul.f32 %v5242, %v1055
    %v5327 = vmul.f32 %v5245, %v1060
    %v5328 = vmul.f32 %v5250, %v1065
    %v5329 = vmul.f32 %v5253, %v1070
    %v5330 = vmul.f32 %v5258, %v1075
    %v5331 = vmul.f32 %v5261, %v1080
    %v5332 = vmul.f32 %v5266, %v1085
    %v5333 = vmul.f32 %v5269, %v1090
    %v5334 = vmul.f32 %v5274, %v1095
    %v5335 = vmul.f32 %v5277, %v1100
    %v5336 = vmul.f32 %v5282, %v1105
    %v5337 = vmul.f32 %v5285, %v1110
    %v5338 = vmul.f32 %v5290, %v1115
    %v5339 = vmul.f32 %v5293, %v1120
    %v5340 = vmul.f32 %v5298, %v1125
    %v5341 = vmul.f32 %v5301, %v1130
    %v5342 = vmul.f32 %v5306, %v1135
    %v5343 = vmul.f32 %v5309, %v1140
    %v5344 = vadd.f32 %v5312, %v1177
    %v5345 = vadd.f32 %v5313, %v1182
    %v5346 = vadd.f32 %v5314, %v1187
    %v5347 = vadd.f32 %v5315, %v1192
    %v5348 = vadd.f32 %v5316, %v1197
    %v5349 = vadd.f32 %v5317, %v1202
    %v5350 = vadd.f32 %v5318, %v1207
    %v5351 = vadd.f32 %v5319, %v1212
    %v5352 = vadd.f32 %v5320, %v1217
    %v5353 = vadd.f32 %v5321, %v1222
    %v5354 = vadd.f32 %v5322, %v1227
    %v5355 = vadd.f32 %v5323, %v1232
    %v5356 = vadd.f32 %v5324, %v1237
    %v5357 = vadd.f32 %v5325, %v1242
    %v5358 = vadd.f32 %v5326, %v1247
    %v5359 = vadd.f32 %v5327, %v1252
    %v5360 = vadd.f32 %v5328, %v1257
    %v5361 = vadd.f32 %v5329, %v1262
    %v5362 = vadd.f32 %v5330, %v1267
    %v5363 = vadd.f32 %v5331, %v1272
    %v5364 = vadd.f32 %v5332, %v1277
    %v5365 = vadd.f32 %v5333, %v1282
    %v5366 = vadd.f32 %v5334, %v1287
    %v5367 = vadd.f32 %v5335, %v1292
    %v5368 = vadd.f32 %v5336, %v1297
    %v5369 = vadd.f32 %v5337, %v1302
    %v5370 = vadd.f32 %v5338, %v1307
    %v5371 = vadd.f32 %v5339, %v1312
    %v5372 = vadd.f32 %v5340, %v1317
    %v5373 = vadd.f32 %v5341, %v1322
    %v5374 = vadd.f32 %v5342, %v1327
    %v5375 = vadd.f32 %v5343, %v1332
    %v5376 = vmax.f32 %v5344, 0.0
    %v5377 = vmax.f32 %v5345, 0.0
    %v5378 = vmax.f32 %v5346, 0.0
    %v5379 = vmax.f32 %v5347, 0.0
    %v5380 = vmax.f32 %v5348, 0.0
    %v5381 = vmax.f32 %v5349, 0.0
    %v5382 = vmax.f32 %v5350, 0.0
    %v5383 = vmax.f32 %v5351, 0.0
    %v5384 = vmax.f32 %v5352, 0.0
    %v5385 = vmax.f32 %v5353, 0.0
    %v5386 = vmax.f32 %v5354, 0.0
    %v5387 = vmax.f32 %v5355, 0.0
    %v5388 = vmax.f32 %v5356, 0.0
    %v5389 = vmax.f32 %v5357, 0.0
    %v5390 = vmax.f32 %v5358, 0.0
    %v5391 = vmax.f32 %v5359, 0.0
    %v5392 = vmax.f32 %v5360, 0.0
    %v5393 = vmax.f32 %v5361, 0.0
    %v5394 = vmax.f32 %v5362, 0.0
    %v5395 = vmax.f32 %v5363, 0.0
    %v5396 = vmax.f32 %v5364, 0.0
    %v5397 = vmax.f32 %v5365, 0.0
    %v5398 = vmax.f32 %v5366, 0.0
    %v5399 = vmax.f32 %v5367, 0.0
    %v5400 = vmax.f32 %v5368, 0.0
    %v5401 = vmax.f32 %v5369, 0.0
    %v5402 = vmax.f32 %v5370, 0.0
    %v5403 = vmax.f32 %v5371, 0.0
    %v5404 = vmax.f32 %v5372, 0.0
    %v5405 = vmax.f32 %v5373, 0.0
    %v5406 = vmax.f32 %v5374, 0.0
    %v5407 = vmax.f32 %v5375, 0.0
    %v5408 = vpack.c.bf16 %v5377, %v5376
    %v5409 = vpack.c.bf16 %v5379, %v5378
    %v5410 = vpack.c.bf16 %v5381, %v5380
    %v5411 = vpack.c.bf16 %v5383, %v5382
    %v5412 = vpack.c.bf16 %v5385, %v5384
    %v5413 = vpack.c.bf16 %v5387, %v5386
    %v5414 = vpack.c.bf16 %v5389, %v5388
    %v5415 = vpack.c.bf16 %v5391, %v5390
    %v5416 = vpack.c.bf16 %v5393, %v5392
    %v5417 = vpack.c.bf16 %v5395, %v5394
    %v5418 = vpack.c.bf16 %v5397, %v5396
    %v5419 = vpack.c.bf16 %v5399, %v5398
    %v5420 = vpack.c.bf16 %v5401, %v5400
    %v5421 = vpack.c.bf16 %v5403, %v5402
    %v5422 = vpack.c.bf16 %v5405, %v5404
    %v5423 = vpack.c.bf16 %v5407, %v5406
    %5424 = vmatprep.subr.bf16.mxu0 0
    %5425 = vmatpush1.bf16.msra.mxu0 %v5408
    %5426 = vmatprep.subr.bf16.mxu0 0
    %5427 = vmatpush1.bf16.msra.mxu0 %v5409
    %5428 = vmatprep.subr.bf16.mxu0 0
    %5429 = vmatpush1.bf16.msra.mxu0 %v5410
    %5430 = vmatprep.subr.bf16.mxu0 0
    %5431 = vmatpush1.bf16.msra.mxu0 %v5411
    %5432 = vmatprep.subr.bf16.mxu0 0
    %5433 = vmatpush1.bf16.msra.mxu0 %v5412
    %5434 = vmatprep.subr.bf16.mxu0 0
    %5435 = vmatpush1.bf16.msra.mxu0 %v5413
    %5436 = vmatprep.subr.bf16.mxu0 0
    %5437 = vmatpush1.bf16.msra.mxu0 %v5414
    %5438 = vmatprep.subr.bf16.mxu0 0
    %5439 = vmatpush1.bf16.msra.mxu0 %v5415
    %5440 = vmatprep.subr.bf16.mxu0 0
    %5441 = vmatpush1.bf16.msra.mxu0 %v5416
    %5442 = vmatprep.subr.bf16.mxu0 0
    %5443 = vmatpush1.bf16.msra.mxu0 %v5417
    %5444 = vmatprep.subr.bf16.mxu0 0
    %5445 = vmatpush1.bf16.msra.mxu0 %v5418
    %5446 = vmatprep.subr.bf16.mxu0 0
    %5447 = vmatpush1.bf16.msra.mxu0 %v5419
    %5448 = vmatprep.subr.bf16.mxu0 0
    %5449 = vmatpush1.bf16.msra.mxu0 %v5420
    %5450 = vmatprep.subr.bf16.mxu0 0
    %5451 = vmatpush1.bf16.msra.mxu0 %v5421
    %5452 = vmatprep.subr.bf16.mxu0 0
    %5453 = vmatpush1.bf16.msra.mxu0 %v5422
    %5454 = vmatprep.subr.bf16.mxu0 0
    %5455 = vmatpush1.bf16.msra.mxu0 %v5423
    %5456 = vmatprep.mubr.bf16.mxu0 %v1463
    %5457 = vmatmul.mubr.bf16.gmra.mrb[0].mxu0 %v1462
    %v5458 = vpop.f32.mrb[0].mxu0
    %v5459 = vadd.f32 0.0, %v5458
    %v5460 = vpop.f32.mrb[0].mxu0
    %v5461 = vpop.f32.mrb[0].mxu0
    %v5462 = vadd.f32 0.0, %v5461
    %v5463 = vpop.f32.mrb[0].mxu0
    %5464 = vmatprep.mubr.bf16.mxu0 %v1465
    %5465 = vmatmul.mubr.bf16.gmra.mrb[0].mxu0 %v1464
    %v5466 = vpop.f32.mrb[0].mxu0
    %v5467 = vadd.f32 0.0, %v5466
    %v5468 = vpop.f32.mrb[0].mxu0
    %v5469 = vpop.f32.mrb[0].mxu0
    %v5470 = vadd.f32 0.0, %v5469
    %v5471 = vpop.f32.mrb[0].mxu0
    %5472 = vmatprep.mubr.bf16.mxu0 %v1467
    %5473 = vmatmul.mubr.bf16.gmra.mrb[0].mxu0 %v1466
    %v5474 = vpop.f32.mrb[0].mxu0
    %v5475 = vadd.f32 0.0, %v5474
    %v5476 = vpop.f32.mrb[0].mxu0
    %v5477 = vpop.f32.mrb[0].mxu0
    %v5478 = vadd.f32 0.0, %v5477
    %v5479 = vpop.f32.mrb[0].mxu0
    %5480 = vmatprep.mubr.bf16.mxu0 %v1469
    %5481 = vmatmul.mubr.bf16.gmra.mrb[0].mxu0 %v1468
    %v5482 = vpop.f32.mrb[0].mxu0
    %v5483 = vadd.f32 0.0, %v5482
    %v5484 = vpop.f32.mrb[0].mxu0
    %v5485 = vpop.f32.mrb[0].mxu0
    %v5486 = vadd.f32 0.0, %v5485
    %v5487 = vpop.f32.mrb[0].mxu0
    %5488 = vmatprep.mubr.bf16.mxu0 %v1471
    %5489 = vmatmul.mubr.bf16.gmra.mrb[0].mxu0 %v1470
    %v5490 = vpop.f32.mrb[0].mxu0
    %v5491 = vadd.f32 0.0, %v5490
    %v5492 = vpop.f32.mrb[0].mxu0
    %v5493 = vpop.f32.mrb[0].mxu0
    %v5494 = vadd.f32 0.0, %v5493
    %v5495 = vpop.f32.mrb[0].mxu0
    %5496 = vmatprep.mubr.bf16.mxu0 %v1473
    %5497 = vmatmul.mubr.bf16.gmra.mrb[0].mxu0 %v1472
    %v5498 = vpop.f32.mrb[0].mxu0
    %v5499 = vadd.f32 0.0, %v5498
    %v5500 = vpop.f32.mrb[0].mxu0
    %v5501 = vpop.f32.mrb[0].mxu0
    %v5502 = vadd.f32 0.0, %v5501
    %v5503 = vpop.f32.mrb[0].mxu0
    %5504 = vmatprep.mubr.bf16.mxu0 %v1475
    %5505 = vmatmul.mubr.bf16.gmra.mrb[0].mxu0 %v1474
    %v5506 = vpop.f32.mrb[0].mxu0
    %v5507 = vadd.f32 0.0, %v5506
    %v5508 = vpop.f32.mrb[0].mxu0
    %v5509 = vpop.f32.mrb[0].mxu0
    %v5510 = vadd.f32 0.0, %v5509
    %v5511 = vpop.f32.mrb[0].mxu0
    %5512 = vmatprep.mubr.bf16.mxu0 %v1477
    %5513 = vmatmul.mubr.bf16.gmra.mrb[0].mxu0 %v1476
    %v5514 = vpop.f32.mrb[0].mxu0
    %v5515 = vadd.f32 0.0, %v5514
    %v5516 = vpop.f32.mrb[0].mxu0
    %v5517 = vpop.f32.mrb[0].mxu0
    %v5518 = vadd.f32 0.0, %v5517
    %v5519 = vpop.f32.mrb[0].mxu0
    %5520 = vdwg.mxu0
    %v5521 = vmul.f32 %v5459, %v1594
    %v5522 = vmul.f32 %v5462, %v1599
    %v5523 = vmul.f32 %v5467, %v1604
    %v5524 = vmul.f32 %v5470, %v1609
    %v5525 = vmul.f32 %v5475, %v1614
    %v5526 = vmul.f32 %v5478, %v1619
    %v5527 = vmul.f32 %v5483, %v1624
    %v5528 = vmul.f32 %v5486, %v1629
    %v5529 = vmul.f32 %v5491, %v1634
    %v5530 = vmul.f32 %v5494, %v1639
    %v5531 = vmul.f32 %v5499, %v1644
    %v5532 = vmul.f32 %v5502, %v1649
    %v5533 = vmul.f32 %v5507, %v1654
    %v5534 = vmul.f32 %v5510, %v1659
    %v5535 = vmul.f32 %v5515, %v1664
    %v5536 = vmul.f32 %v5518, %v1669
    %v5537 = vadd.f32 %v5521, %v1690
    %v5538 = vadd.f32 %v5522, %v1695
    %v5539 = vadd.f32 %v5523, %v1700
    %v5540 = vadd.f32 %v5524, %v1705
    %v5541 = vadd.f32 %v5525, %v1710
    %v5542 = vadd.f32 %v5526, %v1715
    %v5543 = vadd.f32 %v5527, %v1720
    %v5544 = vadd.f32 %v5528, %v1725
    %v5545 = vadd.f32 %v5529, %v1730
    %v5546 = vadd.f32 %v5530, %v1735
    %v5547 = vadd.f32 %v5531, %v1740
    %v5548 = vadd.f32 %v5532, %v1745
    %v5549 = vadd.f32 %v5533, %v1750
    %v5550 = vadd.f32 %v5534, %v1755
    %v5551 = vadd.f32 %v5535, %v1760
    %v5552 = vadd.f32 %v5536, %v1765
    %v5553 = vmax.f32 %v5537, 0.0
    %v5554 = vmax.f32 %v5538, 0.0
    %v5555 = vmax.f32 %v5539, 0.0
    %v5556 = vmax.f32 %v5540, 0.0
    %v5557 = vmax.f32 %v5541, 0.0
    %v5558 = vmax.f32 %v5542, 0.0
    %v5559 = vmax.f32 %v5543, 0.0
    %v5560 = vmax.f32 %v5544, 0.0
    %v5561 = vmax.f32 %v5545, 0.0
    %v5562 = vmax.f32 %v5546, 0.0
    %v5563 = vmax.f32 %v5547, 0.0
    %v5564 = vmax.f32 %v5548, 0.0
    %v5565 = vmax.f32 %v5549, 0.0
    %v5566 = vmax.f32 %v5550, 0.0
    %v5567 = vmax.f32 %v5551, 0.0
    %v5568 = vmax.f32 %v5552, 0.0
    %v5569 = vmul.f32 %v5553, %v1802
    %v5570 = vmul.f32 %v5554, %v1807
    %v5571 = vmul.f32 %v5555, %v1812
    %v5572 = vmul.f32 %v5556, %v1817
    %v5573 = vmul.f32 %v5557, %v1822
    %v5574 = vmul.f32 %v5558, %v1827
    %v5575 = vmul.f32 %v5559, %v1832
    %v5576 = vmul.f32 %v5560, %v1837
    %v5577 = vmul.f32 %v5561, %v1842
    %v5578 = vmul.f32 %v5562, %v1847
    %v5579 = vmul.f32 %v5563, %v1852
    %v5580 = vmul.f32 %v5564, %v1857
    %v5581 = vmul.f32 %v5565, %v1862
    %v5582 = vmul.f32 %v5566, %v1867
    %v5583 = vmul.f32 %v5567, %v1872
    %v5584 = vmul.f32 %v5568, %v1877
    %v5585 = vsel %vm1895, %v5569, 0.0
    %v5586 = vsel %vm1895, %v5570, 0.0
    %v5587 = vadd.f32 %v5585, %v5586
    %v5588 = vsel %vm1895, %v5571, 0.0
    %v5589 = vadd.f32 %v5587, %v5588
    %v5590 = vsel %vm1895, %v5572, 0.0
    %v5591 = vadd.f32 %v5589, %v5590
    %v5592 = vsel %vm1895, %v5573, 0.0
    %v5593 = vadd.f32 %v5591, %v5592
    %v5594 = vsel %vm1895, %v5574, 0.0
    %v5595 = vadd.f32 %v5593, %v5594
    %v5596 = vsel %vm1895, %v5575, 0.0
    %v5597 = vadd.f32 %v5595, %v5596
    %v5598 = vsel %vm1895, %v5576, 0.0
    %v5599 = vadd.f32 %v5597, %v5598
    %v5600 = vsel %vm1895, %v5577, 0.0
    %v5601 = vadd.f32 %v5599, %v5600
    %v5602 = vsel %vm1895, %v5578, 0.0
    %v5603 = vadd.f32 %v5601, %v5602
    %v5604 = vsel %vm1895, %v5579, 0.0
    %v5605 = vadd.f32 %v5603, %v5604
    %v5606 = vsel %vm1895, %v5580, 0.0
    %v5607 = vadd.f32 %v5605, %v5606
    %v5608 = vsel %vm1895, %v5581, 0.0
    %v5609 = vadd.f32 %v5607, %v5608
    %v5610 = vsel %vm1895, %v5582, 0.0
    %v5611 = vadd.f32 %v5609, %v5610
    %v5612 = vsel %vm1895, %v5583, 0.0
    %v5613 = vadd.f32 %v5611, %v5612
    %v5614 = vsel %vm1895, %v5584, 0.0
    %v5615 = vadd.f32 %v5613, %v5614
    %v5616 = vrot.slane %v5615, 4
    %v5617 = vadd.f32 %v5615, %v5616
    %v5618 = vrot.slane %v5617, 2
    %v5619 = vadd.f32 %v5617, %v5618
    %v5620 = vrot.slane %v5619, 1
    %v5621 = vadd.f32 %v5619, %v5620
    %v5622 = vadd.f32 %v5621, %v1933
    %v5623 = vmax.f32 %v5622, 0.0
    %v5624 = vmul.f32 %v5623, %v241
    %v5625 = vsel %vm1937, %v5624, 0.0
    %5626 = vadd.xlane.f32.xlu0 %v5625
    %v5627 = vpop.xlane.xlu0 %5626
    %v5628 = vadd.f32 %v5627, %v1941
    %5629 = vst.msk [vmem:[%s10 + $0x5] sm:$0x1] %vm1943, %v5628
    %s5630 = scalar_lea.vmem %s0, 3072
    %v5631 = vld [vmem:[%s5630] sm:$0xff]
    %v5632 = vld [vmem:[%s5630 + $0x8] sm:$0xff]
    %v5633 = vld [vmem:[%s5630 + $0x10] sm:$0xff]
    %v5634 = vld [vmem:[%s5630 + $0x18] sm:$0xff]
    %v5635 = vld [vmem:[%s5630 + $0x20] sm:$0xff]
    %v5636 = vld [vmem:[%s5630 + $0x28] sm:$0xff]
    %v5637 = vld [vmem:[%s5630 + $0x30] sm:$0xff]
    %v5638 = vld [vmem:[%s5630 + $0x38] sm:$0xff]
    %v5639 = vld [vmem:[%s5630 + $0x40] sm:$0xff]
    %v5640 = vld [vmem:[%s5630 + $0x48] sm:$0xff]
    %v5641 = vld [vmem:[%s5630 + $0x50] sm:$0xff]
    %v5642 = vld [vmem:[%s5630 + $0x58] sm:$0xff]
    %v5643 = vld [vmem:[%s5630 + $0x60] sm:$0xff]
    %v5644 = vld [vmem:[%s5630 + $0x68] sm:$0xff]
    %v5645 = vld [vmem:[%s5630 + $0x70] sm:$0xff]
    %v5646 = vld [vmem:[%s5630 + $0x78] sm:$0xff]
    %v5647 = vld [vmem:[%s5630 + $0x80] sm:$0xff]
    %v5648 = vld [vmem:[%s5630 + $0x88] sm:$0xff]
    %v5649 = vld [vmem:[%s5630 + $0x90] sm:$0xff]
    %v5650 = vld [vmem:[%s5630 + $0x98] sm:$0xff]
    %v5651 = vld [vmem:[%s5630 + $0xa0] sm:$0xff]
    %v5652 = vld [vmem:[%s5630 + $0xa8] sm:$0xff]
    %v5653 = vld [vmem:[%s5630 + $0xb0] sm:$0xff]
    %v5654 = vld [vmem:[%s5630 + $0xb8] sm:$0xff]
    %v5655 = vld [vmem:[%s5630 + $0xc0] sm:$0xff]
    %v5656 = vld [vmem:[%s5630 + $0xc8] sm:$0xff]
    %v5657 = vld [vmem:[%s5630 + $0xd0] sm:$0xff]
    %v5658 = vld [vmem:[%s5630 + $0xd8] sm:$0xff]
    %v5659 = vld [vmem:[%s5630 + $0xe0] sm:$0xff]
    %v5660 = vld [vmem:[%s5630 + $0xe8] sm:$0xff]
    %v5661 = vld [vmem:[%s5630 + $0xf0] sm:$0xff]
    %v5662 = vld [vmem:[%s5630 + $0xf8] sm:$0xff]
    %v5663 = vld [vmem:[%s5630 + $0x100] sm:$0xff]
    %v5664 = vld [vmem:[%s5630 + $0x108] sm:$0xff]
    %v5665 = vld [vmem:[%s5630 + $0x110] sm:$0xff]
    %v5666 = vld [vmem:[%s5630 + $0x118] sm:$0xff]
    %v5667 = vld [vmem:[%s5630 + $0x120] sm:$0xff]
    %v5668 = vld [vmem:[%s5630 + $0x128] sm:$0xff]
    %v5669 = vld [vmem:[%s5630 + $0x130] sm:$0xff]
    %v5670 = vld [vmem:[%s5630 + $0x138] sm:$0xff]
    %v5671 = vld [vmem:[%s5630 + $0x140] sm:$0xff]
    %v5672 = vld [vmem:[%s5630 + $0x148] sm:$0xff]
    %v5673 = vld [vmem:[%s5630 + $0x150] sm:$0xff]
    %v5674 = vld [vmem:[%s5630 + $0x158] sm:$0xff]
    %v5675 = vld [vmem:[%s5630 + $0x160] sm:$0xff]
    %v5676 = vld [vmem:[%s5630 + $0x168] sm:$0xff]
    %v5677 = vld [vmem:[%s5630 + $0x170] sm:$0xff]
    %v5678 = vld [vmem:[%s5630 + $0x178] sm:$0xff]
    %v5679 = vld [vmem:[%s5630 + $0x180] sm:$0xff]
    %v5680 = vld [vmem:[%s5630 + $0x188] sm:$0xff]
    %v5681 = vld [vmem:[%s5630 + $0x190] sm:$0xff]
    %v5682 = vld [vmem:[%s5630 + $0x198] sm:$0xff]
    %v5683 = vld [vmem:[%s5630 + $0x1a0] sm:$0xff]
    %v5684 = vld [vmem:[%s5630 + $0x1a8] sm:$0xff]
    %v5685 = vld [vmem:[%s5630 + $0x1b0] sm:$0xff]
    %v5686 = vld [vmem:[%s5630 + $0x1b8] sm:$0xff]
    %v5687 = vld [vmem:[%s5630 + $0x1c0] sm:$0xff]
    %v5688 = vld [vmem:[%s5630 + $0x1c8] sm:$0xff]
    %v5689 = vld [vmem:[%s5630 + $0x1d0] sm:$0xff]
    %v5690 = vld [vmem:[%s5630 + $0x1d8] sm:$0xff]
    %v5691 = vld [vmem:[%s5630 + $0x1e0] sm:$0xff]
    %v5692 = vld [vmem:[%s5630 + $0x1e8] sm:$0xff]
    %v5693 = vld [vmem:[%s5630 + $0x1f0] sm:$0xff]
    %v5694 = vld [vmem:[%s5630 + $0x1f8] sm:$0xff]
    %v5695 = vpack.c.bf16 %v5632, %v5631
    %v5696 = vpack.c.bf16 %v5634, %v5633
    %v5697 = vpack.c.bf16 %v5636, %v5635
    %v5698 = vpack.c.bf16 %v5638, %v5637
    %v5699 = vpack.c.bf16 %v5640, %v5639
    %v5700 = vpack.c.bf16 %v5642, %v5641
    %v5701 = vpack.c.bf16 %v5644, %v5643
    %v5702 = vpack.c.bf16 %v5646, %v5645
    %v5703 = vpack.c.bf16 %v5648, %v5647
    %v5704 = vpack.c.bf16 %v5650, %v5649
    %v5705 = vpack.c.bf16 %v5652, %v5651
    %v5706 = vpack.c.bf16 %v5654, %v5653
    %v5707 = vpack.c.bf16 %v5656, %v5655
    %v5708 = vpack.c.bf16 %v5658, %v5657
    %v5709 = vpack.c.bf16 %v5660, %v5659
    %v5710 = vpack.c.bf16 %v5662, %v5661
    %v5711 = vpack.c.bf16 %v5664, %v5663
    %v5712 = vpack.c.bf16 %v5666, %v5665
    %v5713 = vpack.c.bf16 %v5668, %v5667
    %v5714 = vpack.c.bf16 %v5670, %v5669
    %v5715 = vpack.c.bf16 %v5672, %v5671
    %v5716 = vpack.c.bf16 %v5674, %v5673
    %v5717 = vpack.c.bf16 %v5676, %v5675
    %v5718 = vpack.c.bf16 %v5678, %v5677
    %v5719 = vpack.c.bf16 %v5680, %v5679
    %v5720 = vpack.c.bf16 %v5682, %v5681
    %v5721 = vpack.c.bf16 %v5684, %v5683
    %v5722 = vpack.c.bf16 %v5686, %v5685
    %v5723 = vpack.c.bf16 %v5688, %v5687
    %v5724 = vpack.c.bf16 %v5690, %v5689
    %v5725 = vpack.c.bf16 %v5692, %v5691
    %v5726 = vpack.c.bf16 %v5694, %v5693
    %5727 = vmatprep.subr.bf16.mxu0 0
    %5728 = vmatpush1.bf16.msra.mxu0 %v5695
    %5729 = vmatprep.subr.bf16.mxu0 0
    %5730 = vmatpush1.bf16.msra.mxu0 %v5696
    %5731 = vmatprep.subr.bf16.mxu0 0
    %5732 = vmatpush1.bf16.msra.mxu0 %v5697
    %5733 = vmatprep.subr.bf16.mxu0 0
    %5734 = vmatpush1.bf16.msra.mxu0 %v5698
    %5735 = vmatprep.subr.bf16.mxu0 0
    %5736 = vmatpush1.bf16.msra.mxu0 %v5699
    %5737 = vmatprep.subr.bf16.mxu0 0
    %5738 = vmatpush1.bf16.msra.mxu0 %v5700
    %5739 = vmatprep.subr.bf16.mxu0 0
    %5740 = vmatpush1.bf16.msra.mxu0 %v5701
    %5741 = vmatprep.subr.bf16.mxu0 0
    %5742 = vmatpush1.bf16.msra.mxu0 %v5702
    %5743 = vmatprep.subr.bf16.mxu0 0
    %5744 = vmatpush1.bf16.msra.mxu0 %v5703
    %5745 = vmatprep.subr.bf16.mxu0 0
    %5746 = vmatpush1.bf16.msra.mxu0 %v5704
    %5747 = vmatprep.subr.bf16.mxu0 0
    %5748 = vmatpush1.bf16.msra.mxu0 %v5705
    %5749 = vmatprep.subr.bf16.mxu0 0
    %5750 = vmatpush1.bf16.msra.mxu0 %v5706
    %5751 = vmatprep.subr.bf16.mxu0 0
    %5752 = vmatpush1.bf16.msra.mxu0 %v5707
    %5753 = vmatprep.subr.bf16.mxu0 0
    %5754 = vmatpush1.bf16.msra.mxu0 %v5708
    %5755 = vmatprep.subr.bf16.mxu0 0
    %5756 = vmatpush1.bf16.msra.mxu0 %v5709
    %5757 = vmatprep.subr.bf16.mxu0 0
    %5758 = vmatpush1.bf16.msra.mxu0 %v5710
    %5759 = vmatprep.mubr.bf16.mxu0 %v533
    %5760 = vmatmul.mubr.bf16.gmra.mrb[0].mxu0 %v532
    %v5761 = vpop.f32.mrb[0].mxu0
    %v5762 = vadd.f32 0.0, %v5761
    %v5763 = vpop.f32.mrb[0].mxu0
    %v5764 = vpop.f32.mrb[0].mxu0
    %v5765 = vadd.f32 0.0, %v5764
    %v5766 = vpop.f32.mrb[0].mxu0
    %5767 = vmatprep.mubr.bf16.mxu0 %v537
    %5768 = vmatmul.mubr.bf16.gmra.mrb[0].mxu0 %v536
    %v5769 = vpop.f32.mrb[0].mxu0
    %v5770 = vadd.f32 0.0, %v5769
    %v5771 = vpop.f32.mrb[0].mxu0
    %v5772 = vpop.f32.mrb[0].mxu0
    %v5773 = vadd.f32 0.0, %v5772
    %v5774 = vpop.f32.mrb[0].mxu0
    %5775 = vmatprep.mubr.bf16.mxu0 %v541
    %5776 = vmatmul.mubr.bf16.gmra.mrb[0].mxu0 %v540
    %v5777 = vpop.f32.mrb[0].mxu0
    %v5778 = vadd.f32 0.0, %v5777
    %v5779 = vpop.f32.mrb[0].mxu0
    %v5780 = vpop.f32.mrb[0].mxu0
    %v5781 = vadd.f32 0.0, %v5780
    %v5782 = vpop.f32.mrb[0].mxu0
    %5783 = vmatprep.mubr.bf16.mxu0 %v545
    %5784 = vmatmul.mubr.bf16.gmra.mrb[0].mxu0 %v544
    %v5785 = vpop.f32.mrb[0].mxu0
    %v5786 = vadd.f32 0.0, %v5785
    %v5787 = vpop.f32.mrb[0].mxu0
    %v5788 = vpop.f32.mrb[0].mxu0
    %v5789 = vadd.f32 0.0, %v5788
    %v5790 = vpop.f32.mrb[0].mxu0
    %5791 = vmatprep.mubr.bf16.mxu0 %v549
    %5792 = vmatmul.mubr.bf16.gmra.mrb[0].mxu0 %v548
    %v5793 = vpop.f32.mrb[0].mxu0
    %v5794 = vadd.f32 0.0, %v5793
    %v5795 = vpop.f32.mrb[0].mxu0
    %v5796 = vpop.f32.mrb[0].mxu0
    %v5797 = vadd.f32 0.0, %v5796
    %v5798 = vpop.f32.mrb[0].mxu0
    %5799 = vmatprep.mubr.bf16.mxu0 %v553
    %5800 = vmatmul.mubr.bf16.gmra.mrb[0].mxu0 %v552
    %v5801 = vpop.f32.mrb[0].mxu0
    %v5802 = vadd.f32 0.0, %v5801
    %v5803 = vpop.f32.mrb[0].mxu0
    %v5804 = vpop.f32.mrb[0].mxu0
    %v5805 = vadd.f32 0.0, %v5804
    %v5806 = vpop.f32.mrb[0].mxu0
    %5807 = vmatprep.mubr.bf16.mxu0 %v557
    %5808 = vmatmul.mubr.bf16.gmra.mrb[0].mxu0 %v556
    %v5809 = vpop.f32.mrb[0].mxu0
    %v5810 = vadd.f32 0.0, %v5809
    %v5811 = vpop.f32.mrb[0].mxu0
    %v5812 = vpop.f32.mrb[0].mxu0
    %v5813 = vadd.f32 0.0, %v5812
    %v5814 = vpop.f32.mrb[0].mxu0
    %5815 = vmatprep.mubr.bf16.mxu0 %v561
    %5816 = vmatmul.mubr.bf16.gmra.mrb[0].mxu0 %v560
    %v5817 = vpop.f32.mrb[0].mxu0
    %v5818 = vadd.f32 0.0, %v5817
    %v5819 = vpop.f32.mrb[0].mxu0
    %v5820 = vpop.f32.mrb[0].mxu0
    %v5821 = vadd.f32 0.0, %v5820
    %v5822 = vpop.f32.mrb[0].mxu0
    %5823 = vmatprep.mubr.bf16.mxu0 %v565
    %5824 = vmatmul.mubr.bf16.gmra.mrb[0].mxu0 %v564
    %v5825 = vpop.f32.mrb[0].mxu0
    %v5826 = vadd.f32 0.0, %v5825
    %v5827 = vpop.f32.mrb[0].mxu0
    %v5828 = vpop.f32.mrb[0].mxu0
    %v5829 = vadd.f32 0.0, %v5828
    %v5830 = vpop.f32.mrb[0].mxu0
    %5831 = vmatprep.mubr.bf16.mxu0 %v569
    %5832 = vmatmul.mubr.bf16.gmra.mrb[0].mxu0 %v568
    %v5833 = vpop.f32.mrb[0].mxu0
    %v5834 = vadd.f32 0.0, %v5833
    %v5835 = vpop.f32.mrb[0].mxu0
    %v5836 = vpop.f32.mrb[0].mxu0
    %v5837 = vadd.f32 0.0, %v5836
    %v5838 = vpop.f32.mrb[0].mxu0
    %5839 = vmatprep.mubr.bf16.mxu0 %v573
    %5840 = vmatmul.mubr.bf16.gmra.mrb[0].mxu0 %v572
    %v5841 = vpop.f32.mrb[0].mxu0
    %v5842 = vadd.f32 0.0, %v5841
    %v5843 = vpop.f32.mrb[0].mxu0
    %v5844 = vpop.f32.mrb[0].mxu0
    %v5845 = vadd.f32 0.0, %v5844
    %v5846 = vpop.f32.mrb[0].mxu0
    %5847 = vmatprep.mubr.bf16.mxu0 %v577
    %5848 = vmatmul.mubr.bf16.gmra.mrb[0].mxu0 %v576
    %v5849 = vpop.f32.mrb[0].mxu0
    %v5850 = vadd.f32 0.0, %v5849
    %v5851 = vpop.f32.mrb[0].mxu0
    %v5852 = vpop.f32.mrb[0].mxu0
    %v5853 = vadd.f32 0.0, %v5852
    %v5854 = vpop.f32.mrb[0].mxu0
    %5855 = vmatprep.mubr.bf16.mxu0 %v581
    %5856 = vmatmul.mubr.bf16.gmra.mrb[0].mxu0 %v580
    %v5857 = vpop.f32.mrb[0].mxu0
    %v5858 = vadd.f32 0.0, %v5857
    %v5859 = vpop.f32.mrb[0].mxu0
    %v5860 = vpop.f32.mrb[0].mxu0
    %v5861 = vadd.f32 0.0, %v5860
    %v5862 = vpop.f32.mrb[0].mxu0
    %5863 = vmatprep.mubr.bf16.mxu0 %v585
    %5864 = vmatmul.mubr.bf16.gmra.mrb[0].mxu0 %v584
    %v5865 = vpop.f32.mrb[0].mxu0
    %v5866 = vadd.f32 0.0, %v5865
    %v5867 = vpop.f32.mrb[0].mxu0
    %v5868 = vpop.f32.mrb[0].mxu0
    %v5869 = vadd.f32 0.0, %v5868
    %v5870 = vpop.f32.mrb[0].mxu0
    %5871 = vmatprep.mubr.bf16.mxu0 %v589
    %5872 = vmatmul.mubr.bf16.gmra.mrb[0].mxu0 %v588
    %v5873 = vpop.f32.mrb[0].mxu0
    %v5874 = vadd.f32 0.0, %v5873
    %v5875 = vpop.f32.mrb[0].mxu0
    %v5876 = vpop.f32.mrb[0].mxu0
    %v5877 = vadd.f32 0.0, %v5876
    %v5878 = vpop.f32.mrb[0].mxu0
    %5879 = vmatprep.mubr.bf16.mxu0 %v593
    %5880 = vmatmul.mubr.bf16.gmra.mrb[0].mxu0 %v592
    %v5881 = vpop.f32.mrb[0].mxu0
    %v5882 = vadd.f32 0.0, %v5881
    %v5883 = vpop.f32.mrb[0].mxu0
    %v5884 = vpop.f32.mrb[0].mxu0
    %v5885 = vadd.f32 0.0, %v5884
    %v5886 = vpop.f32.mrb[0].mxu0
    %5887 = vdwg.mxu0
    %5888 = vmatprep.subr.bf16.mxu0 0
    %5889 = vmatpush1.bf16.msra.mxu0 %v5711
    %5890 = vmatprep.subr.bf16.mxu0 0
    %5891 = vmatpush1.bf16.msra.mxu0 %v5712
    %5892 = vmatprep.subr.bf16.mxu0 0
    %5893 = vmatpush1.bf16.msra.mxu0 %v5713
    %5894 = vmatprep.subr.bf16.mxu0 0
    %5895 = vmatpush1.bf16.msra.mxu0 %v5714
    %5896 = vmatprep.subr.bf16.mxu0 0
    %5897 = vmatpush1.bf16.msra.mxu0 %v5715
    %5898 = vmatprep.subr.bf16.mxu0 0
    %5899 = vmatpush1.bf16.msra.mxu0 %v5716
    %5900 = vmatprep.subr.bf16.mxu0 0
    %5901 = vmatpush1.bf16.msra.mxu0 %v5717
    %5902 = vmatprep.subr.bf16.mxu0 0
    %5903 = vmatpush1.bf16.msra.mxu0 %v5718
    %5904 = vmatprep.subr.bf16.mxu0 0
    %5905 = vmatpush1.bf16.msra.mxu0 %v5719
    %5906 = vmatprep.subr.bf16.mxu0 0
    %5907 = vmatpush1.bf16.msra.mxu0 %v5720
    %5908 = vmatprep.subr.bf16.mxu0 0
    %5909 = vmatpush1.bf16.msra.mxu0 %v5721
    %5910 = vmatprep.subr.bf16.mxu0 0
    %5911 = vmatpush1.bf16.msra.mxu0 %v5722
    %5912 = vmatprep.subr.bf16.mxu0 0
    %5913 = vmatpush1.bf16.msra.mxu0 %v5723
    %5914 = vmatprep.subr.bf16.mxu0 0
    %5915 = vmatpush1.bf16.msra.mxu0 %v5724
    %5916 = vmatprep.subr.bf16.mxu0 0
    %5917 = vmatpush1.bf16.msra.mxu0 %v5725
    %5918 = vmatprep.subr.bf16.mxu0 0
    %5919 = vmatpush1.bf16.msra.mxu0 %v5726
    %5920 = vmatprep.mubr.bf16.mxu0 %v535
    %5921 = vmatmul.mubr.bf16.gmra.mrb[0].mxu0 %v534
    %v5922 = vpop.f32.mrb[0].mxu0
    %v5923 = vadd.f32 %v5762, %v5922
    %v5924 = vpop.f32.mrb[0].mxu0
    %v5925 = vpop.f32.mrb[0].mxu0
    %v5926 = vadd.f32 %v5765, %v5925
    %v5927 = vpop.f32.mrb[0].mxu0
    %5928 = vmatprep.mubr.bf16.mxu0 %v539
    %5929 = vmatmul.mubr.bf16.gmra.mrb[0].mxu0 %v538
    %v5930 = vpop.f32.mrb[0].mxu0
    %v5931 = vadd.f32 %v5770, %v5930
    %v5932 = vpop.f32.mrb[0].mxu0
    %v5933 = vpop.f32.mrb[0].mxu0
    %v5934 = vadd.f32 %v5773, %v5933
    %v5935 = vpop.f32.mrb[0].mxu0
    %5936 = vmatprep.mubr.bf16.mxu0 %v543
    %5937 = vmatmul.mubr.bf16.gmra.mrb[0].mxu0 %v542
    %v5938 = vpop.f32.mrb[0].mxu0
    %v5939 = vadd.f32 %v5778, %v5938
    %v5940 = vpop.f32.mrb[0].mxu0
    %v5941 = vpop.f32.mrb[0].mxu0
    %v5942 = vadd.f32 %v5781, %v5941
    %v5943 = vpop.f32.mrb[0].mxu0
    %5944 = vmatprep.mubr.bf16.mxu0 %v547
    %5945 = vmatmul.mubr.bf16.gmra.mrb[0].mxu0 %v546
    %v5946 = vpop.f32.mrb[0].mxu0
    %v5947 = vadd.f32 %v5786, %v5946
    %v5948 = vpop.f32.mrb[0].mxu0
    %v5949 = vpop.f32.mrb[0].mxu0
    %v5950 = vadd.f32 %v5789, %v5949
    %v5951 = vpop.f32.mrb[0].mxu0
    %5952 = vmatprep.mubr.bf16.mxu0 %v551
    %5953 = vmatmul.mubr.bf16.gmra.mrb[0].mxu0 %v550
    %v5954 = vpop.f32.mrb[0].mxu0
    %v5955 = vadd.f32 %v5794, %v5954
    %v5956 = vpop.f32.mrb[0].mxu0
    %v5957 = vpop.f32.mrb[0].mxu0
    %v5958 = vadd.f32 %v5797, %v5957
    %v5959 = vpop.f32.mrb[0].mxu0
    %5960 = vmatprep.mubr.bf16.mxu0 %v555
    %5961 = vmatmul.mubr.bf16.gmra.mrb[0].mxu0 %v554
    %v5962 = vpop.f32.mrb[0].mxu0
    %v5963 = vadd.f32 %v5802, %v5962
    %v5964 = vpop.f32.mrb[0].mxu0
    %v5965 = vpop.f32.mrb[0].mxu0
    %v5966 = vadd.f32 %v5805, %v5965
    %v5967 = vpop.f32.mrb[0].mxu0
    %5968 = vmatprep.mubr.bf16.mxu0 %v559
    %5969 = vmatmul.mubr.bf16.gmra.mrb[0].mxu0 %v558
    %v5970 = vpop.f32.mrb[0].mxu0
    %v5971 = vadd.f32 %v5810, %v5970
    %v5972 = vpop.f32.mrb[0].mxu0
    %v5973 = vpop.f32.mrb[0].mxu0
    %v5974 = vadd.f32 %v5813, %v5973
    %v5975 = vpop.f32.mrb[0].mxu0
    %5976 = vmatprep.mubr.bf16.mxu0 %v563
    %5977 = vmatmul.mubr.bf16.gmra.mrb[0].mxu0 %v562
    %v5978 = vpop.f32.mrb[0].mxu0
    %v5979 = vadd.f32 %v5818, %v5978
    %v5980 = vpop.f32.mrb[0].mxu0
    %v5981 = vpop.f32.mrb[0].mxu0
    %v5982 = vadd.f32 %v5821, %v5981
    %v5983 = vpop.f32.mrb[0].mxu0
    %5984 = vmatprep.mubr.bf16.mxu0 %v567
    %5985 = vmatmul.mubr.bf16.gmra.mrb[0].mxu0 %v566
    %v5986 = vpop.f32.mrb[0].mxu0
    %v5987 = vadd.f32 %v5826, %v5986
    %v5988 = vpop.f32.mrb[0].mxu0
    %v5989 = vpop.f32.mrb[0].mxu0
    %v5990 = vadd.f32 %v5829, %v5989
    %v5991 = vpop.f32.mrb[0].mxu0
    %5992 = vmatprep.mubr.bf16.mxu0 %v571
    %5993 = vmatmul.mubr.bf16.gmra.mrb[0].mxu0 %v570
    %v5994 = vpop.f32.mrb[0].mxu0
    %v5995 = vadd.f32 %v5834, %v5994
    %v5996 = vpop.f32.mrb[0].mxu0
    %v5997 = vpop.f32.mrb[0].mxu0
    %v5998 = vadd.f32 %v5837, %v5997
    %v5999 = vpop.f32.mrb[0].mxu0
    %6000 = vmatprep.mubr.bf16.mxu0 %v575
    %6001 = vmatmul.mubr.bf16.gmra.mrb[0].mxu0 %v574
    %v6002 = vpop.f32.mrb[0].mxu0
    %v6003 = vadd.f32 %v5842, %v6002
    %v6004 = vpop.f32.mrb[0].mxu0
    %v6005 = vpop.f32.mrb[0].mxu0
    %v6006 = vadd.f32 %v5845, %v6005
    %v6007 = vpop.f32.mrb[0].mxu0
    %6008 = vmatprep.mubr.bf16.mxu0 %v579
    %6009 = vmatmul.mubr.bf16.gmra.mrb[0].mxu0 %v578
    %v6010 = vpop.f32.mrb[0].mxu0
    %v6011 = vadd.f32 %v5850, %v6010
    %v6012 = vpop.f32.mrb[0].mxu0
    %v6013 = vpop.f32.mrb[0].mxu0
    %v6014 = vadd.f32 %v5853, %v6013
    %v6015 = vpop.f32.mrb[0].mxu0
    %6016 = vmatprep.mubr.bf16.mxu0 %v583
    %6017 = vmatmul.mubr.bf16.gmra.mrb[0].mxu0 %v582
    %v6018 = vpop.f32.mrb[0].mxu0
    %v6019 = vadd.f32 %v5858, %v6018
    %v6020 = vpop.f32.mrb[0].mxu0
    %v6021 = vpop.f32.mrb[0].mxu0
    %v6022 = vadd.f32 %v5861, %v6021
    %v6023 = vpop.f32.mrb[0].mxu0
    %6024 = vmatprep.mubr.bf16.mxu0 %v587
    %6025 = vmatmul.mubr.bf16.gmra.mrb[0].mxu0 %v586
    %v6026 = vpop.f32.mrb[0].mxu0
    %v6027 = vadd.f32 %v5866, %v6026
    %v6028 = vpop.f32.mrb[0].mxu0
    %v6029 = vpop.f32.mrb[0].mxu0
    %v6030 = vadd.f32 %v5869, %v6029
    %v6031 = vpop.f32.mrb[0].mxu0
    %6032 = vmatprep.mubr.bf16.mxu0 %v591
    %6033 = vmatmul.mubr.bf16.gmra.mrb[0].mxu0 %v590
    %v6034 = vpop.f32.mrb[0].mxu0
    %v6035 = vadd.f32 %v5874, %v6034
    %v6036 = vpop.f32.mrb[0].mxu0
    %v6037 = vpop.f32.mrb[0].mxu0
    %v6038 = vadd.f32 %v5877, %v6037
    %v6039 = vpop.f32.mrb[0].mxu0
    %6040 = vmatprep.mubr.bf16.mxu0 %v595
    %6041 = vmatmul.mubr.bf16.gmra.mrb[0].mxu0 %v594
    %v6042 = vpop.f32.mrb[0].mxu0
    %v6043 = vadd.f32 %v5882, %v6042
    %v6044 = vpop.f32.mrb[0].mxu0
    %v6045 = vpop.f32.mrb[0].mxu0
    %v6046 = vadd.f32 %v5885, %v6045
    %v6047 = vpop.f32.mrb[0].mxu0
    %6048 = vdwg.mxu0
    %v6049 = vmul.f32 %v5923, %v985
    %v6050 = vmul.f32 %v5926, %v990
    %v6051 = vmul.f32 %v5931, %v995
    %v6052 = vmul.f32 %v5934, %v1000
    %v6053 = vmul.f32 %v5939, %v1005
    %v6054 = vmul.f32 %v5942, %v1010
    %v6055 = vmul.f32 %v5947, %v1015
    %v6056 = vmul.f32 %v5950, %v1020
    %v6057 = vmul.f32 %v5955, %v1025
    %v6058 = vmul.f32 %v5958, %v1030
    %v6059 = vmul.f32 %v5963, %v1035
    %v6060 = vmul.f32 %v5966, %v1040
    %v6061 = vmul.f32 %v5971, %v1045
    %v6062 = vmul.f32 %v5974, %v1050
    %v6063 = vmul.f32 %v5979, %v1055
    %v6064 = vmul.f32 %v5982, %v1060
    %v6065 = vmul.f32 %v5987, %v1065
    %v6066 = vmul.f32 %v5990, %v1070
    %v6067 = vmul.f32 %v5995, %v1075
    %v6068 = vmul.f32 %v5998, %v1080
    %v6069 = vmul.f32 %v6003, %v1085
    %v6070 = vmul.f32 %v6006, %v1090
    %v6071 = vmul.f32 %v6011, %v1095
    %v6072 = vmul.f32 %v6014, %v1100
    %v6073 = vmul.f32 %v6019, %v1105
    %v6074 = vmul.f32 %v6022, %v1110
    %v6075 = vmul.f32 %v6027, %v1115
    %v6076 = vmul.f32 %v6030, %v1120
    %v6077 = vmul.f32 %v6035, %v1125
    %v6078 = vmul.f32 %v6038, %v1130
    %v6079 = vmul.f32 %v6043, %v1135
    %v6080 = vmul.f32 %v6046, %v1140
    %v6081 = vadd.f32 %v6049, %v1177
    %v6082 = vadd.f32 %v6050, %v1182
    %v6083 = vadd.f32 %v6051, %v1187
    %v6084 = vadd.f32 %v6052, %v1192
    %v6085 = vadd.f32 %v6053, %v1197
    %v6086 = vadd.f32 %v6054, %v1202
    %v6087 = vadd.f32 %v6055, %v1207
    %v6088 = vadd.f32 %v6056, %v1212
    %v6089 = vadd.f32 %v6057, %v1217
    %v6090 = vadd.f32 %v6058, %v1222
    %v6091 = vadd.f32 %v6059, %v1227
    %v6092 = vadd.f32 %v6060, %v1232
    %v6093 = vadd.f32 %v6061, %v1237
    %v6094 = vadd.f32 %v6062, %v1242
    %v6095 = vadd.f32 %v6063, %v1247
    %v6096 = vadd.f32 %v6064, %v1252
    %v6097 = vadd.f32 %v6065, %v1257
    %v6098 = vadd.f32 %v6066, %v1262
    %v6099 = vadd.f32 %v6067, %v1267
    %v6100 = vadd.f32 %v6068, %v1272
    %v6101 = vadd.f32 %v6069, %v1277
    %v6102 = vadd.f32 %v6070, %v1282
    %v6103 = vadd.f32 %v6071, %v1287
    %v6104 = vadd.f32 %v6072, %v1292
    %v6105 = vadd.f32 %v6073, %v1297
    %v6106 = vadd.f32 %v6074, %v1302
    %v6107 = vadd.f32 %v6075, %v1307
    %v6108 = vadd.f32 %v6076, %v1312
    %v6109 = vadd.f32 %v6077, %v1317
    %v6110 = vadd.f32 %v6078, %v1322
    %v6111 = vadd.f32 %v6079, %v1327
    %v6112 = vadd.f32 %v6080, %v1332
    %v6113 = vmax.f32 %v6081, 0.0
    %v6114 = vmax.f32 %v6082, 0.0
    %v6115 = vmax.f32 %v6083, 0.0
    %v6116 = vmax.f32 %v6084, 0.0
    %v6117 = vmax.f32 %v6085, 0.0
    %v6118 = vmax.f32 %v6086, 0.0
    %v6119 = vmax.f32 %v6087, 0.0
    %v6120 = vmax.f32 %v6088, 0.0
    %v6121 = vmax.f32 %v6089, 0.0
    %v6122 = vmax.f32 %v6090, 0.0
    %v6123 = vmax.f32 %v6091, 0.0
    %v6124 = vmax.f32 %v6092, 0.0
    %v6125 = vmax.f32 %v6093, 0.0
    %v6126 = vmax.f32 %v6094, 0.0
    %v6127 = vmax.f32 %v6095, 0.0
    %v6128 = vmax.f32 %v6096, 0.0
    %v6129 = vmax.f32 %v6097, 0.0
    %v6130 = vmax.f32 %v6098, 0.0
    %v6131 = vmax.f32 %v6099, 0.0
    %v6132 = vmax.f32 %v6100, 0.0
    %v6133 = vmax.f32 %v6101, 0.0
    %v6134 = vmax.f32 %v6102, 0.0
    %v6135 = vmax.f32 %v6103, 0.0
    %v6136 = vmax.f32 %v6104, 0.0
    %v6137 = vmax.f32 %v6105, 0.0
    %v6138 = vmax.f32 %v6106, 0.0
    %v6139 = vmax.f32 %v6107, 0.0
    %v6140 = vmax.f32 %v6108, 0.0
    %v6141 = vmax.f32 %v6109, 0.0
    %v6142 = vmax.f32 %v6110, 0.0
    %v6143 = vmax.f32 %v6111, 0.0
    %v6144 = vmax.f32 %v6112, 0.0
    %v6145 = vpack.c.bf16 %v6114, %v6113
    %v6146 = vpack.c.bf16 %v6116, %v6115
    %v6147 = vpack.c.bf16 %v6118, %v6117
    %v6148 = vpack.c.bf16 %v6120, %v6119
    %v6149 = vpack.c.bf16 %v6122, %v6121
    %v6150 = vpack.c.bf16 %v6124, %v6123
    %v6151 = vpack.c.bf16 %v6126, %v6125
    %v6152 = vpack.c.bf16 %v6128, %v6127
    %v6153 = vpack.c.bf16 %v6130, %v6129
    %v6154 = vpack.c.bf16 %v6132, %v6131
    %v6155 = vpack.c.bf16 %v6134, %v6133
    %v6156 = vpack.c.bf16 %v6136, %v6135
    %v6157 = vpack.c.bf16 %v6138, %v6137
    %v6158 = vpack.c.bf16 %v6140, %v6139
    %v6159 = vpack.c.bf16 %v6142, %v6141
    %v6160 = vpack.c.bf16 %v6144, %v6143
    %6161 = vmatprep.subr.bf16.mxu0 0
    %6162 = vmatpush1.bf16.msra.mxu0 %v6145
    %6163 = vmatprep.subr.bf16.mxu0 0
    %6164 = vmatpush1.bf16.msra.mxu0 %v6146
    %6165 = vmatprep.subr.bf16.mxu0 0
    %6166 = vmatpush1.bf16.msra.mxu0 %v6147
    %6167 = vmatprep.subr.bf16.mxu0 0
    %6168 = vmatpush1.bf16.msra.mxu0 %v6148
    %6169 = vmatprep.subr.bf16.mxu0 0
    %6170 = vmatpush1.bf16.msra.mxu0 %v6149
    %6171 = vmatprep.subr.bf16.mxu0 0
    %6172 = vmatpush1.bf16.msra.mxu0 %v6150
    %6173 = vmatprep.subr.bf16.mxu0 0
    %6174 = vmatpush1.bf16.msra.mxu0 %v6151
    %6175 = vmatprep.subr.bf16.mxu0 0
    %6176 = vmatpush1.bf16.msra.mxu0 %v6152
    %6177 = vmatprep.subr.bf16.mxu0 0
    %6178 = vmatpush1.bf16.msra.mxu0 %v6153
    %6179 = vmatprep.subr.bf16.mxu0 0
    %6180 = vmatpush1.bf16.msra.mxu0 %v6154
    %6181 = vmatprep.subr.bf16.mxu0 0
    %6182 = vmatpush1.bf16.msra.mxu0 %v6155
    %6183 = vmatprep.subr.bf16.mxu0 0
    %6184 = vmatpush1.bf16.msra.mxu0 %v6156
    %6185 = vmatprep.subr.bf16.mxu0 0
    %6186 = vmatpush1.bf16.msra.mxu0 %v6157
    %6187 = vmatprep.subr.bf16.mxu0 0
    %6188 = vmatpush1.bf16.msra.mxu0 %v6158
    %6189 = vmatprep.subr.bf16.mxu0 0
    %6190 = vmatpush1.bf16.msra.mxu0 %v6159
    %6191 = vmatprep.subr.bf16.mxu0 0
    %6192 = vmatpush1.bf16.msra.mxu0 %v6160
    %6193 = vmatprep.mubr.bf16.mxu0 %v1463
    %6194 = vmatmul.mubr.bf16.gmra.mrb[0].mxu0 %v1462
    %v6195 = vpop.f32.mrb[0].mxu0
    %v6196 = vadd.f32 0.0, %v6195
    %v6197 = vpop.f32.mrb[0].mxu0
    %v6198 = vpop.f32.mrb[0].mxu0
    %v6199 = vadd.f32 0.0, %v6198
    %v6200 = vpop.f32.mrb[0].mxu0
    %6201 = vmatprep.mubr.bf16.mxu0 %v1465
    %6202 = vmatmul.mubr.bf16.gmra.mrb[0].mxu0 %v1464
    %v6203 = vpop.f32.mrb[0].mxu0
    %v6204 = vadd.f32 0.0, %v6203
    %v6205 = vpop.f32.mrb[0].mxu0
    %v6206 = vpop.f32.mrb[0].mxu0
    %v6207 = vadd.f32 0.0, %v6206
    %v6208 = vpop.f32.mrb[0].mxu0
    %6209 = vmatprep.mubr.bf16.mxu0 %v1467
    %6210 = vmatmul.mubr.bf16.gmra.mrb[0].mxu0 %v1466
    %v6211 = vpop.f32.mrb[0].mxu0
    %v6212 = vadd.f32 0.0, %v6211
    %v6213 = vpop.f32.mrb[0].mxu0
    %v6214 = vpop.f32.mrb[0].mxu0
    %v6215 = vadd.f32 0.0, %v6214
    %v6216 = vpop.f32.mrb[0].mxu0
    %6217 = vmatprep.mubr.bf16.mxu0 %v1469
    %6218 = vmatmul.mubr.bf16.gmra.mrb[0].mxu0 %v1468
    %v6219 = vpop.f32.mrb[0].mxu0
    %v6220 = vadd.f32 0.0, %v6219
    %v6221 = vpop.f32.mrb[0].mxu0
    %v6222 = vpop.f32.mrb[0].mxu0
    %v6223 = vadd.f32 0.0, %v6222
    %v6224 = vpop.f32.mrb[0].mxu0
    %6225 = vmatprep.mubr.bf16.mxu0 %v1471
    %6226 = vmatmul.mubr.bf16.gmra.mrb[0].mxu0 %v1470
    %v6227 = vpop.f32.mrb[0].mxu0
    %v6228 = vadd.f32 0.0, %v6227
    %v6229 = vpop.f32.mrb[0].mxu0
    %v6230 = vpop.f32.mrb[0].mxu0
    %v6231 = vadd.f32 0.0, %v6230
    %v6232 = vpop.f32.mrb[0].mxu0
    %6233 = vmatprep.mubr.bf16.mxu0 %v1473
    %6234 = vmatmul.mubr.bf16.gmra.mrb[0].mxu0 %v1472
    %v6235 = vpop.f32.mrb[0].mxu0
    %v6236 = vadd.f32 0.0, %v6235
    %v6237 = vpop.f32.mrb[0].mxu0
    %v6238 = vpop.f32.mrb[0].mxu0
    %v6239 = vadd.f32 0.0, %v6238
    %v6240 = vpop.f32.mrb[0].mxu0
    %6241 = vmatprep.mubr.bf16.mxu0 %v1475
    %6242 = vmatmul.mubr.bf16.gmra.mrb[0].mxu0 %v1474
    %v6243 = vpop.f32.mrb[0].mxu0
    %v6244 = vadd.f32 0.0, %v6243
    %v6245 = vpop.f32.mrb[0].mxu0
    %v6246 = vpop.f32.mrb[0].mxu0
    %v6247 = vadd.f32 0.0, %v6246
    %v6248 = vpop.f32.mrb[0].mxu0
    %6249 = vmatprep.mubr.bf16.mxu0 %v1477
    %6250 = vmatmul.mubr.bf16.gmra.mrb[0].mxu0 %v1476
    %v6251 = vpop.f32.mrb[0].mxu0
    %v6252 = vadd.f32 0.0, %v6251
    %v6253 = vpop.f32.mrb[0].mxu0
    %v6254 = vpop.f32.mrb[0].mxu0
    %v6255 = vadd.f32 0.0, %v6254
    %v6256 = vpop.f32.mrb[0].mxu0
    %6257 = vdwg.mxu0
    %v6258 = vmul.f32 %v6196, %v1594
    %v6259 = vmul.f32 %v6199, %v1599
    %v6260 = vmul.f32 %v6204, %v1604
    %v6261 = vmul.f32 %v6207, %v1609
    %v6262 = vmul.f32 %v6212, %v1614
    %v6263 = vmul.f32 %v6215, %v1619
    %v6264 = vmul.f32 %v6220, %v1624
    %v6265 = vmul.f32 %v6223, %v1629
    %v6266 = vmul.f32 %v6228, %v1634
    %v6267 = vmul.f32 %v6231, %v1639
    %v6268 = vmul.f32 %v6236, %v1644
    %v6269 = vmul.f32 %v6239, %v1649
    %v6270 = vmul.f32 %v6244, %v1654
    %v6271 = vmul.f32 %v6247, %v1659
    %v6272 = vmul.f32 %v6252, %v1664
    %v6273 = vmul.f32 %v6255, %v1669
    %v6274 = vadd.f32 %v6258, %v1690
    %v6275 = vadd.f32 %v6259, %v1695
    %v6276 = vadd.f32 %v6260, %v1700
    %v6277 = vadd.f32 %v6261, %v1705
    %v6278 = vadd.f32 %v6262, %v1710
    %v6279 = vadd.f32 %v6263, %v1715
    %v6280 = vadd.f32 %v6264, %v1720
    %v6281 = vadd.f32 %v6265, %v1725
    %v6282 = vadd.f32 %v6266, %v1730
    %v6283 = vadd.f32 %v6267, %v1735
    %v6284 = vadd.f32 %v6268, %v1740
    %v6285 = vadd.f32 %v6269, %v1745
    %v6286 = vadd.f32 %v6270, %v1750
    %v6287 = vadd.f32 %v6271, %v1755
    %v6288 = vadd.f32 %v6272, %v1760
    %v6289 = vadd.f32 %v6273, %v1765
    %v6290 = vmax.f32 %v6274, 0.0
    %v6291 = vmax.f32 %v6275, 0.0
    %v6292 = vmax.f32 %v6276, 0.0
    %v6293 = vmax.f32 %v6277, 0.0
    %v6294 = vmax.f32 %v6278, 0.0
    %v6295 = vmax.f32 %v6279, 0.0
    %v6296 = vmax.f32 %v6280, 0.0
    %v6297 = vmax.f32 %v6281, 0.0
    %v6298 = vmax.f32 %v6282, 0.0
    %v6299 = vmax.f32 %v6283, 0.0
    %v6300 = vmax.f32 %v6284, 0.0
    %v6301 = vmax.f32 %v6285, 0.0
    %v6302 = vmax.f32 %v6286, 0.0
    %v6303 = vmax.f32 %v6287, 0.0
    %v6304 = vmax.f32 %v6288, 0.0
    %v6305 = vmax.f32 %v6289, 0.0
    %v6306 = vmul.f32 %v6290, %v1802
    %v6307 = vmul.f32 %v6291, %v1807
    %v6308 = vmul.f32 %v6292, %v1812
    %v6309 = vmul.f32 %v6293, %v1817
    %v6310 = vmul.f32 %v6294, %v1822
    %v6311 = vmul.f32 %v6295, %v1827
    %v6312 = vmul.f32 %v6296, %v1832
    %v6313 = vmul.f32 %v6297, %v1837
    %v6314 = vmul.f32 %v6298, %v1842
    %v6315 = vmul.f32 %v6299, %v1847
    %v6316 = vmul.f32 %v6300, %v1852
    %v6317 = vmul.f32 %v6301, %v1857
    %v6318 = vmul.f32 %v6302, %v1862
    %v6319 = vmul.f32 %v6303, %v1867
    %v6320 = vmul.f32 %v6304, %v1872
    %v6321 = vmul.f32 %v6305, %v1877
    %v6322 = vsel %vm1895, %v6306, 0.0
    %v6323 = vsel %vm1895, %v6307, 0.0
    %v6324 = vadd.f32 %v6322, %v6323
    %v6325 = vsel %vm1895, %v6308, 0.0
    %v6326 = vadd.f32 %v6324, %v6325
    %v6327 = vsel %vm1895, %v6309, 0.0
    %v6328 = vadd.f32 %v6326, %v6327
    %v6329 = vsel %vm1895, %v6310, 0.0
    %v6330 = vadd.f32 %v6328, %v6329
    %v6331 = vsel %vm1895, %v6311, 0.0
    %v6332 = vadd.f32 %v6330, %v6331
    %v6333 = vsel %vm1895, %v6312, 0.0
    %v6334 = vadd.f32 %v6332, %v6333
    %v6335 = vsel %vm1895, %v6313, 0.0
    %v6336 = vadd.f32 %v6334, %v6335
    %v6337 = vsel %vm1895, %v6314, 0.0
    %v6338 = vadd.f32 %v6336, %v6337
    %v6339 = vsel %vm1895, %v6315, 0.0
    %v6340 = vadd.f32 %v6338, %v6339
    %v6341 = vsel %vm1895, %v6316, 0.0
    %v6342 = vadd.f32 %v6340, %v6341
    %v6343 = vsel %vm1895, %v6317, 0.0
    %v6344 = vadd.f32 %v6342, %v6343
    %v6345 = vsel %vm1895, %v6318, 0.0
    %v6346 = vadd.f32 %v6344, %v6345
    %v6347 = vsel %vm1895, %v6319, 0.0
    %v6348 = vadd.f32 %v6346, %v6347
    %v6349 = vsel %vm1895, %v6320, 0.0
    %v6350 = vadd.f32 %v6348, %v6349
    %v6351 = vsel %vm1895, %v6321, 0.0
    %v6352 = vadd.f32 %v6350, %v6351
    %v6353 = vrot.slane %v6352, 4
    %v6354 = vadd.f32 %v6352, %v6353
    %v6355 = vrot.slane %v6354, 2
    %v6356 = vadd.f32 %v6354, %v6355
    %v6357 = vrot.slane %v6356, 1
    %v6358 = vadd.f32 %v6356, %v6357
    %v6359 = vadd.f32 %v6358, %v1933
    %v6360 = vmax.f32 %v6359, 0.0
    %v6361 = vmul.f32 %v6360, %v241
    %v6362 = vsel %vm1937, %v6361, 0.0
    %6363 = vadd.xlane.f32.xlu0 %v6362
    %v6364 = vpop.xlane.xlu0 %6363
    %v6365 = vadd.f32 %v6364, %v1941
    %6366 = vst.msk [vmem:[%s10 + $0x6] sm:$0x1] %vm1943, %v6365
    %s6367 = scalar_lea.vmem %s0, 3584
    %v6368 = vld [vmem:[%s6367] sm:$0xff]
    %v6369 = vld [vmem:[%s6367 + $0x8] sm:$0xff]
    %v6370 = vld [vmem:[%s6367 + $0x10] sm:$0xff]
    %v6371 = vld [vmem:[%s6367 + $0x18] sm:$0xff]
    %v6372 = vld [vmem:[%s6367 + $0x20] sm:$0xff]
    %v6373 = vld [vmem:[%s6367 + $0x28] sm:$0xff]
    %v6374 = vld [vmem:[%s6367 + $0x30] sm:$0xff]
    %v6375 = vld [vmem:[%s6367 + $0x38] sm:$0xff]
    %v6376 = vld [vmem:[%s6367 + $0x40] sm:$0xff]
    %v6377 = vld [vmem:[%s6367 + $0x48] sm:$0xff]
    %v6378 = vld [vmem:[%s6367 + $0x50] sm:$0xff]
    %v6379 = vld [vmem:[%s6367 + $0x58] sm:$0xff]
    %v6380 = vld [vmem:[%s6367 + $0x60] sm:$0xff]
    %v6381 = vld [vmem:[%s6367 + $0x68] sm:$0xff]
    %v6382 = vld [vmem:[%s6367 + $0x70] sm:$0xff]
    %v6383 = vld [vmem:[%s6367 + $0x78] sm:$0xff]
    %v6384 = vld [vmem:[%s6367 + $0x80] sm:$0xff]
    %v6385 = vld [vmem:[%s6367 + $0x88] sm:$0xff]
    %v6386 = vld [vmem:[%s6367 + $0x90] sm:$0xff]
    %v6387 = vld [vmem:[%s6367 + $0x98] sm:$0xff]
    %v6388 = vld [vmem:[%s6367 + $0xa0] sm:$0xff]
    %v6389 = vld [vmem:[%s6367 + $0xa8] sm:$0xff]
    %v6390 = vld [vmem:[%s6367 + $0xb0] sm:$0xff]
    %v6391 = vld [vmem:[%s6367 + $0xb8] sm:$0xff]
    %v6392 = vld [vmem:[%s6367 + $0xc0] sm:$0xff]
    %v6393 = vld [vmem:[%s6367 + $0xc8] sm:$0xff]
    %v6394 = vld [vmem:[%s6367 + $0xd0] sm:$0xff]
    %v6395 = vld [vmem:[%s6367 + $0xd8] sm:$0xff]
    %v6396 = vld [vmem:[%s6367 + $0xe0] sm:$0xff]
    %v6397 = vld [vmem:[%s6367 + $0xe8] sm:$0xff]
    %v6398 = vld [vmem:[%s6367 + $0xf0] sm:$0xff]
    %v6399 = vld [vmem:[%s6367 + $0xf8] sm:$0xff]
    %v6400 = vld [vmem:[%s6367 + $0x100] sm:$0xff]
    %v6401 = vld [vmem:[%s6367 + $0x108] sm:$0xff]
    %v6402 = vld [vmem:[%s6367 + $0x110] sm:$0xff]
    %v6403 = vld [vmem:[%s6367 + $0x118] sm:$0xff]
    %v6404 = vld [vmem:[%s6367 + $0x120] sm:$0xff]
    %v6405 = vld [vmem:[%s6367 + $0x128] sm:$0xff]
    %v6406 = vld [vmem:[%s6367 + $0x130] sm:$0xff]
    %v6407 = vld [vmem:[%s6367 + $0x138] sm:$0xff]
    %v6408 = vld [vmem:[%s6367 + $0x140] sm:$0xff]
    %v6409 = vld [vmem:[%s6367 + $0x148] sm:$0xff]
    %v6410 = vld [vmem:[%s6367 + $0x150] sm:$0xff]
    %v6411 = vld [vmem:[%s6367 + $0x158] sm:$0xff]
    %v6412 = vld [vmem:[%s6367 + $0x160] sm:$0xff]
    %v6413 = vld [vmem:[%s6367 + $0x168] sm:$0xff]
    %v6414 = vld [vmem:[%s6367 + $0x170] sm:$0xff]
    %v6415 = vld [vmem:[%s6367 + $0x178] sm:$0xff]
    %v6416 = vld [vmem:[%s6367 + $0x180] sm:$0xff]
    %v6417 = vld [vmem:[%s6367 + $0x188] sm:$0xff]
    %v6418 = vld [vmem:[%s6367 + $0x190] sm:$0xff]
    %v6419 = vld [vmem:[%s6367 + $0x198] sm:$0xff]
    %v6420 = vld [vmem:[%s6367 + $0x1a0] sm:$0xff]
    %v6421 = vld [vmem:[%s6367 + $0x1a8] sm:$0xff]
    %v6422 = vld [vmem:[%s6367 + $0x1b0] sm:$0xff]
    %v6423 = vld [vmem:[%s6367 + $0x1b8] sm:$0xff]
    %v6424 = vld [vmem:[%s6367 + $0x1c0] sm:$0xff]
    %v6425 = vld [vmem:[%s6367 + $0x1c8] sm:$0xff]
    %v6426 = vld [vmem:[%s6367 + $0x1d0] sm:$0xff]
    %v6427 = vld [vmem:[%s6367 + $0x1d8] sm:$0xff]
    %v6428 = vld [vmem:[%s6367 + $0x1e0] sm:$0xff]
    %v6429 = vld [vmem:[%s6367 + $0x1e8] sm:$0xff]
    %v6430 = vld [vmem:[%s6367 + $0x1f0] sm:$0xff]
    %v6431 = vld [vmem:[%s6367 + $0x1f8] sm:$0xff]
    %v6432 = vpack.c.bf16 %v6369, %v6368
    %v6433 = vpack.c.bf16 %v6371, %v6370
    %v6434 = vpack.c.bf16 %v6373, %v6372
    %v6435 = vpack.c.bf16 %v6375, %v6374
    %v6436 = vpack.c.bf16 %v6377, %v6376
    %v6437 = vpack.c.bf16 %v6379, %v6378
    %v6438 = vpack.c.bf16 %v6381, %v6380
    %v6439 = vpack.c.bf16 %v6383, %v6382
    %v6440 = vpack.c.bf16 %v6385, %v6384
    %v6441 = vpack.c.bf16 %v6387, %v6386
    %v6442 = vpack.c.bf16 %v6389, %v6388
    %v6443 = vpack.c.bf16 %v6391, %v6390
    %v6444 = vpack.c.bf16 %v6393, %v6392
    %v6445 = vpack.c.bf16 %v6395, %v6394
    %v6446 = vpack.c.bf16 %v6397, %v6396
    %v6447 = vpack.c.bf16 %v6399, %v6398
    %v6448 = vpack.c.bf16 %v6401, %v6400
    %v6449 = vpack.c.bf16 %v6403, %v6402
    %v6450 = vpack.c.bf16 %v6405, %v6404
    %v6451 = vpack.c.bf16 %v6407, %v6406
    %v6452 = vpack.c.bf16 %v6409, %v6408
    %v6453 = vpack.c.bf16 %v6411, %v6410
    %v6454 = vpack.c.bf16 %v6413, %v6412
    %v6455 = vpack.c.bf16 %v6415, %v6414
    %v6456 = vpack.c.bf16 %v6417, %v6416
    %v6457 = vpack.c.bf16 %v6419, %v6418
    %v6458 = vpack.c.bf16 %v6421, %v6420
    %v6459 = vpack.c.bf16 %v6423, %v6422
    %v6460 = vpack.c.bf16 %v6425, %v6424
    %v6461 = vpack.c.bf16 %v6427, %v6426
    %v6462 = vpack.c.bf16 %v6429, %v6428
    %v6463 = vpack.c.bf16 %v6431, %v6430
    %6464 = vmatprep.subr.bf16.mxu0 0
    %6465 = vmatpush1.bf16.msra.mxu0 %v6432
    %6466 = vmatprep.subr.bf16.mxu0 0
    %6467 = vmatpush1.bf16.msra.mxu0 %v6433
    %6468 = vmatprep.subr.bf16.mxu0 0
    %6469 = vmatpush1.bf16.msra.mxu0 %v6434
    %6470 = vmatprep.subr.bf16.mxu0 0
    %6471 = vmatpush1.bf16.msra.mxu0 %v6435
    %6472 = vmatprep.subr.bf16.mxu0 0
    %6473 = vmatpush1.bf16.msra.mxu0 %v6436
    %6474 = vmatprep.subr.bf16.mxu0 0
    %6475 = vmatpush1.bf16.msra.mxu0 %v6437
    %6476 = vmatprep.subr.bf16.mxu0 0
    %6477 = vmatpush1.bf16.msra.mxu0 %v6438
    %6478 = vmatprep.subr.bf16.mxu0 0
    %6479 = vmatpush1.bf16.msra.mxu0 %v6439
    %6480 = vmatprep.subr.bf16.mxu0 0
    %6481 = vmatpush1.bf16.msra.mxu0 %v6440
    %6482 = vmatprep.subr.bf16.mxu0 0
    %6483 = vmatpush1.bf16.msra.mxu0 %v6441
    %6484 = vmatprep.subr.bf16.mxu0 0
    %6485 = vmatpush1.bf16.msra.mxu0 %v6442
    %6486 = vmatprep.subr.bf16.mxu0 0
    %6487 = vmatpush1.bf16.msra.mxu0 %v6443
    %6488 = vmatprep.subr.bf16.mxu0 0
    %6489 = vmatpush1.bf16.msra.mxu0 %v6444
    %6490 = vmatprep.subr.bf16.mxu0 0
    %6491 = vmatpush1.bf16.msra.mxu0 %v6445
    %6492 = vmatprep.subr.bf16.mxu0 0
    %6493 = vmatpush1.bf16.msra.mxu0 %v6446
    %6494 = vmatprep.subr.bf16.mxu0 0
    %6495 = vmatpush1.bf16.msra.mxu0 %v6447
    %6496 = vmatprep.mubr.bf16.mxu0 %v533
    %6497 = vmatmul.mubr.bf16.gmra.mrb[0].mxu0 %v532
    %v6498 = vpop.f32.mrb[0].mxu0
    %v6499 = vadd.f32 0.0, %v6498
    %v6500 = vpop.f32.mrb[0].mxu0
    %v6501 = vpop.f32.mrb[0].mxu0
    %v6502 = vadd.f32 0.0, %v6501
    %v6503 = vpop.f32.mrb[0].mxu0
    %6504 = vmatprep.mubr.bf16.mxu0 %v537
    %6505 = vmatmul.mubr.bf16.gmra.mrb[0].mxu0 %v536
    %v6506 = vpop.f32.mrb[0].mxu0
    %v6507 = vadd.f32 0.0, %v6506
    %v6508 = vpop.f32.mrb[0].mxu0
    %v6509 = vpop.f32.mrb[0].mxu0
    %v6510 = vadd.f32 0.0, %v6509
    %v6511 = vpop.f32.mrb[0].mxu0
    %6512 = vmatprep.mubr.bf16.mxu0 %v541
    %6513 = vmatmul.mubr.bf16.gmra.mrb[0].mxu0 %v540
    %v6514 = vpop.f32.mrb[0].mxu0
    %v6515 = vadd.f32 0.0, %v6514
    %v6516 = vpop.f32.mrb[0].mxu0
    %v6517 = vpop.f32.mrb[0].mxu0
    %v6518 = vadd.f32 0.0, %v6517
    %v6519 = vpop.f32.mrb[0].mxu0
    %6520 = vmatprep.mubr.bf16.mxu0 %v545
    %6521 = vmatmul.mubr.bf16.gmra.mrb[0].mxu0 %v544
    %v6522 = vpop.f32.mrb[0].mxu0
    %v6523 = vadd.f32 0.0, %v6522
    %v6524 = vpop.f32.mrb[0].mxu0
    %v6525 = vpop.f32.mrb[0].mxu0
    %v6526 = vadd.f32 0.0, %v6525
    %v6527 = vpop.f32.mrb[0].mxu0
    %6528 = vmatprep.mubr.bf16.mxu0 %v549
    %6529 = vmatmul.mubr.bf16.gmra.mrb[0].mxu0 %v548
    %v6530 = vpop.f32.mrb[0].mxu0
    %v6531 = vadd.f32 0.0, %v6530
    %v6532 = vpop.f32.mrb[0].mxu0
    %v6533 = vpop.f32.mrb[0].mxu0
    %v6534 = vadd.f32 0.0, %v6533
    %v6535 = vpop.f32.mrb[0].mxu0
    %6536 = vmatprep.mubr.bf16.mxu0 %v553
    %6537 = vmatmul.mubr.bf16.gmra.mrb[0].mxu0 %v552
    %v6538 = vpop.f32.mrb[0].mxu0
    %v6539 = vadd.f32 0.0, %v6538
    %v6540 = vpop.f32.mrb[0].mxu0
    %v6541 = vpop.f32.mrb[0].mxu0
    %v6542 = vadd.f32 0.0, %v6541
    %v6543 = vpop.f32.mrb[0].mxu0
    %6544 = vmatprep.mubr.bf16.mxu0 %v557
    %6545 = vmatmul.mubr.bf16.gmra.mrb[0].mxu0 %v556
    %v6546 = vpop.f32.mrb[0].mxu0
    %v6547 = vadd.f32 0.0, %v6546
    %v6548 = vpop.f32.mrb[0].mxu0
    %v6549 = vpop.f32.mrb[0].mxu0
    %v6550 = vadd.f32 0.0, %v6549
    %v6551 = vpop.f32.mrb[0].mxu0
    %6552 = vmatprep.mubr.bf16.mxu0 %v561
    %6553 = vmatmul.mubr.bf16.gmra.mrb[0].mxu0 %v560
    %v6554 = vpop.f32.mrb[0].mxu0
    %v6555 = vadd.f32 0.0, %v6554
    %v6556 = vpop.f32.mrb[0].mxu0
    %v6557 = vpop.f32.mrb[0].mxu0
    %v6558 = vadd.f32 0.0, %v6557
    %v6559 = vpop.f32.mrb[0].mxu0
    %6560 = vmatprep.mubr.bf16.mxu0 %v565
    %6561 = vmatmul.mubr.bf16.gmra.mrb[0].mxu0 %v564
    %v6562 = vpop.f32.mrb[0].mxu0
    %v6563 = vadd.f32 0.0, %v6562
    %v6564 = vpop.f32.mrb[0].mxu0
    %v6565 = vpop.f32.mrb[0].mxu0
    %v6566 = vadd.f32 0.0, %v6565
    %v6567 = vpop.f32.mrb[0].mxu0
    %6568 = vmatprep.mubr.bf16.mxu0 %v569
    %6569 = vmatmul.mubr.bf16.gmra.mrb[0].mxu0 %v568
    %v6570 = vpop.f32.mrb[0].mxu0
    %v6571 = vadd.f32 0.0, %v6570
    %v6572 = vpop.f32.mrb[0].mxu0
    %v6573 = vpop.f32.mrb[0].mxu0
    %v6574 = vadd.f32 0.0, %v6573
    %v6575 = vpop.f32.mrb[0].mxu0
    %6576 = vmatprep.mubr.bf16.mxu0 %v573
    %6577 = vmatmul.mubr.bf16.gmra.mrb[0].mxu0 %v572
    %v6578 = vpop.f32.mrb[0].mxu0
    %v6579 = vadd.f32 0.0, %v6578
    %v6580 = vpop.f32.mrb[0].mxu0
    %v6581 = vpop.f32.mrb[0].mxu0
    %v6582 = vadd.f32 0.0, %v6581
    %v6583 = vpop.f32.mrb[0].mxu0
    %6584 = vmatprep.mubr.bf16.mxu0 %v577
    %6585 = vmatmul.mubr.bf16.gmra.mrb[0].mxu0 %v576
    %v6586 = vpop.f32.mrb[0].mxu0
    %v6587 = vadd.f32 0.0, %v6586
    %v6588 = vpop.f32.mrb[0].mxu0
    %v6589 = vpop.f32.mrb[0].mxu0
    %v6590 = vadd.f32 0.0, %v6589
    %v6591 = vpop.f32.mrb[0].mxu0
    %6592 = vmatprep.mubr.bf16.mxu0 %v581
    %6593 = vmatmul.mubr.bf16.gmra.mrb[0].mxu0 %v580
    %v6594 = vpop.f32.mrb[0].mxu0
    %v6595 = vadd.f32 0.0, %v6594
    %v6596 = vpop.f32.mrb[0].mxu0
    %v6597 = vpop.f32.mrb[0].mxu0
    %v6598 = vadd.f32 0.0, %v6597
    %v6599 = vpop.f32.mrb[0].mxu0
    %6600 = vmatprep.mubr.bf16.mxu0 %v585
    %6601 = vmatmul.mubr.bf16.gmra.mrb[0].mxu0 %v584
    %v6602 = vpop.f32.mrb[0].mxu0
    %v6603 = vadd.f32 0.0, %v6602
    %v6604 = vpop.f32.mrb[0].mxu0
    %v6605 = vpop.f32.mrb[0].mxu0
    %v6606 = vadd.f32 0.0, %v6605
    %v6607 = vpop.f32.mrb[0].mxu0
    %6608 = vmatprep.mubr.bf16.mxu0 %v589
    %6609 = vmatmul.mubr.bf16.gmra.mrb[0].mxu0 %v588
    %v6610 = vpop.f32.mrb[0].mxu0
    %v6611 = vadd.f32 0.0, %v6610
    %v6612 = vpop.f32.mrb[0].mxu0
    %v6613 = vpop.f32.mrb[0].mxu0
    %v6614 = vadd.f32 0.0, %v6613
    %v6615 = vpop.f32.mrb[0].mxu0
    %6616 = vmatprep.mubr.bf16.mxu0 %v593
    %6617 = vmatmul.mubr.bf16.gmra.mrb[0].mxu0 %v592
    %v6618 = vpop.f32.mrb[0].mxu0
    %v6619 = vadd.f32 0.0, %v6618
    %v6620 = vpop.f32.mrb[0].mxu0
    %v6621 = vpop.f32.mrb[0].mxu0
    %v6622 = vadd.f32 0.0, %v6621
    %v6623 = vpop.f32.mrb[0].mxu0
    %6624 = vdwg.mxu0
    %6625 = vmatprep.subr.bf16.mxu0 0
    %6626 = vmatpush1.bf16.msra.mxu0 %v6448
    %6627 = vmatprep.subr.bf16.mxu0 0
    %6628 = vmatpush1.bf16.msra.mxu0 %v6449
    %6629 = vmatprep.subr.bf16.mxu0 0
    %6630 = vmatpush1.bf16.msra.mxu0 %v6450
    %6631 = vmatprep.subr.bf16.mxu0 0
    %6632 = vmatpush1.bf16.msra.mxu0 %v6451
    %6633 = vmatprep.subr.bf16.mxu0 0
    %6634 = vmatpush1.bf16.msra.mxu0 %v6452
    %6635 = vmatprep.subr.bf16.mxu0 0
    %6636 = vmatpush1.bf16.msra.mxu0 %v6453
    %6637 = vmatprep.subr.bf16.mxu0 0
    %6638 = vmatpush1.bf16.msra.mxu0 %v6454
    %6639 = vmatprep.subr.bf16.mxu0 0
    %6640 = vmatpush1.bf16.msra.mxu0 %v6455
    %6641 = vmatprep.subr.bf16.mxu0 0
    %6642 = vmatpush1.bf16.msra.mxu0 %v6456
    %6643 = vmatprep.subr.bf16.mxu0 0
    %6644 = vmatpush1.bf16.msra.mxu0 %v6457
    %6645 = vmatprep.subr.bf16.mxu0 0
    %6646 = vmatpush1.bf16.msra.mxu0 %v6458
    %6647 = vmatprep.subr.bf16.mxu0 0
    %6648 = vmatpush1.bf16.msra.mxu0 %v6459
    %6649 = vmatprep.subr.bf16.mxu0 0
    %6650 = vmatpush1.bf16.msra.mxu0 %v6460
    %6651 = vmatprep.subr.bf16.mxu0 0
    %6652 = vmatpush1.bf16.msra.mxu0 %v6461
    %6653 = vmatprep.subr.bf16.mxu0 0
    %6654 = vmatpush1.bf16.msra.mxu0 %v6462
    %6655 = vmatprep.subr.bf16.mxu0 0
    %6656 = vmatpush1.bf16.msra.mxu0 %v6463
    %6657 = vmatprep.mubr.bf16.mxu0 %v535
    %6658 = vmatmul.mubr.bf16.gmra.mrb[0].mxu0 %v534
    %v6659 = vpop.f32.mrb[0].mxu0
    %v6660 = vadd.f32 %v6499, %v6659
    %v6661 = vpop.f32.mrb[0].mxu0
    %v6662 = vpop.f32.mrb[0].mxu0
    %v6663 = vadd.f32 %v6502, %v6662
    %v6664 = vpop.f32.mrb[0].mxu0
    %6665 = vmatprep.mubr.bf16.mxu0 %v539
    %6666 = vmatmul.mubr.bf16.gmra.mrb[0].mxu0 %v538
    %v6667 = vpop.f32.mrb[0].mxu0
    %v6668 = vadd.f32 %v6507, %v6667
    %v6669 = vpop.f32.mrb[0].mxu0
    %v6670 = vpop.f32.mrb[0].mxu0
    %v6671 = vadd.f32 %v6510, %v6670
    %v6672 = vpop.f32.mrb[0].mxu0
    %6673 = vmatprep.mubr.bf16.mxu0 %v543
    %6674 = vmatmul.mubr.bf16.gmra.mrb[0].mxu0 %v542
    %v6675 = vpop.f32.mrb[0].mxu0
    %v6676 = vadd.f32 %v6515, %v6675
    %v6677 = vpop.f32.mrb[0].mxu0
    %v6678 = vpop.f32.mrb[0].mxu0
    %v6679 = vadd.f32 %v6518, %v6678
    %v6680 = vpop.f32.mrb[0].mxu0
    %6681 = vmatprep.mubr.bf16.mxu0 %v547
    %6682 = vmatmul.mubr.bf16.gmra.mrb[0].mxu0 %v546
    %v6683 = vpop.f32.mrb[0].mxu0
    %v6684 = vadd.f32 %v6523, %v6683
    %v6685 = vpop.f32.mrb[0].mxu0
    %v6686 = vpop.f32.mrb[0].mxu0
    %v6687 = vadd.f32 %v6526, %v6686
    %v6688 = vpop.f32.mrb[0].mxu0
    %6689 = vmatprep.mubr.bf16.mxu0 %v551
    %6690 = vmatmul.mubr.bf16.gmra.mrb[0].mxu0 %v550
    %v6691 = vpop.f32.mrb[0].mxu0
    %v6692 = vadd.f32 %v6531, %v6691
    %v6693 = vpop.f32.mrb[0].mxu0
    %v6694 = vpop.f32.mrb[0].mxu0
    %v6695 = vadd.f32 %v6534, %v6694
    %v6696 = vpop.f32.mrb[0].mxu0
    %6697 = vmatprep.mubr.bf16.mxu0 %v555
    %6698 = vmatmul.mubr.bf16.gmra.mrb[0].mxu0 %v554
    %v6699 = vpop.f32.mrb[0].mxu0
    %v6700 = vadd.f32 %v6539, %v6699
    %v6701 = vpop.f32.mrb[0].mxu0
    %v6702 = vpop.f32.mrb[0].mxu0
    %v6703 = vadd.f32 %v6542, %v6702
    %v6704 = vpop.f32.mrb[0].mxu0
    %6705 = vmatprep.mubr.bf16.mxu0 %v559
    %6706 = vmatmul.mubr.bf16.gmra.mrb[0].mxu0 %v558
    %v6707 = vpop.f32.mrb[0].mxu0
    %v6708 = vadd.f32 %v6547, %v6707
    %v6709 = vpop.f32.mrb[0].mxu0
    %v6710 = vpop.f32.mrb[0].mxu0
    %v6711 = vadd.f32 %v6550, %v6710
    %v6712 = vpop.f32.mrb[0].mxu0
    %6713 = vmatprep.mubr.bf16.mxu0 %v563
    %6714 = vmatmul.mubr.bf16.gmra.mrb[0].mxu0 %v562
    %v6715 = vpop.f32.mrb[0].mxu0
    %v6716 = vadd.f32 %v6555, %v6715
    %v6717 = vpop.f32.mrb[0].mxu0
    %v6718 = vpop.f32.mrb[0].mxu0
    %v6719 = vadd.f32 %v6558, %v6718
    %v6720 = vpop.f32.mrb[0].mxu0
    %6721 = vmatprep.mubr.bf16.mxu0 %v567
    %6722 = vmatmul.mubr.bf16.gmra.mrb[0].mxu0 %v566
    %v6723 = vpop.f32.mrb[0].mxu0
    %v6724 = vadd.f32 %v6563, %v6723
    %v6725 = vpop.f32.mrb[0].mxu0
    %v6726 = vpop.f32.mrb[0].mxu0
    %v6727 = vadd.f32 %v6566, %v6726
    %v6728 = vpop.f32.mrb[0].mxu0
    %6729 = vmatprep.mubr.bf16.mxu0 %v571
    %6730 = vmatmul.mubr.bf16.gmra.mrb[0].mxu0 %v570
    %v6731 = vpop.f32.mrb[0].mxu0
    %v6732 = vadd.f32 %v6571, %v6731
    %v6733 = vpop.f32.mrb[0].mxu0
    %v6734 = vpop.f32.mrb[0].mxu0
    %v6735 = vadd.f32 %v6574, %v6734
    %v6736 = vpop.f32.mrb[0].mxu0
    %6737 = vmatprep.mubr.bf16.mxu0 %v575
    %6738 = vmatmul.mubr.bf16.gmra.mrb[0].mxu0 %v574
    %v6739 = vpop.f32.mrb[0].mxu0
    %v6740 = vadd.f32 %v6579, %v6739
    %v6741 = vpop.f32.mrb[0].mxu0
    %v6742 = vpop.f32.mrb[0].mxu0
    %v6743 = vadd.f32 %v6582, %v6742
    %v6744 = vpop.f32.mrb[0].mxu0
    %6745 = vmatprep.mubr.bf16.mxu0 %v579
    %6746 = vmatmul.mubr.bf16.gmra.mrb[0].mxu0 %v578
    %v6747 = vpop.f32.mrb[0].mxu0
    %v6748 = vadd.f32 %v6587, %v6747
    %v6749 = vpop.f32.mrb[0].mxu0
    %v6750 = vpop.f32.mrb[0].mxu0
    %v6751 = vadd.f32 %v6590, %v6750
    %v6752 = vpop.f32.mrb[0].mxu0
    %6753 = vmatprep.mubr.bf16.mxu0 %v583
    %6754 = vmatmul.mubr.bf16.gmra.mrb[0].mxu0 %v582
    %v6755 = vpop.f32.mrb[0].mxu0
    %v6756 = vadd.f32 %v6595, %v6755
    %v6757 = vpop.f32.mrb[0].mxu0
    %v6758 = vpop.f32.mrb[0].mxu0
    %v6759 = vadd.f32 %v6598, %v6758
    %v6760 = vpop.f32.mrb[0].mxu0
    %6761 = vmatprep.mubr.bf16.mxu0 %v587
    %6762 = vmatmul.mubr.bf16.gmra.mrb[0].mxu0 %v586
    %v6763 = vpop.f32.mrb[0].mxu0
    %v6764 = vadd.f32 %v6603, %v6763
    %v6765 = vpop.f32.mrb[0].mxu0
    %v6766 = vpop.f32.mrb[0].mxu0
    %v6767 = vadd.f32 %v6606, %v6766
    %v6768 = vpop.f32.mrb[0].mxu0
    %6769 = vmatprep.mubr.bf16.mxu0 %v591
    %6770 = vmatmul.mubr.bf16.gmra.mrb[0].mxu0 %v590
    %v6771 = vpop.f32.mrb[0].mxu0
    %v6772 = vadd.f32 %v6611, %v6771
    %v6773 = vpop.f32.mrb[0].mxu0
    %v6774 = vpop.f32.mrb[0].mxu0
    %v6775 = vadd.f32 %v6614, %v6774
    %v6776 = vpop.f32.mrb[0].mxu0
    %6777 = vmatprep.mubr.bf16.mxu0 %v595
    %6778 = vmatmul.mubr.bf16.gmra.mrb[0].mxu0 %v594
    %v6779 = vpop.f32.mrb[0].mxu0
    %v6780 = vadd.f32 %v6619, %v6779
    %v6781 = vpop.f32.mrb[0].mxu0
    %v6782 = vpop.f32.mrb[0].mxu0
    %v6783 = vadd.f32 %v6622, %v6782
    %v6784 = vpop.f32.mrb[0].mxu0
    %6785 = vdwg.mxu0
    %v6786 = vmul.f32 %v6660, %v985
    %v6787 = vmul.f32 %v6663, %v990
    %v6788 = vmul.f32 %v6668, %v995
    %v6789 = vmul.f32 %v6671, %v1000
    %v6790 = vmul.f32 %v6676, %v1005
    %v6791 = vmul.f32 %v6679, %v1010
    %v6792 = vmul.f32 %v6684, %v1015
    %v6793 = vmul.f32 %v6687, %v1020
    %v6794 = vmul.f32 %v6692, %v1025
    %v6795 = vmul.f32 %v6695, %v1030
    %v6796 = vmul.f32 %v6700, %v1035
    %v6797 = vmul.f32 %v6703, %v1040
    %v6798 = vmul.f32 %v6708, %v1045
    %v6799 = vmul.f32 %v6711, %v1050
    %v6800 = vmul.f32 %v6716, %v1055
    %v6801 = vmul.f32 %v6719, %v1060
    %v6802 = vmul.f32 %v6724, %v1065
    %v6803 = vmul.f32 %v6727, %v1070
    %v6804 = vmul.f32 %v6732, %v1075
    %v6805 = vmul.f32 %v6735, %v1080
    %v6806 = vmul.f32 %v6740, %v1085
    %v6807 = vmul.f32 %v6743, %v1090
    %v6808 = vmul.f32 %v6748, %v1095
    %v6809 = vmul.f32 %v6751, %v1100
    %v6810 = vmul.f32 %v6756, %v1105
    %v6811 = vmul.f32 %v6759, %v1110
    %v6812 = vmul.f32 %v6764, %v1115
    %v6813 = vmul.f32 %v6767, %v1120
    %v6814 = vmul.f32 %v6772, %v1125
    %v6815 = vmul.f32 %v6775, %v1130
    %v6816 = vmul.f32 %v6780, %v1135
    %v6817 = vmul.f32 %v6783, %v1140
    %v6818 = vadd.f32 %v6786, %v1177
    %v6819 = vadd.f32 %v6787, %v1182
    %v6820 = vadd.f32 %v6788, %v1187
    %v6821 = vadd.f32 %v6789, %v1192
    %v6822 = vadd.f32 %v6790, %v1197
    %v6823 = vadd.f32 %v6791, %v1202
    %v6824 = vadd.f32 %v6792, %v1207
    %v6825 = vadd.f32 %v6793, %v1212
    %v6826 = vadd.f32 %v6794, %v1217
    %v6827 = vadd.f32 %v6795, %v1222
    %v6828 = vadd.f32 %v6796, %v1227
    %v6829 = vadd.f32 %v6797, %v1232
    %v6830 = vadd.f32 %v6798, %v1237
    %v6831 = vadd.f32 %v6799, %v1242
    %v6832 = vadd.f32 %v6800, %v1247
    %v6833 = vadd.f32 %v6801, %v1252
    %v6834 = vadd.f32 %v6802, %v1257
    %v6835 = vadd.f32 %v6803, %v1262
    %v6836 = vadd.f32 %v6804, %v1267
    %v6837 = vadd.f32 %v6805, %v1272
    %v6838 = vadd.f32 %v6806, %v1277
    %v6839 = vadd.f32 %v6807, %v1282
    %v6840 = vadd.f32 %v6808, %v1287
    %v6841 = vadd.f32 %v6809, %v1292
    %v6842 = vadd.f32 %v6810, %v1297
    %v6843 = vadd.f32 %v6811, %v1302
    %v6844 = vadd.f32 %v6812, %v1307
    %v6845 = vadd.f32 %v6813, %v1312
    %v6846 = vadd.f32 %v6814, %v1317
    %v6847 = vadd.f32 %v6815, %v1322
    %v6848 = vadd.f32 %v6816, %v1327
    %v6849 = vadd.f32 %v6817, %v1332
    %v6850 = vmax.f32 %v6818, 0.0
    %v6851 = vmax.f32 %v6819, 0.0
    %v6852 = vmax.f32 %v6820, 0.0
    %v6853 = vmax.f32 %v6821, 0.0
    %v6854 = vmax.f32 %v6822, 0.0
    %v6855 = vmax.f32 %v6823, 0.0
    %v6856 = vmax.f32 %v6824, 0.0
    %v6857 = vmax.f32 %v6825, 0.0
    %v6858 = vmax.f32 %v6826, 0.0
    %v6859 = vmax.f32 %v6827, 0.0
    %v6860 = vmax.f32 %v6828, 0.0
    %v6861 = vmax.f32 %v6829, 0.0
    %v6862 = vmax.f32 %v6830, 0.0
    %v6863 = vmax.f32 %v6831, 0.0
    %v6864 = vmax.f32 %v6832, 0.0
    %v6865 = vmax.f32 %v6833, 0.0
    %v6866 = vmax.f32 %v6834, 0.0
    %v6867 = vmax.f32 %v6835, 0.0
    %v6868 = vmax.f32 %v6836, 0.0
    %v6869 = vmax.f32 %v6837, 0.0
    %v6870 = vmax.f32 %v6838, 0.0
    %v6871 = vmax.f32 %v6839, 0.0
    %v6872 = vmax.f32 %v6840, 0.0
    %v6873 = vmax.f32 %v6841, 0.0
    %v6874 = vmax.f32 %v6842, 0.0
    %v6875 = vmax.f32 %v6843, 0.0
    %v6876 = vmax.f32 %v6844, 0.0
    %v6877 = vmax.f32 %v6845, 0.0
    %v6878 = vmax.f32 %v6846, 0.0
    %v6879 = vmax.f32 %v6847, 0.0
    %v6880 = vmax.f32 %v6848, 0.0
    %v6881 = vmax.f32 %v6849, 0.0
    %v6882 = vpack.c.bf16 %v6851, %v6850
    %v6883 = vpack.c.bf16 %v6853, %v6852
    %v6884 = vpack.c.bf16 %v6855, %v6854
    %v6885 = vpack.c.bf16 %v6857, %v6856
    %v6886 = vpack.c.bf16 %v6859, %v6858
    %v6887 = vpack.c.bf16 %v6861, %v6860
    %v6888 = vpack.c.bf16 %v6863, %v6862
    %v6889 = vpack.c.bf16 %v6865, %v6864
    %v6890 = vpack.c.bf16 %v6867, %v6866
    %v6891 = vpack.c.bf16 %v6869, %v6868
    %v6892 = vpack.c.bf16 %v6871, %v6870
    %v6893 = vpack.c.bf16 %v6873, %v6872
    %v6894 = vpack.c.bf16 %v6875, %v6874
    %v6895 = vpack.c.bf16 %v6877, %v6876
    %v6896 = vpack.c.bf16 %v6879, %v6878
    %v6897 = vpack.c.bf16 %v6881, %v6880
    %6898 = vmatprep.subr.bf16.mxu0 0
    %6899 = vmatpush1.bf16.msra.mxu0 %v6882
    %6900 = vmatprep.subr.bf16.mxu0 0
    %6901 = vmatpush1.bf16.msra.mxu0 %v6883
    %6902 = vmatprep.subr.bf16.mxu0 0
    %6903 = vmatpush1.bf16.msra.mxu0 %v6884
    %6904 = vmatprep.subr.bf16.mxu0 0
    %6905 = vmatpush1.bf16.msra.mxu0 %v6885
    %6906 = vmatprep.subr.bf16.mxu0 0
    %6907 = vmatpush1.bf16.msra.mxu0 %v6886
    %6908 = vmatprep.subr.bf16.mxu0 0
    %6909 = vmatpush1.bf16.msra.mxu0 %v6887
    %6910 = vmatprep.subr.bf16.mxu0 0
    %6911 = vmatpush1.bf16.msra.mxu0 %v6888
    %6912 = vmatprep.subr.bf16.mxu0 0
    %6913 = vmatpush1.bf16.msra.mxu0 %v6889
    %6914 = vmatprep.subr.bf16.mxu0 0
    %6915 = vmatpush1.bf16.msra.mxu0 %v6890
    %6916 = vmatprep.subr.bf16.mxu0 0
    %6917 = vmatpush1.bf16.msra.mxu0 %v6891
    %6918 = vmatprep.subr.bf16.mxu0 0
    %6919 = vmatpush1.bf16.msra.mxu0 %v6892
    %6920 = vmatprep.subr.bf16.mxu0 0
    %6921 = vmatpush1.bf16.msra.mxu0 %v6893
    %6922 = vmatprep.subr.bf16.mxu0 0
    %6923 = vmatpush1.bf16.msra.mxu0 %v6894
    %6924 = vmatprep.subr.bf16.mxu0 0
    %6925 = vmatpush1.bf16.msra.mxu0 %v6895
    %6926 = vmatprep.subr.bf16.mxu0 0
    %6927 = vmatpush1.bf16.msra.mxu0 %v6896
    %6928 = vmatprep.subr.bf16.mxu0 0
    %6929 = vmatpush1.bf16.msra.mxu0 %v6897
    %6930 = vmatprep.mubr.bf16.mxu0 %v1463
    %6931 = vmatmul.mubr.bf16.gmra.mrb[0].mxu0 %v1462
    %v6932 = vpop.f32.mrb[0].mxu0
    %v6933 = vadd.f32 0.0, %v6932
    %v6934 = vpop.f32.mrb[0].mxu0
    %v6935 = vpop.f32.mrb[0].mxu0
    %v6936 = vadd.f32 0.0, %v6935
    %v6937 = vpop.f32.mrb[0].mxu0
    %6938 = vmatprep.mubr.bf16.mxu0 %v1465
    %6939 = vmatmul.mubr.bf16.gmra.mrb[0].mxu0 %v1464
    %v6940 = vpop.f32.mrb[0].mxu0
    %v6941 = vadd.f32 0.0, %v6940
    %v6942 = vpop.f32.mrb[0].mxu0
    %v6943 = vpop.f32.mrb[0].mxu0
    %v6944 = vadd.f32 0.0, %v6943
    %v6945 = vpop.f32.mrb[0].mxu0
    %6946 = vmatprep.mubr.bf16.mxu0 %v1467
    %6947 = vmatmul.mubr.bf16.gmra.mrb[0].mxu0 %v1466
    %v6948 = vpop.f32.mrb[0].mxu0
    %v6949 = vadd.f32 0.0, %v6948
    %v6950 = vpop.f32.mrb[0].mxu0
    %v6951 = vpop.f32.mrb[0].mxu0
    %v6952 = vadd.f32 0.0, %v6951
    %v6953 = vpop.f32.mrb[0].mxu0
    %6954 = vmatprep.mubr.bf16.mxu0 %v1469
    %6955 = vmatmul.mubr.bf16.gmra.mrb[0].mxu0 %v1468
    %v6956 = vpop.f32.mrb[0].mxu0
    %v6957 = vadd.f32 0.0, %v6956
    %v6958 = vpop.f32.mrb[0].mxu0
    %v6959 = vpop.f32.mrb[0].mxu0
    %v6960 = vadd.f32 0.0, %v6959
    %v6961 = vpop.f32.mrb[0].mxu0
    %6962 = vmatprep.mubr.bf16.mxu0 %v1471
    %6963 = vmatmul.mubr.bf16.gmra.mrb[0].mxu0 %v1470
    %v6964 = vpop.f32.mrb[0].mxu0
    %v6965 = vadd.f32 0.0, %v6964
    %v6966 = vpop.f32.mrb[0].mxu0
    %v6967 = vpop.f32.mrb[0].mxu0
    %v6968 = vadd.f32 0.0, %v6967
    %v6969 = vpop.f32.mrb[0].mxu0
    %6970 = vmatprep.mubr.bf16.mxu0 %v1473
    %6971 = vmatmul.mubr.bf16.gmra.mrb[0].mxu0 %v1472
    %v6972 = vpop.f32.mrb[0].mxu0
    %v6973 = vadd.f32 0.0, %v6972
    %v6974 = vpop.f32.mrb[0].mxu0
    %v6975 = vpop.f32.mrb[0].mxu0
    %v6976 = vadd.f32 0.0, %v6975
    %v6977 = vpop.f32.mrb[0].mxu0
    %6978 = vmatprep.mubr.bf16.mxu0 %v1475
    %6979 = vmatmul.mubr.bf16.gmra.mrb[0].mxu0 %v1474
    %v6980 = vpop.f32.mrb[0].mxu0
    %v6981 = vadd.f32 0.0, %v6980
    %v6982 = vpop.f32.mrb[0].mxu0
    %v6983 = vpop.f32.mrb[0].mxu0
    %v6984 = vadd.f32 0.0, %v6983
    %v6985 = vpop.f32.mrb[0].mxu0
    %6986 = vmatprep.mubr.bf16.mxu0 %v1477
    %6987 = vmatmul.mubr.bf16.gmra.mrb[0].mxu0 %v1476
    %v6988 = vpop.f32.mrb[0].mxu0
    %v6989 = vadd.f32 0.0, %v6988
    %v6990 = vpop.f32.mrb[0].mxu0
    %v6991 = vpop.f32.mrb[0].mxu0
    %v6992 = vadd.f32 0.0, %v6991
    %v6993 = vpop.f32.mrb[0].mxu0
    %6994 = vdwg.mxu0
    %v6995 = vmul.f32 %v6933, %v1594
    %v6996 = vmul.f32 %v6936, %v1599
    %v6997 = vmul.f32 %v6941, %v1604
    %v6998 = vmul.f32 %v6944, %v1609
    %v6999 = vmul.f32 %v6949, %v1614
    %v7000 = vmul.f32 %v6952, %v1619
    %v7001 = vmul.f32 %v6957, %v1624
    %v7002 = vmul.f32 %v6960, %v1629
    %v7003 = vmul.f32 %v6965, %v1634
    %v7004 = vmul.f32 %v6968, %v1639
    %v7005 = vmul.f32 %v6973, %v1644
    %v7006 = vmul.f32 %v6976, %v1649
    %v7007 = vmul.f32 %v6981, %v1654
    %v7008 = vmul.f32 %v6984, %v1659
    %v7009 = vmul.f32 %v6989, %v1664
    %v7010 = vmul.f32 %v6992, %v1669
    %v7011 = vadd.f32 %v6995, %v1690
    %v7012 = vadd.f32 %v6996, %v1695
    %v7013 = vadd.f32 %v6997, %v1700
    %v7014 = vadd.f32 %v6998, %v1705
    %v7015 = vadd.f32 %v6999, %v1710
    %v7016 = vadd.f32 %v7000, %v1715
    %v7017 = vadd.f32 %v7001, %v1720
    %v7018 = vadd.f32 %v7002, %v1725
    %v7019 = vadd.f32 %v7003, %v1730
    %v7020 = vadd.f32 %v7004, %v1735
    %v7021 = vadd.f32 %v7005, %v1740
    %v7022 = vadd.f32 %v7006, %v1745
    %v7023 = vadd.f32 %v7007, %v1750
    %v7024 = vadd.f32 %v7008, %v1755
    %v7025 = vadd.f32 %v7009, %v1760
    %v7026 = vadd.f32 %v7010, %v1765
    %v7027 = vmax.f32 %v7011, 0.0
    %v7028 = vmax.f32 %v7012, 0.0
    %v7029 = vmax.f32 %v7013, 0.0
    %v7030 = vmax.f32 %v7014, 0.0
    %v7031 = vmax.f32 %v7015, 0.0
    %v7032 = vmax.f32 %v7016, 0.0
    %v7033 = vmax.f32 %v7017, 0.0
    %v7034 = vmax.f32 %v7018, 0.0
    %v7035 = vmax.f32 %v7019, 0.0
    %v7036 = vmax.f32 %v7020, 0.0
    %v7037 = vmax.f32 %v7021, 0.0
    %v7038 = vmax.f32 %v7022, 0.0
    %v7039 = vmax.f32 %v7023, 0.0
    %v7040 = vmax.f32 %v7024, 0.0
    %v7041 = vmax.f32 %v7025, 0.0
    %v7042 = vmax.f32 %v7026, 0.0
    %v7043 = vmul.f32 %v7027, %v1802
    %v7044 = vmul.f32 %v7028, %v1807
    %v7045 = vmul.f32 %v7029, %v1812
    %v7046 = vmul.f32 %v7030, %v1817
    %v7047 = vmul.f32 %v7031, %v1822
    %v7048 = vmul.f32 %v7032, %v1827
    %v7049 = vmul.f32 %v7033, %v1832
    %v7050 = vmul.f32 %v7034, %v1837
    %v7051 = vmul.f32 %v7035, %v1842
    %v7052 = vmul.f32 %v7036, %v1847
    %v7053 = vmul.f32 %v7037, %v1852
    %v7054 = vmul.f32 %v7038, %v1857
    %v7055 = vmul.f32 %v7039, %v1862
    %v7056 = vmul.f32 %v7040, %v1867
    %v7057 = vmul.f32 %v7041, %v1872
    %v7058 = vmul.f32 %v7042, %v1877
    %v7059 = vsel %vm1895, %v7043, 0.0
    %v7060 = vsel %vm1895, %v7044, 0.0
    %v7061 = vadd.f32 %v7059, %v7060
    %v7062 = vsel %vm1895, %v7045, 0.0
    %v7063 = vadd.f32 %v7061, %v7062
    %v7064 = vsel %vm1895, %v7046, 0.0
    %v7065 = vadd.f32 %v7063, %v7064
    %v7066 = vsel %vm1895, %v7047, 0.0
    %v7067 = vadd.f32 %v7065, %v7066
    %v7068 = vsel %vm1895, %v7048, 0.0
    %v7069 = vadd.f32 %v7067, %v7068
    %v7070 = vsel %vm1895, %v7049, 0.0
    %v7071 = vadd.f32 %v7069, %v7070
    %v7072 = vsel %vm1895, %v7050, 0.0
    %v7073 = vadd.f32 %v7071, %v7072
    %v7074 = vsel %vm1895, %v7051, 0.0
    %v7075 = vadd.f32 %v7073, %v7074
    %v7076 = vsel %vm1895, %v7052, 0.0
    %v7077 = vadd.f32 %v7075, %v7076
    %v7078 = vsel %vm1895, %v7053, 0.0
    %v7079 = vadd.f32 %v7077, %v7078
    %v7080 = vsel %vm1895, %v7054, 0.0
    %v7081 = vadd.f32 %v7079, %v7080
    %v7082 = vsel %vm1895, %v7055, 0.0
    %v7083 = vadd.f32 %v7081, %v7082
    %v7084 = vsel %vm1895, %v7056, 0.0
    %v7085 = vadd.f32 %v7083, %v7084
    %v7086 = vsel %vm1895, %v7057, 0.0
    %v7087 = vadd.f32 %v7085, %v7086
    %v7088 = vsel %vm1895, %v7058, 0.0
    %v7089 = vadd.f32 %v7087, %v7088
    %v7090 = vrot.slane %v7089, 4
    %v7091 = vadd.f32 %v7089, %v7090
    %v7092 = vrot.slane %v7091, 2
    %v7093 = vadd.f32 %v7091, %v7092
    %v7094 = vrot.slane %v7093, 1
    %v7095 = vadd.f32 %v7093, %v7094
    %v7096 = vadd.f32 %v7095, %v1933
    %v7097 = vmax.f32 %v7096, 0.0
    %v7098 = vmul.f32 %v7097, %v241
    %v7099 = vsel %vm1937, %v7098, 0.0
    %7100 = vadd.xlane.f32.xlu0 %v7099
    %v7101 = vpop.xlane.xlu0 %7100
    %v7102 = vadd.f32 %v7101, %v1941
    %7103 = vst.msk [vmem:[%s10 + $0x7] sm:$0x1] %vm1943, %v7102
    // Predicated region
    $region46: #{tpu_custom_call.1} parent=1 // pred_check
      _
    $region47: #{tpu_custom_call.1} parent=1 // pred_check_branch
      %7105 = sbr.rel (0) target = $region49
    $region48: #{tpu_custom_call.1} parent=1 // pred_region
      _
    $region49: #{tpu_custom_call.1} parent=1 // pred_fallthru
      _
    // Predicated region
    $region50: #{tpu_custom_call.1} parent=1 // pred_check
      _
    $region51: #{tpu_custom_call.1} parent=1 // pred_check_branch
      %7107 = sbr.rel (0) target = $region53
    $region52: #{tpu_custom_call.1} parent=1 // pred_region
      _
    $region53: #{tpu_custom_call.1} parent=1 // pred_fallthru
      _
    %7108 = vsyncpa [#allocation3], 1

</llo_original>
